<compile_context>
chip_gen: v6e
topology: v6e:2x2x1
jax: 0.10.0
libtpu: 0.0.40
codegen_flags: <defaults>
</compile_context>

<pallas_src>
import math
import functools

import jax
import jax.numpy as jnp
import numpy as np
from jax import lax
from jax.experimental import pallas as pl
from jax.experimental.pallas import tpu as pltpu

# Make the pure-JAX reference dots f32-faithful so they match the in-kernel
# MXU f32 dots within tight tolerances.
jax.config.update("jax_default_matmul_precision", "highest")

# ----------------------------- config (small) --------------------------------
DIM_FT = 32
DIM_HIDDEN = 32
DIM_EMB = 16
DIM_KERNEL = 8
NUM_KERNEL = 16
DIM_ALL = DIM_KERNEL * NUM_KERNEL          # 128
NUM_SENTENCE = 4
VOCAB = 50
VOCAB_PAD = 64                             # sublane-aligned vocab (padded rows unused)
SEQ_T = 8
OUT_LANES = 128                            # lane-dense output slab width
NOISE = 0.0   # dropout prob; 0.0 -> identity so the kernel is deterministic
# TODO(synk): F.dropout(p=noise) is stochastic in torch; modeled as identity (p=0).

# -------------------- packed weight-slab layout (row offsets) ----------------
# One (SLAB_ROWS, 128) f32 slab; every slice starts at lane 0 and at an
# 8-aligned row offset.
R_WSI = 0                                   # (32, 128) sent->img projection
R_WSS = 32                                  # (32, 128) sent->sent projection
R_WIMG = 64                                 # (32, 128) img projection
R_POOL = 96                                 # (128, 16) pooling matrix * 1/sqrt(dk)
R_EMBP = 224                                # (64, 32)  emb @ w_ih + b_h (vocab-padded)
R_WHH = 288                                 # (32, 32)  recurrent weight
R_WFF = 320                                 # (32, 8)   block-diag ff weight (zero-padded)
R_BFF = 352                                 # (1, 8)    ff biases (zero-padded)
R_KEEP = 360                                # (16, 16)  leave-one-out mask
SLAB_ROWS = 376
SLAB_LANES = 128


# ------------------------------ Pallas kernel --------------------------------
def _disc_kernel(sents_ref, lens_ref, fts_ref, w_ref, out_ref, *,
                 b, ns, nk, dk, t, vocab_pad):
    bn = b * ns
    dim_all = nk * dk
    dh = DIM_HIDDEN
    f32 = jnp.float32

    # ---- static slices of the packed weight slab (one DMA for all weights) --
    w_si = w_ref[R_WSI:R_WSI + dh, :]                       # (32, 128)
    w_ss = w_ref[R_WSS:R_WSS + dh, :]                       # (32, 128)
    w_img = w_ref[R_WIMG:R_WIMG + DIM_FT, :]                # (32, 128)
    pool = w_ref[R_POOL:R_POOL + dim_all, 0:nk]             # (128, 16), pre-scaled
    embp = w_ref[R_EMBP:R_EMBP + vocab_pad, 0:dh]           # (64, 32) = emb@w_ih + b_h
    w_hh = w_ref[R_WHH:R_WHH + dh, 0:dh]                    # (32, 32)
    w_ff = w_ref[R_WFF:R_WFF + 2 * nk, 0:8]                 # (32, 8) block-diag, padded
    b_ff = w_ref[R_BFF:R_BFF + 1, 0:8]                      # (1, 8)
    keep = w_ref[R_KEEP:R_KEEP + ns * ns, 0:nk]             # (16, 16) static mask

    # ---- sentence encoder: one-hot MXU embedding-projection + tanh RNN ------
    # TODO(synk): encoder.rnn.Encoder source was not provided; deterministic
    # single-layer tanh-RNN stand-in returning the hidden state at step lens-1.
    sents = sents_ref[...]                                   # (t*bn, 1) int32, time-major
    onehot = (sents == lax.broadcasted_iota(jnp.int32, (t * bn, vocab_pad), 1)
              ).astype(f32)                                  # (t*bn, 64)
    # emb @ w_ih + b_h pre-folded at init (one-hot rows sum to exactly 1), so
    # the recurrence below has no input matmul / bias add on its critical path.
    xproj = jnp.dot(onehot, embp, preferred_element_type=f32)   # (t*bn, 32)

    idx = jnp.clip(lens_ref[...] - 1, 0, t - 1)              # (bn, 1) int32
    h = jnp.zeros((bn, dh), f32)
    hidden = h
    # TODO(synk): on v5e/v6e a weight-stationary w_hh (matmul_push_rhs once,
    # matmul_acc_lhs per step) would trim per-step MXU push latency; kept as
    # portable jnp.dot here.
    for step in range(t):                                    # static unroll (t == 8)
        x_t = xproj[step * bn:(step + 1) * bn, :]            # aligned (bn, 32) slice
        h = jnp.tanh(x_t + jnp.dot(h, w_hh, preferred_element_type=f32))
        hidden = jnp.where(idx == step, h, hidden)           # keep state at lens-1

    # ---- projections ---------------------------------------------------------
    img_embed = jnp.dot(fts_ref[...], w_img, preferred_element_type=f32)  # (b, 128)
    s2i = jnp.dot(hidden, w_si, preferred_element_type=f32)               # (bn, 128)
    s2s = jnp.dot(hidden, w_ss, preferred_element_type=f32)               # (bn, 128)

    # ---- kernel products + pooling (pool pre-scaled by 1/sqrt(dk)) ----------
    prod_img = (s2i.reshape(b, ns, dim_all)
                * img_embed[:, None, :]).reshape(bn, dim_all)             # (bn, 128)
    # rows ordered (batch, i, j): row b*ns*ns + i*ns + j = s2s[b*ns+i]*s2s[b*ns+j]
    s2s_j = jnp.broadcast_to(s2s.reshape(b, 1, ns, dim_all),
                             (b, ns, ns, dim_all)).reshape(bn, ns, dim_all)
    prod_pair = (s2s[:, None, :] * s2s_j).reshape(bn * ns, dim_all)       # (32, 128)

    d2i = jnp.tanh(jnp.dot(prod_img, pool, preferred_element_type=f32))   # (bn, nk)
    pooled_pair = jnp.tanh(jnp.dot(prod_pair, pool,
                                   preferred_element_type=f32))           # (32, nk)

    # leave-one-out mean over j != i via the static mask baked into the slab
    masked = pooled_pair.reshape(b, ns * ns, nk) * keep.reshape(1, ns * ns, nk)
    d2s = jnp.sum(masked.reshape(bn, ns, nk), axis=1) * (1.0 / (ns - 1))  # (bn, nk)

    # ---- fused ff heads (block-diag weight, already zero-padded to 8 lanes) --
    feats = jnp.concatenate([d2i, d2s], axis=1)                            # (bn, 32)
    heads = jnp.dot(feats, w_ff, preferred_element_type=f32) + b_ff        # (bn, 8)
    out2 = heads[:, 0:2] + heads[:, 2:4]                                   # (bn, 2)
    out8 = jnp.concatenate([out2, jnp.zeros((bn, 6), f32)], axis=1)        # (bn, 8)

    # ---- single lane-dense, 8-aligned output slab ----------------------------
    # lanes: [0:16]=d2i [16:32]=d2s [32:34]=out_img [34:36]=out_sent [40:42]=out
    out_ref[...] = jnp.concatenate(
        [feats, heads, out8, jnp.zeros((bn, OUT_LANES - 48), f32)], axis=1)


def discriminator_predict_pallas(fts, sents, lens, params):
    b = fts.shape[0]
    bn, t = sents.shape
    ns, nk, dk, dh = NUM_SENTENCE, NUM_KERNEL, DIM_KERNEL, DIM_HIDDEN
    assert bn == b * ns

    # time-major token ids so each RNN step is an aligned static sublane slice
    sents_tm = jnp.transpose(sents).reshape(t * bn, 1).astype(jnp.int32)
    lens2d = lens.reshape(bn, 1).astype(jnp.int32)
    slab_w = params["slab"]

    kernel = functools.partial(_disc_kernel, b=b, ns=ns, nk=nk, dk=dk, t=t,
                               vocab_pad=VOCAB_PAD)
    vmem = pl.BlockSpec(memory_space=pltpu.MemorySpace.VMEM)

    # advisory cost hint so XLA can overlap neighbours with kernel launch/DMA
    flops = 2 * (t * bn * VOCAB_PAD * dh + t * bn * dh * dh
                 + b * DIM_FT * DIM_ALL + 2 * bn * dh * DIM_ALL
                 + (bn + bn * ns) * DIM_ALL * nk + bn * 2 * nk * 8)
    transcendentals = t * bn * dh + (bn + bn * ns) * nk
    bytes_accessed = 4 * (sents_tm.size + lens2d.size + fts.size
                          + slab_w.size + bn * OUT_LANES)

    # TODO(synk): if batch grows, add a grid over b with
    # dimension_semantics=("parallel",) to shard across v7x's 2 TensorCores;
    # at B=2 a grid would only add per-step overhead on v5e/v6e.
    slab = pl.pallas_call(
        kernel,
        out_shape=jax.ShapeDtypeStruct((bn, OUT_LANES), jnp.float32),
        in_specs=[vmem] * 4,
        out_specs=vmem,
        cost_estimate=pl.CostEstimate(flops=flops,
                                      transcendentals=transcendentals,
                                      bytes_accessed=bytes_accessed),
    )(sents_tm, lens2d, fts, slab_w)

    d2i = slab[:, 0:nk].reshape(b, ns, nk)
    d2s = slab[:, nk:2 * nk].reshape(b, ns, nk)
    out_img = slab[:, 32:34]
    out_sent = slab[:, 34:36]
    out = slab[:, 40:42]
    return out, out_img, out_sent, d2i, d2s


# ------------------------------- forward -------------------------------------
def discriminator_forward(mode, fts, sents, lens, params):
    out, out_img, out_sent, d2i, d2s = discriminator_predict_pallas(
        fts, sents, lens, params)
    if mode == "eval":
        return (jax.nn.log_softmax(out, -1)[:, 1],
                jax.nn.log_softmax(out_img, -1)[:, 1],
                jax.nn.log_softmax(out_sent, -1)[:, 1])
    if mode == "tst":
        return (jax.nn.softmax(out, -1), jax.nn.softmax(out_img, -1),
                jax.nn.softmax(out_sent, -1))
    # TODO(synk): 'trn' cross-entropy path needs labels y; not implemented here.
    return out, out_img, out_sent, d2i, d2s


# --------------------------- pure-JAX reference -------------------------------
def sent_encoder_ref(sents, lens, params):
    emb = params["emb"][sents]                            # (bn, t, dim_emb)
    bn, t, _ = emb.shape
    h0 = jnp.zeros((bn, DIM_HIDDEN), jnp.float32)

    def step(h, x_t):
        h_new = jnp.tanh(x_t @ params["w_ih"] + h @ params["w_hh"] + params["b_h"])
        return h_new, h_new

    _, hs = lax.scan(step, h0, jnp.transpose(emb, (1, 0, 2)))
    hs = jnp.transpose(hs, (1, 0, 2))                     # (bn, t, dim_hidden)
    idx = jnp.clip(lens - 1, 0, t - 1)
    return jnp.take_along_axis(hs, idx[:, None, None], axis=1)[:, 0, :]


def predict_ref(fts, hidden, params):
    b = fts.shape[0]
    ns, nk, dk = NUM_SENTENCE, NUM_KERNEL, DIM_KERNEL
    img_embed = fts @ params["w_img"]
    s2i = (hidden @ params["w_si"]).reshape(b, ns, -1)
    s2s = (hidden @ params["w_ss"]).reshape(b, ns, -1)
    d2i = (img_embed[:, None, :] * s2i).reshape(b, ns, nk, dk)
    d2i = jnp.tanh(jnp.sum(d2i, -1) / math.sqrt(dk))
    ss = (s2s[:, :, None, :] * s2s[:, None, :, :]).reshape(b, ns, ns, nk, dk)
    ss = jnp.tanh(jnp.sum(ss, -1) / math.sqrt(dk))
    d2s = jnp.stack(
        [(jnp.sum(ss[:, i], 1) - ss[:, i, i]) / (ns - 1) for i in range(ns)], 1)
    out_img = (d2i.reshape(b * ns, nk) @ params["w_ffi"]) + params["b_ffi"]
    out_sent = (d2s.reshape(b * ns, nk) @ params["w_ffs"]) + params["b_ffs"]
    return out_img + out_sent, out_img, out_sent, d2i, d2s


# ------------------------------ params init ----------------------------------
def init_params(key):
    ks = jax.random.split(key, 10)
    s = 0.1
    rows = jnp.arange(DIM_ALL)
    pool = (rows[:, None] // DIM_KERNEL ==
            jnp.arange(NUM_KERNEL)[None, :]).astype(jnp.float32)

    w_img = s * jax.random.normal(ks[0], (DIM_FT, DIM_ALL), jnp.float32)
    w_si = s * jax.random.normal(ks[1], (DIM_HIDDEN, DIM_ALL), jnp.float32)
    w_ss = s * jax.random.normal(ks[2], (DIM_HIDDEN, DIM_ALL), jnp.float32)
    w_ffi = s * jax.random.normal(ks[3], (NUM_KERNEL, 2), jnp.float32)
    b_ffi = s * jax.random.normal(ks[4], (1, 2), jnp.float32)
    w_ffs = s * jax.random.normal(ks[5], (NUM_KERNEL, 2), jnp.float32)
    b_ffs = s * jax.random.normal(ks[6], (1, 2), jnp.float32)
    emb = s * jax.random.normal(ks[7], (VOCAB, DIM_EMB), jnp.float32)
    w_ih = s * jax.random.normal(ks[8], (DIM_EMB, DIM_HIDDEN), jnp.float32)
    w_hh = s * jax.random.normal(ks[9], (DIM_HIDDEN, DIM_HIDDEN), jnp.float32)
    b_h = jnp.zeros((1, DIM_HIDDEN), jnp.float32)

    # ---- pre-folded constants for the Pallas kernel ---------------------------
    emb_proj = emb @ w_ih + b_h                      # (VOCAB, DIM_HIDDEN): fold bias
    keep = (np.arange(NUM_SENTENCE)[:, None] != np.arange(NUM_SENTENCE)[None, :]
            ).astype(np.float32).reshape(NUM_SENTENCE * NUM_SENTENCE, 1)
    keep_nk = jnp.asarray(np.tile(keep, (1, NUM_KERNEL)))    # (16, 16)

    # ---- single packed f32 weight slab (one DMA into the kernel) --------------
    slab = jnp.zeros((SLAB_ROWS, SLAB_LANES), jnp.float32)
    slab = slab.at[R_WSI:R_WSI + DIM_HIDDEN, :].set(w_si)
    slab = slab.at[R_WSS:R_WSS + DIM_HIDDEN, :].set(w_ss)
    slab = slab.at[R_WIMG:R_WIMG + DIM_FT, :].set(w_img)
    slab = slab.at[R_POOL:R_POOL + DIM_ALL, 0:NUM_KERNEL].set(
        pool * (1.0 / math.sqrt(DIM_KERNEL)))                 # fold 1/sqrt(dk)
    slab = slab.at[R_EMBP:R_EMBP + VOCAB, 0:DIM_HIDDEN].set(emb_proj)
    slab = slab.at[R_WHH:R_WHH + DIM_HIDDEN, 0:DIM_HIDDEN].set(w_hh)
    slab = slab.at[R_WFF:R_WFF + NUM_KERNEL, 0:2].set(w_ffi)
    slab = slab.at[R_WFF + NUM_KERNEL:R_WFF + 2 * NUM_KERNEL, 2:4].set(w_ffs)
    slab = slab.at[R_BFF, 0:2].set(b_ffi[0])
    slab = slab.at[R_BFF, 2:4].set(b_ffs[0])
    slab = slab.at[R_KEEP:R_KEEP + NUM_SENTENCE ** 2, 0:NUM_KERNEL].set(keep_nk)

    return {
        # base parameters (used by the pure-JAX reference)
        "w_img": w_img, "w_si": w_si, "w_ss": w_ss,
        "w_ffi": w_ffi, "b_ffi": b_ffi, "w_ffs": w_ffs, "b_ffs": b_ffs,
        "pool": pool, "emb": emb, "w_ih": w_ih, "w_hh": w_hh, "b_h": b_h,
        # packed constants consumed by the Pallas kernel
        "slab": slab,
    }


# ---------------------------------- main --------------------------------------
if __name__ == "__main__":
    key = jax.random.PRNGKey(0)
    kp, kf, ks, kl = jax.random.split(key, 4)
    params = init_params(kp)

    B = 2
    BN = B * NUM_SENTENCE
    fts = jax.random.normal(kf, (B, DIM_FT), jnp.float32)
    sents = jax.random.randint(ks, (BN, SEQ_T), 0, VOCAB, dtype=jnp.int32)
    lens = jax.random.randint(kl, (BN,), 1, SEQ_T + 1, dtype=jnp.int32)

    # fused Pallas predict()
    out, out_img, out_sent, d2i, d2s = jax.block_until_ready(
        discriminator_predict_pallas(fts, sents, lens, params))

    # module-style forward paths
    preds, preds_img, preds_sent = jax.block_until_ready(
        discriminator_forward("tst", fts, sents, lens, params))
    _ = jax.block_until_ready(discriminator_forward("eval", fts, sents, lens, params))

    # correctness check vs. pure-JAX reference (encoder + predict)
    hidden_ref = sent_encoder_ref(sents, lens, params)
    r_out, r_oi, r_os, r_d2i, r_d2s = predict_ref(fts, hidden_ref, params)
    for a, b_ in ((out, r_out), (out_img, r_oi), (out_sent, r_os),
                  (d2i, r_d2i), (d2s, r_d2s)):
        np.testing.assert_allclose(np.asarray(a), np.asarray(b_),
                                   rtol=5e-4, atol=2e-5)

    assert preds.shape == (BN, 2) and d2i.shape == (B, NUM_SENTENCE, NUM_KERNEL)
    print("KERNEL_OK")
</pallas_src>

<mosaic_0001>
module attributes {stable_mosaic.version = 11 : i64} {
  func.func @_disc_kernel(%arg0: memref<64x1xi32, #tpu.memory_space<vmem>>, %arg1: memref<8x1xi32, #tpu.memory_space<vmem>>, %arg2: memref<2x32xf32, #tpu.memory_space<vmem>>, %arg3: memref<376x128xf32, #tpu.memory_space<vmem>>, %arg4: memref<8x128xf32, #tpu.memory_space<vmem>>) attributes {dimension_semantics = [], scalar_prefetch = 0 : i64, scratch_operands = 0 : i64, tpu.core_type = #tpu.core_type<tc>} {
    %c0 = arith.constant 0 : index
    %c0_0 = arith.constant 0 : index
    %0 = vector.load %arg3[%c0, %c0_0] : memref<376x128xf32, #tpu.memory_space<vmem>>, vector<32x128xf32>
    %c32 = arith.constant 32 : index
    %c0_1 = arith.constant 0 : index
    %1 = vector.load %arg3[%c32, %c0_1] : memref<376x128xf32, #tpu.memory_space<vmem>>, vector<32x128xf32>
    %c64 = arith.constant 64 : index
    %c0_2 = arith.constant 0 : index
    %2 = vector.load %arg3[%c64, %c0_2] : memref<376x128xf32, #tpu.memory_space<vmem>>, vector<32x128xf32>
    %c96 = arith.constant 96 : index
    %c0_3 = arith.constant 0 : index
    %3 = vector.load %arg3[%c96, %c0_3] : memref<376x128xf32, #tpu.memory_space<vmem>>, vector<128x16xf32>
    %c224 = arith.constant 224 : index
    %c0_4 = arith.constant 0 : index
    %4 = vector.load %arg3[%c224, %c0_4] : memref<376x128xf32, #tpu.memory_space<vmem>>, vector<64x32xf32>
    %c288 = arith.constant 288 : index
    %c0_5 = arith.constant 0 : index
    %5 = vector.load %arg3[%c288, %c0_5] : memref<376x128xf32, #tpu.memory_space<vmem>>, vector<32x32xf32>
    %c320 = arith.constant 320 : index
    %c0_6 = arith.constant 0 : index
    %6 = vector.load %arg3[%c320, %c0_6] : memref<376x128xf32, #tpu.memory_space<vmem>>, vector<32x8xf32>
    %c352 = arith.constant 352 : index
    %c0_7 = arith.constant 0 : index
    %7 = vector.load %arg3[%c352, %c0_7] : memref<376x128xf32, #tpu.memory_space<vmem>>, vector<1x8xf32>
    %c360 = arith.constant 360 : index
    %c0_8 = arith.constant 0 : index
    %8 = vector.load %arg3[%c360, %c0_8] : memref<376x128xf32, #tpu.memory_space<vmem>>, vector<16x16xf32>
    %c0_9 = arith.constant 0 : index
    %c0_10 = arith.constant 0 : index
    %9 = vector.load %arg0[%c0_9, %c0_10] : memref<64x1xi32, #tpu.memory_space<vmem>>, vector<64x1xi32>
    %10 = tpu.iota {dimensions = array<i32: 1>} : vector<64x64xi32>
    %11 = vector.broadcast %9 : vector<64x1xi32> to vector<64x64xi32>
    %12 = arith.cmpi eq, %11, %10 : vector<64x64xi32>
    %13 = arith.extui %12 : vector<64x64xi1> to vector<64x64xi32>
    %14 = arith.sitofp %13 : vector<64x64xi32> to vector<64x64xf32>
    %cst = arith.constant dense<0.000000e+00> : vector<64x32xf32>
    %15 = tpu.matmul %14, %4, %cst {dimension_numbers = #tpu.dot_dimension_numbers<[1], [0], [0], [1], [0, 0, 1, 1], [], []>, precision = #tpu.contract_precision<fp32>} : vector<64x64xf32>, vector<64x32xf32>, vector<64x32xf32> -> vector<64x32xf32>
    %c0_11 = arith.constant 0 : index
    %c0_12 = arith.constant 0 : index
    %16 = vector.load %arg1[%c0_11, %c0_12] : memref<8x1xi32, #tpu.memory_space<vmem>>, vector<8x1xi32>
    %c1_i32 = arith.constant 1 : i32
    %17 = vector.broadcast %c1_i32 : i32 to vector<8x1xi32>
    %18 = arith.subi %16, %17 : vector<8x1xi32>
    %c0_i32 = arith.constant 0 : i32
    %c7_i32 = arith.constant 7 : i32
    %19 = vector.broadcast %c0_i32 : i32 to vector<8x1xi32>
    %20 = arith.maxsi %19, %18 : vector<8x1xi32>
    %21 = vector.broadcast %c7_i32 : i32 to vector<8x1xi32>
    %22 = arith.minsi %21, %20 : vector<8x1xi32>
    %cst_13 = arith.constant 0.000000e+00 : f32
    %23 = vector.broadcast %cst_13 : f32 to vector<8x32xf32>
    %24 = vector.extract_strided_slice %15 {offsets = [0, 0], sizes = [8, 32], strides = [1, 1]} : vector<64x32xf32> to vector<8x32xf32>
    %cst_14 = arith.constant dense<0.000000e+00> : vector<8x32xf32>
    %25 = tpu.matmul %23, %5, %cst_14 {dimension_numbers = #tpu.dot_dimension_numbers<[1], [0], [0], [1], [0, 0, 1, 1], [], []>, precision = #tpu.contract_precision<fp32>} : vector<8x32xf32>, vector<32x32xf32>, vector<8x32xf32> -> vector<8x32xf32>
    %26 = arith.addf %24, %25 : vector<8x32xf32>
    %27 = math.tanh %26 : vector<8x32xf32>
    %c0_i32_15 = arith.constant 0 : i32
    %28 = vector.broadcast %c0_i32_15 : i32 to vector<8x1xi32>
    %29 = arith.cmpi eq, %22, %28 : vector<8x1xi32>
    %30 = vector.shape_cast %29 : vector<8x1xi1> to vector<8x1xi1>
    %31 = vector.broadcast %30 : vector<8x1xi1> to vector<8x32xi1>
    %32 = arith.select %31, %27, %23 : vector<8x32xi1>, vector<8x32xf32>
    %33 = vector.extract_strided_slice %15 {offsets = [8, 0], sizes = [8, 32], strides = [1, 1]} : vector<64x32xf32> to vector<8x32xf32>
    %cst_16 = arith.constant dense<0.000000e+00> : vector<8x32xf32>
    %34 = tpu.matmul %27, %5, %cst_16 {dimension_numbers = #tpu.dot_dimension_numbers<[1], [0], [0], [1], [0, 0, 1, 1], [], []>, precision = #tpu.contract_precision<fp32>} : vector<8x32xf32>, vector<32x32xf32>, vector<8x32xf32> -> vector<8x32xf32>
    %35 = arith.addf %33, %34 : vector<8x32xf32>
    %36 = math.tanh %35 : vector<8x32xf32>
    %c1_i32_17 = arith.constant 1 : i32
    %37 = vector.broadcast %c1_i32_17 : i32 to vector<8x1xi32>
    %38 = arith.cmpi eq, %22, %37 : vector<8x1xi32>
    %39 = vector.shape_cast %38 : vector<8x1xi1> to vector<8x1xi1>
    %40 = vector.broadcast %39 : vector<8x1xi1> to vector<8x32xi1>
    %41 = arith.select %40, %36, %32 : vector<8x32xi1>, vector<8x32xf32>
    %42 = vector.extract_strided_slice %15 {offsets = [16, 0], sizes = [8, 32], strides = [1, 1]} : vector<64x32xf32> to vector<8x32xf32>
    %cst_18 = arith.constant dense<0.000000e+00> : vector<8x32xf32>
    %43 = tpu.matmul %36, %5, %cst_18 {dimension_numbers = #tpu.dot_dimension_numbers<[1], [0], [0], [1], [0, 0, 1, 1], [], []>, precision = #tpu.contract_precision<fp32>} : vector<8x32xf32>, vector<32x32xf32>, vector<8x32xf32> -> vector<8x32xf32>
    %44 = arith.addf %42, %43 : vector<8x32xf32>
    %45 = math.tanh %44 : vector<8x32xf32>
    %c2_i32 = arith.constant 2 : i32
    %46 = vector.broadcast %c2_i32 : i32 to vector<8x1xi32>
    %47 = arith.cmpi eq, %22, %46 : vector<8x1xi32>
    %48 = vector.shape_cast %47 : vector<8x1xi1> to vector<8x1xi1>
    %49 = vector.broadcast %48 : vector<8x1xi1> to vector<8x32xi1>
    %50 = arith.select %49, %45, %41 : vector<8x32xi1>, vector<8x32xf32>
    %51 = vector.extract_strided_slice %15 {offsets = [24, 0], sizes = [8, 32], strides = [1, 1]} : vector<64x32xf32> to vector<8x32xf32>
    %cst_19 = arith.constant dense<0.000000e+00> : vector<8x32xf32>
    %52 = tpu.matmul %45, %5, %cst_19 {dimension_numbers = #tpu.dot_dimension_numbers<[1], [0], [0], [1], [0, 0, 1, 1], [], []>, precision = #tpu.contract_precision<fp32>} : vector<8x32xf32>, vector<32x32xf32>, vector<8x32xf32> -> vector<8x32xf32>
    %53 = arith.addf %51, %52 : vector<8x32xf32>
    %54 = math.tanh %53 : vector<8x32xf32>
    %c3_i32 = arith.constant 3 : i32
    %55 = vector.broadcast %c3_i32 : i32 to vector<8x1xi32>
    %56 = arith.cmpi eq, %22, %55 : vector<8x1xi32>
    %57 = vector.shape_cast %56 : vector<8x1xi1> to vector<8x1xi1>
    %58 = vector.broadcast %57 : vector<8x1xi1> to vector<8x32xi1>
    %59 = arith.select %58, %54, %50 : vector<8x32xi1>, vector<8x32xf32>
    %60 = vector.extract_strided_slice %15 {offsets = [32, 0], sizes = [8, 32], strides = [1, 1]} : vector<64x32xf32> to vector<8x32xf32>
    %cst_20 = arith.constant dense<0.000000e+00> : vector<8x32xf32>
    %61 = tpu.matmul %54, %5, %cst_20 {dimension_numbers = #tpu.dot_dimension_numbers<[1], [0], [0], [1], [0, 0, 1, 1], [], []>, precision = #tpu.contract_precision<fp32>} : vector<8x32xf32>, vector<32x32xf32>, vector<8x32xf32> -> vector<8x32xf32>
    %62 = arith.addf %60, %61 : vector<8x32xf32>
    %63 = math.tanh %62 : vector<8x32xf32>
    %c4_i32 = arith.constant 4 : i32
    %64 = vector.broadcast %c4_i32 : i32 to vector<8x1xi32>
    %65 = arith.cmpi eq, %22, %64 : vector<8x1xi32>
    %66 = vector.shape_cast %65 : vector<8x1xi1> to vector<8x1xi1>
    %67 = vector.broadcast %66 : vector<8x1xi1> to vector<8x32xi1>
    %68 = arith.select %67, %63, %59 : vector<8x32xi1>, vector<8x32xf32>
    %69 = vector.extract_strided_slice %15 {offsets = [40, 0], sizes = [8, 32], strides = [1, 1]} : vector<64x32xf32> to vector<8x32xf32>
    %cst_21 = arith.constant dense<0.000000e+00> : vector<8x32xf32>
    %70 = tpu.matmul %63, %5, %cst_21 {dimension_numbers = #tpu.dot_dimension_numbers<[1], [0], [0], [1], [0, 0, 1, 1], [], []>, precision = #tpu.contract_precision<fp32>} : vector<8x32xf32>, vector<32x32xf32>, vector<8x32xf32> -> vector<8x32xf32>
    %71 = arith.addf %69, %70 : vector<8x32xf32>
    %72 = math.tanh %71 : vector<8x32xf32>
    %c5_i32 = arith.constant 5 : i32
    %73 = vector.broadcast %c5_i32 : i32 to vector<8x1xi32>
    %74 = arith.cmpi eq, %22, %73 : vector<8x1xi32>
    %75 = vector.shape_cast %74 : vector<8x1xi1> to vector<8x1xi1>
    %76 = vector.broadcast %75 : vector<8x1xi1> to vector<8x32xi1>
    %77 = arith.select %76, %72, %68 : vector<8x32xi1>, vector<8x32xf32>
    %78 = vector.extract_strided_slice %15 {offsets = [48, 0], sizes = [8, 32], strides = [1, 1]} : vector<64x32xf32> to vector<8x32xf32>
    %cst_22 = arith.constant dense<0.000000e+00> : vector<8x32xf32>
    %79 = tpu.matmul %72, %5, %cst_22 {dimension_numbers = #tpu.dot_dimension_numbers<[1], [0], [0], [1], [0, 0, 1, 1], [], []>, precision = #tpu.contract_precision<fp32>} : vector<8x32xf32>, vector<32x32xf32>, vector<8x32xf32> -> vector<8x32xf32>
    %80 = arith.addf %78, %79 : vector<8x32xf32>
    %81 = math.tanh %80 : vector<8x32xf32>
    %c6_i32 = arith.constant 6 : i32
    %82 = vector.broadcast %c6_i32 : i32 to vector<8x1xi32>
    %83 = arith.cmpi eq, %22, %82 : vector<8x1xi32>
    %84 = vector.shape_cast %83 : vector<8x1xi1> to vector<8x1xi1>
    %85 = vector.broadcast %84 : vector<8x1xi1> to vector<8x32xi1>
    %86 = arith.select %85, %81, %77 : vector<8x32xi1>, vector<8x32xf32>
    %87 = vector.extract_strided_slice %15 {offsets = [56, 0], sizes = [8, 32], strides = [1, 1]} : vector<64x32xf32> to vector<8x32xf32>
    %cst_23 = arith.constant dense<0.000000e+00> : vector<8x32xf32>
    %88 = tpu.matmul %81, %5, %cst_23 {dimension_numbers = #tpu.dot_dimension_numbers<[1], [0], [0], [1], [0, 0, 1, 1], [], []>, precision = #tpu.contract_precision<fp32>} : vector<8x32xf32>, vector<32x32xf32>, vector<8x32xf32> -> vector<8x32xf32>
    %89 = arith.addf %87, %88 : vector<8x32xf32>
    %90 = math.tanh %89 : vector<8x32xf32>
    %c7_i32_24 = arith.constant 7 : i32
    %91 = vector.broadcast %c7_i32_24 : i32 to vector<8x1xi32>
    %92 = arith.cmpi eq, %22, %91 : vector<8x1xi32>
    %93 = vector.shape_cast %92 : vector<8x1xi1> to vector<8x1xi1>
    %94 = vector.broadcast %93 : vector<8x1xi1> to vector<8x32xi1>
    %95 = arith.select %94, %90, %86 : vector<8x32xi1>, vector<8x32xf32>
    %c0_25 = arith.constant 0 : index
    %c0_26 = arith.constant 0 : index
    %96 = vector.load %arg2[%c0_25, %c0_26] : memref<2x32xf32, #tpu.memory_space<vmem>>, vector<2x32xf32>
    %cst_27 = arith.constant dense<0.000000e+00> : vector<2x128xf32>
    %97 = tpu.matmul %96, %2, %cst_27 {dimension_numbers = #tpu.dot_dimension_numbers<[1], [0], [0], [1], [0, 0, 1, 1], [], []>, precision = #tpu.contract_precision<fp32>} : vector<2x32xf32>, vector<32x128xf32>, vector<2x128xf32> -> vector<2x128xf32>
    %cst_28 = arith.constant dense<0.000000e+00> : vector<8x128xf32>
    %98 = tpu.matmul %95, %0, %cst_28 {dimension_numbers = #tpu.dot_dimension_numbers<[1], [0], [0], [1], [0, 0, 1, 1], [], []>, precision = #tpu.contract_precision<fp32>} : vector<8x32xf32>, vector<32x128xf32>, vector<8x128xf32> -> vector<8x128xf32>
    %cst_29 = arith.constant dense<0.000000e+00> : vector<8x128xf32>
    %99 = tpu.matmul %95, %1, %cst_29 {dimension_numbers = #tpu.dot_dimension_numbers<[1], [0], [0], [1], [0, 0, 1, 1], [], []>, precision = #tpu.contract_precision<fp32>} : vector<8x32xf32>, vector<32x128xf32>, vector<8x128xf32> -> vector<8x128xf32>
    %100 = vector.shape_cast %98 : vector<8x128xf32> to vector<2x4x128xf32>
    %101 = vector.shape_cast %97 : vector<2x128xf32> to vector<2x1x128xf32>
    %102 = vector.broadcast %101 : vector<2x1x128xf32> to vector<2x4x128xf32>
    %103 = arith.mulf %100, %102 : vector<2x4x128xf32>
    %104 = vector.shape_cast %103 : vector<2x4x128xf32> to vector<8x128xf32>
    %105 = vector.shape_cast %99 : vector<8x128xf32> to vector<2x1x4x128xf32>
    %106 = vector.shape_cast %105 : vector<2x1x4x128xf32> to vector<2x1x4x128xf32>
    %107 = vector.broadcast %106 : vector<2x1x4x128xf32> to vector<2x4x4x128xf32>
    %108 = vector.shape_cast %107 : vector<2x4x4x128xf32> to vector<8x4x128xf32>
    %109 = vector.shape_cast %99 : vector<8x128xf32> to vector<8x1x128xf32>
    %110 = vector.broadcast %109 : vector<8x1x128xf32> to vector<8x4x128xf32>
    %111 = arith.mulf %110, %108 : vector<8x4x128xf32>
    %112 = vector.shape_cast %111 : vector<8x4x128xf32> to vector<32x128xf32>
    %cst_30 = arith.constant dense<0.000000e+00> : vector<8x16xf32>
    %113 = tpu.matmul %104, %3, %cst_30 {dimension_numbers = #tpu.dot_dimension_numbers<[1], [0], [0], [1], [0, 0, 1, 1], [], []>, precision = #tpu.contract_precision<fp32>} : vector<8x128xf32>, vector<128x16xf32>, vector<8x16xf32> -> vector<8x16xf32>
    %114 = math.tanh %113 : vector<8x16xf32>
    %cst_31 = arith.constant dense<0.000000e+00> : vector<32x16xf32>
    %115 = tpu.matmul %112, %3, %cst_31 {dimension_numbers = #tpu.dot_dimension_numbers<[1], [0], [0], [1], [0, 0, 1, 1], [], []>, precision = #tpu.contract_precision<fp32>} : vector<32x128xf32>, vector<128x16xf32>, vector<32x16xf32> -> vector<32x16xf32>
    %116 = math.tanh %115 : vector<32x16xf32>
    %117 = vector.shape_cast %116 : vector<32x16xf32> to vector<2x16x16xf32>
    %118 = vector.shape_cast %8 : vector<16x16xf32> to vector<1x16x16xf32>
    %119 = vector.broadcast %118 : vector<1x16x16xf32> to vector<2x16x16xf32>
    %120 = arith.mulf %117, %119 : vector<2x16x16xf32>
    %121 = vector.shape_cast %120 : vector<2x16x16xf32> to vector<8x4x16xf32>
    %cst_32 = arith.constant dense<0.000000e+00> : vector<8x16xf32>
    %122 = vector.multi_reduction <add>, %121, %cst_32 [1] : vector<8x4x16xf32> to vector<8x16xf32>
    %cst_33 = arith.constant 0.333333343 : f32
    %123 = vector.broadcast %cst_33 : f32 to vector<8x16xf32>
    %124 = arith.mulf %122, %123 : vector<8x16xf32>
    %125 = tpu.concatenate %114, %124 in 1 : vector<8x16xf32>, vector<8x16xf32> -> vector<8x32xf32>
    %cst_34 = arith.constant dense<0.000000e+00> : vector<8x8xf32>
    %126 = tpu.matmul %125, %6, %cst_34 {dimension_numbers = #tpu.dot_dimension_numbers<[1], [0], [0], [1], [0, 0, 1, 1], [], []>, precision = #tpu.contract_precision<fp32>} : vector<8x32xf32>, vector<32x8xf32>, vector<8x8xf32> -> vector<8x8xf32>
    %127 = vector.broadcast %7 : vector<1x8xf32> to vector<8x8xf32>
    %128 = arith.addf %126, %127 : vector<8x8xf32>
    %129 = vector.extract_strided_slice %128 {offsets = [0, 0], sizes = [8, 2], strides = [1, 1]} : vector<8x8xf32> to vector<8x2xf32>
    %130 = vector.extract_strided_slice %128 {offsets = [0, 2], sizes = [8, 2], strides = [1, 1]} : vector<8x8xf32> to vector<8x2xf32>
    %131 = arith.addf %129, %130 : vector<8x2xf32>
    %cst_35 = arith.constant 0.000000e+00 : f32
    %132 = vector.broadcast %cst_35 : f32 to vector<8x6xf32>
    %133 = tpu.concatenate %131, %132 in 1 : vector<8x2xf32>, vector<8x6xf32> -> vector<8x8xf32>
    %cst_36 = arith.constant 0.000000e+00 : f32
    %134 = vector.broadcast %cst_36 : f32 to vector<8x80xf32>
    %135 = tpu.concatenate %125, %128, %133, %134 in 1 : vector<8x32xf32>, vector<8x8xf32>, vector<8x8xf32>, vector<8x80xf32> -> vector<8x128xf32>
    %c0_37 = arith.constant 0 : index
    %c0_38 = arith.constant 0 : index
    %136 = vector.load %arg4[%c0_37, %c0_38] : memref<8x128xf32, #tpu.memory_space<vmem>>, vector<8x128xf32>
    tpu.vector_store %arg4[%c0_37, %c0_38], %135 {strides = array<i32>} : memref<8x128xf32, #tpu.memory_space<vmem>>, vector<8x128xf32>,
    return
  }
}

</mosaic_0001>

<llo_original>
// kernel: tpu_custom_call.1
$region0: #{tpu_custom_call.1}
  #allocation0 [shape = 'u32[]', space=smem, size = 0x4, offset = 0x4, fixed_abs, tag = 'smem constant byte address 0x4 - core index']
  #allocation1 [shape = 'u32[144,128]{1,0:T(1,128)}', space=vmem, size = 0x12000, scoped, tag = 'internal scratch']
  %s0 = inlined_call_operand.vmem [shape: s32[64,1], index: 0, kind: input, shape index: {}]
  %s1 = inlined_call_operand.vmem [shape: s32[8,1], index: 1, kind: input, shape index: {}]
  %s2 = inlined_call_operand.vmem [shape: f32[2,32], index: 2, kind: input, shape index: {}]
  %s3 = inlined_call_operand.hbm [shape: f32[376,128], index: 3, kind: input, shape index: {}]
  %s4 = inlined_call_operand.hbm [shape: f32[8,128], index: 4, kind: output, shape index: {}]
  %s5 = sld [smem:[#allocation0]]
  $region30: #{tpu_custom_call.1} parent=0
    _
  %s7 = ssub.s32 1, %s5
  %s8 = scalar_select 0, %s7, %s5
  $region1: #{tpu_custom_call.1} parent=0
    #allocation2 [shape = 'u8[192512]{0}', space=vmem, size = 0x2f000, scoped, tag = 'input window, operand 3, single buffered']
    #allocation3 [shape = 's32[1]{0}', space=sflag, size = 0x4, scoped, tag = 'scoped memory for tpu_custom_call.1']
    #allocation4 [shape = 's32[1]{0}', space=sflag, size = 0x4, scoped, tag = 'scoped memory for tpu_custom_call.1']
    #allocation5 [shape = 'u8[4096]{0}', space=vmem, size = 0x1000, scoped, tag = 'output window, operand 0, single buffered']
    %9 = vsyncpa [#allocation3], 0
    %10 = vsyncpa [#allocation4], 0
    // Predicated region
    $region2: #{tpu_custom_call.1} parent=1 // pred_check
      _
    $region3: #{tpu_custom_call.1} parent=1 // pred_check_branch
      %12 = sbr.rel (0) target = $region5
    $region4: #{tpu_custom_call.1} parent=1 // pred_region
      _
    $region5: #{tpu_custom_call.1} parent=1 // pred_fallthru
      _
    // Predicated region
    $region6: #{tpu_custom_call.1} parent=1 // pred_check
      _
    $region7: #{tpu_custom_call.1} parent=1 // pred_check_branch
      %14 = sbr.rel (0) target = $region9
    $region8: #{tpu_custom_call.1} parent=1 // pred_region
      _
    $region9: #{tpu_custom_call.1} parent=1 // pred_fallthru
      _
    // Predicated region
    $region10: #{tpu_custom_call.1} parent=1 // pred_check
      _
    $region11: #{tpu_custom_call.1} parent=1 // pred_check_branch
      %16 = sbr.rel (0) target = $region13
    $region12: #{tpu_custom_call.1} parent=1 // pred_region
      _
    $region13: #{tpu_custom_call.1} parent=1 // pred_fallthru
      _
    // Predicated region
    $region14: #{tpu_custom_call.1} parent=1 // pred_check
      _
    $region15: #{tpu_custom_call.1} parent=1 // pred_check_branch
      %18 = sbr.rel (0) target = $region17
    $region16: #{tpu_custom_call.1} parent=1 // pred_region
      %s20 = ssub.s32 6016, 6016
      %21 = vsyncadd [#allocation3], %s20
      %s22 = sshll.u32 [#allocation2], 4
      %s23 = int_to_ptr.vmem [resolvable:$true] %s22
      %28 = dma.hbm_to_vmem [thread:$0]  %s3, 6016, %s23, [#allocation3], 128, 128, 8
    $region17: #{tpu_custom_call.1} parent=1 // pred_fallthru
      _
    // Predicated region
    $region18: #{tpu_custom_call.1} parent=1 // pred_check
      _
    $region19: #{tpu_custom_call.1} parent=1 // pred_check_branch
      %30 = sbr.rel (0) target = $region21
    $region20: #{tpu_custom_call.1} parent=1 // pred_region
      %31 = dma.done [#allocation3], 6016
    $region21: #{tpu_custom_call.1} parent=1 // pred_fallthru
      _
    %v32 = vld [vmem:[#allocation2] sm:$0xff]
    %v33 = vld [vmem:[#allocation2 + $0x8] sm:$0xff]
    %v34 = vld [vmem:[#allocation2 + $0x10] sm:$0xff]
    %v35 = vld [vmem:[#allocation2 + $0x18] sm:$0xff]
    %v36 = vld [vmem:[#allocation2 + $0x20] sm:$0xff]
    %v37 = vld [vmem:[#allocation2 + $0x28] sm:$0xff]
    %v38 = vld [vmem:[#allocation2 + $0x30] sm:$0xff]
    %v39 = vld [vmem:[#allocation2 + $0x38] sm:$0xff]
    %v40 = vld [vmem:[#allocation2 + $0x40] sm:$0xff]
    %v41 = vld [vmem:[#allocation2 + $0x48] sm:$0xff]
    %v42 = vld [vmem:[#allocation2 + $0x50] sm:$0xff]
    %v43 = vld [vmem:[#allocation2 + $0x58] sm:$0xff]
    %v44 = vld [vmem:[#allocation2 + $0x60] sm:$0xff]
    %v45 = vld [vmem:[#allocation2 + $0x68] sm:$0xff]
    %v46 = vld [vmem:[#allocation2 + $0x70] sm:$0xff]
    %v47 = vld [vmem:[#allocation2 + $0x78] sm:$0xff]
    %v48 = vld [vmem:[#allocation2 + $0x80] sm:$0xff]
    %v49 = vld [vmem:[#allocation2 + $0x88] sm:$0xff]
    %v50 = vld [vmem:[#allocation2 + $0x90] sm:$0xff]
    %v51 = vld [vmem:[#allocation2 + $0x98] sm:$0xff]
    %v52 = vld [vmem:[#allocation2 + $0xa0] sm:$0xff]
    %v53 = vld [vmem:[#allocation2 + $0xa8] sm:$0xff]
    %v54 = vld [vmem:[#allocation2 + $0xb0] sm:$0xff]
    %v55 = vld [vmem:[#allocation2 + $0xb8] sm:$0xff]
    %v56 = vld [vmem:[#allocation2 + $0xc0] sm:$0xff]
    %v57 = vld [vmem:[#allocation2 + $0xc8] sm:$0xff]
    %v58 = vld [vmem:[#allocation2 + $0xd0] sm:$0xff]
    %v59 = vld [vmem:[#allocation2 + $0xd8] sm:$0xff]
    %v60 = vld [vmem:[#allocation2 + $0xe0] sm:$0xff]
    %v61 = vld [vmem:[#allocation2 + $0xe8] sm:$0xff]
    %v62 = vld [vmem:[#allocation2 + $0xf0] sm:$0xff]
    %v63 = vld [vmem:[#allocation2 + $0xf8] sm:$0xff]
    %v64 = vld [vmem:[#allocation2 + $0x100] sm:$0xff]
    %v65 = vld [vmem:[#allocation2 + $0x108] sm:$0xff]
    %v66 = vld [vmem:[#allocation2 + $0x110] sm:$0xff]
    %v67 = vld [vmem:[#allocation2 + $0x118] sm:$0xff]
    %v68 = vld [vmem:[#allocation2 + $0x120] sm:$0xff]
    %v69 = vld [vmem:[#allocation2 + $0x128] sm:$0xff]
    %v70 = vld [vmem:[#allocation2 + $0x130] sm:$0xff]
    %v71 = vld [vmem:[#allocation2 + $0x138] sm:$0xff]
    %v72 = vld [vmem:[#allocation2 + $0x140] sm:$0xff]
    %v73 = vld [vmem:[#allocation2 + $0x148] sm:$0xff]
    %v74 = vld [vmem:[#allocation2 + $0x150] sm:$0xff]
    %v75 = vld [vmem:[#allocation2 + $0x158] sm:$0xff]
    %v76 = vld [vmem:[#allocation2 + $0x160] sm:$0x1]
    %v77 = vld [vmem:[#allocation2 + $0x168] sm:$0xff]
    %v78 = vld [vmem:[#allocation2 + $0x170] sm:$0xff]
    %v79 = vld [vmem:[%s0] sm:$0xff]
    %v80 = vld [vmem:[%s0 + $0x8] sm:$0xff]
    %v81 = vld [vmem:[%s0 + $0x10] sm:$0xff]
    %v82 = vld [vmem:[%s0 + $0x18] sm:$0xff]
    %v83 = vld [vmem:[%s0 + $0x20] sm:$0xff]
    %v84 = vld [vmem:[%s0 + $0x28] sm:$0xff]
    %v85 = vld [vmem:[%s0 + $0x30] sm:$0xff]
    %v86 = vld [vmem:[%s0 + $0x38] sm:$0xff]
    %v87 = vlaneseq
    %v88 = vand.u32 %v87, 127
    %89 = vset.pattern.permute.xlu0 0
    %90 = vperm.xlu0 %89, %v79
    %v91 = vpop.permute.xlu0 %90
    %92 = vset.pattern.permute.xlu0 0
    %93 = vperm.xlu0 %92, %v80
    %v94 = vpop.permute.xlu0 %93
    %95 = vset.pattern.permute.xlu0 0
    %96 = vperm.xlu0 %95, %v81
    %v97 = vpop.permute.xlu0 %96
    %98 = vset.pattern.permute.xlu0 0
    %99 = vperm.xlu0 %98, %v82
    %v100 = vpop.permute.xlu0 %99
    %101 = vset.pattern.permute.xlu0 0
    %102 = vperm.xlu0 %101, %v83
    %v103 = vpop.permute.xlu0 %102
    %104 = vset.pattern.permute.xlu0 0
    %105 = vperm.xlu0 %104, %v84
    %v106 = vpop.permute.xlu0 %105
    %107 = vset.pattern.permute.xlu0 0
    %108 = vperm.xlu0 %107, %v85
    %v109 = vpop.permute.xlu0 %108
    %110 = vset.pattern.permute.xlu0 0
    %111 = vperm.xlu0 %110, %v86
    %v112 = vpop.permute.xlu0 %111
    %vm113 = vcmp.eq.s32.totalorder %v91, %v88
    %vm114 = vcmp.eq.s32.totalorder %v94, %v88
    %vm115 = vcmp.eq.s32.totalorder %v97, %v88
    %vm116 = vcmp.eq.s32.totalorder %v100, %v88
    %vm117 = vcmp.eq.s32.totalorder %v103, %v88
    %vm118 = vcmp.eq.s32.totalorder %v106, %v88
    %vm119 = vcmp.eq.s32.totalorder %v109, %v88
    %vm120 = vcmp.eq.s32.totalorder %v112, %v88
    %v121 = vsel %vm113, 1, 0
    %v122 = vsel %vm114, 1, 0
    %v123 = vsel %vm115, 1, 0
    %v124 = vsel %vm116, 1, 0
    %v125 = vsel %vm117, 1, 0
    %v126 = vsel %vm118, 1, 0
    %v127 = vsel %vm119, 1, 0
    %v128 = vsel %vm120, 1, 0
    %v129 = vcvt.s32.f32 %v121
    %v130 = vcvt.s32.f32 %v122
    %v131 = vcvt.s32.f32 %v123
    %v132 = vcvt.s32.f32 %v124
    %v133 = vcvt.s32.f32 %v125
    %v134 = vcvt.s32.f32 %v126
    %v135 = vcvt.s32.f32 %v127
    %v136 = vcvt.s32.f32 %v128
    %vm137 = vcmask 523264
    %v139 = vsel %vm137, %v129, 0
    %v142 = vsel %vm137, %v130, 0
    %v145 = vsel %vm137, %v131, 0
    %v148 = vsel %vm137, %v132, 0
    %v151 = vsel %vm137, %v133, 0
    %v154 = vsel %vm137, %v134, 0
    %v157 = vsel %vm137, %v135, 0
    %v160 = vsel %vm137, %v136, 0
    %162 = vmatprep.subr.mxu0 0.0
    %163 = vmatpush1.msra.mxu0 0.0
    %164 = vmatprep.subr.mxu0 0.0
    %165 = vmatpush1.msra.mxu0 0.0
    %166 = vmatprep.subr.mxu0 0.0
    %167 = vmatpush1.msra.mxu0 0.0
    %168 = vmatprep.subr.mxu0 0.0
    %169 = vmatpush1.msra.mxu0 0.0
    %170 = vmatprep.subr.mxu0 0.0
    %171 = vmatpush1.msra.mxu0 0.0
    %172 = vmatprep.subr.mxu0 0.0
    %173 = vmatpush1.msra.mxu0 0.0
    %174 = vmatprep.subr.mxu0 0.0
    %175 = vmatpush1.msra.mxu0 0.0
    %176 = vmatprep.subr.mxu0 0.0
    %177 = vmatpush1.msra.mxu0 0.0
    %178 = vmatprep.subr.mxu0 0.0
    %v179 = vand.u32 %v67, 4294901760
    %180 = vmatpush1.msra.mxu0 %v179
    %181 = vmatprep.subr.mxu0 0.0
    %v182 = vand.u32 %v66, 4294901760
    %183 = vmatpush1.msra.mxu0 %v182
    %184 = vmatprep.subr.mxu0 0.0
    %v185 = vand.u32 %v65, 4294901760
    %186 = vmatpush1.msra.mxu0 %v185
    %187 = vmatprep.subr.mxu0 0.0
    %v188 = vand.u32 %v64, 4294901760
    %189 = vmatpush1.msra.mxu0 %v188
    %190 = vmatprep.subr.mxu0 0.0
    %v191 = vand.u32 %v63, 4294901760
    %192 = vmatpush1.msra.mxu0 %v191
    %193 = vmatprep.subr.mxu0 0.0
    %v194 = vand.u32 %v62, 4294901760
    %195 = vmatpush1.msra.mxu0 %v194
    %196 = vmatprep.subr.mxu0 0.0
    %v197 = vand.u32 %v61, 4294901760
    %198 = vmatpush1.msra.mxu0 %v197
    %199 = vmatprep.subr.mxu0 0.0
    %v200 = vand.u32 %v60, 4294901760
    %201 = vmatpush1.msra.mxu0 %v200
    %202 = vmatprep.subr.mxu0 0.0
    %203 = vmatpush2.msra.mxu0 0.0
    %204 = vmatprep.subr.mxu0 0.0
    %205 = vmatpush2.msra.mxu0 0.0
    %206 = vmatprep.subr.mxu0 0.0
    %207 = vmatpush2.msra.mxu0 0.0
    %208 = vmatprep.subr.mxu0 0.0
    %209 = vmatpush2.msra.mxu0 0.0
    %210 = vmatprep.subr.mxu0 0.0
    %211 = vmatpush2.msra.mxu0 0.0
    %212 = vmatprep.subr.mxu0 0.0
    %213 = vmatpush2.msra.mxu0 0.0
    %214 = vmatprep.subr.mxu0 0.0
    %215 = vmatpush2.msra.mxu0 0.0
    %216 = vmatprep.subr.mxu0 0.0
    %217 = vmatpush2.msra.mxu0 0.0
    %218 = vmatprep.subr.mxu0 0.0
    %219 = vmatpush2.msra.mxu0 0.0
    %220 = vmatprep.subr.mxu0 0.0
    %221 = vmatpush2.msra.mxu0 0.0
    %222 = vmatprep.subr.mxu0 0.0
    %223 = vmatpush2.msra.mxu0 0.0
    %224 = vmatprep.subr.mxu0 0.0
    %225 = vmatpush2.msra.mxu0 0.0
    %226 = vmatprep.subr.mxu0 0.0
    %227 = vmatpush2.msra.mxu0 0.0
    %228 = vmatprep.subr.mxu0 0.0
    %229 = vmatpush2.msra.mxu0 0.0
    %230 = vmatprep.subr.mxu0 0.0
    %231 = vmatpush2.msra.mxu0 0.0
    %232 = vmatprep.subr.mxu0 0.0
    %233 = vmatpush2.msra.mxu0 0.0
    %234 = vmatprep.mubr.f32.mxu0 0.0
    %v235 = vand.u32 %v139, 4294901760
    %v236 = vsub.f32 %v139, %v235
    %v237 = vand.u32 %v236, 4294901760
    %v238 = vsub.f32 %v236, %v237
    %v239 = vand.u32 %v238, 4294901760
    %240 = vmatmul.mubr.f32.gmra.mxu0 %v239
    %v241 = vpop.f32.mrf.mxu0
    %v242 = vadd.f32 0.0, %v241
    %v243 = vpop.f32.mrf.mxu0
    %244 = vmatprep.mubr.f32.mxu0 0.0
    %v245 = vand.u32 %v142, 4294901760
    %v246 = vsub.f32 %v142, %v245
    %v247 = vand.u32 %v246, 4294901760
    %v248 = vsub.f32 %v246, %v247
    %v249 = vand.u32 %v248, 4294901760
    %250 = vmatmul.mubr.f32.gmra.mxu0 %v249
    %v251 = vpop.f32.mrf.mxu0
    %v252 = vadd.f32 0.0, %v251
    %v253 = vpop.f32.mrf.mxu0
    %254 = vmatprep.mubr.f32.mxu0 0.0
    %v255 = vand.u32 %v145, 4294901760
    %v256 = vsub.f32 %v145, %v255
    %v257 = vand.u32 %v256, 4294901760
    %v258 = vsub.f32 %v256, %v257
    %v259 = vand.u32 %v258, 4294901760
    %260 = vmatmul.mubr.f32.gmra.mxu0 %v259
    %v261 = vpop.f32.mrf.mxu0
    %v262 = vadd.f32 0.0, %v261
    %v263 = vpop.f32.mrf.mxu0
    %264 = vmatprep.mubr.f32.mxu0 0.0
    %v265 = vand.u32 %v148, 4294901760
    %v266 = vsub.f32 %v148, %v265
    %v267 = vand.u32 %v266, 4294901760
    %v268 = vsub.f32 %v266, %v267
    %v269 = vand.u32 %v268, 4294901760
    %270 = vmatmul.mubr.f32.gmra.mxu0 %v269
    %v271 = vpop.f32.mrf.mxu0
    %v272 = vadd.f32 0.0, %v271
    %v273 = vpop.f32.mrf.mxu0
    %274 = vmatprep.mubr.f32.mxu0 0.0
    %v275 = vand.u32 %v151, 4294901760
    %v276 = vsub.f32 %v151, %v275
    %v277 = vand.u32 %v276, 4294901760
    %v278 = vsub.f32 %v276, %v277
    %v279 = vand.u32 %v278, 4294901760
    %280 = vmatmul.mubr.f32.gmra.mxu0 %v279
    %v281 = vpop.f32.mrf.mxu0
    %v282 = vadd.f32 0.0, %v281
    %v283 = vpop.f32.mrf.mxu0
    %284 = vmatprep.mubr.f32.mxu0 0.0
    %v285 = vand.u32 %v154, 4294901760
    %v286 = vsub.f32 %v154, %v285
    %v287 = vand.u32 %v286, 4294901760
    %v288 = vsub.f32 %v286, %v287
    %v289 = vand.u32 %v288, 4294901760
    %290 = vmatmul.mubr.f32.gmra.mxu0 %v289
    %v291 = vpop.f32.mrf.mxu0
    %v292 = vadd.f32 0.0, %v291
    %v293 = vpop.f32.mrf.mxu0
    %294 = vmatprep.mubr.f32.mxu0 0.0
    %v295 = vand.u32 %v157, 4294901760
    %v296 = vsub.f32 %v157, %v295
    %v297 = vand.u32 %v296, 4294901760
    %v298 = vsub.f32 %v296, %v297
    %v299 = vand.u32 %v298, 4294901760
    %300 = vmatmul.mubr.f32.gmra.mxu0 %v299
    %v301 = vpop.f32.mrf.mxu0
    %v302 = vadd.f32 0.0, %v301
    %v303 = vpop.f32.mrf.mxu0
    %304 = vmatprep.mubr.f32.mxu0 0.0
    %v305 = vand.u32 %v160, 4294901760
    %v306 = vsub.f32 %v160, %v305
    %v307 = vand.u32 %v306, 4294901760
    %v308 = vsub.f32 %v306, %v307
    %v309 = vand.u32 %v308, 4294901760
    %310 = vmatmul.mubr.f32.gmra.mxu0 %v309
    %v311 = vpop.f32.mrf.mxu0
    %v312 = vadd.f32 0.0, %v311
    %v313 = vpop.f32.mrf.mxu0
    %314 = vdwg.mxu0
    %315 = vmatprep.subr.mxu0 0.0
    %316 = vmatpush1.msra.mxu0 0.0
    %317 = vmatprep.subr.mxu0 0.0
    %318 = vmatpush1.msra.mxu0 0.0
    %319 = vmatprep.subr.mxu0 0.0
    %320 = vmatpush1.msra.mxu0 0.0
    %321 = vmatprep.subr.mxu0 0.0
    %322 = vmatpush1.msra.mxu0 0.0
    %323 = vmatprep.subr.mxu0 0.0
    %324 = vmatpush1.msra.mxu0 0.0
    %325 = vmatprep.subr.mxu0 0.0
    %326 = vmatpush1.msra.mxu0 0.0
    %327 = vmatprep.subr.mxu0 0.0
    %328 = vmatpush1.msra.mxu0 0.0
    %329 = vmatprep.subr.mxu0 0.0
    %330 = vmatpush1.msra.mxu0 0.0
    %331 = vmatprep.subr.mxu0 0.0
    %v332 = vand.u32 %v67, 4294901760
    %v333 = vsub.f32 %v67, %v332
    %v334 = vand.u32 %v333, 4294901760
    %v335 = vsub.f32 %v333, %v334
    %v336 = vand.u32 %v335, 4294901760
    %337 = vmatpush1.msra.mxu0 %v336
    %338 = vmatprep.subr.mxu0 0.0
    %v339 = vand.u32 %v66, 4294901760
    %v340 = vsub.f32 %v66, %v339
    %v341 = vand.u32 %v340, 4294901760
    %v342 = vsub.f32 %v340, %v341
    %v343 = vand.u32 %v342, 4294901760
    %344 = vmatpush1.msra.mxu0 %v343
    %345 = vmatprep.subr.mxu0 0.0
    %v346 = vand.u32 %v65, 4294901760
    %v347 = vsub.f32 %v65, %v346
    %v348 = vand.u32 %v347, 4294901760
    %v349 = vsub.f32 %v347, %v348
    %v350 = vand.u32 %v349, 4294901760
    %351 = vmatpush1.msra.mxu0 %v350
    %352 = vmatprep.subr.mxu0 0.0
    %v353 = vand.u32 %v64, 4294901760
    %v354 = vsub.f32 %v64, %v353
    %v355 = vand.u32 %v354, 4294901760
    %v356 = vsub.f32 %v354, %v355
    %v357 = vand.u32 %v356, 4294901760
    %358 = vmatpush1.msra.mxu0 %v357
    %359 = vmatprep.subr.mxu0 0.0
    %v360 = vand.u32 %v63, 4294901760
    %v361 = vsub.f32 %v63, %v360
    %v362 = vand.u32 %v361, 4294901760
    %v363 = vsub.f32 %v361, %v362
    %v364 = vand.u32 %v363, 4294901760
    %365 = vmatpush1.msra.mxu0 %v364
    %366 = vmatprep.subr.mxu0 0.0
    %v367 = vand.u32 %v62, 4294901760
    %v368 = vsub.f32 %v62, %v367
    %v369 = vand.u32 %v368, 4294901760
    %v370 = vsub.f32 %v368, %v369
    %v371 = vand.u32 %v370, 4294901760
    %372 = vmatpush1.msra.mxu0 %v371
    %373 = vmatprep.subr.mxu0 0.0
    %v374 = vand.u32 %v61, 4294901760
    %v375 = vsub.f32 %v61, %v374
    %v376 = vand.u32 %v375, 4294901760
    %v377 = vsub.f32 %v375, %v376
    %v378 = vand.u32 %v377, 4294901760
    %379 = vmatpush1.msra.mxu0 %v378
    %380 = vmatprep.subr.mxu0 0.0
    %v381 = vand.u32 %v60, 4294901760
    %v382 = vsub.f32 %v60, %v381
    %v383 = vand.u32 %v382, 4294901760
    %v384 = vsub.f32 %v382, %v383
    %v385 = vand.u32 %v384, 4294901760
    %386 = vmatpush1.msra.mxu0 %v385
    %387 = vmatprep.subr.mxu0 0.0
    %388 = vmatpush2.msra.mxu0 0.0
    %389 = vmatprep.subr.mxu0 0.0
    %390 = vmatpush2.msra.mxu0 0.0
    %391 = vmatprep.subr.mxu0 0.0
    %392 = vmatpush2.msra.mxu0 0.0
    %393 = vmatprep.subr.mxu0 0.0
    %394 = vmatpush2.msra.mxu0 0.0
    %395 = vmatprep.subr.mxu0 0.0
    %396 = vmatpush2.msra.mxu0 0.0
    %397 = vmatprep.subr.mxu0 0.0
    %398 = vmatpush2.msra.mxu0 0.0
    %399 = vmatprep.subr.mxu0 0.0
    %400 = vmatpush2.msra.mxu0 0.0
    %401 = vmatprep.subr.mxu0 0.0
    %402 = vmatpush2.msra.mxu0 0.0
    %403 = vmatprep.subr.mxu0 0.0
    %404 = vmatpush2.msra.mxu0 0.0
    %405 = vmatprep.subr.mxu0 0.0
    %406 = vmatpush2.msra.mxu0 0.0
    %407 = vmatprep.subr.mxu0 0.0
    %408 = vmatpush2.msra.mxu0 0.0
    %409 = vmatprep.subr.mxu0 0.0
    %410 = vmatpush2.msra.mxu0 0.0
    %411 = vmatprep.subr.mxu0 0.0
    %412 = vmatpush2.msra.mxu0 0.0
    %413 = vmatprep.subr.mxu0 0.0
    %414 = vmatpush2.msra.mxu0 0.0
    %415 = vmatprep.subr.mxu0 0.0
    %416 = vmatpush2.msra.mxu0 0.0
    %417 = vmatprep.subr.mxu0 0.0
    %418 = vmatpush2.msra.mxu0 0.0
    %419 = vmatprep.mubr.f32.mxu0 0.0
    %v420 = vand.u32 %v139, 4294901760
    %421 = vmatmul.mubr.f32.gmra.mxu0 %v420
    %v422 = vpop.f32.mrf.mxu0
    %v423 = vadd.f32 %v242, %v422
    %v424 = vpop.f32.mrf.mxu0
    %425 = vmatprep.mubr.f32.mxu0 0.0
    %v426 = vand.u32 %v142, 4294901760
    %427 = vmatmul.mubr.f32.gmra.mxu0 %v426
    %v428 = vpop.f32.mrf.mxu0
    %v429 = vadd.f32 %v252, %v428
    %v430 = vpop.f32.mrf.mxu0
    %431 = vmatprep.mubr.f32.mxu0 0.0
    %v432 = vand.u32 %v145, 4294901760
    %433 = vmatmul.mubr.f32.gmra.mxu0 %v432
    %v434 = vpop.f32.mrf.mxu0
    %v435 = vadd.f32 %v262, %v434
    %v436 = vpop.f32.mrf.mxu0
    %437 = vmatprep.mubr.f32.mxu0 0.0
    %v438 = vand.u32 %v148, 4294901760
    %439 = vmatmul.mubr.f32.gmra.mxu0 %v438
    %v440 = vpop.f32.mrf.mxu0
    %v441 = vadd.f32 %v272, %v440
    %v442 = vpop.f32.mrf.mxu0
    %443 = vmatprep.mubr.f32.mxu0 0.0
    %v444 = vand.u32 %v151, 4294901760
    %445 = vmatmul.mubr.f32.gmra.mxu0 %v444
    %v446 = vpop.f32.mrf.mxu0
    %v447 = vadd.f32 %v282, %v446
    %v448 = vpop.f32.mrf.mxu0
    %449 = vmatprep.mubr.f32.mxu0 0.0
    %v450 = vand.u32 %v154, 4294901760
    %451 = vmatmul.mubr.f32.gmra.mxu0 %v450
    %v452 = vpop.f32.mrf.mxu0
    %v453 = vadd.f32 %v292, %v452
    %v454 = vpop.f32.mrf.mxu0
    %455 = vmatprep.mubr.f32.mxu0 0.0
    %v456 = vand.u32 %v157, 4294901760
    %457 = vmatmul.mubr.f32.gmra.mxu0 %v456
    %v458 = vpop.f32.mrf.mxu0
    %v459 = vadd.f32 %v302, %v458
    %v460 = vpop.f32.mrf.mxu0
    %461 = vmatprep.mubr.f32.mxu0 0.0
    %v462 = vand.u32 %v160, 4294901760
    %463 = vmatmul.mubr.f32.gmra.mxu0 %v462
    %v464 = vpop.f32.mrf.mxu0
    %v465 = vadd.f32 %v312, %v464
    %v466 = vpop.f32.mrf.mxu0
    %467 = vdwg.mxu0
    %468 = vmatprep.subr.mxu0 0.0
    %469 = vmatpush1.msra.mxu0 0.0
    %470 = vmatprep.subr.mxu0 0.0
    %471 = vmatpush1.msra.mxu0 0.0
    %472 = vmatprep.subr.mxu0 0.0
    %473 = vmatpush1.msra.mxu0 0.0
    %474 = vmatprep.subr.mxu0 0.0
    %475 = vmatpush1.msra.mxu0 0.0
    %476 = vmatprep.subr.mxu0 0.0
    %477 = vmatpush1.msra.mxu0 0.0
    %478 = vmatprep.subr.mxu0 0.0
    %479 = vmatpush1.msra.mxu0 0.0
    %480 = vmatprep.subr.mxu0 0.0
    %481 = vmatpush1.msra.mxu0 0.0
    %482 = vmatprep.subr.mxu0 0.0
    %483 = vmatpush1.msra.mxu0 0.0
    %484 = vmatprep.subr.mxu0 0.0
    %v485 = vand.u32 %v67, 4294901760
    %v486 = vsub.f32 %v67, %v485
    %487 = vmatpush1.msra.mxu0 %v486
    %488 = vmatprep.subr.mxu0 0.0
    %v489 = vand.u32 %v66, 4294901760
    %v490 = vsub.f32 %v66, %v489
    %491 = vmatpush1.msra.mxu0 %v490
    %492 = vmatprep.subr.mxu0 0.0
    %v493 = vand.u32 %v65, 4294901760
    %v494 = vsub.f32 %v65, %v493
    %495 = vmatpush1.msra.mxu0 %v494
    %496 = vmatprep.subr.mxu0 0.0
    %v497 = vand.u32 %v64, 4294901760
    %v498 = vsub.f32 %v64, %v497
    %499 = vmatpush1.msra.mxu0 %v498
    %500 = vmatprep.subr.mxu0 0.0
    %v501 = vand.u32 %v63, 4294901760
    %v502 = vsub.f32 %v63, %v501
    %503 = vmatpush1.msra.mxu0 %v502
    %504 = vmatprep.subr.mxu0 0.0
    %v505 = vand.u32 %v62, 4294901760
    %v506 = vsub.f32 %v62, %v505
    %507 = vmatpush1.msra.mxu0 %v506
    %508 = vmatprep.subr.mxu0 0.0
    %v509 = vand.u32 %v61, 4294901760
    %v510 = vsub.f32 %v61, %v509
    %511 = vmatpush1.msra.mxu0 %v510
    %512 = vmatprep.subr.mxu0 0.0
    %v513 = vand.u32 %v60, 4294901760
    %v514 = vsub.f32 %v60, %v513
    %515 = vmatpush1.msra.mxu0 %v514
    %516 = vmatprep.subr.mxu0 0.0
    %517 = vmatpush2.msra.mxu0 0.0
    %518 = vmatprep.subr.mxu0 0.0
    %519 = vmatpush2.msra.mxu0 0.0
    %520 = vmatprep.subr.mxu0 0.0
    %521 = vmatpush2.msra.mxu0 0.0
    %522 = vmatprep.subr.mxu0 0.0
    %523 = vmatpush2.msra.mxu0 0.0
    %524 = vmatprep.subr.mxu0 0.0
    %525 = vmatpush2.msra.mxu0 0.0
    %526 = vmatprep.subr.mxu0 0.0
    %527 = vmatpush2.msra.mxu0 0.0
    %528 = vmatprep.subr.mxu0 0.0
    %529 = vmatpush2.msra.mxu0 0.0
    %530 = vmatprep.subr.mxu0 0.0
    %531 = vmatpush2.msra.mxu0 0.0
    %532 = vmatprep.subr.mxu0 0.0
    %533 = vmatpush2.msra.mxu0 0.0
    %534 = vmatprep.subr.mxu0 0.0
    %535 = vmatpush2.msra.mxu0 0.0
    %536 = vmatprep.subr.mxu0 0.0
    %537 = vmatpush2.msra.mxu0 0.0
    %538 = vmatprep.subr.mxu0 0.0
    %539 = vmatpush2.msra.mxu0 0.0
    %540 = vmatprep.subr.mxu0 0.0
    %541 = vmatpush2.msra.mxu0 0.0
    %542 = vmatprep.subr.mxu0 0.0
    %543 = vmatpush2.msra.mxu0 0.0
    %544 = vmatprep.subr.mxu0 0.0
    %545 = vmatpush2.msra.mxu0 0.0
    %546 = vmatprep.subr.mxu0 0.0
    %547 = vmatpush2.msra.mxu0 0.0
    %548 = vmatprep.mubr.f32.mxu0 0.0
    %v549 = vand.u32 %v139, 4294901760
    %v550 = vsub.f32 %v139, %v549
    %551 = vmatmul.mubr.f32.gmra.mxu0 %v550
    %v552 = vpop.f32.mrf.mxu0
    %v553 = vadd.f32 %v423, %v552
    %v554 = vpop.f32.mrf.mxu0
    %555 = vmatprep.mubr.f32.mxu0 0.0
    %v556 = vand.u32 %v142, 4294901760
    %v557 = vsub.f32 %v142, %v556
    %558 = vmatmul.mubr.f32.gmra.mxu0 %v557
    %v559 = vpop.f32.mrf.mxu0
    %v560 = vadd.f32 %v429, %v559
    %v561 = vpop.f32.mrf.mxu0
    %562 = vmatprep.mubr.f32.mxu0 0.0
    %v563 = vand.u32 %v145, 4294901760
    %v564 = vsub.f32 %v145, %v563
    %565 = vmatmul.mubr.f32.gmra.mxu0 %v564
    %v566 = vpop.f32.mrf.mxu0
    %v567 = vadd.f32 %v435, %v566
    %v568 = vpop.f32.mrf.mxu0
    %569 = vmatprep.mubr.f32.mxu0 0.0
    %v570 = vand.u32 %v148, 4294901760
    %v571 = vsub.f32 %v148, %v570
    %572 = vmatmul.mubr.f32.gmra.mxu0 %v571
    %v573 = vpop.f32.mrf.mxu0
    %v574 = vadd.f32 %v441, %v573
    %v575 = vpop.f32.mrf.mxu0
    %576 = vmatprep.mubr.f32.mxu0 0.0
    %v577 = vand.u32 %v151, 4294901760
    %v578 = vsub.f32 %v151, %v577
    %579 = vmatmul.mubr.f32.gmra.mxu0 %v578
    %v580 = vpop.f32.mrf.mxu0
    %v581 = vadd.f32 %v447, %v580
    %v582 = vpop.f32.mrf.mxu0
    %583 = vmatprep.mubr.f32.mxu0 0.0
    %v584 = vand.u32 %v154, 4294901760
    %v585 = vsub.f32 %v154, %v584
    %586 = vmatmul.mubr.f32.gmra.mxu0 %v585
    %v587 = vpop.f32.mrf.mxu0
    %v588 = vadd.f32 %v453, %v587
    %v589 = vpop.f32.mrf.mxu0
    %590 = vmatprep.mubr.f32.mxu0 0.0
    %v591 = vand.u32 %v157, 4294901760
    %v592 = vsub.f32 %v157, %v591
    %593 = vmatmul.mubr.f32.gmra.mxu0 %v592
    %v594 = vpop.f32.mrf.mxu0
    %v595 = vadd.f32 %v459, %v594
    %v596 = vpop.f32.mrf.mxu0
    %597 = vmatprep.mubr.f32.mxu0 0.0
    %v598 = vand.u32 %v160, 4294901760
    %v599 = vsub.f32 %v160, %v598
    %600 = vmatmul.mubr.f32.gmra.mxu0 %v599
    %v601 = vpop.f32.mrf.mxu0
    %v602 = vadd.f32 %v465, %v601
    %v603 = vpop.f32.mrf.mxu0
    %604 = vdwg.mxu0
    %605 = vmatprep.subr.mxu0 0.0
    %606 = vmatpush1.msra.mxu0 0.0
    %607 = vmatprep.subr.mxu0 0.0
    %608 = vmatpush1.msra.mxu0 0.0
    %609 = vmatprep.subr.mxu0 0.0
    %610 = vmatpush1.msra.mxu0 0.0
    %611 = vmatprep.subr.mxu0 0.0
    %612 = vmatpush1.msra.mxu0 0.0
    %613 = vmatprep.subr.mxu0 0.0
    %614 = vmatpush1.msra.mxu0 0.0
    %615 = vmatprep.subr.mxu0 0.0
    %616 = vmatpush1.msra.mxu0 0.0
    %617 = vmatprep.subr.mxu0 0.0
    %618 = vmatpush1.msra.mxu0 0.0
    %619 = vmatprep.subr.mxu0 0.0
    %620 = vmatpush1.msra.mxu0 0.0
    %621 = vmatprep.subr.mxu0 0.0
    %v622 = vand.u32 %v67, 4294901760
    %623 = vmatpush1.msra.mxu0 %v622
    %624 = vmatprep.subr.mxu0 0.0
    %v625 = vand.u32 %v66, 4294901760
    %626 = vmatpush1.msra.mxu0 %v625
    %627 = vmatprep.subr.mxu0 0.0
    %v628 = vand.u32 %v65, 4294901760
    %629 = vmatpush1.msra.mxu0 %v628
    %630 = vmatprep.subr.mxu0 0.0
    %v631 = vand.u32 %v64, 4294901760
    %632 = vmatpush1.msra.mxu0 %v631
    %633 = vmatprep.subr.mxu0 0.0
    %v634 = vand.u32 %v63, 4294901760
    %635 = vmatpush1.msra.mxu0 %v634
    %636 = vmatprep.subr.mxu0 0.0
    %v637 = vand.u32 %v62, 4294901760
    %638 = vmatpush1.msra.mxu0 %v637
    %639 = vmatprep.subr.mxu0 0.0
    %v640 = vand.u32 %v61, 4294901760
    %641 = vmatpush1.msra.mxu0 %v640
    %642 = vmatprep.subr.mxu0 0.0
    %v643 = vand.u32 %v60, 4294901760
    %644 = vmatpush1.msra.mxu0 %v643
    %645 = vmatprep.subr.mxu0 0.0
    %646 = vmatpush2.msra.mxu0 0.0
    %647 = vmatprep.subr.mxu0 0.0
    %648 = vmatpush2.msra.mxu0 0.0
    %649 = vmatprep.subr.mxu0 0.0
    %650 = vmatpush2.msra.mxu0 0.0
    %651 = vmatprep.subr.mxu0 0.0
    %652 = vmatpush2.msra.mxu0 0.0
    %653 = vmatprep.subr.mxu0 0.0
    %654 = vmatpush2.msra.mxu0 0.0
    %655 = vmatprep.subr.mxu0 0.0
    %656 = vmatpush2.msra.mxu0 0.0
    %657 = vmatprep.subr.mxu0 0.0
    %658 = vmatpush2.msra.mxu0 0.0
    %659 = vmatprep.subr.mxu0 0.0
    %660 = vmatpush2.msra.mxu0 0.0
    %661 = vmatprep.subr.mxu0 0.0
    %662 = vmatpush2.msra.mxu0 0.0
    %663 = vmatprep.subr.mxu0 0.0
    %664 = vmatpush2.msra.mxu0 0.0
    %665 = vmatprep.subr.mxu0 0.0
    %666 = vmatpush2.msra.mxu0 0.0
    %667 = vmatprep.subr.mxu0 0.0
    %668 = vmatpush2.msra.mxu0 0.0
    %669 = vmatprep.subr.mxu0 0.0
    %670 = vmatpush2.msra.mxu0 0.0
    %671 = vmatprep.subr.mxu0 0.0
    %672 = vmatpush2.msra.mxu0 0.0
    %673 = vmatprep.subr.mxu0 0.0
    %674 = vmatpush2.msra.mxu0 0.0
    %675 = vmatprep.subr.mxu0 0.0
    %676 = vmatpush2.msra.mxu0 0.0
    %677 = vmatprep.mubr.f32.mxu0 0.0
    %v678 = vand.u32 %v139, 4294901760
    %v679 = vsub.f32 %v139, %v678
    %v680 = vand.u32 %v679, 4294901760
    %681 = vmatmul.mubr.f32.gmra.mxu0 %v680
    %v682 = vpop.f32.mrf.mxu0
    %v683 = vadd.f32 %v553, %v682
    %v684 = vpop.f32.mrf.mxu0
    %685 = vmatprep.mubr.f32.mxu0 0.0
    %v686 = vand.u32 %v142, 4294901760
    %v687 = vsub.f32 %v142, %v686
    %v688 = vand.u32 %v687, 4294901760
    %689 = vmatmul.mubr.f32.gmra.mxu0 %v688
    %v690 = vpop.f32.mrf.mxu0
    %v691 = vadd.f32 %v560, %v690
    %v692 = vpop.f32.mrf.mxu0
    %693 = vmatprep.mubr.f32.mxu0 0.0
    %v694 = vand.u32 %v145, 4294901760
    %v695 = vsub.f32 %v145, %v694
    %v696 = vand.u32 %v695, 4294901760
    %697 = vmatmul.mubr.f32.gmra.mxu0 %v696
    %v698 = vpop.f32.mrf.mxu0
    %v699 = vadd.f32 %v567, %v698
    %v700 = vpop.f32.mrf.mxu0
    %701 = vmatprep.mubr.f32.mxu0 0.0
    %v702 = vand.u32 %v148, 4294901760
    %v703 = vsub.f32 %v148, %v702
    %v704 = vand.u32 %v703, 4294901760
    %705 = vmatmul.mubr.f32.gmra.mxu0 %v704
    %v706 = vpop.f32.mrf.mxu0
    %v707 = vadd.f32 %v574, %v706
    %v708 = vpop.f32.mrf.mxu0
    %709 = vmatprep.mubr.f32.mxu0 0.0
    %v710 = vand.u32 %v151, 4294901760
    %v711 = vsub.f32 %v151, %v710
    %v712 = vand.u32 %v711, 4294901760
    %713 = vmatmul.mubr.f32.gmra.mxu0 %v712
    %v714 = vpop.f32.mrf.mxu0
    %v715 = vadd.f32 %v581, %v714
    %v716 = vpop.f32.mrf.mxu0
    %717 = vmatprep.mubr.f32.mxu0 0.0
    %v718 = vand.u32 %v154, 4294901760
    %v719 = vsub.f32 %v154, %v718
    %v720 = vand.u32 %v719, 4294901760
    %721 = vmatmul.mubr.f32.gmra.mxu0 %v720
    %v722 = vpop.f32.mrf.mxu0
    %v723 = vadd.f32 %v588, %v722
    %v724 = vpop.f32.mrf.mxu0
    %725 = vmatprep.mubr.f32.mxu0 0.0
    %v726 = vand.u32 %v157, 4294901760
    %v727 = vsub.f32 %v157, %v726
    %v728 = vand.u32 %v727, 4294901760
    %729 = vmatmul.mubr.f32.gmra.mxu0 %v728
    %v730 = vpop.f32.mrf.mxu0
    %v731 = vadd.f32 %v595, %v730
    %v732 = vpop.f32.mrf.mxu0
    %733 = vmatprep.mubr.f32.mxu0 0.0
    %v734 = vand.u32 %v160, 4294901760
    %v735 = vsub.f32 %v160, %v734
    %v736 = vand.u32 %v735, 4294901760
    %737 = vmatmul.mubr.f32.gmra.mxu0 %v736
    %v738 = vpop.f32.mrf.mxu0
    %v739 = vadd.f32 %v602, %v738
    %v740 = vpop.f32.mrf.mxu0
    %741 = vdwg.mxu0
    %742 = vmatprep.subr.mxu0 0.0
    %743 = vmatpush1.msra.mxu0 0.0
    %744 = vmatprep.subr.mxu0 0.0
    %745 = vmatpush1.msra.mxu0 0.0
    %746 = vmatprep.subr.mxu0 0.0
    %747 = vmatpush1.msra.mxu0 0.0
    %748 = vmatprep.subr.mxu0 0.0
    %749 = vmatpush1.msra.mxu0 0.0
    %750 = vmatprep.subr.mxu0 0.0
    %751 = vmatpush1.msra.mxu0 0.0
    %752 = vmatprep.subr.mxu0 0.0
    %753 = vmatpush1.msra.mxu0 0.0
    %754 = vmatprep.subr.mxu0 0.0
    %755 = vmatpush1.msra.mxu0 0.0
    %756 = vmatprep.subr.mxu0 0.0
    %757 = vmatpush1.msra.mxu0 0.0
    %758 = vmatprep.subr.mxu0 0.0
    %v759 = vand.u32 %v67, 4294901760
    %v760 = vsub.f32 %v67, %v759
    %v761 = vand.u32 %v760, 4294901760
    %762 = vmatpush1.msra.mxu0 %v761
    %763 = vmatprep.subr.mxu0 0.0
    %v764 = vand.u32 %v66, 4294901760
    %v765 = vsub.f32 %v66, %v764
    %v766 = vand.u32 %v765, 4294901760
    %767 = vmatpush1.msra.mxu0 %v766
    %768 = vmatprep.subr.mxu0 0.0
    %v769 = vand.u32 %v65, 4294901760
    %v770 = vsub.f32 %v65, %v769
    %v771 = vand.u32 %v770, 4294901760
    %772 = vmatpush1.msra.mxu0 %v771
    %773 = vmatprep.subr.mxu0 0.0
    %v774 = vand.u32 %v64, 4294901760
    %v775 = vsub.f32 %v64, %v774
    %v776 = vand.u32 %v775, 4294901760
    %777 = vmatpush1.msra.mxu0 %v776
    %778 = vmatprep.subr.mxu0 0.0
    %v779 = vand.u32 %v63, 4294901760
    %v780 = vsub.f32 %v63, %v779
    %v781 = vand.u32 %v780, 4294901760
    %782 = vmatpush1.msra.mxu0 %v781
    %783 = vmatprep.subr.mxu0 0.0
    %v784 = vand.u32 %v62, 4294901760
    %v785 = vsub.f32 %v62, %v784
    %v786 = vand.u32 %v785, 4294901760
    %787 = vmatpush1.msra.mxu0 %v786
    %788 = vmatprep.subr.mxu0 0.0
    %v789 = vand.u32 %v61, 4294901760
    %v790 = vsub.f32 %v61, %v789
    %v791 = vand.u32 %v790, 4294901760
    %792 = vmatpush1.msra.mxu0 %v791
    %793 = vmatprep.subr.mxu0 0.0
    %v794 = vand.u32 %v60, 4294901760
    %v795 = vsub.f32 %v60, %v794
    %v796 = vand.u32 %v795, 4294901760
    %797 = vmatpush1.msra.mxu0 %v796
    %798 = vmatprep.subr.mxu0 0.0
    %799 = vmatpush2.msra.mxu0 0.0
    %800 = vmatprep.subr.mxu0 0.0
    %801 = vmatpush2.msra.mxu0 0.0
    %802 = vmatprep.subr.mxu0 0.0
    %803 = vmatpush2.msra.mxu0 0.0
    %804 = vmatprep.subr.mxu0 0.0
    %805 = vmatpush2.msra.mxu0 0.0
    %806 = vmatprep.subr.mxu0 0.0
    %807 = vmatpush2.msra.mxu0 0.0
    %808 = vmatprep.subr.mxu0 0.0
    %809 = vmatpush2.msra.mxu0 0.0
    %810 = vmatprep.subr.mxu0 0.0
    %811 = vmatpush2.msra.mxu0 0.0
    %812 = vmatprep.subr.mxu0 0.0
    %813 = vmatpush2.msra.mxu0 0.0
    %814 = vmatprep.subr.mxu0 0.0
    %815 = vmatpush2.msra.mxu0 0.0
    %816 = vmatprep.subr.mxu0 0.0
    %817 = vmatpush2.msra.mxu0 0.0
    %818 = vmatprep.subr.mxu0 0.0
    %819 = vmatpush2.msra.mxu0 0.0
    %820 = vmatprep.subr.mxu0 0.0
    %821 = vmatpush2.msra.mxu0 0.0
    %822 = vmatprep.subr.mxu0 0.0
    %823 = vmatpush2.msra.mxu0 0.0
    %824 = vmatprep.subr.mxu0 0.0
    %825 = vmatpush2.msra.mxu0 0.0
    %826 = vmatprep.subr.mxu0 0.0
    %827 = vmatpush2.msra.mxu0 0.0
    %828 = vmatprep.subr.mxu0 0.0
    %829 = vmatpush2.msra.mxu0 0.0
    %830 = vmatprep.mubr.f32.mxu0 0.0
    %v831 = vand.u32 %v139, 4294901760
    %832 = vmatmul.mubr.f32.gmra.mxu0 %v831
    %v833 = vpop.f32.mrf.mxu0
    %v834 = vadd.f32 %v683, %v833
    %v835 = vpop.f32.mrf.mxu0
    %836 = vmatprep.mubr.f32.mxu0 0.0
    %v837 = vand.u32 %v142, 4294901760
    %838 = vmatmul.mubr.f32.gmra.mxu0 %v837
    %v839 = vpop.f32.mrf.mxu0
    %v840 = vadd.f32 %v691, %v839
    %v841 = vpop.f32.mrf.mxu0
    %842 = vmatprep.mubr.f32.mxu0 0.0
    %v843 = vand.u32 %v145, 4294901760
    %844 = vmatmul.mubr.f32.gmra.mxu0 %v843
    %v845 = vpop.f32.mrf.mxu0
    %v846 = vadd.f32 %v699, %v845
    %v847 = vpop.f32.mrf.mxu0
    %848 = vmatprep.mubr.f32.mxu0 0.0
    %v849 = vand.u32 %v148, 4294901760
    %850 = vmatmul.mubr.f32.gmra.mxu0 %v849
    %v851 = vpop.f32.mrf.mxu0
    %v852 = vadd.f32 %v707, %v851
    %v853 = vpop.f32.mrf.mxu0
    %854 = vmatprep.mubr.f32.mxu0 0.0
    %v855 = vand.u32 %v151, 4294901760
    %856 = vmatmul.mubr.f32.gmra.mxu0 %v855
    %v857 = vpop.f32.mrf.mxu0
    %v858 = vadd.f32 %v715, %v857
    %v859 = vpop.f32.mrf.mxu0
    %860 = vmatprep.mubr.f32.mxu0 0.0
    %v861 = vand.u32 %v154, 4294901760
    %862 = vmatmul.mubr.f32.gmra.mxu0 %v861
    %v863 = vpop.f32.mrf.mxu0
    %v864 = vadd.f32 %v723, %v863
    %v865 = vpop.f32.mrf.mxu0
    %866 = vmatprep.mubr.f32.mxu0 0.0
    %v867 = vand.u32 %v157, 4294901760
    %868 = vmatmul.mubr.f32.gmra.mxu0 %v867
    %v869 = vpop.f32.mrf.mxu0
    %v870 = vadd.f32 %v731, %v869
    %v871 = vpop.f32.mrf.mxu0
    %872 = vmatprep.mubr.f32.mxu0 0.0
    %v873 = vand.u32 %v160, 4294901760
    %874 = vmatmul.mubr.f32.gmra.mxu0 %v873
    %v875 = vpop.f32.mrf.mxu0
    %v876 = vadd.f32 %v739, %v875
    %v877 = vpop.f32.mrf.mxu0
    %878 = vdwg.mxu0
    %879 = vmatprep.subr.mxu0 0.0
    %880 = vmatpush1.msra.mxu0 0.0
    %881 = vmatprep.subr.mxu0 0.0
    %882 = vmatpush1.msra.mxu0 0.0
    %883 = vmatprep.subr.mxu0 0.0
    %884 = vmatpush1.msra.mxu0 0.0
    %885 = vmatprep.subr.mxu0 0.0
    %886 = vmatpush1.msra.mxu0 0.0
    %887 = vmatprep.subr.mxu0 0.0
    %888 = vmatpush1.msra.mxu0 0.0
    %889 = vmatprep.subr.mxu0 0.0
    %890 = vmatpush1.msra.mxu0 0.0
    %891 = vmatprep.subr.mxu0 0.0
    %892 = vmatpush1.msra.mxu0 0.0
    %893 = vmatprep.subr.mxu0 0.0
    %894 = vmatpush1.msra.mxu0 0.0
    %895 = vmatprep.subr.mxu0 0.0
    %v896 = vand.u32 %v67, 4294901760
    %897 = vmatpush1.msra.mxu0 %v896
    %898 = vmatprep.subr.mxu0 0.0
    %v899 = vand.u32 %v66, 4294901760
    %900 = vmatpush1.msra.mxu0 %v899
    %901 = vmatprep.subr.mxu0 0.0
    %v902 = vand.u32 %v65, 4294901760
    %903 = vmatpush1.msra.mxu0 %v902
    %904 = vmatprep.subr.mxu0 0.0
    %v905 = vand.u32 %v64, 4294901760
    %906 = vmatpush1.msra.mxu0 %v905
    %907 = vmatprep.subr.mxu0 0.0
    %v908 = vand.u32 %v63, 4294901760
    %909 = vmatpush1.msra.mxu0 %v908
    %910 = vmatprep.subr.mxu0 0.0
    %v911 = vand.u32 %v62, 4294901760
    %912 = vmatpush1.msra.mxu0 %v911
    %913 = vmatprep.subr.mxu0 0.0
    %v914 = vand.u32 %v61, 4294901760
    %915 = vmatpush1.msra.mxu0 %v914
    %916 = vmatprep.subr.mxu0 0.0
    %v917 = vand.u32 %v60, 4294901760
    %918 = vmatpush1.msra.mxu0 %v917
    %919 = vmatprep.subr.mxu0 0.0
    %920 = vmatpush2.msra.mxu0 0.0
    %921 = vmatprep.subr.mxu0 0.0
    %922 = vmatpush2.msra.mxu0 0.0
    %923 = vmatprep.subr.mxu0 0.0
    %924 = vmatpush2.msra.mxu0 0.0
    %925 = vmatprep.subr.mxu0 0.0
    %926 = vmatpush2.msra.mxu0 0.0
    %927 = vmatprep.subr.mxu0 0.0
    %928 = vmatpush2.msra.mxu0 0.0
    %929 = vmatprep.subr.mxu0 0.0
    %930 = vmatpush2.msra.mxu0 0.0
    %931 = vmatprep.subr.mxu0 0.0
    %932 = vmatpush2.msra.mxu0 0.0
    %933 = vmatprep.subr.mxu0 0.0
    %934 = vmatpush2.msra.mxu0 0.0
    %935 = vmatprep.subr.mxu0 0.0
    %936 = vmatpush2.msra.mxu0 0.0
    %937 = vmatprep.subr.mxu0 0.0
    %938 = vmatpush2.msra.mxu0 0.0
    %939 = vmatprep.subr.mxu0 0.0
    %940 = vmatpush2.msra.mxu0 0.0
    %941 = vmatprep.subr.mxu0 0.0
    %942 = vmatpush2.msra.mxu0 0.0
    %943 = vmatprep.subr.mxu0 0.0
    %944 = vmatpush2.msra.mxu0 0.0
    %945 = vmatprep.subr.mxu0 0.0
    %946 = vmatpush2.msra.mxu0 0.0
    %947 = vmatprep.subr.mxu0 0.0
    %948 = vmatpush2.msra.mxu0 0.0
    %949 = vmatprep.subr.mxu0 0.0
    %950 = vmatpush2.msra.mxu0 0.0
    %951 = vmatprep.mubr.f32.mxu0 0.0
    %v952 = vand.u32 %v139, 4294901760
    %953 = vmatmul.mubr.f32.gmra.mxu0 %v952
    %v954 = vpop.f32.mrf.mxu0
    %v955 = vadd.f32 %v834, %v954
    %v956 = vpop.f32.mrf.mxu0
    %957 = vmatprep.mubr.f32.mxu0 0.0
    %v958 = vand.u32 %v142, 4294901760
    %959 = vmatmul.mubr.f32.gmra.mxu0 %v958
    %v960 = vpop.f32.mrf.mxu0
    %v961 = vadd.f32 %v840, %v960
    %v962 = vpop.f32.mrf.mxu0
    %963 = vmatprep.mubr.f32.mxu0 0.0
    %v964 = vand.u32 %v145, 4294901760
    %965 = vmatmul.mubr.f32.gmra.mxu0 %v964
    %v966 = vpop.f32.mrf.mxu0
    %v967 = vadd.f32 %v846, %v966
    %v968 = vpop.f32.mrf.mxu0
    %969 = vmatprep.mubr.f32.mxu0 0.0
    %v970 = vand.u32 %v148, 4294901760
    %971 = vmatmul.mubr.f32.gmra.mxu0 %v970
    %v972 = vpop.f32.mrf.mxu0
    %v973 = vadd.f32 %v852, %v972
    %v974 = vpop.f32.mrf.mxu0
    %975 = vmatprep.mubr.f32.mxu0 0.0
    %v976 = vand.u32 %v151, 4294901760
    %977 = vmatmul.mubr.f32.gmra.mxu0 %v976
    %v978 = vpop.f32.mrf.mxu0
    %v979 = vadd.f32 %v858, %v978
    %v980 = vpop.f32.mrf.mxu0
    %981 = vmatprep.mubr.f32.mxu0 0.0
    %v982 = vand.u32 %v154, 4294901760
    %983 = vmatmul.mubr.f32.gmra.mxu0 %v982
    %v984 = vpop.f32.mrf.mxu0
    %v985 = vadd.f32 %v864, %v984
    %v986 = vpop.f32.mrf.mxu0
    %987 = vmatprep.mubr.f32.mxu0 0.0
    %v988 = vand.u32 %v157, 4294901760
    %989 = vmatmul.mubr.f32.gmra.mxu0 %v988
    %v990 = vpop.f32.mrf.mxu0
    %v991 = vadd.f32 %v870, %v990
    %v992 = vpop.f32.mrf.mxu0
    %993 = vmatprep.mubr.f32.mxu0 0.0
    %v994 = vand.u32 %v160, 4294901760
    %995 = vmatmul.mubr.f32.gmra.mxu0 %v994
    %v996 = vpop.f32.mrf.mxu0
    %v997 = vadd.f32 %v876, %v996
    %v998 = vpop.f32.mrf.mxu0
    %999 = vdwg.mxu0
    %v1000 = vld [vmem:[%s1] sm:$0xff]
    %v1001 = vsub.s32 %v1000, 1
    %vm1002 = vcmp.gt.s32.totalorder %v1001, 0
    %v1003 = vsel %vm1002, %v1001, 0
    %vm1004 = vcmp.lt.s32.totalorder %v1003, 7
    %v1005 = vsel %vm1004, %v1003, 7
    %vm1006 = vcmask 261120
    %v1008 = vsel %vm1006, 0.0, 0
    %1010 = vmatprep.subr.mxu0 0.0
    %1011 = vmatpush1.msra.mxu0 0.0
    %1012 = vmatprep.subr.mxu0 0.0
    %1013 = vmatpush1.msra.mxu0 0.0
    %1014 = vmatprep.subr.mxu0 0.0
    %1015 = vmatpush1.msra.mxu0 0.0
    %1016 = vmatprep.subr.mxu0 0.0
    %1017 = vmatpush1.msra.mxu0 0.0
    %1018 = vmatprep.subr.mxu0 0.0
    %1019 = vmatpush1.msra.mxu0 0.0
    %1020 = vmatprep.subr.mxu0 0.0
    %1021 = vmatpush1.msra.mxu0 0.0
    %1022 = vmatprep.subr.mxu0 0.0
    %1023 = vmatpush1.msra.mxu0 0.0
    %1024 = vmatprep.subr.mxu0 0.0
    %1025 = vmatpush1.msra.mxu0 0.0
    %1026 = vmatprep.subr.mxu0 0.0
    %1027 = vmatpush1.msra.mxu0 0.0
    %1028 = vmatprep.subr.mxu0 0.0
    %1029 = vmatpush1.msra.mxu0 0.0
    %1030 = vmatprep.subr.mxu0 0.0
    %1031 = vmatpush1.msra.mxu0 0.0
    %1032 = vmatprep.subr.mxu0 0.0
    %1033 = vmatpush1.msra.mxu0 0.0
    %1034 = vmatprep.subr.mxu0 0.0
    %v1035 = vand.u32 %v71, 4294901760
    %1036 = vmatpush1.msra.mxu0 %v1035
    %1037 = vmatprep.subr.mxu0 0.0
    %v1038 = vand.u32 %v70, 4294901760
    %1039 = vmatpush1.msra.mxu0 %v1038
    %1040 = vmatprep.subr.mxu0 0.0
    %v1041 = vand.u32 %v69, 4294901760
    %1042 = vmatpush1.msra.mxu0 %v1041
    %1043 = vmatprep.subr.mxu0 0.0
    %v1044 = vand.u32 %v68, 4294901760
    %1045 = vmatpush1.msra.mxu0 %v1044
    %1046 = vmatprep.subr.mxu0 0.0
    %1047 = vmatpush2.msra.mxu0 0.0
    %1048 = vmatprep.subr.mxu0 0.0
    %1049 = vmatpush2.msra.mxu0 0.0
    %1050 = vmatprep.subr.mxu0 0.0
    %1051 = vmatpush2.msra.mxu0 0.0
    %1052 = vmatprep.subr.mxu0 0.0
    %1053 = vmatpush2.msra.mxu0 0.0
    %1054 = vmatprep.subr.mxu0 0.0
    %1055 = vmatpush2.msra.mxu0 0.0
    %1056 = vmatprep.subr.mxu0 0.0
    %1057 = vmatpush2.msra.mxu0 0.0
    %1058 = vmatprep.subr.mxu0 0.0
    %1059 = vmatpush2.msra.mxu0 0.0
    %1060 = vmatprep.subr.mxu0 0.0
    %1061 = vmatpush2.msra.mxu0 0.0
    %1062 = vmatprep.subr.mxu0 0.0
    %1063 = vmatpush2.msra.mxu0 0.0
    %1064 = vmatprep.subr.mxu0 0.0
    %1065 = vmatpush2.msra.mxu0 0.0
    %1066 = vmatprep.subr.mxu0 0.0
    %1067 = vmatpush2.msra.mxu0 0.0
    %1068 = vmatprep.subr.mxu0 0.0
    %1069 = vmatpush2.msra.mxu0 0.0
    %1070 = vmatprep.subr.mxu0 0.0
    %1071 = vmatpush2.msra.mxu0 0.0
    %1072 = vmatprep.subr.mxu0 0.0
    %1073 = vmatpush2.msra.mxu0 0.0
    %1074 = vmatprep.subr.mxu0 0.0
    %1075 = vmatpush2.msra.mxu0 0.0
    %1076 = vmatprep.subr.mxu0 0.0
    %1077 = vmatpush2.msra.mxu0 0.0
    %1078 = vmatprep.mubr.f32.mxu0 0.0
    %v1079 = vand.u32 %v1008, 4294901760
    %v1080 = vsub.f32 %v1008, %v1079
    %v1081 = vand.u32 %v1080, 4294901760
    %v1082 = vsub.f32 %v1080, %v1081
    %v1083 = vand.u32 %v1082, 4294901760
    %1084 = vmatmul.mubr.f32.gmra.mxu0 %v1083
    %v1085 = vpop.f32.mrf.mxu0
    %v1086 = vadd.f32 0.0, %v1085
    %v1087 = vpop.f32.mrf.mxu0
    %1088 = vdwg.mxu0
    %1089 = vmatprep.subr.mxu0 0.0
    %1090 = vmatpush1.msra.mxu0 0.0
    %1091 = vmatprep.subr.mxu0 0.0
    %1092 = vmatpush1.msra.mxu0 0.0
    %1093 = vmatprep.subr.mxu0 0.0
    %1094 = vmatpush1.msra.mxu0 0.0
    %1095 = vmatprep.subr.mxu0 0.0
    %1096 = vmatpush1.msra.mxu0 0.0
    %1097 = vmatprep.subr.mxu0 0.0
    %1098 = vmatpush1.msra.mxu0 0.0
    %1099 = vmatprep.subr.mxu0 0.0
    %1100 = vmatpush1.msra.mxu0 0.0
    %1101 = vmatprep.subr.mxu0 0.0
    %1102 = vmatpush1.msra.mxu0 0.0
    %1103 = vmatprep.subr.mxu0 0.0
    %1104 = vmatpush1.msra.mxu0 0.0
    %1105 = vmatprep.subr.mxu0 0.0
    %1106 = vmatpush1.msra.mxu0 0.0
    %1107 = vmatprep.subr.mxu0 0.0
    %1108 = vmatpush1.msra.mxu0 0.0
    %1109 = vmatprep.subr.mxu0 0.0
    %1110 = vmatpush1.msra.mxu0 0.0
    %1111 = vmatprep.subr.mxu0 0.0
    %1112 = vmatpush1.msra.mxu0 0.0
    %1113 = vmatprep.subr.mxu0 0.0
    %v1114 = vand.u32 %v71, 4294901760
    %v1115 = vsub.f32 %v71, %v1114
    %v1116 = vand.u32 %v1115, 4294901760
    %v1117 = vsub.f32 %v1115, %v1116
    %v1118 = vand.u32 %v1117, 4294901760
    %1119 = vmatpush1.msra.mxu0 %v1118
    %1120 = vmatprep.subr.mxu0 0.0
    %v1121 = vand.u32 %v70, 4294901760
    %v1122 = vsub.f32 %v70, %v1121
    %v1123 = vand.u32 %v1122, 4294901760
    %v1124 = vsub.f32 %v1122, %v1123
    %v1125 = vand.u32 %v1124, 4294901760
    %1126 = vmatpush1.msra.mxu0 %v1125
    %1127 = vmatprep.subr.mxu0 0.0
    %v1128 = vand.u32 %v69, 4294901760
    %v1129 = vsub.f32 %v69, %v1128
    %v1130 = vand.u32 %v1129, 4294901760
    %v1131 = vsub.f32 %v1129, %v1130
    %v1132 = vand.u32 %v1131, 4294901760
    %1133 = vmatpush1.msra.mxu0 %v1132
    %1134 = vmatprep.subr.mxu0 0.0
    %v1135 = vand.u32 %v68, 4294901760
    %v1136 = vsub.f32 %v68, %v1135
    %v1137 = vand.u32 %v1136, 4294901760
    %v1138 = vsub.f32 %v1136, %v1137
    %v1139 = vand.u32 %v1138, 4294901760
    %1140 = vmatpush1.msra.mxu0 %v1139
    %1141 = vmatprep.subr.mxu0 0.0
    %1142 = vmatpush2.msra.mxu0 0.0
    %1143 = vmatprep.subr.mxu0 0.0
    %1144 = vmatpush2.msra.mxu0 0.0
    %1145 = vmatprep.subr.mxu0 0.0
    %1146 = vmatpush2.msra.mxu0 0.0
    %1147 = vmatprep.subr.mxu0 0.0
    %1148 = vmatpush2.msra.mxu0 0.0
    %1149 = vmatprep.subr.mxu0 0.0
    %1150 = vmatpush2.msra.mxu0 0.0
    %1151 = vmatprep.subr.mxu0 0.0
    %1152 = vmatpush2.msra.mxu0 0.0
    %1153 = vmatprep.subr.mxu0 0.0
    %1154 = vmatpush2.msra.mxu0 0.0
    %1155 = vmatprep.subr.mxu0 0.0
    %1156 = vmatpush2.msra.mxu0 0.0
    %1157 = vmatprep.subr.mxu0 0.0
    %1158 = vmatpush2.msra.mxu0 0.0
    %1159 = vmatprep.subr.mxu0 0.0
    %1160 = vmatpush2.msra.mxu0 0.0
    %1161 = vmatprep.subr.mxu0 0.0
    %1162 = vmatpush2.msra.mxu0 0.0
    %1163 = vmatprep.subr.mxu0 0.0
    %1164 = vmatpush2.msra.mxu0 0.0
    %1165 = vmatprep.subr.mxu0 0.0
    %1166 = vmatpush2.msra.mxu0 0.0
    %1167 = vmatprep.subr.mxu0 0.0
    %1168 = vmatpush2.msra.mxu0 0.0
    %1169 = vmatprep.subr.mxu0 0.0
    %1170 = vmatpush2.msra.mxu0 0.0
    %1171 = vmatprep.subr.mxu0 0.0
    %1172 = vmatpush2.msra.mxu0 0.0
    %1173 = vmatprep.mubr.f32.mxu0 0.0
    %v1174 = vand.u32 %v1008, 4294901760
    %1175 = vmatmul.mubr.f32.gmra.mxu0 %v1174
    %v1176 = vpop.f32.mrf.mxu0
    %v1177 = vadd.f32 %v1086, %v1176
    %v1178 = vpop.f32.mrf.mxu0
    %1179 = vdwg.mxu0
    %1180 = vmatprep.subr.mxu0 0.0
    %1181 = vmatpush1.msra.mxu0 0.0
    %1182 = vmatprep.subr.mxu0 0.0
    %1183 = vmatpush1.msra.mxu0 0.0
    %1184 = vmatprep.subr.mxu0 0.0
    %1185 = vmatpush1.msra.mxu0 0.0
    %1186 = vmatprep.subr.mxu0 0.0
    %1187 = vmatpush1.msra.mxu0 0.0
    %1188 = vmatprep.subr.mxu0 0.0
    %1189 = vmatpush1.msra.mxu0 0.0
    %1190 = vmatprep.subr.mxu0 0.0
    %1191 = vmatpush1.msra.mxu0 0.0
    %1192 = vmatprep.subr.mxu0 0.0
    %1193 = vmatpush1.msra.mxu0 0.0
    %1194 = vmatprep.subr.mxu0 0.0
    %1195 = vmatpush1.msra.mxu0 0.0
    %1196 = vmatprep.subr.mxu0 0.0
    %1197 = vmatpush1.msra.mxu0 0.0
    %1198 = vmatprep.subr.mxu0 0.0
    %1199 = vmatpush1.msra.mxu0 0.0
    %1200 = vmatprep.subr.mxu0 0.0
    %1201 = vmatpush1.msra.mxu0 0.0
    %1202 = vmatprep.subr.mxu0 0.0
    %1203 = vmatpush1.msra.mxu0 0.0
    %1204 = vmatprep.subr.mxu0 0.0
    %v1205 = vand.u32 %v71, 4294901760
    %v1206 = vsub.f32 %v71, %v1205
    %1207 = vmatpush1.msra.mxu0 %v1206
    %1208 = vmatprep.subr.mxu0 0.0
    %v1209 = vand.u32 %v70, 4294901760
    %v1210 = vsub.f32 %v70, %v1209
    %1211 = vmatpush1.msra.mxu0 %v1210
    %1212 = vmatprep.subr.mxu0 0.0
    %v1213 = vand.u32 %v69, 4294901760
    %v1214 = vsub.f32 %v69, %v1213
    %1215 = vmatpush1.msra.mxu0 %v1214
    %1216 = vmatprep.subr.mxu0 0.0
    %v1217 = vand.u32 %v68, 4294901760
    %v1218 = vsub.f32 %v68, %v1217
    %1219 = vmatpush1.msra.mxu0 %v1218
    %1220 = vmatprep.subr.mxu0 0.0
    %1221 = vmatpush2.msra.mxu0 0.0
    %1222 = vmatprep.subr.mxu0 0.0
    %1223 = vmatpush2.msra.mxu0 0.0
    %1224 = vmatprep.subr.mxu0 0.0
    %1225 = vmatpush2.msra.mxu0 0.0
    %1226 = vmatprep.subr.mxu0 0.0
    %1227 = vmatpush2.msra.mxu0 0.0
    %1228 = vmatprep.subr.mxu0 0.0
    %1229 = vmatpush2.msra.mxu0 0.0
    %1230 = vmatprep.subr.mxu0 0.0
    %1231 = vmatpush2.msra.mxu0 0.0
    %1232 = vmatprep.subr.mxu0 0.0
    %1233 = vmatpush2.msra.mxu0 0.0
    %1234 = vmatprep.subr.mxu0 0.0
    %1235 = vmatpush2.msra.mxu0 0.0
    %1236 = vmatprep.subr.mxu0 0.0
    %1237 = vmatpush2.msra.mxu0 0.0
    %1238 = vmatprep.subr.mxu0 0.0
    %1239 = vmatpush2.msra.mxu0 0.0
    %1240 = vmatprep.subr.mxu0 0.0
    %1241 = vmatpush2.msra.mxu0 0.0
    %1242 = vmatprep.subr.mxu0 0.0
    %1243 = vmatpush2.msra.mxu0 0.0
    %1244 = vmatprep.subr.mxu0 0.0
    %1245 = vmatpush2.msra.mxu0 0.0
    %1246 = vmatprep.subr.mxu0 0.0
    %1247 = vmatpush2.msra.mxu0 0.0
    %1248 = vmatprep.subr.mxu0 0.0
    %1249 = vmatpush2.msra.mxu0 0.0
    %1250 = vmatprep.subr.mxu0 0.0
    %1251 = vmatpush2.msra.mxu0 0.0
    %1252 = vmatprep.mubr.f32.mxu0 0.0
    %v1253 = vand.u32 %v1008, 4294901760
    %v1254 = vsub.f32 %v1008, %v1253
    %1255 = vmatmul.mubr.f32.gmra.mxu0 %v1254
    %v1256 = vpop.f32.mrf.mxu0
    %v1257 = vadd.f32 %v1177, %v1256
    %v1258 = vpop.f32.mrf.mxu0
    %1259 = vdwg.mxu0
    %1260 = vmatprep.subr.mxu0 0.0
    %1261 = vmatpush1.msra.mxu0 0.0
    %1262 = vmatprep.subr.mxu0 0.0
    %1263 = vmatpush1.msra.mxu0 0.0
    %1264 = vmatprep.subr.mxu0 0.0
    %1265 = vmatpush1.msra.mxu0 0.0
    %1266 = vmatprep.subr.mxu0 0.0
    %1267 = vmatpush1.msra.mxu0 0.0
    %1268 = vmatprep.subr.mxu0 0.0
    %1269 = vmatpush1.msra.mxu0 0.0
    %1270 = vmatprep.subr.mxu0 0.0
    %1271 = vmatpush1.msra.mxu0 0.0
    %1272 = vmatprep.subr.mxu0 0.0
    %1273 = vmatpush1.msra.mxu0 0.0
    %1274 = vmatprep.subr.mxu0 0.0
    %1275 = vmatpush1.msra.mxu0 0.0
    %1276 = vmatprep.subr.mxu0 0.0
    %1277 = vmatpush1.msra.mxu0 0.0
    %1278 = vmatprep.subr.mxu0 0.0
    %1279 = vmatpush1.msra.mxu0 0.0
    %1280 = vmatprep.subr.mxu0 0.0
    %1281 = vmatpush1.msra.mxu0 0.0
    %1282 = vmatprep.subr.mxu0 0.0
    %1283 = vmatpush1.msra.mxu0 0.0
    %1284 = vmatprep.subr.mxu0 0.0
    %v1285 = vand.u32 %v71, 4294901760
    %1286 = vmatpush1.msra.mxu0 %v1285
    %1287 = vmatprep.subr.mxu0 0.0
    %v1288 = vand.u32 %v70, 4294901760
    %1289 = vmatpush1.msra.mxu0 %v1288
    %1290 = vmatprep.subr.mxu0 0.0
    %v1291 = vand.u32 %v69, 4294901760
    %1292 = vmatpush1.msra.mxu0 %v1291
    %1293 = vmatprep.subr.mxu0 0.0
    %v1294 = vand.u32 %v68, 4294901760
    %1295 = vmatpush1.msra.mxu0 %v1294
    %1296 = vmatprep.subr.mxu0 0.0
    %1297 = vmatpush2.msra.mxu0 0.0
    %1298 = vmatprep.subr.mxu0 0.0
    %1299 = vmatpush2.msra.mxu0 0.0
    %1300 = vmatprep.subr.mxu0 0.0
    %1301 = vmatpush2.msra.mxu0 0.0
    %1302 = vmatprep.subr.mxu0 0.0
    %1303 = vmatpush2.msra.mxu0 0.0
    %1304 = vmatprep.subr.mxu0 0.0
    %1305 = vmatpush2.msra.mxu0 0.0
    %1306 = vmatprep.subr.mxu0 0.0
    %1307 = vmatpush2.msra.mxu0 0.0
    %1308 = vmatprep.subr.mxu0 0.0
    %1309 = vmatpush2.msra.mxu0 0.0
    %1310 = vmatprep.subr.mxu0 0.0
    %1311 = vmatpush2.msra.mxu0 0.0
    %1312 = vmatprep.subr.mxu0 0.0
    %1313 = vmatpush2.msra.mxu0 0.0
    %1314 = vmatprep.subr.mxu0 0.0
    %1315 = vmatpush2.msra.mxu0 0.0
    %1316 = vmatprep.subr.mxu0 0.0
    %1317 = vmatpush2.msra.mxu0 0.0
    %1318 = vmatprep.subr.mxu0 0.0
    %1319 = vmatpush2.msra.mxu0 0.0
    %1320 = vmatprep.subr.mxu0 0.0
    %1321 = vmatpush2.msra.mxu0 0.0
    %1322 = vmatprep.subr.mxu0 0.0
    %1323 = vmatpush2.msra.mxu0 0.0
    %1324 = vmatprep.subr.mxu0 0.0
    %1325 = vmatpush2.msra.mxu0 0.0
    %1326 = vmatprep.subr.mxu0 0.0
    %1327 = vmatpush2.msra.mxu0 0.0
    %1328 = vmatprep.mubr.f32.mxu0 0.0
    %v1329 = vand.u32 %v1008, 4294901760
    %v1330 = vsub.f32 %v1008, %v1329
    %v1331 = vand.u32 %v1330, 4294901760
    %1332 = vmatmul.mubr.f32.gmra.mxu0 %v1331
    %v1333 = vpop.f32.mrf.mxu0
    %v1334 = vadd.f32 %v1257, %v1333
    %v1335 = vpop.f32.mrf.mxu0
    %1336 = vdwg.mxu0
    %1337 = vmatprep.subr.mxu0 0.0
    %1338 = vmatpush1.msra.mxu0 0.0
    %1339 = vmatprep.subr.mxu0 0.0
    %1340 = vmatpush1.msra.mxu0 0.0
    %1341 = vmatprep.subr.mxu0 0.0
    %1342 = vmatpush1.msra.mxu0 0.0
    %1343 = vmatprep.subr.mxu0 0.0
    %1344 = vmatpush1.msra.mxu0 0.0
    %1345 = vmatprep.subr.mxu0 0.0
    %1346 = vmatpush1.msra.mxu0 0.0
    %1347 = vmatprep.subr.mxu0 0.0
    %1348 = vmatpush1.msra.mxu0 0.0
    %1349 = vmatprep.subr.mxu0 0.0
    %1350 = vmatpush1.msra.mxu0 0.0
    %1351 = vmatprep.subr.mxu0 0.0
    %1352 = vmatpush1.msra.mxu0 0.0
    %1353 = vmatprep.subr.mxu0 0.0
    %1354 = vmatpush1.msra.mxu0 0.0
    %1355 = vmatprep.subr.mxu0 0.0
    %1356 = vmatpush1.msra.mxu0 0.0
    %1357 = vmatprep.subr.mxu0 0.0
    %1358 = vmatpush1.msra.mxu0 0.0
    %1359 = vmatprep.subr.mxu0 0.0
    %1360 = vmatpush1.msra.mxu0 0.0
    %1361 = vmatprep.subr.mxu0 0.0
    %v1362 = vand.u32 %v71, 4294901760
    %v1363 = vsub.f32 %v71, %v1362
    %v1364 = vand.u32 %v1363, 4294901760
    %1365 = vmatpush1.msra.mxu0 %v1364
    %1366 = vmatprep.subr.mxu0 0.0
    %v1367 = vand.u32 %v70, 4294901760
    %v1368 = vsub.f32 %v70, %v1367
    %v1369 = vand.u32 %v1368, 4294901760
    %1370 = vmatpush1.msra.mxu0 %v1369
    %1371 = vmatprep.subr.mxu0 0.0
    %v1372 = vand.u32 %v69, 4294901760
    %v1373 = vsub.f32 %v69, %v1372
    %v1374 = vand.u32 %v1373, 4294901760
    %1375 = vmatpush1.msra.mxu0 %v1374
    %1376 = vmatprep.subr.mxu0 0.0
    %v1377 = vand.u32 %v68, 4294901760
    %v1378 = vsub.f32 %v68, %v1377
    %v1379 = vand.u32 %v1378, 4294901760
    %1380 = vmatpush1.msra.mxu0 %v1379
    %1381 = vmatprep.subr.mxu0 0.0
    %1382 = vmatpush2.msra.mxu0 0.0
    %1383 = vmatprep.subr.mxu0 0.0
    %1384 = vmatpush2.msra.mxu0 0.0
    %1385 = vmatprep.subr.mxu0 0.0
    %1386 = vmatpush2.msra.mxu0 0.0
    %1387 = vmatprep.subr.mxu0 0.0
    %1388 = vmatpush2.msra.mxu0 0.0
    %1389 = vmatprep.subr.mxu0 0.0
    %1390 = vmatpush2.msra.mxu0 0.0
    %1391 = vmatprep.subr.mxu0 0.0
    %1392 = vmatpush2.msra.mxu0 0.0
    %1393 = vmatprep.subr.mxu0 0.0
    %1394 = vmatpush2.msra.mxu0 0.0
    %1395 = vmatprep.subr.mxu0 0.0
    %1396 = vmatpush2.msra.mxu0 0.0
    %1397 = vmatprep.subr.mxu0 0.0
    %1398 = vmatpush2.msra.mxu0 0.0
    %1399 = vmatprep.subr.mxu0 0.0
    %1400 = vmatpush2.msra.mxu0 0.0
    %1401 = vmatprep.subr.mxu0 0.0
    %1402 = vmatpush2.msra.mxu0 0.0
    %1403 = vmatprep.subr.mxu0 0.0
    %1404 = vmatpush2.msra.mxu0 0.0
    %1405 = vmatprep.subr.mxu0 0.0
    %1406 = vmatpush2.msra.mxu0 0.0
    %1407 = vmatprep.subr.mxu0 0.0
    %1408 = vmatpush2.msra.mxu0 0.0
    %1409 = vmatprep.subr.mxu0 0.0
    %1410 = vmatpush2.msra.mxu0 0.0
    %1411 = vmatprep.subr.mxu0 0.0
    %1412 = vmatpush2.msra.mxu0 0.0
    %1413 = vmatprep.mubr.f32.mxu0 0.0
    %v1414 = vand.u32 %v1008, 4294901760
    %1415 = vmatmul.mubr.f32.gmra.mxu0 %v1414
    %v1416 = vpop.f32.mrf.mxu0
    %v1417 = vadd.f32 %v1334, %v1416
    %v1418 = vpop.f32.mrf.mxu0
    %1419 = vdwg.mxu0
    %1420 = vmatprep.subr.mxu0 0.0
    %1421 = vmatpush1.msra.mxu0 0.0
    %1422 = vmatprep.subr.mxu0 0.0
    %1423 = vmatpush1.msra.mxu0 0.0
    %1424 = vmatprep.subr.mxu0 0.0
    %1425 = vmatpush1.msra.mxu0 0.0
    %1426 = vmatprep.subr.mxu0 0.0
    %1427 = vmatpush1.msra.mxu0 0.0
    %1428 = vmatprep.subr.mxu0 0.0
    %1429 = vmatpush1.msra.mxu0 0.0
    %1430 = vmatprep.subr.mxu0 0.0
    %1431 = vmatpush1.msra.mxu0 0.0
    %1432 = vmatprep.subr.mxu0 0.0
    %1433 = vmatpush1.msra.mxu0 0.0
    %1434 = vmatprep.subr.mxu0 0.0
    %1435 = vmatpush1.msra.mxu0 0.0
    %1436 = vmatprep.subr.mxu0 0.0
    %1437 = vmatpush1.msra.mxu0 0.0
    %1438 = vmatprep.subr.mxu0 0.0
    %1439 = vmatpush1.msra.mxu0 0.0
    %1440 = vmatprep.subr.mxu0 0.0
    %1441 = vmatpush1.msra.mxu0 0.0
    %1442 = vmatprep.subr.mxu0 0.0
    %1443 = vmatpush1.msra.mxu0 0.0
    %1444 = vmatprep.subr.mxu0 0.0
    %v1445 = vand.u32 %v71, 4294901760
    %1446 = vmatpush1.msra.mxu0 %v1445
    %1447 = vmatprep.subr.mxu0 0.0
    %v1448 = vand.u32 %v70, 4294901760
    %1449 = vmatpush1.msra.mxu0 %v1448
    %1450 = vmatprep.subr.mxu0 0.0
    %v1451 = vand.u32 %v69, 4294901760
    %1452 = vmatpush1.msra.mxu0 %v1451
    %1453 = vmatprep.subr.mxu0 0.0
    %v1454 = vand.u32 %v68, 4294901760
    %1455 = vmatpush1.msra.mxu0 %v1454
    %1456 = vmatprep.subr.mxu0 0.0
    %1457 = vmatpush2.msra.mxu0 0.0
    %1458 = vmatprep.subr.mxu0 0.0
    %1459 = vmatpush2.msra.mxu0 0.0
    %1460 = vmatprep.subr.mxu0 0.0
    %1461 = vmatpush2.msra.mxu0 0.0
    %1462 = vmatprep.subr.mxu0 0.0
    %1463 = vmatpush2.msra.mxu0 0.0
    %1464 = vmatprep.subr.mxu0 0.0
    %1465 = vmatpush2.msra.mxu0 0.0
    %1466 = vmatprep.subr.mxu0 0.0
    %1467 = vmatpush2.msra.mxu0 0.0
    %1468 = vmatprep.subr.mxu0 0.0
    %1469 = vmatpush2.msra.mxu0 0.0
    %1470 = vmatprep.subr.mxu0 0.0
    %1471 = vmatpush2.msra.mxu0 0.0
    %1472 = vmatprep.subr.mxu0 0.0
    %1473 = vmatpush2.msra.mxu0 0.0
    %1474 = vmatprep.subr.mxu0 0.0
    %1475 = vmatpush2.msra.mxu0 0.0
    %1476 = vmatprep.subr.mxu0 0.0
    %1477 = vmatpush2.msra.mxu0 0.0
    %1478 = vmatprep.subr.mxu0 0.0
    %1479 = vmatpush2.msra.mxu0 0.0
    %1480 = vmatprep.subr.mxu0 0.0
    %1481 = vmatpush2.msra.mxu0 0.0
    %1482 = vmatprep.subr.mxu0 0.0
    %1483 = vmatpush2.msra.mxu0 0.0
    %1484 = vmatprep.subr.mxu0 0.0
    %1485 = vmatpush2.msra.mxu0 0.0
    %1486 = vmatprep.subr.mxu0 0.0
    %1487 = vmatpush2.msra.mxu0 0.0
    %1488 = vmatprep.mubr.f32.mxu0 0.0
    %v1489 = vand.u32 %v1008, 4294901760
    %1490 = vmatmul.mubr.f32.gmra.mxu0 %v1489
    %v1491 = vpop.f32.mrf.mxu0
    %v1492 = vadd.f32 %v1417, %v1491
    %v1493 = vpop.f32.mrf.mxu0
    %1494 = vdwg.mxu0
    %v1495 = vadd.f32 %v955, %v1492
    %v1496 = vtanh.pop %v1495
    %vm1497 = vcmp.eq.s32.totalorder %v1005, 0
    %v1498 = vsel %vm1497, 1, 0
    %1499 = vset.pattern.permute.xlu0 0
    %1500 = vperm.xlu0 %1499, %v1498
    %v1501 = vpop.permute.xlu0 %1500
    %vm1502 = vcmp.eq.s32.totalorder %v1501, 1
    %v1503 = vsel %vm1502, %v1496, 0.0
    %v1505 = vsel %vm1006, %v1496, 0
    %1507 = vmatprep.subr.mxu0 0.0
    %1508 = vmatpush1.msra.mxu0 0.0
    %1509 = vmatprep.subr.mxu0 0.0
    %1510 = vmatpush1.msra.mxu0 0.0
    %1511 = vmatprep.subr.mxu0 0.0
    %1512 = vmatpush1.msra.mxu0 0.0
    %1513 = vmatprep.subr.mxu0 0.0
    %1514 = vmatpush1.msra.mxu0 0.0
    %1515 = vmatprep.subr.mxu0 0.0
    %1516 = vmatpush1.msra.mxu0 0.0
    %1517 = vmatprep.subr.mxu0 0.0
    %1518 = vmatpush1.msra.mxu0 0.0
    %1519 = vmatprep.subr.mxu0 0.0
    %1520 = vmatpush1.msra.mxu0 0.0
    %1521 = vmatprep.subr.mxu0 0.0
    %1522 = vmatpush1.msra.mxu0 0.0
    %1523 = vmatprep.subr.mxu0 0.0
    %1524 = vmatpush1.msra.mxu0 0.0
    %1525 = vmatprep.subr.mxu0 0.0
    %1526 = vmatpush1.msra.mxu0 0.0
    %1527 = vmatprep.subr.mxu0 0.0
    %1528 = vmatpush1.msra.mxu0 0.0
    %1529 = vmatprep.subr.mxu0 0.0
    %1530 = vmatpush1.msra.mxu0 0.0
    %1531 = vmatprep.subr.mxu0 0.0
    %v1532 = vand.u32 %v71, 4294901760
    %1533 = vmatpush1.msra.mxu0 %v1532
    %1534 = vmatprep.subr.mxu0 0.0
    %v1535 = vand.u32 %v70, 4294901760
    %1536 = vmatpush1.msra.mxu0 %v1535
    %1537 = vmatprep.subr.mxu0 0.0
    %v1538 = vand.u32 %v69, 4294901760
    %1539 = vmatpush1.msra.mxu0 %v1538
    %1540 = vmatprep.subr.mxu0 0.0
    %v1541 = vand.u32 %v68, 4294901760
    %1542 = vmatpush1.msra.mxu0 %v1541
    %1543 = vmatprep.subr.mxu0 0.0
    %1544 = vmatpush2.msra.mxu0 0.0
    %1545 = vmatprep.subr.mxu0 0.0
    %1546 = vmatpush2.msra.mxu0 0.0
    %1547 = vmatprep.subr.mxu0 0.0
    %1548 = vmatpush2.msra.mxu0 0.0
    %1549 = vmatprep.subr.mxu0 0.0
    %1550 = vmatpush2.msra.mxu0 0.0
    %1551 = vmatprep.subr.mxu0 0.0
    %1552 = vmatpush2.msra.mxu0 0.0
    %1553 = vmatprep.subr.mxu0 0.0
    %1554 = vmatpush2.msra.mxu0 0.0
    %1555 = vmatprep.subr.mxu0 0.0
    %1556 = vmatpush2.msra.mxu0 0.0
    %1557 = vmatprep.subr.mxu0 0.0
    %1558 = vmatpush2.msra.mxu0 0.0
    %1559 = vmatprep.subr.mxu0 0.0
    %1560 = vmatpush2.msra.mxu0 0.0
    %1561 = vmatprep.subr.mxu0 0.0
    %1562 = vmatpush2.msra.mxu0 0.0
    %1563 = vmatprep.subr.mxu0 0.0
    %1564 = vmatpush2.msra.mxu0 0.0
    %1565 = vmatprep.subr.mxu0 0.0
    %1566 = vmatpush2.msra.mxu0 0.0
    %1567 = vmatprep.subr.mxu0 0.0
    %1568 = vmatpush2.msra.mxu0 0.0
    %1569 = vmatprep.subr.mxu0 0.0
    %1570 = vmatpush2.msra.mxu0 0.0
    %1571 = vmatprep.subr.mxu0 0.0
    %1572 = vmatpush2.msra.mxu0 0.0
    %1573 = vmatprep.subr.mxu0 0.0
    %1574 = vmatpush2.msra.mxu0 0.0
    %1575 = vmatprep.mubr.f32.mxu0 0.0
    %v1576 = vand.u32 %v1505, 4294901760
    %v1577 = vsub.f32 %v1505, %v1576
    %v1578 = vand.u32 %v1577, 4294901760
    %v1579 = vsub.f32 %v1577, %v1578
    %v1580 = vand.u32 %v1579, 4294901760
    %1581 = vmatmul.mubr.f32.gmra.mxu0 %v1580
    %v1582 = vpop.f32.mrf.mxu0
    %v1583 = vadd.f32 0.0, %v1582
    %v1584 = vpop.f32.mrf.mxu0
    %1585 = vdwg.mxu0
    %1586 = vmatprep.subr.mxu0 0.0
    %1587 = vmatpush1.msra.mxu0 0.0
    %1588 = vmatprep.subr.mxu0 0.0
    %1589 = vmatpush1.msra.mxu0 0.0
    %1590 = vmatprep.subr.mxu0 0.0
    %1591 = vmatpush1.msra.mxu0 0.0
    %1592 = vmatprep.subr.mxu0 0.0
    %1593 = vmatpush1.msra.mxu0 0.0
    %1594 = vmatprep.subr.mxu0 0.0
    %1595 = vmatpush1.msra.mxu0 0.0
    %1596 = vmatprep.subr.mxu0 0.0
    %1597 = vmatpush1.msra.mxu0 0.0
    %1598 = vmatprep.subr.mxu0 0.0
    %1599 = vmatpush1.msra.mxu0 0.0
    %1600 = vmatprep.subr.mxu0 0.0
    %1601 = vmatpush1.msra.mxu0 0.0
    %1602 = vmatprep.subr.mxu0 0.0
    %1603 = vmatpush1.msra.mxu0 0.0
    %1604 = vmatprep.subr.mxu0 0.0
    %1605 = vmatpush1.msra.mxu0 0.0
    %1606 = vmatprep.subr.mxu0 0.0
    %1607 = vmatpush1.msra.mxu0 0.0
    %1608 = vmatprep.subr.mxu0 0.0
    %1609 = vmatpush1.msra.mxu0 0.0
    %1610 = vmatprep.subr.mxu0 0.0
    %v1611 = vand.u32 %v71, 4294901760
    %v1612 = vsub.f32 %v71, %v1611
    %v1613 = vand.u32 %v1612, 4294901760
    %v1614 = vsub.f32 %v1612, %v1613
    %v1615 = vand.u32 %v1614, 4294901760
    %1616 = vmatpush1.msra.mxu0 %v1615
    %1617 = vmatprep.subr.mxu0 0.0
    %v1618 = vand.u32 %v70, 4294901760
    %v1619 = vsub.f32 %v70, %v1618
    %v1620 = vand.u32 %v1619, 4294901760
    %v1621 = vsub.f32 %v1619, %v1620
    %v1622 = vand.u32 %v1621, 4294901760
    %1623 = vmatpush1.msra.mxu0 %v1622
    %1624 = vmatprep.subr.mxu0 0.0
    %v1625 = vand.u32 %v69, 4294901760
    %v1626 = vsub.f32 %v69, %v1625
    %v1627 = vand.u32 %v1626, 4294901760
    %v1628 = vsub.f32 %v1626, %v1627
    %v1629 = vand.u32 %v1628, 4294901760
    %1630 = vmatpush1.msra.mxu0 %v1629
    %1631 = vmatprep.subr.mxu0 0.0
    %v1632 = vand.u32 %v68, 4294901760
    %v1633 = vsub.f32 %v68, %v1632
    %v1634 = vand.u32 %v1633, 4294901760
    %v1635 = vsub.f32 %v1633, %v1634
    %v1636 = vand.u32 %v1635, 4294901760
    %1637 = vmatpush1.msra.mxu0 %v1636
    %1638 = vmatprep.subr.mxu0 0.0
    %1639 = vmatpush2.msra.mxu0 0.0
    %1640 = vmatprep.subr.mxu0 0.0
    %1641 = vmatpush2.msra.mxu0 0.0
    %1642 = vmatprep.subr.mxu0 0.0
    %1643 = vmatpush2.msra.mxu0 0.0
    %1644 = vmatprep.subr.mxu0 0.0
    %1645 = vmatpush2.msra.mxu0 0.0
    %1646 = vmatprep.subr.mxu0 0.0
    %1647 = vmatpush2.msra.mxu0 0.0
    %1648 = vmatprep.subr.mxu0 0.0
    %1649 = vmatpush2.msra.mxu0 0.0
    %1650 = vmatprep.subr.mxu0 0.0
    %1651 = vmatpush2.msra.mxu0 0.0
    %1652 = vmatprep.subr.mxu0 0.0
    %1653 = vmatpush2.msra.mxu0 0.0
    %1654 = vmatprep.subr.mxu0 0.0
    %1655 = vmatpush2.msra.mxu0 0.0
    %1656 = vmatprep.subr.mxu0 0.0
    %1657 = vmatpush2.msra.mxu0 0.0
    %1658 = vmatprep.subr.mxu0 0.0
    %1659 = vmatpush2.msra.mxu0 0.0
    %1660 = vmatprep.subr.mxu0 0.0
    %1661 = vmatpush2.msra.mxu0 0.0
    %1662 = vmatprep.subr.mxu0 0.0
    %1663 = vmatpush2.msra.mxu0 0.0
    %1664 = vmatprep.subr.mxu0 0.0
    %1665 = vmatpush2.msra.mxu0 0.0
    %1666 = vmatprep.subr.mxu0 0.0
    %1667 = vmatpush2.msra.mxu0 0.0
    %1668 = vmatprep.subr.mxu0 0.0
    %1669 = vmatpush2.msra.mxu0 0.0
    %1670 = vmatprep.mubr.f32.mxu0 0.0
    %v1671 = vand.u32 %v1505, 4294901760
    %1672 = vmatmul.mubr.f32.gmra.mxu0 %v1671
    %v1673 = vpop.f32.mrf.mxu0
    %v1674 = vadd.f32 %v1583, %v1673
    %v1675 = vpop.f32.mrf.mxu0
    %1676 = vdwg.mxu0
    %1677 = vmatprep.subr.mxu0 0.0
    %1678 = vmatpush1.msra.mxu0 0.0
    %1679 = vmatprep.subr.mxu0 0.0
    %1680 = vmatpush1.msra.mxu0 0.0
    %1681 = vmatprep.subr.mxu0 0.0
    %1682 = vmatpush1.msra.mxu0 0.0
    %1683 = vmatprep.subr.mxu0 0.0
    %1684 = vmatpush1.msra.mxu0 0.0
    %1685 = vmatprep.subr.mxu0 0.0
    %1686 = vmatpush1.msra.mxu0 0.0
    %1687 = vmatprep.subr.mxu0 0.0
    %1688 = vmatpush1.msra.mxu0 0.0
    %1689 = vmatprep.subr.mxu0 0.0
    %1690 = vmatpush1.msra.mxu0 0.0
    %1691 = vmatprep.subr.mxu0 0.0
    %1692 = vmatpush1.msra.mxu0 0.0
    %1693 = vmatprep.subr.mxu0 0.0
    %1694 = vmatpush1.msra.mxu0 0.0
    %1695 = vmatprep.subr.mxu0 0.0
    %1696 = vmatpush1.msra.mxu0 0.0
    %1697 = vmatprep.subr.mxu0 0.0
    %1698 = vmatpush1.msra.mxu0 0.0
    %1699 = vmatprep.subr.mxu0 0.0
    %1700 = vmatpush1.msra.mxu0 0.0
    %1701 = vmatprep.subr.mxu0 0.0
    %v1702 = vand.u32 %v71, 4294901760
    %v1703 = vsub.f32 %v71, %v1702
    %1704 = vmatpush1.msra.mxu0 %v1703
    %1705 = vmatprep.subr.mxu0 0.0
    %v1706 = vand.u32 %v70, 4294901760
    %v1707 = vsub.f32 %v70, %v1706
    %1708 = vmatpush1.msra.mxu0 %v1707
    %1709 = vmatprep.subr.mxu0 0.0
    %v1710 = vand.u32 %v69, 4294901760
    %v1711 = vsub.f32 %v69, %v1710
    %1712 = vmatpush1.msra.mxu0 %v1711
    %1713 = vmatprep.subr.mxu0 0.0
    %v1714 = vand.u32 %v68, 4294901760
    %v1715 = vsub.f32 %v68, %v1714
    %1716 = vmatpush1.msra.mxu0 %v1715
    %1717 = vmatprep.subr.mxu0 0.0
    %1718 = vmatpush2.msra.mxu0 0.0
    %1719 = vmatprep.subr.mxu0 0.0
    %1720 = vmatpush2.msra.mxu0 0.0
    %1721 = vmatprep.subr.mxu0 0.0
    %1722 = vmatpush2.msra.mxu0 0.0
    %1723 = vmatprep.subr.mxu0 0.0
    %1724 = vmatpush2.msra.mxu0 0.0
    %1725 = vmatprep.subr.mxu0 0.0
    %1726 = vmatpush2.msra.mxu0 0.0
    %1727 = vmatprep.subr.mxu0 0.0
    %1728 = vmatpush2.msra.mxu0 0.0
    %1729 = vmatprep.subr.mxu0 0.0
    %1730 = vmatpush2.msra.mxu0 0.0
    %1731 = vmatprep.subr.mxu0 0.0
    %1732 = vmatpush2.msra.mxu0 0.0
    %1733 = vmatprep.subr.mxu0 0.0
    %1734 = vmatpush2.msra.mxu0 0.0
    %1735 = vmatprep.subr.mxu0 0.0
    %1736 = vmatpush2.msra.mxu0 0.0
    %1737 = vmatprep.subr.mxu0 0.0
    %1738 = vmatpush2.msra.mxu0 0.0
    %1739 = vmatprep.subr.mxu0 0.0
    %1740 = vmatpush2.msra.mxu0 0.0
    %1741 = vmatprep.subr.mxu0 0.0
    %1742 = vmatpush2.msra.mxu0 0.0
    %1743 = vmatprep.subr.mxu0 0.0
    %1744 = vmatpush2.msra.mxu0 0.0
    %1745 = vmatprep.subr.mxu0 0.0
    %1746 = vmatpush2.msra.mxu0 0.0
    %1747 = vmatprep.subr.mxu0 0.0
    %1748 = vmatpush2.msra.mxu0 0.0
    %1749 = vmatprep.mubr.f32.mxu0 0.0
    %v1750 = vand.u32 %v1505, 4294901760
    %v1751 = vsub.f32 %v1505, %v1750
    %1752 = vmatmul.mubr.f32.gmra.mxu0 %v1751
    %v1753 = vpop.f32.mrf.mxu0
    %v1754 = vadd.f32 %v1674, %v1753
    %v1755 = vpop.f32.mrf.mxu0
    %1756 = vdwg.mxu0
    %1757 = vmatprep.subr.mxu0 0.0
    %1758 = vmatpush1.msra.mxu0 0.0
    %1759 = vmatprep.subr.mxu0 0.0
    %1760 = vmatpush1.msra.mxu0 0.0
    %1761 = vmatprep.subr.mxu0 0.0
    %1762 = vmatpush1.msra.mxu0 0.0
    %1763 = vmatprep.subr.mxu0 0.0
    %1764 = vmatpush1.msra.mxu0 0.0
    %1765 = vmatprep.subr.mxu0 0.0
    %1766 = vmatpush1.msra.mxu0 0.0
    %1767 = vmatprep.subr.mxu0 0.0
    %1768 = vmatpush1.msra.mxu0 0.0
    %1769 = vmatprep.subr.mxu0 0.0
    %1770 = vmatpush1.msra.mxu0 0.0
    %1771 = vmatprep.subr.mxu0 0.0
    %1772 = vmatpush1.msra.mxu0 0.0
    %1773 = vmatprep.subr.mxu0 0.0
    %1774 = vmatpush1.msra.mxu0 0.0
    %1775 = vmatprep.subr.mxu0 0.0
    %1776 = vmatpush1.msra.mxu0 0.0
    %1777 = vmatprep.subr.mxu0 0.0
    %1778 = vmatpush1.msra.mxu0 0.0
    %1779 = vmatprep.subr.mxu0 0.0
    %1780 = vmatpush1.msra.mxu0 0.0
    %1781 = vmatprep.subr.mxu0 0.0
    %v1782 = vand.u32 %v71, 4294901760
    %1783 = vmatpush1.msra.mxu0 %v1782
    %1784 = vmatprep.subr.mxu0 0.0
    %v1785 = vand.u32 %v70, 4294901760
    %1786 = vmatpush1.msra.mxu0 %v1785
    %1787 = vmatprep.subr.mxu0 0.0
    %v1788 = vand.u32 %v69, 4294901760
    %1789 = vmatpush1.msra.mxu0 %v1788
    %1790 = vmatprep.subr.mxu0 0.0
    %v1791 = vand.u32 %v68, 4294901760
    %1792 = vmatpush1.msra.mxu0 %v1791
    %1793 = vmatprep.subr.mxu0 0.0
    %1794 = vmatpush2.msra.mxu0 0.0
    %1795 = vmatprep.subr.mxu0 0.0
    %1796 = vmatpush2.msra.mxu0 0.0
    %1797 = vmatprep.subr.mxu0 0.0
    %1798 = vmatpush2.msra.mxu0 0.0
    %1799 = vmatprep.subr.mxu0 0.0
    %1800 = vmatpush2.msra.mxu0 0.0
    %1801 = vmatprep.subr.mxu0 0.0
    %1802 = vmatpush2.msra.mxu0 0.0
    %1803 = vmatprep.subr.mxu0 0.0
    %1804 = vmatpush2.msra.mxu0 0.0
    %1805 = vmatprep.subr.mxu0 0.0
    %1806 = vmatpush2.msra.mxu0 0.0
    %1807 = vmatprep.subr.mxu0 0.0
    %1808 = vmatpush2.msra.mxu0 0.0
    %1809 = vmatprep.subr.mxu0 0.0
    %1810 = vmatpush2.msra.mxu0 0.0
    %1811 = vmatprep.subr.mxu0 0.0
    %1812 = vmatpush2.msra.mxu0 0.0
    %1813 = vmatprep.subr.mxu0 0.0
    %1814 = vmatpush2.msra.mxu0 0.0
    %1815 = vmatprep.subr.mxu0 0.0
    %1816 = vmatpush2.msra.mxu0 0.0
    %1817 = vmatprep.subr.mxu0 0.0
    %1818 = vmatpush2.msra.mxu0 0.0
    %1819 = vmatprep.subr.mxu0 0.0
    %1820 = vmatpush2.msra.mxu0 0.0
    %1821 = vmatprep.subr.mxu0 0.0
    %1822 = vmatpush2.msra.mxu0 0.0
    %1823 = vmatprep.subr.mxu0 0.0
    %1824 = vmatpush2.msra.mxu0 0.0
    %1825 = vmatprep.mubr.f32.mxu0 0.0
    %v1826 = vand.u32 %v1505, 4294901760
    %v1827 = vsub.f32 %v1505, %v1826
    %v1828 = vand.u32 %v1827, 4294901760
    %1829 = vmatmul.mubr.f32.gmra.mxu0 %v1828
    %v1830 = vpop.f32.mrf.mxu0
    %v1831 = vadd.f32 %v1754, %v1830
    %v1832 = vpop.f32.mrf.mxu0
    %1833 = vdwg.mxu0
    %1834 = vmatprep.subr.mxu0 0.0
    %1835 = vmatpush1.msra.mxu0 0.0
    %1836 = vmatprep.subr.mxu0 0.0
    %1837 = vmatpush1.msra.mxu0 0.0
    %1838 = vmatprep.subr.mxu0 0.0
    %1839 = vmatpush1.msra.mxu0 0.0
    %1840 = vmatprep.subr.mxu0 0.0
    %1841 = vmatpush1.msra.mxu0 0.0
    %1842 = vmatprep.subr.mxu0 0.0
    %1843 = vmatpush1.msra.mxu0 0.0
    %1844 = vmatprep.subr.mxu0 0.0
    %1845 = vmatpush1.msra.mxu0 0.0
    %1846 = vmatprep.subr.mxu0 0.0
    %1847 = vmatpush1.msra.mxu0 0.0
    %1848 = vmatprep.subr.mxu0 0.0
    %1849 = vmatpush1.msra.mxu0 0.0
    %1850 = vmatprep.subr.mxu0 0.0
    %1851 = vmatpush1.msra.mxu0 0.0
    %1852 = vmatprep.subr.mxu0 0.0
    %1853 = vmatpush1.msra.mxu0 0.0
    %1854 = vmatprep.subr.mxu0 0.0
    %1855 = vmatpush1.msra.mxu0 0.0
    %1856 = vmatprep.subr.mxu0 0.0
    %1857 = vmatpush1.msra.mxu0 0.0
    %1858 = vmatprep.subr.mxu0 0.0
    %v1859 = vand.u32 %v71, 4294901760
    %v1860 = vsub.f32 %v71, %v1859
    %v1861 = vand.u32 %v1860, 4294901760
    %1862 = vmatpush1.msra.mxu0 %v1861
    %1863 = vmatprep.subr.mxu0 0.0
    %v1864 = vand.u32 %v70, 4294901760
    %v1865 = vsub.f32 %v70, %v1864
    %v1866 = vand.u32 %v1865, 4294901760
    %1867 = vmatpush1.msra.mxu0 %v1866
    %1868 = vmatprep.subr.mxu0 0.0
    %v1869 = vand.u32 %v69, 4294901760
    %v1870 = vsub.f32 %v69, %v1869
    %v1871 = vand.u32 %v1870, 4294901760
    %1872 = vmatpush1.msra.mxu0 %v1871
    %1873 = vmatprep.subr.mxu0 0.0
    %v1874 = vand.u32 %v68, 4294901760
    %v1875 = vsub.f32 %v68, %v1874
    %v1876 = vand.u32 %v1875, 4294901760
    %1877 = vmatpush1.msra.mxu0 %v1876
    %1878 = vmatprep.subr.mxu0 0.0
    %1879 = vmatpush2.msra.mxu0 0.0
    %1880 = vmatprep.subr.mxu0 0.0
    %1881 = vmatpush2.msra.mxu0 0.0
    %1882 = vmatprep.subr.mxu0 0.0
    %1883 = vmatpush2.msra.mxu0 0.0
    %1884 = vmatprep.subr.mxu0 0.0
    %1885 = vmatpush2.msra.mxu0 0.0
    %1886 = vmatprep.subr.mxu0 0.0
    %1887 = vmatpush2.msra.mxu0 0.0
    %1888 = vmatprep.subr.mxu0 0.0
    %1889 = vmatpush2.msra.mxu0 0.0
    %1890 = vmatprep.subr.mxu0 0.0
    %1891 = vmatpush2.msra.mxu0 0.0
    %1892 = vmatprep.subr.mxu0 0.0
    %1893 = vmatpush2.msra.mxu0 0.0
    %1894 = vmatprep.subr.mxu0 0.0
    %1895 = vmatpush2.msra.mxu0 0.0
    %1896 = vmatprep.subr.mxu0 0.0
    %1897 = vmatpush2.msra.mxu0 0.0
    %1898 = vmatprep.subr.mxu0 0.0
    %1899 = vmatpush2.msra.mxu0 0.0
    %1900 = vmatprep.subr.mxu0 0.0
    %1901 = vmatpush2.msra.mxu0 0.0
    %1902 = vmatprep.subr.mxu0 0.0
    %1903 = vmatpush2.msra.mxu0 0.0
    %1904 = vmatprep.subr.mxu0 0.0
    %1905 = vmatpush2.msra.mxu0 0.0
    %1906 = vmatprep.subr.mxu0 0.0
    %1907 = vmatpush2.msra.mxu0 0.0
    %1908 = vmatprep.subr.mxu0 0.0
    %1909 = vmatpush2.msra.mxu0 0.0
    %1910 = vmatprep.mubr.f32.mxu0 0.0
    %v1911 = vand.u32 %v1505, 4294901760
    %1912 = vmatmul.mubr.f32.gmra.mxu0 %v1911
    %v1913 = vpop.f32.mrf.mxu0
    %v1914 = vadd.f32 %v1831, %v1913
    %v1915 = vpop.f32.mrf.mxu0
    %1916 = vdwg.mxu0
    %1917 = vmatprep.subr.mxu0 0.0
    %1918 = vmatpush1.msra.mxu0 0.0
    %1919 = vmatprep.subr.mxu0 0.0
    %1920 = vmatpush1.msra.mxu0 0.0
    %1921 = vmatprep.subr.mxu0 0.0
    %1922 = vmatpush1.msra.mxu0 0.0
    %1923 = vmatprep.subr.mxu0 0.0
    %1924 = vmatpush1.msra.mxu0 0.0
    %1925 = vmatprep.subr.mxu0 0.0
    %1926 = vmatpush1.msra.mxu0 0.0
    %1927 = vmatprep.subr.mxu0 0.0
    %1928 = vmatpush1.msra.mxu0 0.0
    %1929 = vmatprep.subr.mxu0 0.0
    %1930 = vmatpush1.msra.mxu0 0.0
    %1931 = vmatprep.subr.mxu0 0.0
    %1932 = vmatpush1.msra.mxu0 0.0
    %1933 = vmatprep.subr.mxu0 0.0
    %1934 = vmatpush1.msra.mxu0 0.0
    %1935 = vmatprep.subr.mxu0 0.0
    %1936 = vmatpush1.msra.mxu0 0.0
    %1937 = vmatprep.subr.mxu0 0.0
    %1938 = vmatpush1.msra.mxu0 0.0
    %1939 = vmatprep.subr.mxu0 0.0
    %1940 = vmatpush1.msra.mxu0 0.0
    %1941 = vmatprep.subr.mxu0 0.0
    %v1942 = vand.u32 %v71, 4294901760
    %1943 = vmatpush1.msra.mxu0 %v1942
    %1944 = vmatprep.subr.mxu0 0.0
    %v1945 = vand.u32 %v70, 4294901760
    %1946 = vmatpush1.msra.mxu0 %v1945
    %1947 = vmatprep.subr.mxu0 0.0
    %v1948 = vand.u32 %v69, 4294901760
    %1949 = vmatpush1.msra.mxu0 %v1948
    %1950 = vmatprep.subr.mxu0 0.0
    %v1951 = vand.u32 %v68, 4294901760
    %1952 = vmatpush1.msra.mxu0 %v1951
    %1953 = vmatprep.subr.mxu0 0.0
    %1954 = vmatpush2.msra.mxu0 0.0
    %1955 = vmatprep.subr.mxu0 0.0
    %1956 = vmatpush2.msra.mxu0 0.0
    %1957 = vmatprep.subr.mxu0 0.0
    %1958 = vmatpush2.msra.mxu0 0.0
    %1959 = vmatprep.subr.mxu0 0.0
    %1960 = vmatpush2.msra.mxu0 0.0
    %1961 = vmatprep.subr.mxu0 0.0
    %1962 = vmatpush2.msra.mxu0 0.0
    %1963 = vmatprep.subr.mxu0 0.0
    %1964 = vmatpush2.msra.mxu0 0.0
    %1965 = vmatprep.subr.mxu0 0.0
    %1966 = vmatpush2.msra.mxu0 0.0
    %1967 = vmatprep.subr.mxu0 0.0
    %1968 = vmatpush2.msra.mxu0 0.0
    %1969 = vmatprep.subr.mxu0 0.0
    %1970 = vmatpush2.msra.mxu0 0.0
    %1971 = vmatprep.subr.mxu0 0.0
    %1972 = vmatpush2.msra.mxu0 0.0
    %1973 = vmatprep.subr.mxu0 0.0
    %1974 = vmatpush2.msra.mxu0 0.0
    %1975 = vmatprep.subr.mxu0 0.0
    %1976 = vmatpush2.msra.mxu0 0.0
    %1977 = vmatprep.subr.mxu0 0.0
    %1978 = vmatpush2.msra.mxu0 0.0
    %1979 = vmatprep.subr.mxu0 0.0
    %1980 = vmatpush2.msra.mxu0 0.0
    %1981 = vmatprep.subr.mxu0 0.0
    %1982 = vmatpush2.msra.mxu0 0.0
    %1983 = vmatprep.subr.mxu0 0.0
    %1984 = vmatpush2.msra.mxu0 0.0
    %1985 = vmatprep.mubr.f32.mxu0 0.0
    %v1986 = vand.u32 %v1505, 4294901760
    %1987 = vmatmul.mubr.f32.gmra.mxu0 %v1986
    %v1988 = vpop.f32.mrf.mxu0
    %v1989 = vadd.f32 %v1914, %v1988
    %v1990 = vpop.f32.mrf.mxu0
    %1991 = vdwg.mxu0
    %v1992 = vadd.f32 %v961, %v1989
    %v1993 = vtanh.pop %v1992
    %vm1994 = vcmp.eq.s32.totalorder %v1005, 1
    %v1995 = vsel %vm1994, 1, 0
    %1996 = vset.pattern.permute.xlu0 0
    %1997 = vperm.xlu0 %1996, %v1995
    %v1998 = vpop.permute.xlu0 %1997
    %vm1999 = vcmp.eq.s32.totalorder %v1998, 1
    %v2000 = vsel %vm1999, %v1993, %v1503
    %v2002 = vsel %vm1006, %v1993, 0
    %2004 = vmatprep.subr.mxu0 0.0
    %2005 = vmatpush1.msra.mxu0 0.0
    %2006 = vmatprep.subr.mxu0 0.0
    %2007 = vmatpush1.msra.mxu0 0.0
    %2008 = vmatprep.subr.mxu0 0.0
    %2009 = vmatpush1.msra.mxu0 0.0
    %2010 = vmatprep.subr.mxu0 0.0
    %2011 = vmatpush1.msra.mxu0 0.0
    %2012 = vmatprep.subr.mxu0 0.0
    %2013 = vmatpush1.msra.mxu0 0.0
    %2014 = vmatprep.subr.mxu0 0.0
    %2015 = vmatpush1.msra.mxu0 0.0
    %2016 = vmatprep.subr.mxu0 0.0
    %2017 = vmatpush1.msra.mxu0 0.0
    %2018 = vmatprep.subr.mxu0 0.0
    %2019 = vmatpush1.msra.mxu0 0.0
    %2020 = vmatprep.subr.mxu0 0.0
    %2021 = vmatpush1.msra.mxu0 0.0
    %2022 = vmatprep.subr.mxu0 0.0
    %2023 = vmatpush1.msra.mxu0 0.0
    %2024 = vmatprep.subr.mxu0 0.0
    %2025 = vmatpush1.msra.mxu0 0.0
    %2026 = vmatprep.subr.mxu0 0.0
    %2027 = vmatpush1.msra.mxu0 0.0
    %2028 = vmatprep.subr.mxu0 0.0
    %v2029 = vand.u32 %v71, 4294901760
    %2030 = vmatpush1.msra.mxu0 %v2029
    %2031 = vmatprep.subr.mxu0 0.0
    %v2032 = vand.u32 %v70, 4294901760
    %2033 = vmatpush1.msra.mxu0 %v2032
    %2034 = vmatprep.subr.mxu0 0.0
    %v2035 = vand.u32 %v69, 4294901760
    %2036 = vmatpush1.msra.mxu0 %v2035
    %2037 = vmatprep.subr.mxu0 0.0
    %v2038 = vand.u32 %v68, 4294901760
    %2039 = vmatpush1.msra.mxu0 %v2038
    %2040 = vmatprep.subr.mxu0 0.0
    %2041 = vmatpush2.msra.mxu0 0.0
    %2042 = vmatprep.subr.mxu0 0.0
    %2043 = vmatpush2.msra.mxu0 0.0
    %2044 = vmatprep.subr.mxu0 0.0
    %2045 = vmatpush2.msra.mxu0 0.0
    %2046 = vmatprep.subr.mxu0 0.0
    %2047 = vmatpush2.msra.mxu0 0.0
    %2048 = vmatprep.subr.mxu0 0.0
    %2049 = vmatpush2.msra.mxu0 0.0
    %2050 = vmatprep.subr.mxu0 0.0
    %2051 = vmatpush2.msra.mxu0 0.0
    %2052 = vmatprep.subr.mxu0 0.0
    %2053 = vmatpush2.msra.mxu0 0.0
    %2054 = vmatprep.subr.mxu0 0.0
    %2055 = vmatpush2.msra.mxu0 0.0
    %2056 = vmatprep.subr.mxu0 0.0
    %2057 = vmatpush2.msra.mxu0 0.0
    %2058 = vmatprep.subr.mxu0 0.0
    %2059 = vmatpush2.msra.mxu0 0.0
    %2060 = vmatprep.subr.mxu0 0.0
    %2061 = vmatpush2.msra.mxu0 0.0
    %2062 = vmatprep.subr.mxu0 0.0
    %2063 = vmatpush2.msra.mxu0 0.0
    %2064 = vmatprep.subr.mxu0 0.0
    %2065 = vmatpush2.msra.mxu0 0.0
    %2066 = vmatprep.subr.mxu0 0.0
    %2067 = vmatpush2.msra.mxu0 0.0
    %2068 = vmatprep.subr.mxu0 0.0
    %2069 = vmatpush2.msra.mxu0 0.0
    %2070 = vmatprep.subr.mxu0 0.0
    %2071 = vmatpush2.msra.mxu0 0.0
    %2072 = vmatprep.mubr.f32.mxu0 0.0
    %v2073 = vand.u32 %v2002, 4294901760
    %v2074 = vsub.f32 %v2002, %v2073
    %v2075 = vand.u32 %v2074, 4294901760
    %v2076 = vsub.f32 %v2074, %v2075
    %v2077 = vand.u32 %v2076, 4294901760
    %2078 = vmatmul.mubr.f32.gmra.mxu0 %v2077
    %v2079 = vpop.f32.mrf.mxu0
    %v2080 = vadd.f32 0.0, %v2079
    %v2081 = vpop.f32.mrf.mxu0
    %2082 = vdwg.mxu0
    %2083 = vmatprep.subr.mxu0 0.0
    %2084 = vmatpush1.msra.mxu0 0.0
    %2085 = vmatprep.subr.mxu0 0.0
    %2086 = vmatpush1.msra.mxu0 0.0
    %2087 = vmatprep.subr.mxu0 0.0
    %2088 = vmatpush1.msra.mxu0 0.0
    %2089 = vmatprep.subr.mxu0 0.0
    %2090 = vmatpush1.msra.mxu0 0.0
    %2091 = vmatprep.subr.mxu0 0.0
    %2092 = vmatpush1.msra.mxu0 0.0
    %2093 = vmatprep.subr.mxu0 0.0
    %2094 = vmatpush1.msra.mxu0 0.0
    %2095 = vmatprep.subr.mxu0 0.0
    %2096 = vmatpush1.msra.mxu0 0.0
    %2097 = vmatprep.subr.mxu0 0.0
    %2098 = vmatpush1.msra.mxu0 0.0
    %2099 = vmatprep.subr.mxu0 0.0
    %2100 = vmatpush1.msra.mxu0 0.0
    %2101 = vmatprep.subr.mxu0 0.0
    %2102 = vmatpush1.msra.mxu0 0.0
    %2103 = vmatprep.subr.mxu0 0.0
    %2104 = vmatpush1.msra.mxu0 0.0
    %2105 = vmatprep.subr.mxu0 0.0
    %2106 = vmatpush1.msra.mxu0 0.0
    %2107 = vmatprep.subr.mxu0 0.0
    %v2108 = vand.u32 %v71, 4294901760
    %v2109 = vsub.f32 %v71, %v2108
    %v2110 = vand.u32 %v2109, 4294901760
    %v2111 = vsub.f32 %v2109, %v2110
    %v2112 = vand.u32 %v2111, 4294901760
    %2113 = vmatpush1.msra.mxu0 %v2112
    %2114 = vmatprep.subr.mxu0 0.0
    %v2115 = vand.u32 %v70, 4294901760
    %v2116 = vsub.f32 %v70, %v2115
    %v2117 = vand.u32 %v2116, 4294901760
    %v2118 = vsub.f32 %v2116, %v2117
    %v2119 = vand.u32 %v2118, 4294901760
    %2120 = vmatpush1.msra.mxu0 %v2119
    %2121 = vmatprep.subr.mxu0 0.0
    %v2122 = vand.u32 %v69, 4294901760
    %v2123 = vsub.f32 %v69, %v2122
    %v2124 = vand.u32 %v2123, 4294901760
    %v2125 = vsub.f32 %v2123, %v2124
    %v2126 = vand.u32 %v2125, 4294901760
    %2127 = vmatpush1.msra.mxu0 %v2126
    %2128 = vmatprep.subr.mxu0 0.0
    %v2129 = vand.u32 %v68, 4294901760
    %v2130 = vsub.f32 %v68, %v2129
    %v2131 = vand.u32 %v2130, 4294901760
    %v2132 = vsub.f32 %v2130, %v2131
    %v2133 = vand.u32 %v2132, 4294901760
    %2134 = vmatpush1.msra.mxu0 %v2133
    %2135 = vmatprep.subr.mxu0 0.0
    %2136 = vmatpush2.msra.mxu0 0.0
    %2137 = vmatprep.subr.mxu0 0.0
    %2138 = vmatpush2.msra.mxu0 0.0
    %2139 = vmatprep.subr.mxu0 0.0
    %2140 = vmatpush2.msra.mxu0 0.0
    %2141 = vmatprep.subr.mxu0 0.0
    %2142 = vmatpush2.msra.mxu0 0.0
    %2143 = vmatprep.subr.mxu0 0.0
    %2144 = vmatpush2.msra.mxu0 0.0
    %2145 = vmatprep.subr.mxu0 0.0
    %2146 = vmatpush2.msra.mxu0 0.0
    %2147 = vmatprep.subr.mxu0 0.0
    %2148 = vmatpush2.msra.mxu0 0.0
    %2149 = vmatprep.subr.mxu0 0.0
    %2150 = vmatpush2.msra.mxu0 0.0
    %2151 = vmatprep.subr.mxu0 0.0
    %2152 = vmatpush2.msra.mxu0 0.0
    %2153 = vmatprep.subr.mxu0 0.0
    %2154 = vmatpush2.msra.mxu0 0.0
    %2155 = vmatprep.subr.mxu0 0.0
    %2156 = vmatpush2.msra.mxu0 0.0
    %2157 = vmatprep.subr.mxu0 0.0
    %2158 = vmatpush2.msra.mxu0 0.0
    %2159 = vmatprep.subr.mxu0 0.0
    %2160 = vmatpush2.msra.mxu0 0.0
    %2161 = vmatprep.subr.mxu0 0.0
    %2162 = vmatpush2.msra.mxu0 0.0
    %2163 = vmatprep.subr.mxu0 0.0
    %2164 = vmatpush2.msra.mxu0 0.0
    %2165 = vmatprep.subr.mxu0 0.0
    %2166 = vmatpush2.msra.mxu0 0.0
    %2167 = vmatprep.mubr.f32.mxu0 0.0
    %v2168 = vand.u32 %v2002, 4294901760
    %2169 = vmatmul.mubr.f32.gmra.mxu0 %v2168
    %v2170 = vpop.f32.mrf.mxu0
    %v2171 = vadd.f32 %v2080, %v2170
    %v2172 = vpop.f32.mrf.mxu0
    %2173 = vdwg.mxu0
    %2174 = vmatprep.subr.mxu0 0.0
    %2175 = vmatpush1.msra.mxu0 0.0
    %2176 = vmatprep.subr.mxu0 0.0
    %2177 = vmatpush1.msra.mxu0 0.0
    %2178 = vmatprep.subr.mxu0 0.0
    %2179 = vmatpush1.msra.mxu0 0.0
    %2180 = vmatprep.subr.mxu0 0.0
    %2181 = vmatpush1.msra.mxu0 0.0
    %2182 = vmatprep.subr.mxu0 0.0
    %2183 = vmatpush1.msra.mxu0 0.0
    %2184 = vmatprep.subr.mxu0 0.0
    %2185 = vmatpush1.msra.mxu0 0.0
    %2186 = vmatprep.subr.mxu0 0.0
    %2187 = vmatpush1.msra.mxu0 0.0
    %2188 = vmatprep.subr.mxu0 0.0
    %2189 = vmatpush1.msra.mxu0 0.0
    %2190 = vmatprep.subr.mxu0 0.0
    %2191 = vmatpush1.msra.mxu0 0.0
    %2192 = vmatprep.subr.mxu0 0.0
    %2193 = vmatpush1.msra.mxu0 0.0
    %2194 = vmatprep.subr.mxu0 0.0
    %2195 = vmatpush1.msra.mxu0 0.0
    %2196 = vmatprep.subr.mxu0 0.0
    %2197 = vmatpush1.msra.mxu0 0.0
    %2198 = vmatprep.subr.mxu0 0.0
    %v2199 = vand.u32 %v71, 4294901760
    %v2200 = vsub.f32 %v71, %v2199
    %2201 = vmatpush1.msra.mxu0 %v2200
    %2202 = vmatprep.subr.mxu0 0.0
    %v2203 = vand.u32 %v70, 4294901760
    %v2204 = vsub.f32 %v70, %v2203
    %2205 = vmatpush1.msra.mxu0 %v2204
    %2206 = vmatprep.subr.mxu0 0.0
    %v2207 = vand.u32 %v69, 4294901760
    %v2208 = vsub.f32 %v69, %v2207
    %2209 = vmatpush1.msra.mxu0 %v2208
    %2210 = vmatprep.subr.mxu0 0.0
    %v2211 = vand.u32 %v68, 4294901760
    %v2212 = vsub.f32 %v68, %v2211
    %2213 = vmatpush1.msra.mxu0 %v2212
    %2214 = vmatprep.subr.mxu0 0.0
    %2215 = vmatpush2.msra.mxu0 0.0
    %2216 = vmatprep.subr.mxu0 0.0
    %2217 = vmatpush2.msra.mxu0 0.0
    %2218 = vmatprep.subr.mxu0 0.0
    %2219 = vmatpush2.msra.mxu0 0.0
    %2220 = vmatprep.subr.mxu0 0.0
    %2221 = vmatpush2.msra.mxu0 0.0
    %2222 = vmatprep.subr.mxu0 0.0
    %2223 = vmatpush2.msra.mxu0 0.0
    %2224 = vmatprep.subr.mxu0 0.0
    %2225 = vmatpush2.msra.mxu0 0.0
    %2226 = vmatprep.subr.mxu0 0.0
    %2227 = vmatpush2.msra.mxu0 0.0
    %2228 = vmatprep.subr.mxu0 0.0
    %2229 = vmatpush2.msra.mxu0 0.0
    %2230 = vmatprep.subr.mxu0 0.0
    %2231 = vmatpush2.msra.mxu0 0.0
    %2232 = vmatprep.subr.mxu0 0.0
    %2233 = vmatpush2.msra.mxu0 0.0
    %2234 = vmatprep.subr.mxu0 0.0
    %2235 = vmatpush2.msra.mxu0 0.0
    %2236 = vmatprep.subr.mxu0 0.0
    %2237 = vmatpush2.msra.mxu0 0.0
    %2238 = vmatprep.subr.mxu0 0.0
    %2239 = vmatpush2.msra.mxu0 0.0
    %2240 = vmatprep.subr.mxu0 0.0
    %2241 = vmatpush2.msra.mxu0 0.0
    %2242 = vmatprep.subr.mxu0 0.0
    %2243 = vmatpush2.msra.mxu0 0.0
    %2244 = vmatprep.subr.mxu0 0.0
    %2245 = vmatpush2.msra.mxu0 0.0
    %2246 = vmatprep.mubr.f32.mxu0 0.0
    %v2247 = vand.u32 %v2002, 4294901760
    %v2248 = vsub.f32 %v2002, %v2247
    %2249 = vmatmul.mubr.f32.gmra.mxu0 %v2248
    %v2250 = vpop.f32.mrf.mxu0
    %v2251 = vadd.f32 %v2171, %v2250
    %v2252 = vpop.f32.mrf.mxu0
    %2253 = vdwg.mxu0
    %2254 = vmatprep.subr.mxu0 0.0
    %2255 = vmatpush1.msra.mxu0 0.0
    %2256 = vmatprep.subr.mxu0 0.0
    %2257 = vmatpush1.msra.mxu0 0.0
    %2258 = vmatprep.subr.mxu0 0.0
    %2259 = vmatpush1.msra.mxu0 0.0
    %2260 = vmatprep.subr.mxu0 0.0
    %2261 = vmatpush1.msra.mxu0 0.0
    %2262 = vmatprep.subr.mxu0 0.0
    %2263 = vmatpush1.msra.mxu0 0.0
    %2264 = vmatprep.subr.mxu0 0.0
    %2265 = vmatpush1.msra.mxu0 0.0
    %2266 = vmatprep.subr.mxu0 0.0
    %2267 = vmatpush1.msra.mxu0 0.0
    %2268 = vmatprep.subr.mxu0 0.0
    %2269 = vmatpush1.msra.mxu0 0.0
    %2270 = vmatprep.subr.mxu0 0.0
    %2271 = vmatpush1.msra.mxu0 0.0
    %2272 = vmatprep.subr.mxu0 0.0
    %2273 = vmatpush1.msra.mxu0 0.0
    %2274 = vmatprep.subr.mxu0 0.0
    %2275 = vmatpush1.msra.mxu0 0.0
    %2276 = vmatprep.subr.mxu0 0.0
    %2277 = vmatpush1.msra.mxu0 0.0
    %2278 = vmatprep.subr.mxu0 0.0
    %v2279 = vand.u32 %v71, 4294901760
    %2280 = vmatpush1.msra.mxu0 %v2279
    %2281 = vmatprep.subr.mxu0 0.0
    %v2282 = vand.u32 %v70, 4294901760
    %2283 = vmatpush1.msra.mxu0 %v2282
    %2284 = vmatprep.subr.mxu0 0.0
    %v2285 = vand.u32 %v69, 4294901760
    %2286 = vmatpush1.msra.mxu0 %v2285
    %2287 = vmatprep.subr.mxu0 0.0
    %v2288 = vand.u32 %v68, 4294901760
    %2289 = vmatpush1.msra.mxu0 %v2288
    %2290 = vmatprep.subr.mxu0 0.0
    %2291 = vmatpush2.msra.mxu0 0.0
    %2292 = vmatprep.subr.mxu0 0.0
    %2293 = vmatpush2.msra.mxu0 0.0
    %2294 = vmatprep.subr.mxu0 0.0
    %2295 = vmatpush2.msra.mxu0 0.0
    %2296 = vmatprep.subr.mxu0 0.0
    %2297 = vmatpush2.msra.mxu0 0.0
    %2298 = vmatprep.subr.mxu0 0.0
    %2299 = vmatpush2.msra.mxu0 0.0
    %2300 = vmatprep.subr.mxu0 0.0
    %2301 = vmatpush2.msra.mxu0 0.0
    %2302 = vmatprep.subr.mxu0 0.0
    %2303 = vmatpush2.msra.mxu0 0.0
    %2304 = vmatprep.subr.mxu0 0.0
    %2305 = vmatpush2.msra.mxu0 0.0
    %2306 = vmatprep.subr.mxu0 0.0
    %2307 = vmatpush2.msra.mxu0 0.0
    %2308 = vmatprep.subr.mxu0 0.0
    %2309 = vmatpush2.msra.mxu0 0.0
    %2310 = vmatprep.subr.mxu0 0.0
    %2311 = vmatpush2.msra.mxu0 0.0
    %2312 = vmatprep.subr.mxu0 0.0
    %2313 = vmatpush2.msra.mxu0 0.0
    %2314 = vmatprep.subr.mxu0 0.0
    %2315 = vmatpush2.msra.mxu0 0.0
    %2316 = vmatprep.subr.mxu0 0.0
    %2317 = vmatpush2.msra.mxu0 0.0
    %2318 = vmatprep.subr.mxu0 0.0
    %2319 = vmatpush2.msra.mxu0 0.0
    %2320 = vmatprep.subr.mxu0 0.0
    %2321 = vmatpush2.msra.mxu0 0.0
    %2322 = vmatprep.mubr.f32.mxu0 0.0
    %v2323 = vand.u32 %v2002, 4294901760
    %v2324 = vsub.f32 %v2002, %v2323
    %v2325 = vand.u32 %v2324, 4294901760
    %2326 = vmatmul.mubr.f32.gmra.mxu0 %v2325
    %v2327 = vpop.f32.mrf.mxu0
    %v2328 = vadd.f32 %v2251, %v2327
    %v2329 = vpop.f32.mrf.mxu0
    %2330 = vdwg.mxu0
    %2331 = vmatprep.subr.mxu0 0.0
    %2332 = vmatpush1.msra.mxu0 0.0
    %2333 = vmatprep.subr.mxu0 0.0
    %2334 = vmatpush1.msra.mxu0 0.0
    %2335 = vmatprep.subr.mxu0 0.0
    %2336 = vmatpush1.msra.mxu0 0.0
    %2337 = vmatprep.subr.mxu0 0.0
    %2338 = vmatpush1.msra.mxu0 0.0
    %2339 = vmatprep.subr.mxu0 0.0
    %2340 = vmatpush1.msra.mxu0 0.0
    %2341 = vmatprep.subr.mxu0 0.0
    %2342 = vmatpush1.msra.mxu0 0.0
    %2343 = vmatprep.subr.mxu0 0.0
    %2344 = vmatpush1.msra.mxu0 0.0
    %2345 = vmatprep.subr.mxu0 0.0
    %2346 = vmatpush1.msra.mxu0 0.0
    %2347 = vmatprep.subr.mxu0 0.0
    %2348 = vmatpush1.msra.mxu0 0.0
    %2349 = vmatprep.subr.mxu0 0.0
    %2350 = vmatpush1.msra.mxu0 0.0
    %2351 = vmatprep.subr.mxu0 0.0
    %2352 = vmatpush1.msra.mxu0 0.0
    %2353 = vmatprep.subr.mxu0 0.0
    %2354 = vmatpush1.msra.mxu0 0.0
    %2355 = vmatprep.subr.mxu0 0.0
    %v2356 = vand.u32 %v71, 4294901760
    %v2357 = vsub.f32 %v71, %v2356
    %v2358 = vand.u32 %v2357, 4294901760
    %2359 = vmatpush1.msra.mxu0 %v2358
    %2360 = vmatprep.subr.mxu0 0.0
    %v2361 = vand.u32 %v70, 4294901760
    %v2362 = vsub.f32 %v70, %v2361
    %v2363 = vand.u32 %v2362, 4294901760
    %2364 = vmatpush1.msra.mxu0 %v2363
    %2365 = vmatprep.subr.mxu0 0.0
    %v2366 = vand.u32 %v69, 4294901760
    %v2367 = vsub.f32 %v69, %v2366
    %v2368 = vand.u32 %v2367, 4294901760
    %2369 = vmatpush1.msra.mxu0 %v2368
    %2370 = vmatprep.subr.mxu0 0.0
    %v2371 = vand.u32 %v68, 4294901760
    %v2372 = vsub.f32 %v68, %v2371
    %v2373 = vand.u32 %v2372, 4294901760
    %2374 = vmatpush1.msra.mxu0 %v2373
    %2375 = vmatprep.subr.mxu0 0.0
    %2376 = vmatpush2.msra.mxu0 0.0
    %2377 = vmatprep.subr.mxu0 0.0
    %2378 = vmatpush2.msra.mxu0 0.0
    %2379 = vmatprep.subr.mxu0 0.0
    %2380 = vmatpush2.msra.mxu0 0.0
    %2381 = vmatprep.subr.mxu0 0.0
    %2382 = vmatpush2.msra.mxu0 0.0
    %2383 = vmatprep.subr.mxu0 0.0
    %2384 = vmatpush2.msra.mxu0 0.0
    %2385 = vmatprep.subr.mxu0 0.0
    %2386 = vmatpush2.msra.mxu0 0.0
    %2387 = vmatprep.subr.mxu0 0.0
    %2388 = vmatpush2.msra.mxu0 0.0
    %2389 = vmatprep.subr.mxu0 0.0
    %2390 = vmatpush2.msra.mxu0 0.0
    %2391 = vmatprep.subr.mxu0 0.0
    %2392 = vmatpush2.msra.mxu0 0.0
    %2393 = vmatprep.subr.mxu0 0.0
    %2394 = vmatpush2.msra.mxu0 0.0
    %2395 = vmatprep.subr.mxu0 0.0
    %2396 = vmatpush2.msra.mxu0 0.0
    %2397 = vmatprep.subr.mxu0 0.0
    %2398 = vmatpush2.msra.mxu0 0.0
    %2399 = vmatprep.subr.mxu0 0.0
    %2400 = vmatpush2.msra.mxu0 0.0
    %2401 = vmatprep.subr.mxu0 0.0
    %2402 = vmatpush2.msra.mxu0 0.0
    %2403 = vmatprep.subr.mxu0 0.0
    %2404 = vmatpush2.msra.mxu0 0.0
    %2405 = vmatprep.subr.mxu0 0.0
    %2406 = vmatpush2.msra.mxu0 0.0
    %2407 = vmatprep.mubr.f32.mxu0 0.0
    %v2408 = vand.u32 %v2002, 4294901760
    %2409 = vmatmul.mubr.f32.gmra.mxu0 %v2408
    %v2410 = vpop.f32.mrf.mxu0
    %v2411 = vadd.f32 %v2328, %v2410
    %v2412 = vpop.f32.mrf.mxu0
    %2413 = vdwg.mxu0
    %2414 = vmatprep.subr.mxu0 0.0
    %2415 = vmatpush1.msra.mxu0 0.0
    %2416 = vmatprep.subr.mxu0 0.0
    %2417 = vmatpush1.msra.mxu0 0.0
    %2418 = vmatprep.subr.mxu0 0.0
    %2419 = vmatpush1.msra.mxu0 0.0
    %2420 = vmatprep.subr.mxu0 0.0
    %2421 = vmatpush1.msra.mxu0 0.0
    %2422 = vmatprep.subr.mxu0 0.0
    %2423 = vmatpush1.msra.mxu0 0.0
    %2424 = vmatprep.subr.mxu0 0.0
    %2425 = vmatpush1.msra.mxu0 0.0
    %2426 = vmatprep.subr.mxu0 0.0
    %2427 = vmatpush1.msra.mxu0 0.0
    %2428 = vmatprep.subr.mxu0 0.0
    %2429 = vmatpush1.msra.mxu0 0.0
    %2430 = vmatprep.subr.mxu0 0.0
    %2431 = vmatpush1.msra.mxu0 0.0
    %2432 = vmatprep.subr.mxu0 0.0
    %2433 = vmatpush1.msra.mxu0 0.0
    %2434 = vmatprep.subr.mxu0 0.0
    %2435 = vmatpush1.msra.mxu0 0.0
    %2436 = vmatprep.subr.mxu0 0.0
    %2437 = vmatpush1.msra.mxu0 0.0
    %2438 = vmatprep.subr.mxu0 0.0
    %v2439 = vand.u32 %v71, 4294901760
    %2440 = vmatpush1.msra.mxu0 %v2439
    %2441 = vmatprep.subr.mxu0 0.0
    %v2442 = vand.u32 %v70, 4294901760
    %2443 = vmatpush1.msra.mxu0 %v2442
    %2444 = vmatprep.subr.mxu0 0.0
    %v2445 = vand.u32 %v69, 4294901760
    %2446 = vmatpush1.msra.mxu0 %v2445
    %2447 = vmatprep.subr.mxu0 0.0
    %v2448 = vand.u32 %v68, 4294901760
    %2449 = vmatpush1.msra.mxu0 %v2448
    %2450 = vmatprep.subr.mxu0 0.0
    %2451 = vmatpush2.msra.mxu0 0.0
    %2452 = vmatprep.subr.mxu0 0.0
    %2453 = vmatpush2.msra.mxu0 0.0
    %2454 = vmatprep.subr.mxu0 0.0
    %2455 = vmatpush2.msra.mxu0 0.0
    %2456 = vmatprep.subr.mxu0 0.0
    %2457 = vmatpush2.msra.mxu0 0.0
    %2458 = vmatprep.subr.mxu0 0.0
    %2459 = vmatpush2.msra.mxu0 0.0
    %2460 = vmatprep.subr.mxu0 0.0
    %2461 = vmatpush2.msra.mxu0 0.0
    %2462 = vmatprep.subr.mxu0 0.0
    %2463 = vmatpush2.msra.mxu0 0.0
    %2464 = vmatprep.subr.mxu0 0.0
    %2465 = vmatpush2.msra.mxu0 0.0
    %2466 = vmatprep.subr.mxu0 0.0
    %2467 = vmatpush2.msra.mxu0 0.0
    %2468 = vmatprep.subr.mxu0 0.0
    %2469 = vmatpush2.msra.mxu0 0.0
    %2470 = vmatprep.subr.mxu0 0.0
    %2471 = vmatpush2.msra.mxu0 0.0
    %2472 = vmatprep.subr.mxu0 0.0
    %2473 = vmatpush2.msra.mxu0 0.0
    %2474 = vmatprep.subr.mxu0 0.0
    %2475 = vmatpush2.msra.mxu0 0.0
    %2476 = vmatprep.subr.mxu0 0.0
    %2477 = vmatpush2.msra.mxu0 0.0
    %2478 = vmatprep.subr.mxu0 0.0
    %2479 = vmatpush2.msra.mxu0 0.0
    %2480 = vmatprep.subr.mxu0 0.0
    %2481 = vmatpush2.msra.mxu0 0.0
    %2482 = vmatprep.mubr.f32.mxu0 0.0
    %v2483 = vand.u32 %v2002, 4294901760
    %2484 = vmatmul.mubr.f32.gmra.mxu0 %v2483
    %v2485 = vpop.f32.mrf.mxu0
    %v2486 = vadd.f32 %v2411, %v2485
    %v2487 = vpop.f32.mrf.mxu0
    %2488 = vdwg.mxu0
    %v2489 = vadd.f32 %v967, %v2486
    %v2490 = vtanh.pop %v2489
    %vm2491 = vcmp.eq.s32.totalorder %v1005, 2
    %v2492 = vsel %vm2491, 1, 0
    %2493 = vset.pattern.permute.xlu0 0
    %2494 = vperm.xlu0 %2493, %v2492
    %v2495 = vpop.permute.xlu0 %2494
    %vm2496 = vcmp.eq.s32.totalorder %v2495, 1
    %v2497 = vsel %vm2496, %v2490, %v2000
    %v2499 = vsel %vm1006, %v2490, 0
    %2501 = vmatprep.subr.mxu0 0.0
    %2502 = vmatpush1.msra.mxu0 0.0
    %2503 = vmatprep.subr.mxu0 0.0
    %2504 = vmatpush1.msra.mxu0 0.0
    %2505 = vmatprep.subr.mxu0 0.0
    %2506 = vmatpush1.msra.mxu0 0.0
    %2507 = vmatprep.subr.mxu0 0.0
    %2508 = vmatpush1.msra.mxu0 0.0
    %2509 = vmatprep.subr.mxu0 0.0
    %2510 = vmatpush1.msra.mxu0 0.0
    %2511 = vmatprep.subr.mxu0 0.0
    %2512 = vmatpush1.msra.mxu0 0.0
    %2513 = vmatprep.subr.mxu0 0.0
    %2514 = vmatpush1.msra.mxu0 0.0
    %2515 = vmatprep.subr.mxu0 0.0
    %2516 = vmatpush1.msra.mxu0 0.0
    %2517 = vmatprep.subr.mxu0 0.0
    %2518 = vmatpush1.msra.mxu0 0.0
    %2519 = vmatprep.subr.mxu0 0.0
    %2520 = vmatpush1.msra.mxu0 0.0
    %2521 = vmatprep.subr.mxu0 0.0
    %2522 = vmatpush1.msra.mxu0 0.0
    %2523 = vmatprep.subr.mxu0 0.0
    %2524 = vmatpush1.msra.mxu0 0.0
    %2525 = vmatprep.subr.mxu0 0.0
    %v2526 = vand.u32 %v71, 4294901760
    %2527 = vmatpush1.msra.mxu0 %v2526
    %2528 = vmatprep.subr.mxu0 0.0
    %v2529 = vand.u32 %v70, 4294901760
    %2530 = vmatpush1.msra.mxu0 %v2529
    %2531 = vmatprep.subr.mxu0 0.0
    %v2532 = vand.u32 %v69, 4294901760
    %2533 = vmatpush1.msra.mxu0 %v2532
    %2534 = vmatprep.subr.mxu0 0.0
    %v2535 = vand.u32 %v68, 4294901760
    %2536 = vmatpush1.msra.mxu0 %v2535
    %2537 = vmatprep.subr.mxu0 0.0
    %2538 = vmatpush2.msra.mxu0 0.0
    %2539 = vmatprep.subr.mxu0 0.0
    %2540 = vmatpush2.msra.mxu0 0.0
    %2541 = vmatprep.subr.mxu0 0.0
    %2542 = vmatpush2.msra.mxu0 0.0
    %2543 = vmatprep.subr.mxu0 0.0
    %2544 = vmatpush2.msra.mxu0 0.0
    %2545 = vmatprep.subr.mxu0 0.0
    %2546 = vmatpush2.msra.mxu0 0.0
    %2547 = vmatprep.subr.mxu0 0.0
    %2548 = vmatpush2.msra.mxu0 0.0
    %2549 = vmatprep.subr.mxu0 0.0
    %2550 = vmatpush2.msra.mxu0 0.0
    %2551 = vmatprep.subr.mxu0 0.0
    %2552 = vmatpush2.msra.mxu0 0.0
    %2553 = vmatprep.subr.mxu0 0.0
    %2554 = vmatpush2.msra.mxu0 0.0
    %2555 = vmatprep.subr.mxu0 0.0
    %2556 = vmatpush2.msra.mxu0 0.0
    %2557 = vmatprep.subr.mxu0 0.0
    %2558 = vmatpush2.msra.mxu0 0.0
    %2559 = vmatprep.subr.mxu0 0.0
    %2560 = vmatpush2.msra.mxu0 0.0
    %2561 = vmatprep.subr.mxu0 0.0
    %2562 = vmatpush2.msra.mxu0 0.0
    %2563 = vmatprep.subr.mxu0 0.0
    %2564 = vmatpush2.msra.mxu0 0.0
    %2565 = vmatprep.subr.mxu0 0.0
    %2566 = vmatpush2.msra.mxu0 0.0
    %2567 = vmatprep.subr.mxu0 0.0
    %2568 = vmatpush2.msra.mxu0 0.0
    %2569 = vmatprep.mubr.f32.mxu0 0.0
    %v2570 = vand.u32 %v2499, 4294901760
    %v2571 = vsub.f32 %v2499, %v2570
    %v2572 = vand.u32 %v2571, 4294901760
    %v2573 = vsub.f32 %v2571, %v2572
    %v2574 = vand.u32 %v2573, 4294901760
    %2575 = vmatmul.mubr.f32.gmra.mxu0 %v2574
    %v2576 = vpop.f32.mrf.mxu0
    %v2577 = vadd.f32 0.0, %v2576
    %v2578 = vpop.f32.mrf.mxu0
    %2579 = vdwg.mxu0
    %2580 = vmatprep.subr.mxu0 0.0
    %2581 = vmatpush1.msra.mxu0 0.0
    %2582 = vmatprep.subr.mxu0 0.0
    %2583 = vmatpush1.msra.mxu0 0.0
    %2584 = vmatprep.subr.mxu0 0.0
    %2585 = vmatpush1.msra.mxu0 0.0
    %2586 = vmatprep.subr.mxu0 0.0
    %2587 = vmatpush1.msra.mxu0 0.0
    %2588 = vmatprep.subr.mxu0 0.0
    %2589 = vmatpush1.msra.mxu0 0.0
    %2590 = vmatprep.subr.mxu0 0.0
    %2591 = vmatpush1.msra.mxu0 0.0
    %2592 = vmatprep.subr.mxu0 0.0
    %2593 = vmatpush1.msra.mxu0 0.0
    %2594 = vmatprep.subr.mxu0 0.0
    %2595 = vmatpush1.msra.mxu0 0.0
    %2596 = vmatprep.subr.mxu0 0.0
    %2597 = vmatpush1.msra.mxu0 0.0
    %2598 = vmatprep.subr.mxu0 0.0
    %2599 = vmatpush1.msra.mxu0 0.0
    %2600 = vmatprep.subr.mxu0 0.0
    %2601 = vmatpush1.msra.mxu0 0.0
    %2602 = vmatprep.subr.mxu0 0.0
    %2603 = vmatpush1.msra.mxu0 0.0
    %2604 = vmatprep.subr.mxu0 0.0
    %v2605 = vand.u32 %v71, 4294901760
    %v2606 = vsub.f32 %v71, %v2605
    %v2607 = vand.u32 %v2606, 4294901760
    %v2608 = vsub.f32 %v2606, %v2607
    %v2609 = vand.u32 %v2608, 4294901760
    %2610 = vmatpush1.msra.mxu0 %v2609
    %2611 = vmatprep.subr.mxu0 0.0
    %v2612 = vand.u32 %v70, 4294901760
    %v2613 = vsub.f32 %v70, %v2612
    %v2614 = vand.u32 %v2613, 4294901760
    %v2615 = vsub.f32 %v2613, %v2614
    %v2616 = vand.u32 %v2615, 4294901760
    %2617 = vmatpush1.msra.mxu0 %v2616
    %2618 = vmatprep.subr.mxu0 0.0
    %v2619 = vand.u32 %v69, 4294901760
    %v2620 = vsub.f32 %v69, %v2619
    %v2621 = vand.u32 %v2620, 4294901760
    %v2622 = vsub.f32 %v2620, %v2621
    %v2623 = vand.u32 %v2622, 4294901760
    %2624 = vmatpush1.msra.mxu0 %v2623
    %2625 = vmatprep.subr.mxu0 0.0
    %v2626 = vand.u32 %v68, 4294901760
    %v2627 = vsub.f32 %v68, %v2626
    %v2628 = vand.u32 %v2627, 4294901760
    %v2629 = vsub.f32 %v2627, %v2628
    %v2630 = vand.u32 %v2629, 4294901760
    %2631 = vmatpush1.msra.mxu0 %v2630
    %2632 = vmatprep.subr.mxu0 0.0
    %2633 = vmatpush2.msra.mxu0 0.0
    %2634 = vmatprep.subr.mxu0 0.0
    %2635 = vmatpush2.msra.mxu0 0.0
    %2636 = vmatprep.subr.mxu0 0.0
    %2637 = vmatpush2.msra.mxu0 0.0
    %2638 = vmatprep.subr.mxu0 0.0
    %2639 = vmatpush2.msra.mxu0 0.0
    %2640 = vmatprep.subr.mxu0 0.0
    %2641 = vmatpush2.msra.mxu0 0.0
    %2642 = vmatprep.subr.mxu0 0.0
    %2643 = vmatpush2.msra.mxu0 0.0
    %2644 = vmatprep.subr.mxu0 0.0
    %2645 = vmatpush2.msra.mxu0 0.0
    %2646 = vmatprep.subr.mxu0 0.0
    %2647 = vmatpush2.msra.mxu0 0.0
    %2648 = vmatprep.subr.mxu0 0.0
    %2649 = vmatpush2.msra.mxu0 0.0
    %2650 = vmatprep.subr.mxu0 0.0
    %2651 = vmatpush2.msra.mxu0 0.0
    %2652 = vmatprep.subr.mxu0 0.0
    %2653 = vmatpush2.msra.mxu0 0.0
    %2654 = vmatprep.subr.mxu0 0.0
    %2655 = vmatpush2.msra.mxu0 0.0
    %2656 = vmatprep.subr.mxu0 0.0
    %2657 = vmatpush2.msra.mxu0 0.0
    %2658 = vmatprep.subr.mxu0 0.0
    %2659 = vmatpush2.msra.mxu0 0.0
    %2660 = vmatprep.subr.mxu0 0.0
    %2661 = vmatpush2.msra.mxu0 0.0
    %2662 = vmatprep.subr.mxu0 0.0
    %2663 = vmatpush2.msra.mxu0 0.0
    %2664 = vmatprep.mubr.f32.mxu0 0.0
    %v2665 = vand.u32 %v2499, 4294901760
    %2666 = vmatmul.mubr.f32.gmra.mxu0 %v2665
    %v2667 = vpop.f32.mrf.mxu0
    %v2668 = vadd.f32 %v2577, %v2667
    %v2669 = vpop.f32.mrf.mxu0
    %2670 = vdwg.mxu0
    %2671 = vmatprep.subr.mxu0 0.0
    %2672 = vmatpush1.msra.mxu0 0.0
    %2673 = vmatprep.subr.mxu0 0.0
    %2674 = vmatpush1.msra.mxu0 0.0
    %2675 = vmatprep.subr.mxu0 0.0
    %2676 = vmatpush1.msra.mxu0 0.0
    %2677 = vmatprep.subr.mxu0 0.0
    %2678 = vmatpush1.msra.mxu0 0.0
    %2679 = vmatprep.subr.mxu0 0.0
    %2680 = vmatpush1.msra.mxu0 0.0
    %2681 = vmatprep.subr.mxu0 0.0
    %2682 = vmatpush1.msra.mxu0 0.0
    %2683 = vmatprep.subr.mxu0 0.0
    %2684 = vmatpush1.msra.mxu0 0.0
    %2685 = vmatprep.subr.mxu0 0.0
    %2686 = vmatpush1.msra.mxu0 0.0
    %2687 = vmatprep.subr.mxu0 0.0
    %2688 = vmatpush1.msra.mxu0 0.0
    %2689 = vmatprep.subr.mxu0 0.0
    %2690 = vmatpush1.msra.mxu0 0.0
    %2691 = vmatprep.subr.mxu0 0.0
    %2692 = vmatpush1.msra.mxu0 0.0
    %2693 = vmatprep.subr.mxu0 0.0
    %2694 = vmatpush1.msra.mxu0 0.0
    %2695 = vmatprep.subr.mxu0 0.0
    %v2696 = vand.u32 %v71, 4294901760
    %v2697 = vsub.f32 %v71, %v2696
    %2698 = vmatpush1.msra.mxu0 %v2697
    %2699 = vmatprep.subr.mxu0 0.0
    %v2700 = vand.u32 %v70, 4294901760
    %v2701 = vsub.f32 %v70, %v2700
    %2702 = vmatpush1.msra.mxu0 %v2701
    %2703 = vmatprep.subr.mxu0 0.0
    %v2704 = vand.u32 %v69, 4294901760
    %v2705 = vsub.f32 %v69, %v2704
    %2706 = vmatpush1.msra.mxu0 %v2705
    %2707 = vmatprep.subr.mxu0 0.0
    %v2708 = vand.u32 %v68, 4294901760
    %v2709 = vsub.f32 %v68, %v2708
    %2710 = vmatpush1.msra.mxu0 %v2709
    %2711 = vmatprep.subr.mxu0 0.0
    %2712 = vmatpush2.msra.mxu0 0.0
    %2713 = vmatprep.subr.mxu0 0.0
    %2714 = vmatpush2.msra.mxu0 0.0
    %2715 = vmatprep.subr.mxu0 0.0
    %2716 = vmatpush2.msra.mxu0 0.0
    %2717 = vmatprep.subr.mxu0 0.0
    %2718 = vmatpush2.msra.mxu0 0.0
    %2719 = vmatprep.subr.mxu0 0.0
    %2720 = vmatpush2.msra.mxu0 0.0
    %2721 = vmatprep.subr.mxu0 0.0
    %2722 = vmatpush2.msra.mxu0 0.0
    %2723 = vmatprep.subr.mxu0 0.0
    %2724 = vmatpush2.msra.mxu0 0.0
    %2725 = vmatprep.subr.mxu0 0.0
    %2726 = vmatpush2.msra.mxu0 0.0
    %2727 = vmatprep.subr.mxu0 0.0
    %2728 = vmatpush2.msra.mxu0 0.0
    %2729 = vmatprep.subr.mxu0 0.0
    %2730 = vmatpush2.msra.mxu0 0.0
    %2731 = vmatprep.subr.mxu0 0.0
    %2732 = vmatpush2.msra.mxu0 0.0
    %2733 = vmatprep.subr.mxu0 0.0
    %2734 = vmatpush2.msra.mxu0 0.0
    %2735 = vmatprep.subr.mxu0 0.0
    %2736 = vmatpush2.msra.mxu0 0.0
    %2737 = vmatprep.subr.mxu0 0.0
    %2738 = vmatpush2.msra.mxu0 0.0
    %2739 = vmatprep.subr.mxu0 0.0
    %2740 = vmatpush2.msra.mxu0 0.0
    %2741 = vmatprep.subr.mxu0 0.0
    %2742 = vmatpush2.msra.mxu0 0.0
    %2743 = vmatprep.mubr.f32.mxu0 0.0
    %v2744 = vand.u32 %v2499, 4294901760
    %v2745 = vsub.f32 %v2499, %v2744
    %2746 = vmatmul.mubr.f32.gmra.mxu0 %v2745
    %v2747 = vpop.f32.mrf.mxu0
    %v2748 = vadd.f32 %v2668, %v2747
    %v2749 = vpop.f32.mrf.mxu0
    %2750 = vdwg.mxu0
    %2751 = vmatprep.subr.mxu0 0.0
    %2752 = vmatpush1.msra.mxu0 0.0
    %2753 = vmatprep.subr.mxu0 0.0
    %2754 = vmatpush1.msra.mxu0 0.0
    %2755 = vmatprep.subr.mxu0 0.0
    %2756 = vmatpush1.msra.mxu0 0.0
    %2757 = vmatprep.subr.mxu0 0.0
    %2758 = vmatpush1.msra.mxu0 0.0
    %2759 = vmatprep.subr.mxu0 0.0
    %2760 = vmatpush1.msra.mxu0 0.0
    %2761 = vmatprep.subr.mxu0 0.0
    %2762 = vmatpush1.msra.mxu0 0.0
    %2763 = vmatprep.subr.mxu0 0.0
    %2764 = vmatpush1.msra.mxu0 0.0
    %2765 = vmatprep.subr.mxu0 0.0
    %2766 = vmatpush1.msra.mxu0 0.0
    %2767 = vmatprep.subr.mxu0 0.0
    %2768 = vmatpush1.msra.mxu0 0.0
    %2769 = vmatprep.subr.mxu0 0.0
    %2770 = vmatpush1.msra.mxu0 0.0
    %2771 = vmatprep.subr.mxu0 0.0
    %2772 = vmatpush1.msra.mxu0 0.0
    %2773 = vmatprep.subr.mxu0 0.0
    %2774 = vmatpush1.msra.mxu0 0.0
    %2775 = vmatprep.subr.mxu0 0.0
    %v2776 = vand.u32 %v71, 4294901760
    %2777 = vmatpush1.msra.mxu0 %v2776
    %2778 = vmatprep.subr.mxu0 0.0
    %v2779 = vand.u32 %v70, 4294901760
    %2780 = vmatpush1.msra.mxu0 %v2779
    %2781 = vmatprep.subr.mxu0 0.0
    %v2782 = vand.u32 %v69, 4294901760
    %2783 = vmatpush1.msra.mxu0 %v2782
    %2784 = vmatprep.subr.mxu0 0.0
    %v2785 = vand.u32 %v68, 4294901760
    %2786 = vmatpush1.msra.mxu0 %v2785
    %2787 = vmatprep.subr.mxu0 0.0
    %2788 = vmatpush2.msra.mxu0 0.0
    %2789 = vmatprep.subr.mxu0 0.0
    %2790 = vmatpush2.msra.mxu0 0.0
    %2791 = vmatprep.subr.mxu0 0.0
    %2792 = vmatpush2.msra.mxu0 0.0
    %2793 = vmatprep.subr.mxu0 0.0
    %2794 = vmatpush2.msra.mxu0 0.0
    %2795 = vmatprep.subr.mxu0 0.0
    %2796 = vmatpush2.msra.mxu0 0.0
    %2797 = vmatprep.subr.mxu0 0.0
    %2798 = vmatpush2.msra.mxu0 0.0
    %2799 = vmatprep.subr.mxu0 0.0
    %2800 = vmatpush2.msra.mxu0 0.0
    %2801 = vmatprep.subr.mxu0 0.0
    %2802 = vmatpush2.msra.mxu0 0.0
    %2803 = vmatprep.subr.mxu0 0.0
    %2804 = vmatpush2.msra.mxu0 0.0
    %2805 = vmatprep.subr.mxu0 0.0
    %2806 = vmatpush2.msra.mxu0 0.0
    %2807 = vmatprep.subr.mxu0 0.0
    %2808 = vmatpush2.msra.mxu0 0.0
    %2809 = vmatprep.subr.mxu0 0.0
    %2810 = vmatpush2.msra.mxu0 0.0
    %2811 = vmatprep.subr.mxu0 0.0
    %2812 = vmatpush2.msra.mxu0 0.0
    %2813 = vmatprep.subr.mxu0 0.0
    %2814 = vmatpush2.msra.mxu0 0.0
    %2815 = vmatprep.subr.mxu0 0.0
    %2816 = vmatpush2.msra.mxu0 0.0
    %2817 = vmatprep.subr.mxu0 0.0
    %2818 = vmatpush2.msra.mxu0 0.0
    %2819 = vmatprep.mubr.f32.mxu0 0.0
    %v2820 = vand.u32 %v2499, 4294901760
    %v2821 = vsub.f32 %v2499, %v2820
    %v2822 = vand.u32 %v2821, 4294901760
    %2823 = vmatmul.mubr.f32.gmra.mxu0 %v2822
    %v2824 = vpop.f32.mrf.mxu0
    %v2825 = vadd.f32 %v2748, %v2824
    %v2826 = vpop.f32.mrf.mxu0
    %2827 = vdwg.mxu0
    %2828 = vmatprep.subr.mxu0 0.0
    %2829 = vmatpush1.msra.mxu0 0.0
    %2830 = vmatprep.subr.mxu0 0.0
    %2831 = vmatpush1.msra.mxu0 0.0
    %2832 = vmatprep.subr.mxu0 0.0
    %2833 = vmatpush1.msra.mxu0 0.0
    %2834 = vmatprep.subr.mxu0 0.0
    %2835 = vmatpush1.msra.mxu0 0.0
    %2836 = vmatprep.subr.mxu0 0.0
    %2837 = vmatpush1.msra.mxu0 0.0
    %2838 = vmatprep.subr.mxu0 0.0
    %2839 = vmatpush1.msra.mxu0 0.0
    %2840 = vmatprep.subr.mxu0 0.0
    %2841 = vmatpush1.msra.mxu0 0.0
    %2842 = vmatprep.subr.mxu0 0.0
    %2843 = vmatpush1.msra.mxu0 0.0
    %2844 = vmatprep.subr.mxu0 0.0
    %2845 = vmatpush1.msra.mxu0 0.0
    %2846 = vmatprep.subr.mxu0 0.0
    %2847 = vmatpush1.msra.mxu0 0.0
    %2848 = vmatprep.subr.mxu0 0.0
    %2849 = vmatpush1.msra.mxu0 0.0
    %2850 = vmatprep.subr.mxu0 0.0
    %2851 = vmatpush1.msra.mxu0 0.0
    %2852 = vmatprep.subr.mxu0 0.0
    %v2853 = vand.u32 %v71, 4294901760
    %v2854 = vsub.f32 %v71, %v2853
    %v2855 = vand.u32 %v2854, 4294901760
    %2856 = vmatpush1.msra.mxu0 %v2855
    %2857 = vmatprep.subr.mxu0 0.0
    %v2858 = vand.u32 %v70, 4294901760
    %v2859 = vsub.f32 %v70, %v2858
    %v2860 = vand.u32 %v2859, 4294901760
    %2861 = vmatpush1.msra.mxu0 %v2860
    %2862 = vmatprep.subr.mxu0 0.0
    %v2863 = vand.u32 %v69, 4294901760
    %v2864 = vsub.f32 %v69, %v2863
    %v2865 = vand.u32 %v2864, 4294901760
    %2866 = vmatpush1.msra.mxu0 %v2865
    %2867 = vmatprep.subr.mxu0 0.0
    %v2868 = vand.u32 %v68, 4294901760
    %v2869 = vsub.f32 %v68, %v2868
    %v2870 = vand.u32 %v2869, 4294901760
    %2871 = vmatpush1.msra.mxu0 %v2870
    %2872 = vmatprep.subr.mxu0 0.0
    %2873 = vmatpush2.msra.mxu0 0.0
    %2874 = vmatprep.subr.mxu0 0.0
    %2875 = vmatpush2.msra.mxu0 0.0
    %2876 = vmatprep.subr.mxu0 0.0
    %2877 = vmatpush2.msra.mxu0 0.0
    %2878 = vmatprep.subr.mxu0 0.0
    %2879 = vmatpush2.msra.mxu0 0.0
    %2880 = vmatprep.subr.mxu0 0.0
    %2881 = vmatpush2.msra.mxu0 0.0
    %2882 = vmatprep.subr.mxu0 0.0
    %2883 = vmatpush2.msra.mxu0 0.0
    %2884 = vmatprep.subr.mxu0 0.0
    %2885 = vmatpush2.msra.mxu0 0.0
    %2886 = vmatprep.subr.mxu0 0.0
    %2887 = vmatpush2.msra.mxu0 0.0
    %2888 = vmatprep.subr.mxu0 0.0
    %2889 = vmatpush2.msra.mxu0 0.0
    %2890 = vmatprep.subr.mxu0 0.0
    %2891 = vmatpush2.msra.mxu0 0.0
    %2892 = vmatprep.subr.mxu0 0.0
    %2893 = vmatpush2.msra.mxu0 0.0
    %2894 = vmatprep.subr.mxu0 0.0
    %2895 = vmatpush2.msra.mxu0 0.0
    %2896 = vmatprep.subr.mxu0 0.0
    %2897 = vmatpush2.msra.mxu0 0.0
    %2898 = vmatprep.subr.mxu0 0.0
    %2899 = vmatpush2.msra.mxu0 0.0
    %2900 = vmatprep.subr.mxu0 0.0
    %2901 = vmatpush2.msra.mxu0 0.0
    %2902 = vmatprep.subr.mxu0 0.0
    %2903 = vmatpush2.msra.mxu0 0.0
    %2904 = vmatprep.mubr.f32.mxu0 0.0
    %v2905 = vand.u32 %v2499, 4294901760
    %2906 = vmatmul.mubr.f32.gmra.mxu0 %v2905
    %v2907 = vpop.f32.mrf.mxu0
    %v2908 = vadd.f32 %v2825, %v2907
    %v2909 = vpop.f32.mrf.mxu0
    %2910 = vdwg.mxu0
    %2911 = vmatprep.subr.mxu0 0.0
    %2912 = vmatpush1.msra.mxu0 0.0
    %2913 = vmatprep.subr.mxu0 0.0
    %2914 = vmatpush1.msra.mxu0 0.0
    %2915 = vmatprep.subr.mxu0 0.0
    %2916 = vmatpush1.msra.mxu0 0.0
    %2917 = vmatprep.subr.mxu0 0.0
    %2918 = vmatpush1.msra.mxu0 0.0
    %2919 = vmatprep.subr.mxu0 0.0
    %2920 = vmatpush1.msra.mxu0 0.0
    %2921 = vmatprep.subr.mxu0 0.0
    %2922 = vmatpush1.msra.mxu0 0.0
    %2923 = vmatprep.subr.mxu0 0.0
    %2924 = vmatpush1.msra.mxu0 0.0
    %2925 = vmatprep.subr.mxu0 0.0
    %2926 = vmatpush1.msra.mxu0 0.0
    %2927 = vmatprep.subr.mxu0 0.0
    %2928 = vmatpush1.msra.mxu0 0.0
    %2929 = vmatprep.subr.mxu0 0.0
    %2930 = vmatpush1.msra.mxu0 0.0
    %2931 = vmatprep.subr.mxu0 0.0
    %2932 = vmatpush1.msra.mxu0 0.0
    %2933 = vmatprep.subr.mxu0 0.0
    %2934 = vmatpush1.msra.mxu0 0.0
    %2935 = vmatprep.subr.mxu0 0.0
    %v2936 = vand.u32 %v71, 4294901760
    %2937 = vmatpush1.msra.mxu0 %v2936
    %2938 = vmatprep.subr.mxu0 0.0
    %v2939 = vand.u32 %v70, 4294901760
    %2940 = vmatpush1.msra.mxu0 %v2939
    %2941 = vmatprep.subr.mxu0 0.0
    %v2942 = vand.u32 %v69, 4294901760
    %2943 = vmatpush1.msra.mxu0 %v2942
    %2944 = vmatprep.subr.mxu0 0.0
    %v2945 = vand.u32 %v68, 4294901760
    %2946 = vmatpush1.msra.mxu0 %v2945
    %2947 = vmatprep.subr.mxu0 0.0
    %2948 = vmatpush2.msra.mxu0 0.0
    %2949 = vmatprep.subr.mxu0 0.0
    %2950 = vmatpush2.msra.mxu0 0.0
    %2951 = vmatprep.subr.mxu0 0.0
    %2952 = vmatpush2.msra.mxu0 0.0
    %2953 = vmatprep.subr.mxu0 0.0
    %2954 = vmatpush2.msra.mxu0 0.0
    %2955 = vmatprep.subr.mxu0 0.0
    %2956 = vmatpush2.msra.mxu0 0.0
    %2957 = vmatprep.subr.mxu0 0.0
    %2958 = vmatpush2.msra.mxu0 0.0
    %2959 = vmatprep.subr.mxu0 0.0
    %2960 = vmatpush2.msra.mxu0 0.0
    %2961 = vmatprep.subr.mxu0 0.0
    %2962 = vmatpush2.msra.mxu0 0.0
    %2963 = vmatprep.subr.mxu0 0.0
    %2964 = vmatpush2.msra.mxu0 0.0
    %2965 = vmatprep.subr.mxu0 0.0
    %2966 = vmatpush2.msra.mxu0 0.0
    %2967 = vmatprep.subr.mxu0 0.0
    %2968 = vmatpush2.msra.mxu0 0.0
    %2969 = vmatprep.subr.mxu0 0.0
    %2970 = vmatpush2.msra.mxu0 0.0
    %2971 = vmatprep.subr.mxu0 0.0
    %2972 = vmatpush2.msra.mxu0 0.0
    %2973 = vmatprep.subr.mxu0 0.0
    %2974 = vmatpush2.msra.mxu0 0.0
    %2975 = vmatprep.subr.mxu0 0.0
    %2976 = vmatpush2.msra.mxu0 0.0
    %2977 = vmatprep.subr.mxu0 0.0
    %2978 = vmatpush2.msra.mxu0 0.0
    %2979 = vmatprep.mubr.f32.mxu0 0.0
    %v2980 = vand.u32 %v2499, 4294901760
    %2981 = vmatmul.mubr.f32.gmra.mxu0 %v2980
    %v2982 = vpop.f32.mrf.mxu0
    %v2983 = vadd.f32 %v2908, %v2982
    %v2984 = vpop.f32.mrf.mxu0
    %2985 = vdwg.mxu0
    %v2986 = vadd.f32 %v973, %v2983
    %v2987 = vtanh.pop %v2986
    %vm2988 = vcmp.eq.s32.totalorder %v1005, 3
    %v2989 = vsel %vm2988, 1, 0
    %2990 = vset.pattern.permute.xlu0 0
    %2991 = vperm.xlu0 %2990, %v2989
    %v2992 = vpop.permute.xlu0 %2991
    %vm2993 = vcmp.eq.s32.totalorder %v2992, 1
    %v2994 = vsel %vm2993, %v2987, %v2497
    %v2996 = vsel %vm1006, %v2987, 0
    %2998 = vmatprep.subr.mxu0 0.0
    %2999 = vmatpush1.msra.mxu0 0.0
    %3000 = vmatprep.subr.mxu0 0.0
    %3001 = vmatpush1.msra.mxu0 0.0
    %3002 = vmatprep.subr.mxu0 0.0
    %3003 = vmatpush1.msra.mxu0 0.0
    %3004 = vmatprep.subr.mxu0 0.0
    %3005 = vmatpush1.msra.mxu0 0.0
    %3006 = vmatprep.subr.mxu0 0.0
    %3007 = vmatpush1.msra.mxu0 0.0
    %3008 = vmatprep.subr.mxu0 0.0
    %3009 = vmatpush1.msra.mxu0 0.0
    %3010 = vmatprep.subr.mxu0 0.0
    %3011 = vmatpush1.msra.mxu0 0.0
    %3012 = vmatprep.subr.mxu0 0.0
    %3013 = vmatpush1.msra.mxu0 0.0
    %3014 = vmatprep.subr.mxu0 0.0
    %3015 = vmatpush1.msra.mxu0 0.0
    %3016 = vmatprep.subr.mxu0 0.0
    %3017 = vmatpush1.msra.mxu0 0.0
    %3018 = vmatprep.subr.mxu0 0.0
    %3019 = vmatpush1.msra.mxu0 0.0
    %3020 = vmatprep.subr.mxu0 0.0
    %3021 = vmatpush1.msra.mxu0 0.0
    %3022 = vmatprep.subr.mxu0 0.0
    %v3023 = vand.u32 %v71, 4294901760
    %3024 = vmatpush1.msra.mxu0 %v3023
    %3025 = vmatprep.subr.mxu0 0.0
    %v3026 = vand.u32 %v70, 4294901760
    %3027 = vmatpush1.msra.mxu0 %v3026
    %3028 = vmatprep.subr.mxu0 0.0
    %v3029 = vand.u32 %v69, 4294901760
    %3030 = vmatpush1.msra.mxu0 %v3029
    %3031 = vmatprep.subr.mxu0 0.0
    %v3032 = vand.u32 %v68, 4294901760
    %3033 = vmatpush1.msra.mxu0 %v3032
    %3034 = vmatprep.subr.mxu0 0.0
    %3035 = vmatpush2.msra.mxu0 0.0
    %3036 = vmatprep.subr.mxu0 0.0
    %3037 = vmatpush2.msra.mxu0 0.0
    %3038 = vmatprep.subr.mxu0 0.0
    %3039 = vmatpush2.msra.mxu0 0.0
    %3040 = vmatprep.subr.mxu0 0.0
    %3041 = vmatpush2.msra.mxu0 0.0
    %3042 = vmatprep.subr.mxu0 0.0
    %3043 = vmatpush2.msra.mxu0 0.0
    %3044 = vmatprep.subr.mxu0 0.0
    %3045 = vmatpush2.msra.mxu0 0.0
    %3046 = vmatprep.subr.mxu0 0.0
    %3047 = vmatpush2.msra.mxu0 0.0
    %3048 = vmatprep.subr.mxu0 0.0
    %3049 = vmatpush2.msra.mxu0 0.0
    %3050 = vmatprep.subr.mxu0 0.0
    %3051 = vmatpush2.msra.mxu0 0.0
    %3052 = vmatprep.subr.mxu0 0.0
    %3053 = vmatpush2.msra.mxu0 0.0
    %3054 = vmatprep.subr.mxu0 0.0
    %3055 = vmatpush2.msra.mxu0 0.0
    %3056 = vmatprep.subr.mxu0 0.0
    %3057 = vmatpush2.msra.mxu0 0.0
    %3058 = vmatprep.subr.mxu0 0.0
    %3059 = vmatpush2.msra.mxu0 0.0
    %3060 = vmatprep.subr.mxu0 0.0
    %3061 = vmatpush2.msra.mxu0 0.0
    %3062 = vmatprep.subr.mxu0 0.0
    %3063 = vmatpush2.msra.mxu0 0.0
    %3064 = vmatprep.subr.mxu0 0.0
    %3065 = vmatpush2.msra.mxu0 0.0
    %3066 = vmatprep.mubr.f32.mxu0 0.0
    %v3067 = vand.u32 %v2996, 4294901760
    %v3068 = vsub.f32 %v2996, %v3067
    %v3069 = vand.u32 %v3068, 4294901760
    %v3070 = vsub.f32 %v3068, %v3069
    %v3071 = vand.u32 %v3070, 4294901760
    %3072 = vmatmul.mubr.f32.gmra.mxu0 %v3071
    %v3073 = vpop.f32.mrf.mxu0
    %v3074 = vadd.f32 0.0, %v3073
    %v3075 = vpop.f32.mrf.mxu0
    %3076 = vdwg.mxu0
    %3077 = vmatprep.subr.mxu0 0.0
    %3078 = vmatpush1.msra.mxu0 0.0
    %3079 = vmatprep.subr.mxu0 0.0
    %3080 = vmatpush1.msra.mxu0 0.0
    %3081 = vmatprep.subr.mxu0 0.0
    %3082 = vmatpush1.msra.mxu0 0.0
    %3083 = vmatprep.subr.mxu0 0.0
    %3084 = vmatpush1.msra.mxu0 0.0
    %3085 = vmatprep.subr.mxu0 0.0
    %3086 = vmatpush1.msra.mxu0 0.0
    %3087 = vmatprep.subr.mxu0 0.0
    %3088 = vmatpush1.msra.mxu0 0.0
    %3089 = vmatprep.subr.mxu0 0.0
    %3090 = vmatpush1.msra.mxu0 0.0
    %3091 = vmatprep.subr.mxu0 0.0
    %3092 = vmatpush1.msra.mxu0 0.0
    %3093 = vmatprep.subr.mxu0 0.0
    %3094 = vmatpush1.msra.mxu0 0.0
    %3095 = vmatprep.subr.mxu0 0.0
    %3096 = vmatpush1.msra.mxu0 0.0
    %3097 = vmatprep.subr.mxu0 0.0
    %3098 = vmatpush1.msra.mxu0 0.0
    %3099 = vmatprep.subr.mxu0 0.0
    %3100 = vmatpush1.msra.mxu0 0.0
    %3101 = vmatprep.subr.mxu0 0.0
    %v3102 = vand.u32 %v71, 4294901760
    %v3103 = vsub.f32 %v71, %v3102
    %v3104 = vand.u32 %v3103, 4294901760
    %v3105 = vsub.f32 %v3103, %v3104
    %v3106 = vand.u32 %v3105, 4294901760
    %3107 = vmatpush1.msra.mxu0 %v3106
    %3108 = vmatprep.subr.mxu0 0.0
    %v3109 = vand.u32 %v70, 4294901760
    %v3110 = vsub.f32 %v70, %v3109
    %v3111 = vand.u32 %v3110, 4294901760
    %v3112 = vsub.f32 %v3110, %v3111
    %v3113 = vand.u32 %v3112, 4294901760
    %3114 = vmatpush1.msra.mxu0 %v3113
    %3115 = vmatprep.subr.mxu0 0.0
    %v3116 = vand.u32 %v69, 4294901760
    %v3117 = vsub.f32 %v69, %v3116
    %v3118 = vand.u32 %v3117, 4294901760
    %v3119 = vsub.f32 %v3117, %v3118
    %v3120 = vand.u32 %v3119, 4294901760
    %3121 = vmatpush1.msra.mxu0 %v3120
    %3122 = vmatprep.subr.mxu0 0.0
    %v3123 = vand.u32 %v68, 4294901760
    %v3124 = vsub.f32 %v68, %v3123
    %v3125 = vand.u32 %v3124, 4294901760
    %v3126 = vsub.f32 %v3124, %v3125
    %v3127 = vand.u32 %v3126, 4294901760
    %3128 = vmatpush1.msra.mxu0 %v3127
    %3129 = vmatprep.subr.mxu0 0.0
    %3130 = vmatpush2.msra.mxu0 0.0
    %3131 = vmatprep.subr.mxu0 0.0
    %3132 = vmatpush2.msra.mxu0 0.0
    %3133 = vmatprep.subr.mxu0 0.0
    %3134 = vmatpush2.msra.mxu0 0.0
    %3135 = vmatprep.subr.mxu0 0.0
    %3136 = vmatpush2.msra.mxu0 0.0
    %3137 = vmatprep.subr.mxu0 0.0
    %3138 = vmatpush2.msra.mxu0 0.0
    %3139 = vmatprep.subr.mxu0 0.0
    %3140 = vmatpush2.msra.mxu0 0.0
    %3141 = vmatprep.subr.mxu0 0.0
    %3142 = vmatpush2.msra.mxu0 0.0
    %3143 = vmatprep.subr.mxu0 0.0
    %3144 = vmatpush2.msra.mxu0 0.0
    %3145 = vmatprep.subr.mxu0 0.0
    %3146 = vmatpush2.msra.mxu0 0.0
    %3147 = vmatprep.subr.mxu0 0.0
    %3148 = vmatpush2.msra.mxu0 0.0
    %3149 = vmatprep.subr.mxu0 0.0
    %3150 = vmatpush2.msra.mxu0 0.0
    %3151 = vmatprep.subr.mxu0 0.0
    %3152 = vmatpush2.msra.mxu0 0.0
    %3153 = vmatprep.subr.mxu0 0.0
    %3154 = vmatpush2.msra.mxu0 0.0
    %3155 = vmatprep.subr.mxu0 0.0
    %3156 = vmatpush2.msra.mxu0 0.0
    %3157 = vmatprep.subr.mxu0 0.0
    %3158 = vmatpush2.msra.mxu0 0.0
    %3159 = vmatprep.subr.mxu0 0.0
    %3160 = vmatpush2.msra.mxu0 0.0
    %3161 = vmatprep.mubr.f32.mxu0 0.0
    %v3162 = vand.u32 %v2996, 4294901760
    %3163 = vmatmul.mubr.f32.gmra.mxu0 %v3162
    %v3164 = vpop.f32.mrf.mxu0
    %v3165 = vadd.f32 %v3074, %v3164
    %v3166 = vpop.f32.mrf.mxu0
    %3167 = vdwg.mxu0
    %3168 = vmatprep.subr.mxu0 0.0
    %3169 = vmatpush1.msra.mxu0 0.0
    %3170 = vmatprep.subr.mxu0 0.0
    %3171 = vmatpush1.msra.mxu0 0.0
    %3172 = vmatprep.subr.mxu0 0.0
    %3173 = vmatpush1.msra.mxu0 0.0
    %3174 = vmatprep.subr.mxu0 0.0
    %3175 = vmatpush1.msra.mxu0 0.0
    %3176 = vmatprep.subr.mxu0 0.0
    %3177 = vmatpush1.msra.mxu0 0.0
    %3178 = vmatprep.subr.mxu0 0.0
    %3179 = vmatpush1.msra.mxu0 0.0
    %3180 = vmatprep.subr.mxu0 0.0
    %3181 = vmatpush1.msra.mxu0 0.0
    %3182 = vmatprep.subr.mxu0 0.0
    %3183 = vmatpush1.msra.mxu0 0.0
    %3184 = vmatprep.subr.mxu0 0.0
    %3185 = vmatpush1.msra.mxu0 0.0
    %3186 = vmatprep.subr.mxu0 0.0
    %3187 = vmatpush1.msra.mxu0 0.0
    %3188 = vmatprep.subr.mxu0 0.0
    %3189 = vmatpush1.msra.mxu0 0.0
    %3190 = vmatprep.subr.mxu0 0.0
    %3191 = vmatpush1.msra.mxu0 0.0
    %3192 = vmatprep.subr.mxu0 0.0
    %v3193 = vand.u32 %v71, 4294901760
    %v3194 = vsub.f32 %v71, %v3193
    %3195 = vmatpush1.msra.mxu0 %v3194
    %3196 = vmatprep.subr.mxu0 0.0
    %v3197 = vand.u32 %v70, 4294901760
    %v3198 = vsub.f32 %v70, %v3197
    %3199 = vmatpush1.msra.mxu0 %v3198
    %3200 = vmatprep.subr.mxu0 0.0
    %v3201 = vand.u32 %v69, 4294901760
    %v3202 = vsub.f32 %v69, %v3201
    %3203 = vmatpush1.msra.mxu0 %v3202
    %3204 = vmatprep.subr.mxu0 0.0
    %v3205 = vand.u32 %v68, 4294901760
    %v3206 = vsub.f32 %v68, %v3205
    %3207 = vmatpush1.msra.mxu0 %v3206
    %3208 = vmatprep.subr.mxu0 0.0
    %3209 = vmatpush2.msra.mxu0 0.0
    %3210 = vmatprep.subr.mxu0 0.0
    %3211 = vmatpush2.msra.mxu0 0.0
    %3212 = vmatprep.subr.mxu0 0.0
    %3213 = vmatpush2.msra.mxu0 0.0
    %3214 = vmatprep.subr.mxu0 0.0
    %3215 = vmatpush2.msra.mxu0 0.0
    %3216 = vmatprep.subr.mxu0 0.0
    %3217 = vmatpush2.msra.mxu0 0.0
    %3218 = vmatprep.subr.mxu0 0.0
    %3219 = vmatpush2.msra.mxu0 0.0
    %3220 = vmatprep.subr.mxu0 0.0
    %3221 = vmatpush2.msra.mxu0 0.0
    %3222 = vmatprep.subr.mxu0 0.0
    %3223 = vmatpush2.msra.mxu0 0.0
    %3224 = vmatprep.subr.mxu0 0.0
    %3225 = vmatpush2.msra.mxu0 0.0
    %3226 = vmatprep.subr.mxu0 0.0
    %3227 = vmatpush2.msra.mxu0 0.0
    %3228 = vmatprep.subr.mxu0 0.0
    %3229 = vmatpush2.msra.mxu0 0.0
    %3230 = vmatprep.subr.mxu0 0.0
    %3231 = vmatpush2.msra.mxu0 0.0
    %3232 = vmatprep.subr.mxu0 0.0
    %3233 = vmatpush2.msra.mxu0 0.0
    %3234 = vmatprep.subr.mxu0 0.0
    %3235 = vmatpush2.msra.mxu0 0.0
    %3236 = vmatprep.subr.mxu0 0.0
    %3237 = vmatpush2.msra.mxu0 0.0
    %3238 = vmatprep.subr.mxu0 0.0
    %3239 = vmatpush2.msra.mxu0 0.0
    %3240 = vmatprep.mubr.f32.mxu0 0.0
    %v3241 = vand.u32 %v2996, 4294901760
    %v3242 = vsub.f32 %v2996, %v3241
    %3243 = vmatmul.mubr.f32.gmra.mxu0 %v3242
    %v3244 = vpop.f32.mrf.mxu0
    %v3245 = vadd.f32 %v3165, %v3244
    %v3246 = vpop.f32.mrf.mxu0
    %3247 = vdwg.mxu0
    %3248 = vmatprep.subr.mxu0 0.0
    %3249 = vmatpush1.msra.mxu0 0.0
    %3250 = vmatprep.subr.mxu0 0.0
    %3251 = vmatpush1.msra.mxu0 0.0
    %3252 = vmatprep.subr.mxu0 0.0
    %3253 = vmatpush1.msra.mxu0 0.0
    %3254 = vmatprep.subr.mxu0 0.0
    %3255 = vmatpush1.msra.mxu0 0.0
    %3256 = vmatprep.subr.mxu0 0.0
    %3257 = vmatpush1.msra.mxu0 0.0
    %3258 = vmatprep.subr.mxu0 0.0
    %3259 = vmatpush1.msra.mxu0 0.0
    %3260 = vmatprep.subr.mxu0 0.0
    %3261 = vmatpush1.msra.mxu0 0.0
    %3262 = vmatprep.subr.mxu0 0.0
    %3263 = vmatpush1.msra.mxu0 0.0
    %3264 = vmatprep.subr.mxu0 0.0
    %3265 = vmatpush1.msra.mxu0 0.0
    %3266 = vmatprep.subr.mxu0 0.0
    %3267 = vmatpush1.msra.mxu0 0.0
    %3268 = vmatprep.subr.mxu0 0.0
    %3269 = vmatpush1.msra.mxu0 0.0
    %3270 = vmatprep.subr.mxu0 0.0
    %3271 = vmatpush1.msra.mxu0 0.0
    %3272 = vmatprep.subr.mxu0 0.0
    %v3273 = vand.u32 %v71, 4294901760
    %3274 = vmatpush1.msra.mxu0 %v3273
    %3275 = vmatprep.subr.mxu0 0.0
    %v3276 = vand.u32 %v70, 4294901760
    %3277 = vmatpush1.msra.mxu0 %v3276
    %3278 = vmatprep.subr.mxu0 0.0
    %v3279 = vand.u32 %v69, 4294901760
    %3280 = vmatpush1.msra.mxu0 %v3279
    %3281 = vmatprep.subr.mxu0 0.0
    %v3282 = vand.u32 %v68, 4294901760
    %3283 = vmatpush1.msra.mxu0 %v3282
    %3284 = vmatprep.subr.mxu0 0.0
    %3285 = vmatpush2.msra.mxu0 0.0
    %3286 = vmatprep.subr.mxu0 0.0
    %3287 = vmatpush2.msra.mxu0 0.0
    %3288 = vmatprep.subr.mxu0 0.0
    %3289 = vmatpush2.msra.mxu0 0.0
    %3290 = vmatprep.subr.mxu0 0.0
    %3291 = vmatpush2.msra.mxu0 0.0
    %3292 = vmatprep.subr.mxu0 0.0
    %3293 = vmatpush2.msra.mxu0 0.0
    %3294 = vmatprep.subr.mxu0 0.0
    %3295 = vmatpush2.msra.mxu0 0.0
    %3296 = vmatprep.subr.mxu0 0.0
    %3297 = vmatpush2.msra.mxu0 0.0
    %3298 = vmatprep.subr.mxu0 0.0
    %3299 = vmatpush2.msra.mxu0 0.0
    %3300 = vmatprep.subr.mxu0 0.0
    %3301 = vmatpush2.msra.mxu0 0.0
    %3302 = vmatprep.subr.mxu0 0.0
    %3303 = vmatpush2.msra.mxu0 0.0
    %3304 = vmatprep.subr.mxu0 0.0
    %3305 = vmatpush2.msra.mxu0 0.0
    %3306 = vmatprep.subr.mxu0 0.0
    %3307 = vmatpush2.msra.mxu0 0.0
    %3308 = vmatprep.subr.mxu0 0.0
    %3309 = vmatpush2.msra.mxu0 0.0
    %3310 = vmatprep.subr.mxu0 0.0
    %3311 = vmatpush2.msra.mxu0 0.0
    %3312 = vmatprep.subr.mxu0 0.0
    %3313 = vmatpush2.msra.mxu0 0.0
    %3314 = vmatprep.subr.mxu0 0.0
    %3315 = vmatpush2.msra.mxu0 0.0
    %3316 = vmatprep.mubr.f32.mxu0 0.0
    %v3317 = vand.u32 %v2996, 4294901760
    %v3318 = vsub.f32 %v2996, %v3317
    %v3319 = vand.u32 %v3318, 4294901760
    %3320 = vmatmul.mubr.f32.gmra.mxu0 %v3319
    %v3321 = vpop.f32.mrf.mxu0
    %v3322 = vadd.f32 %v3245, %v3321
    %v3323 = vpop.f32.mrf.mxu0
    %3324 = vdwg.mxu0
    %3325 = vmatprep.subr.mxu0 0.0
    %3326 = vmatpush1.msra.mxu0 0.0
    %3327 = vmatprep.subr.mxu0 0.0
    %3328 = vmatpush1.msra.mxu0 0.0
    %3329 = vmatprep.subr.mxu0 0.0
    %3330 = vmatpush1.msra.mxu0 0.0
    %3331 = vmatprep.subr.mxu0 0.0
    %3332 = vmatpush1.msra.mxu0 0.0
    %3333 = vmatprep.subr.mxu0 0.0
    %3334 = vmatpush1.msra.mxu0 0.0
    %3335 = vmatprep.subr.mxu0 0.0
    %3336 = vmatpush1.msra.mxu0 0.0
    %3337 = vmatprep.subr.mxu0 0.0
    %3338 = vmatpush1.msra.mxu0 0.0
    %3339 = vmatprep.subr.mxu0 0.0
    %3340 = vmatpush1.msra.mxu0 0.0
    %3341 = vmatprep.subr.mxu0 0.0
    %3342 = vmatpush1.msra.mxu0 0.0
    %3343 = vmatprep.subr.mxu0 0.0
    %3344 = vmatpush1.msra.mxu0 0.0
    %3345 = vmatprep.subr.mxu0 0.0
    %3346 = vmatpush1.msra.mxu0 0.0
    %3347 = vmatprep.subr.mxu0 0.0
    %3348 = vmatpush1.msra.mxu0 0.0
    %3349 = vmatprep.subr.mxu0 0.0
    %v3350 = vand.u32 %v71, 4294901760
    %v3351 = vsub.f32 %v71, %v3350
    %v3352 = vand.u32 %v3351, 4294901760
    %3353 = vmatpush1.msra.mxu0 %v3352
    %3354 = vmatprep.subr.mxu0 0.0
    %v3355 = vand.u32 %v70, 4294901760
    %v3356 = vsub.f32 %v70, %v3355
    %v3357 = vand.u32 %v3356, 4294901760
    %3358 = vmatpush1.msra.mxu0 %v3357
    %3359 = vmatprep.subr.mxu0 0.0
    %v3360 = vand.u32 %v69, 4294901760
    %v3361 = vsub.f32 %v69, %v3360
    %v3362 = vand.u32 %v3361, 4294901760
    %3363 = vmatpush1.msra.mxu0 %v3362
    %3364 = vmatprep.subr.mxu0 0.0
    %v3365 = vand.u32 %v68, 4294901760
    %v3366 = vsub.f32 %v68, %v3365
    %v3367 = vand.u32 %v3366, 4294901760
    %3368 = vmatpush1.msra.mxu0 %v3367
    %3369 = vmatprep.subr.mxu0 0.0
    %3370 = vmatpush2.msra.mxu0 0.0
    %3371 = vmatprep.subr.mxu0 0.0
    %3372 = vmatpush2.msra.mxu0 0.0
    %3373 = vmatprep.subr.mxu0 0.0
    %3374 = vmatpush2.msra.mxu0 0.0
    %3375 = vmatprep.subr.mxu0 0.0
    %3376 = vmatpush2.msra.mxu0 0.0
    %3377 = vmatprep.subr.mxu0 0.0
    %3378 = vmatpush2.msra.mxu0 0.0
    %3379 = vmatprep.subr.mxu0 0.0
    %3380 = vmatpush2.msra.mxu0 0.0
    %3381 = vmatprep.subr.mxu0 0.0
    %3382 = vmatpush2.msra.mxu0 0.0
    %3383 = vmatprep.subr.mxu0 0.0
    %3384 = vmatpush2.msra.mxu0 0.0
    %3385 = vmatprep.subr.mxu0 0.0
    %3386 = vmatpush2.msra.mxu0 0.0
    %3387 = vmatprep.subr.mxu0 0.0
    %3388 = vmatpush2.msra.mxu0 0.0
    %3389 = vmatprep.subr.mxu0 0.0
    %3390 = vmatpush2.msra.mxu0 0.0
    %3391 = vmatprep.subr.mxu0 0.0
    %3392 = vmatpush2.msra.mxu0 0.0
    %3393 = vmatprep.subr.mxu0 0.0
    %3394 = vmatpush2.msra.mxu0 0.0
    %3395 = vmatprep.subr.mxu0 0.0
    %3396 = vmatpush2.msra.mxu0 0.0
    %3397 = vmatprep.subr.mxu0 0.0
    %3398 = vmatpush2.msra.mxu0 0.0
    %3399 = vmatprep.subr.mxu0 0.0
    %3400 = vmatpush2.msra.mxu0 0.0
    %3401 = vmatprep.mubr.f32.mxu0 0.0
    %v3402 = vand.u32 %v2996, 4294901760
    %3403 = vmatmul.mubr.f32.gmra.mxu0 %v3402
    %v3404 = vpop.f32.mrf.mxu0
    %v3405 = vadd.f32 %v3322, %v3404
    %v3406 = vpop.f32.mrf.mxu0
    %3407 = vdwg.mxu0
    %3408 = vmatprep.subr.mxu0 0.0
    %3409 = vmatpush1.msra.mxu0 0.0
    %3410 = vmatprep.subr.mxu0 0.0
    %3411 = vmatpush1.msra.mxu0 0.0
    %3412 = vmatprep.subr.mxu0 0.0
    %3413 = vmatpush1.msra.mxu0 0.0
    %3414 = vmatprep.subr.mxu0 0.0
    %3415 = vmatpush1.msra.mxu0 0.0
    %3416 = vmatprep.subr.mxu0 0.0
    %3417 = vmatpush1.msra.mxu0 0.0
    %3418 = vmatprep.subr.mxu0 0.0
    %3419 = vmatpush1.msra.mxu0 0.0
    %3420 = vmatprep.subr.mxu0 0.0
    %3421 = vmatpush1.msra.mxu0 0.0
    %3422 = vmatprep.subr.mxu0 0.0
    %3423 = vmatpush1.msra.mxu0 0.0
    %3424 = vmatprep.subr.mxu0 0.0
    %3425 = vmatpush1.msra.mxu0 0.0
    %3426 = vmatprep.subr.mxu0 0.0
    %3427 = vmatpush1.msra.mxu0 0.0
    %3428 = vmatprep.subr.mxu0 0.0
    %3429 = vmatpush1.msra.mxu0 0.0
    %3430 = vmatprep.subr.mxu0 0.0
    %3431 = vmatpush1.msra.mxu0 0.0
    %3432 = vmatprep.subr.mxu0 0.0
    %v3433 = vand.u32 %v71, 4294901760
    %3434 = vmatpush1.msra.mxu0 %v3433
    %3435 = vmatprep.subr.mxu0 0.0
    %v3436 = vand.u32 %v70, 4294901760
    %3437 = vmatpush1.msra.mxu0 %v3436
    %3438 = vmatprep.subr.mxu0 0.0
    %v3439 = vand.u32 %v69, 4294901760
    %3440 = vmatpush1.msra.mxu0 %v3439
    %3441 = vmatprep.subr.mxu0 0.0
    %v3442 = vand.u32 %v68, 4294901760
    %3443 = vmatpush1.msra.mxu0 %v3442
    %3444 = vmatprep.subr.mxu0 0.0
    %3445 = vmatpush2.msra.mxu0 0.0
    %3446 = vmatprep.subr.mxu0 0.0
    %3447 = vmatpush2.msra.mxu0 0.0
    %3448 = vmatprep.subr.mxu0 0.0
    %3449 = vmatpush2.msra.mxu0 0.0
    %3450 = vmatprep.subr.mxu0 0.0
    %3451 = vmatpush2.msra.mxu0 0.0
    %3452 = vmatprep.subr.mxu0 0.0
    %3453 = vmatpush2.msra.mxu0 0.0
    %3454 = vmatprep.subr.mxu0 0.0
    %3455 = vmatpush2.msra.mxu0 0.0
    %3456 = vmatprep.subr.mxu0 0.0
    %3457 = vmatpush2.msra.mxu0 0.0
    %3458 = vmatprep.subr.mxu0 0.0
    %3459 = vmatpush2.msra.mxu0 0.0
    %3460 = vmatprep.subr.mxu0 0.0
    %3461 = vmatpush2.msra.mxu0 0.0
    %3462 = vmatprep.subr.mxu0 0.0
    %3463 = vmatpush2.msra.mxu0 0.0
    %3464 = vmatprep.subr.mxu0 0.0
    %3465 = vmatpush2.msra.mxu0 0.0
    %3466 = vmatprep.subr.mxu0 0.0
    %3467 = vmatpush2.msra.mxu0 0.0
    %3468 = vmatprep.subr.mxu0 0.0
    %3469 = vmatpush2.msra.mxu0 0.0
    %3470 = vmatprep.subr.mxu0 0.0
    %3471 = vmatpush2.msra.mxu0 0.0
    %3472 = vmatprep.subr.mxu0 0.0
    %3473 = vmatpush2.msra.mxu0 0.0
    %3474 = vmatprep.subr.mxu0 0.0
    %3475 = vmatpush2.msra.mxu0 0.0
    %3476 = vmatprep.mubr.f32.mxu0 0.0
    %v3477 = vand.u32 %v2996, 4294901760
    %3478 = vmatmul.mubr.f32.gmra.mxu0 %v3477
    %v3479 = vpop.f32.mrf.mxu0
    %v3480 = vadd.f32 %v3405, %v3479
    %v3481 = vpop.f32.mrf.mxu0
    %3482 = vdwg.mxu0
    %v3483 = vadd.f32 %v979, %v3480
    %v3484 = vtanh.pop %v3483
    %vm3485 = vcmp.eq.s32.totalorder %v1005, 4
    %v3486 = vsel %vm3485, 1, 0
    %3487 = vset.pattern.permute.xlu0 0
    %3488 = vperm.xlu0 %3487, %v3486
    %v3489 = vpop.permute.xlu0 %3488
    %vm3490 = vcmp.eq.s32.totalorder %v3489, 1
    %v3491 = vsel %vm3490, %v3484, %v2994
    %v3493 = vsel %vm1006, %v3484, 0
    %3495 = vmatprep.subr.mxu0 0.0
    %3496 = vmatpush1.msra.mxu0 0.0
    %3497 = vmatprep.subr.mxu0 0.0
    %3498 = vmatpush1.msra.mxu0 0.0
    %3499 = vmatprep.subr.mxu0 0.0
    %3500 = vmatpush1.msra.mxu0 0.0
    %3501 = vmatprep.subr.mxu0 0.0
    %3502 = vmatpush1.msra.mxu0 0.0
    %3503 = vmatprep.subr.mxu0 0.0
    %3504 = vmatpush1.msra.mxu0 0.0
    %3505 = vmatprep.subr.mxu0 0.0
    %3506 = vmatpush1.msra.mxu0 0.0
    %3507 = vmatprep.subr.mxu0 0.0
    %3508 = vmatpush1.msra.mxu0 0.0
    %3509 = vmatprep.subr.mxu0 0.0
    %3510 = vmatpush1.msra.mxu0 0.0
    %3511 = vmatprep.subr.mxu0 0.0
    %3512 = vmatpush1.msra.mxu0 0.0
    %3513 = vmatprep.subr.mxu0 0.0
    %3514 = vmatpush1.msra.mxu0 0.0
    %3515 = vmatprep.subr.mxu0 0.0
    %3516 = vmatpush1.msra.mxu0 0.0
    %3517 = vmatprep.subr.mxu0 0.0
    %3518 = vmatpush1.msra.mxu0 0.0
    %3519 = vmatprep.subr.mxu0 0.0
    %v3520 = vand.u32 %v71, 4294901760
    %3521 = vmatpush1.msra.mxu0 %v3520
    %3522 = vmatprep.subr.mxu0 0.0
    %v3523 = vand.u32 %v70, 4294901760
    %3524 = vmatpush1.msra.mxu0 %v3523
    %3525 = vmatprep.subr.mxu0 0.0
    %v3526 = vand.u32 %v69, 4294901760
    %3527 = vmatpush1.msra.mxu0 %v3526
    %3528 = vmatprep.subr.mxu0 0.0
    %v3529 = vand.u32 %v68, 4294901760
    %3530 = vmatpush1.msra.mxu0 %v3529
    %3531 = vmatprep.subr.mxu0 0.0
    %3532 = vmatpush2.msra.mxu0 0.0
    %3533 = vmatprep.subr.mxu0 0.0
    %3534 = vmatpush2.msra.mxu0 0.0
    %3535 = vmatprep.subr.mxu0 0.0
    %3536 = vmatpush2.msra.mxu0 0.0
    %3537 = vmatprep.subr.mxu0 0.0
    %3538 = vmatpush2.msra.mxu0 0.0
    %3539 = vmatprep.subr.mxu0 0.0
    %3540 = vmatpush2.msra.mxu0 0.0
    %3541 = vmatprep.subr.mxu0 0.0
    %3542 = vmatpush2.msra.mxu0 0.0
    %3543 = vmatprep.subr.mxu0 0.0
    %3544 = vmatpush2.msra.mxu0 0.0
    %3545 = vmatprep.subr.mxu0 0.0
    %3546 = vmatpush2.msra.mxu0 0.0
    %3547 = vmatprep.subr.mxu0 0.0
    %3548 = vmatpush2.msra.mxu0 0.0
    %3549 = vmatprep.subr.mxu0 0.0
    %3550 = vmatpush2.msra.mxu0 0.0
    %3551 = vmatprep.subr.mxu0 0.0
    %3552 = vmatpush2.msra.mxu0 0.0
    %3553 = vmatprep.subr.mxu0 0.0
    %3554 = vmatpush2.msra.mxu0 0.0
    %3555 = vmatprep.subr.mxu0 0.0
    %3556 = vmatpush2.msra.mxu0 0.0
    %3557 = vmatprep.subr.mxu0 0.0
    %3558 = vmatpush2.msra.mxu0 0.0
    %3559 = vmatprep.subr.mxu0 0.0
    %3560 = vmatpush2.msra.mxu0 0.0
    %3561 = vmatprep.subr.mxu0 0.0
    %3562 = vmatpush2.msra.mxu0 0.0
    %3563 = vmatprep.mubr.f32.mxu0 0.0
    %v3564 = vand.u32 %v3493, 4294901760
    %v3565 = vsub.f32 %v3493, %v3564
    %v3566 = vand.u32 %v3565, 4294901760
    %v3567 = vsub.f32 %v3565, %v3566
    %v3568 = vand.u32 %v3567, 4294901760
    %3569 = vmatmul.mubr.f32.gmra.mxu0 %v3568
    %v3570 = vpop.f32.mrf.mxu0
    %v3571 = vadd.f32 0.0, %v3570
    %v3572 = vpop.f32.mrf.mxu0
    %3573 = vdwg.mxu0
    %3574 = vmatprep.subr.mxu0 0.0
    %3575 = vmatpush1.msra.mxu0 0.0
    %3576 = vmatprep.subr.mxu0 0.0
    %3577 = vmatpush1.msra.mxu0 0.0
    %3578 = vmatprep.subr.mxu0 0.0
    %3579 = vmatpush1.msra.mxu0 0.0
    %3580 = vmatprep.subr.mxu0 0.0
    %3581 = vmatpush1.msra.mxu0 0.0
    %3582 = vmatprep.subr.mxu0 0.0
    %3583 = vmatpush1.msra.mxu0 0.0
    %3584 = vmatprep.subr.mxu0 0.0
    %3585 = vmatpush1.msra.mxu0 0.0
    %3586 = vmatprep.subr.mxu0 0.0
    %3587 = vmatpush1.msra.mxu0 0.0
    %3588 = vmatprep.subr.mxu0 0.0
    %3589 = vmatpush1.msra.mxu0 0.0
    %3590 = vmatprep.subr.mxu0 0.0
    %3591 = vmatpush1.msra.mxu0 0.0
    %3592 = vmatprep.subr.mxu0 0.0
    %3593 = vmatpush1.msra.mxu0 0.0
    %3594 = vmatprep.subr.mxu0 0.0
    %3595 = vmatpush1.msra.mxu0 0.0
    %3596 = vmatprep.subr.mxu0 0.0
    %3597 = vmatpush1.msra.mxu0 0.0
    %3598 = vmatprep.subr.mxu0 0.0
    %v3599 = vand.u32 %v71, 4294901760
    %v3600 = vsub.f32 %v71, %v3599
    %v3601 = vand.u32 %v3600, 4294901760
    %v3602 = vsub.f32 %v3600, %v3601
    %v3603 = vand.u32 %v3602, 4294901760
    %3604 = vmatpush1.msra.mxu0 %v3603
    %3605 = vmatprep.subr.mxu0 0.0
    %v3606 = vand.u32 %v70, 4294901760
    %v3607 = vsub.f32 %v70, %v3606
    %v3608 = vand.u32 %v3607, 4294901760
    %v3609 = vsub.f32 %v3607, %v3608
    %v3610 = vand.u32 %v3609, 4294901760
    %3611 = vmatpush1.msra.mxu0 %v3610
    %3612 = vmatprep.subr.mxu0 0.0
    %v3613 = vand.u32 %v69, 4294901760
    %v3614 = vsub.f32 %v69, %v3613
    %v3615 = vand.u32 %v3614, 4294901760
    %v3616 = vsub.f32 %v3614, %v3615
    %v3617 = vand.u32 %v3616, 4294901760
    %3618 = vmatpush1.msra.mxu0 %v3617
    %3619 = vmatprep.subr.mxu0 0.0
    %v3620 = vand.u32 %v68, 4294901760
    %v3621 = vsub.f32 %v68, %v3620
    %v3622 = vand.u32 %v3621, 4294901760
    %v3623 = vsub.f32 %v3621, %v3622
    %v3624 = vand.u32 %v3623, 4294901760
    %3625 = vmatpush1.msra.mxu0 %v3624
    %3626 = vmatprep.subr.mxu0 0.0
    %3627 = vmatpush2.msra.mxu0 0.0
    %3628 = vmatprep.subr.mxu0 0.0
    %3629 = vmatpush2.msra.mxu0 0.0
    %3630 = vmatprep.subr.mxu0 0.0
    %3631 = vmatpush2.msra.mxu0 0.0
    %3632 = vmatprep.subr.mxu0 0.0
    %3633 = vmatpush2.msra.mxu0 0.0
    %3634 = vmatprep.subr.mxu0 0.0
    %3635 = vmatpush2.msra.mxu0 0.0
    %3636 = vmatprep.subr.mxu0 0.0
    %3637 = vmatpush2.msra.mxu0 0.0
    %3638 = vmatprep.subr.mxu0 0.0
    %3639 = vmatpush2.msra.mxu0 0.0
    %3640 = vmatprep.subr.mxu0 0.0
    %3641 = vmatpush2.msra.mxu0 0.0
    %3642 = vmatprep.subr.mxu0 0.0
    %3643 = vmatpush2.msra.mxu0 0.0
    %3644 = vmatprep.subr.mxu0 0.0
    %3645 = vmatpush2.msra.mxu0 0.0
    %3646 = vmatprep.subr.mxu0 0.0
    %3647 = vmatpush2.msra.mxu0 0.0
    %3648 = vmatprep.subr.mxu0 0.0
    %3649 = vmatpush2.msra.mxu0 0.0
    %3650 = vmatprep.subr.mxu0 0.0
    %3651 = vmatpush2.msra.mxu0 0.0
    %3652 = vmatprep.subr.mxu0 0.0
    %3653 = vmatpush2.msra.mxu0 0.0
    %3654 = vmatprep.subr.mxu0 0.0
    %3655 = vmatpush2.msra.mxu0 0.0
    %3656 = vmatprep.subr.mxu0 0.0
    %3657 = vmatpush2.msra.mxu0 0.0
    %3658 = vmatprep.mubr.f32.mxu0 0.0
    %v3659 = vand.u32 %v3493, 4294901760
    %3660 = vmatmul.mubr.f32.gmra.mxu0 %v3659
    %v3661 = vpop.f32.mrf.mxu0
    %v3662 = vadd.f32 %v3571, %v3661
    %v3663 = vpop.f32.mrf.mxu0
    %3664 = vdwg.mxu0
    %3665 = vmatprep.subr.mxu0 0.0
    %3666 = vmatpush1.msra.mxu0 0.0
    %3667 = vmatprep.subr.mxu0 0.0
    %3668 = vmatpush1.msra.mxu0 0.0
    %3669 = vmatprep.subr.mxu0 0.0
    %3670 = vmatpush1.msra.mxu0 0.0
    %3671 = vmatprep.subr.mxu0 0.0
    %3672 = vmatpush1.msra.mxu0 0.0
    %3673 = vmatprep.subr.mxu0 0.0
    %3674 = vmatpush1.msra.mxu0 0.0
    %3675 = vmatprep.subr.mxu0 0.0
    %3676 = vmatpush1.msra.mxu0 0.0
    %3677 = vmatprep.subr.mxu0 0.0
    %3678 = vmatpush1.msra.mxu0 0.0
    %3679 = vmatprep.subr.mxu0 0.0
    %3680 = vmatpush1.msra.mxu0 0.0
    %3681 = vmatprep.subr.mxu0 0.0
    %3682 = vmatpush1.msra.mxu0 0.0
    %3683 = vmatprep.subr.mxu0 0.0
    %3684 = vmatpush1.msra.mxu0 0.0
    %3685 = vmatprep.subr.mxu0 0.0
    %3686 = vmatpush1.msra.mxu0 0.0
    %3687 = vmatprep.subr.mxu0 0.0
    %3688 = vmatpush1.msra.mxu0 0.0
    %3689 = vmatprep.subr.mxu0 0.0
    %v3690 = vand.u32 %v71, 4294901760
    %v3691 = vsub.f32 %v71, %v3690
    %3692 = vmatpush1.msra.mxu0 %v3691
    %3693 = vmatprep.subr.mxu0 0.0
    %v3694 = vand.u32 %v70, 4294901760
    %v3695 = vsub.f32 %v70, %v3694
    %3696 = vmatpush1.msra.mxu0 %v3695
    %3697 = vmatprep.subr.mxu0 0.0
    %v3698 = vand.u32 %v69, 4294901760
    %v3699 = vsub.f32 %v69, %v3698
    %3700 = vmatpush1.msra.mxu0 %v3699
    %3701 = vmatprep.subr.mxu0 0.0
    %v3702 = vand.u32 %v68, 4294901760
    %v3703 = vsub.f32 %v68, %v3702
    %3704 = vmatpush1.msra.mxu0 %v3703
    %3705 = vmatprep.subr.mxu0 0.0
    %3706 = vmatpush2.msra.mxu0 0.0
    %3707 = vmatprep.subr.mxu0 0.0
    %3708 = vmatpush2.msra.mxu0 0.0
    %3709 = vmatprep.subr.mxu0 0.0
    %3710 = vmatpush2.msra.mxu0 0.0
    %3711 = vmatprep.subr.mxu0 0.0
    %3712 = vmatpush2.msra.mxu0 0.0
    %3713 = vmatprep.subr.mxu0 0.0
    %3714 = vmatpush2.msra.mxu0 0.0
    %3715 = vmatprep.subr.mxu0 0.0
    %3716 = vmatpush2.msra.mxu0 0.0
    %3717 = vmatprep.subr.mxu0 0.0
    %3718 = vmatpush2.msra.mxu0 0.0
    %3719 = vmatprep.subr.mxu0 0.0
    %3720 = vmatpush2.msra.mxu0 0.0
    %3721 = vmatprep.subr.mxu0 0.0
    %3722 = vmatpush2.msra.mxu0 0.0
    %3723 = vmatprep.subr.mxu0 0.0
    %3724 = vmatpush2.msra.mxu0 0.0
    %3725 = vmatprep.subr.mxu0 0.0
    %3726 = vmatpush2.msra.mxu0 0.0
    %3727 = vmatprep.subr.mxu0 0.0
    %3728 = vmatpush2.msra.mxu0 0.0
    %3729 = vmatprep.subr.mxu0 0.0
    %3730 = vmatpush2.msra.mxu0 0.0
    %3731 = vmatprep.subr.mxu0 0.0
    %3732 = vmatpush2.msra.mxu0 0.0
    %3733 = vmatprep.subr.mxu0 0.0
    %3734 = vmatpush2.msra.mxu0 0.0
    %3735 = vmatprep.subr.mxu0 0.0
    %3736 = vmatpush2.msra.mxu0 0.0
    %3737 = vmatprep.mubr.f32.mxu0 0.0
    %v3738 = vand.u32 %v3493, 4294901760
    %v3739 = vsub.f32 %v3493, %v3738
    %3740 = vmatmul.mubr.f32.gmra.mxu0 %v3739
    %v3741 = vpop.f32.mrf.mxu0
    %v3742 = vadd.f32 %v3662, %v3741
    %v3743 = vpop.f32.mrf.mxu0
    %3744 = vdwg.mxu0
    %3745 = vmatprep.subr.mxu0 0.0
    %3746 = vmatpush1.msra.mxu0 0.0
    %3747 = vmatprep.subr.mxu0 0.0
    %3748 = vmatpush1.msra.mxu0 0.0
    %3749 = vmatprep.subr.mxu0 0.0
    %3750 = vmatpush1.msra.mxu0 0.0
    %3751 = vmatprep.subr.mxu0 0.0
    %3752 = vmatpush1.msra.mxu0 0.0
    %3753 = vmatprep.subr.mxu0 0.0
    %3754 = vmatpush1.msra.mxu0 0.0
    %3755 = vmatprep.subr.mxu0 0.0
    %3756 = vmatpush1.msra.mxu0 0.0
    %3757 = vmatprep.subr.mxu0 0.0
    %3758 = vmatpush1.msra.mxu0 0.0
    %3759 = vmatprep.subr.mxu0 0.0
    %3760 = vmatpush1.msra.mxu0 0.0
    %3761 = vmatprep.subr.mxu0 0.0
    %3762 = vmatpush1.msra.mxu0 0.0
    %3763 = vmatprep.subr.mxu0 0.0
    %3764 = vmatpush1.msra.mxu0 0.0
    %3765 = vmatprep.subr.mxu0 0.0
    %3766 = vmatpush1.msra.mxu0 0.0
    %3767 = vmatprep.subr.mxu0 0.0
    %3768 = vmatpush1.msra.mxu0 0.0
    %3769 = vmatprep.subr.mxu0 0.0
    %v3770 = vand.u32 %v71, 4294901760
    %3771 = vmatpush1.msra.mxu0 %v3770
    %3772 = vmatprep.subr.mxu0 0.0
    %v3773 = vand.u32 %v70, 4294901760
    %3774 = vmatpush1.msra.mxu0 %v3773
    %3775 = vmatprep.subr.mxu0 0.0
    %v3776 = vand.u32 %v69, 4294901760
    %3777 = vmatpush1.msra.mxu0 %v3776
    %3778 = vmatprep.subr.mxu0 0.0
    %v3779 = vand.u32 %v68, 4294901760
    %3780 = vmatpush1.msra.mxu0 %v3779
    %3781 = vmatprep.subr.mxu0 0.0
    %3782 = vmatpush2.msra.mxu0 0.0
    %3783 = vmatprep.subr.mxu0 0.0
    %3784 = vmatpush2.msra.mxu0 0.0
    %3785 = vmatprep.subr.mxu0 0.0
    %3786 = vmatpush2.msra.mxu0 0.0
    %3787 = vmatprep.subr.mxu0 0.0
    %3788 = vmatpush2.msra.mxu0 0.0
    %3789 = vmatprep.subr.mxu0 0.0
    %3790 = vmatpush2.msra.mxu0 0.0
    %3791 = vmatprep.subr.mxu0 0.0
    %3792 = vmatpush2.msra.mxu0 0.0
    %3793 = vmatprep.subr.mxu0 0.0
    %3794 = vmatpush2.msra.mxu0 0.0
    %3795 = vmatprep.subr.mxu0 0.0
    %3796 = vmatpush2.msra.mxu0 0.0
    %3797 = vmatprep.subr.mxu0 0.0
    %3798 = vmatpush2.msra.mxu0 0.0
    %3799 = vmatprep.subr.mxu0 0.0
    %3800 = vmatpush2.msra.mxu0 0.0
    %3801 = vmatprep.subr.mxu0 0.0
    %3802 = vmatpush2.msra.mxu0 0.0
    %3803 = vmatprep.subr.mxu0 0.0
    %3804 = vmatpush2.msra.mxu0 0.0
    %3805 = vmatprep.subr.mxu0 0.0
    %3806 = vmatpush2.msra.mxu0 0.0
    %3807 = vmatprep.subr.mxu0 0.0
    %3808 = vmatpush2.msra.mxu0 0.0
    %3809 = vmatprep.subr.mxu0 0.0
    %3810 = vmatpush2.msra.mxu0 0.0
    %3811 = vmatprep.subr.mxu0 0.0
    %3812 = vmatpush2.msra.mxu0 0.0
    %3813 = vmatprep.mubr.f32.mxu0 0.0
    %v3814 = vand.u32 %v3493, 4294901760
    %v3815 = vsub.f32 %v3493, %v3814
    %v3816 = vand.u32 %v3815, 4294901760
    %3817 = vmatmul.mubr.f32.gmra.mxu0 %v3816
    %v3818 = vpop.f32.mrf.mxu0
    %v3819 = vadd.f32 %v3742, %v3818
    %v3820 = vpop.f32.mrf.mxu0
    %3821 = vdwg.mxu0
    %3822 = vmatprep.subr.mxu0 0.0
    %3823 = vmatpush1.msra.mxu0 0.0
    %3824 = vmatprep.subr.mxu0 0.0
    %3825 = vmatpush1.msra.mxu0 0.0
    %3826 = vmatprep.subr.mxu0 0.0
    %3827 = vmatpush1.msra.mxu0 0.0
    %3828 = vmatprep.subr.mxu0 0.0
    %3829 = vmatpush1.msra.mxu0 0.0
    %3830 = vmatprep.subr.mxu0 0.0
    %3831 = vmatpush1.msra.mxu0 0.0
    %3832 = vmatprep.subr.mxu0 0.0
    %3833 = vmatpush1.msra.mxu0 0.0
    %3834 = vmatprep.subr.mxu0 0.0
    %3835 = vmatpush1.msra.mxu0 0.0
    %3836 = vmatprep.subr.mxu0 0.0
    %3837 = vmatpush1.msra.mxu0 0.0
    %3838 = vmatprep.subr.mxu0 0.0
    %3839 = vmatpush1.msra.mxu0 0.0
    %3840 = vmatprep.subr.mxu0 0.0
    %3841 = vmatpush1.msra.mxu0 0.0
    %3842 = vmatprep.subr.mxu0 0.0
    %3843 = vmatpush1.msra.mxu0 0.0
    %3844 = vmatprep.subr.mxu0 0.0
    %3845 = vmatpush1.msra.mxu0 0.0
    %3846 = vmatprep.subr.mxu0 0.0
    %v3847 = vand.u32 %v71, 4294901760
    %v3848 = vsub.f32 %v71, %v3847
    %v3849 = vand.u32 %v3848, 4294901760
    %3850 = vmatpush1.msra.mxu0 %v3849
    %3851 = vmatprep.subr.mxu0 0.0
    %v3852 = vand.u32 %v70, 4294901760
    %v3853 = vsub.f32 %v70, %v3852
    %v3854 = vand.u32 %v3853, 4294901760
    %3855 = vmatpush1.msra.mxu0 %v3854
    %3856 = vmatprep.subr.mxu0 0.0
    %v3857 = vand.u32 %v69, 4294901760
    %v3858 = vsub.f32 %v69, %v3857
    %v3859 = vand.u32 %v3858, 4294901760
    %3860 = vmatpush1.msra.mxu0 %v3859
    %3861 = vmatprep.subr.mxu0 0.0
    %v3862 = vand.u32 %v68, 4294901760
    %v3863 = vsub.f32 %v68, %v3862
    %v3864 = vand.u32 %v3863, 4294901760
    %3865 = vmatpush1.msra.mxu0 %v3864
    %3866 = vmatprep.subr.mxu0 0.0
    %3867 = vmatpush2.msra.mxu0 0.0
    %3868 = vmatprep.subr.mxu0 0.0
    %3869 = vmatpush2.msra.mxu0 0.0
    %3870 = vmatprep.subr.mxu0 0.0
    %3871 = vmatpush2.msra.mxu0 0.0
    %3872 = vmatprep.subr.mxu0 0.0
    %3873 = vmatpush2.msra.mxu0 0.0
    %3874 = vmatprep.subr.mxu0 0.0
    %3875 = vmatpush2.msra.mxu0 0.0
    %3876 = vmatprep.subr.mxu0 0.0
    %3877 = vmatpush2.msra.mxu0 0.0
    %3878 = vmatprep.subr.mxu0 0.0
    %3879 = vmatpush2.msra.mxu0 0.0
    %3880 = vmatprep.subr.mxu0 0.0
    %3881 = vmatpush2.msra.mxu0 0.0
    %3882 = vmatprep.subr.mxu0 0.0
    %3883 = vmatpush2.msra.mxu0 0.0
    %3884 = vmatprep.subr.mxu0 0.0
    %3885 = vmatpush2.msra.mxu0 0.0
    %3886 = vmatprep.subr.mxu0 0.0
    %3887 = vmatpush2.msra.mxu0 0.0
    %3888 = vmatprep.subr.mxu0 0.0
    %3889 = vmatpush2.msra.mxu0 0.0
    %3890 = vmatprep.subr.mxu0 0.0
    %3891 = vmatpush2.msra.mxu0 0.0
    %3892 = vmatprep.subr.mxu0 0.0
    %3893 = vmatpush2.msra.mxu0 0.0
    %3894 = vmatprep.subr.mxu0 0.0
    %3895 = vmatpush2.msra.mxu0 0.0
    %3896 = vmatprep.subr.mxu0 0.0
    %3897 = vmatpush2.msra.mxu0 0.0
    %3898 = vmatprep.mubr.f32.mxu0 0.0
    %v3899 = vand.u32 %v3493, 4294901760
    %3900 = vmatmul.mubr.f32.gmra.mxu0 %v3899
    %v3901 = vpop.f32.mrf.mxu0
    %v3902 = vadd.f32 %v3819, %v3901
    %v3903 = vpop.f32.mrf.mxu0
    %3904 = vdwg.mxu0
    %3905 = vmatprep.subr.mxu0 0.0
    %3906 = vmatpush1.msra.mxu0 0.0
    %3907 = vmatprep.subr.mxu0 0.0
    %3908 = vmatpush1.msra.mxu0 0.0
    %3909 = vmatprep.subr.mxu0 0.0
    %3910 = vmatpush1.msra.mxu0 0.0
    %3911 = vmatprep.subr.mxu0 0.0
    %3912 = vmatpush1.msra.mxu0 0.0
    %3913 = vmatprep.subr.mxu0 0.0
    %3914 = vmatpush1.msra.mxu0 0.0
    %3915 = vmatprep.subr.mxu0 0.0
    %3916 = vmatpush1.msra.mxu0 0.0
    %3917 = vmatprep.subr.mxu0 0.0
    %3918 = vmatpush1.msra.mxu0 0.0
    %3919 = vmatprep.subr.mxu0 0.0
    %3920 = vmatpush1.msra.mxu0 0.0
    %3921 = vmatprep.subr.mxu0 0.0
    %3922 = vmatpush1.msra.mxu0 0.0
    %3923 = vmatprep.subr.mxu0 0.0
    %3924 = vmatpush1.msra.mxu0 0.0
    %3925 = vmatprep.subr.mxu0 0.0
    %3926 = vmatpush1.msra.mxu0 0.0
    %3927 = vmatprep.subr.mxu0 0.0
    %3928 = vmatpush1.msra.mxu0 0.0
    %3929 = vmatprep.subr.mxu0 0.0
    %v3930 = vand.u32 %v71, 4294901760
    %3931 = vmatpush1.msra.mxu0 %v3930
    %3932 = vmatprep.subr.mxu0 0.0
    %v3933 = vand.u32 %v70, 4294901760
    %3934 = vmatpush1.msra.mxu0 %v3933
    %3935 = vmatprep.subr.mxu0 0.0
    %v3936 = vand.u32 %v69, 4294901760
    %3937 = vmatpush1.msra.mxu0 %v3936
    %3938 = vmatprep.subr.mxu0 0.0
    %v3939 = vand.u32 %v68, 4294901760
    %3940 = vmatpush1.msra.mxu0 %v3939
    %3941 = vmatprep.subr.mxu0 0.0
    %3942 = vmatpush2.msra.mxu0 0.0
    %3943 = vmatprep.subr.mxu0 0.0
    %3944 = vmatpush2.msra.mxu0 0.0
    %3945 = vmatprep.subr.mxu0 0.0
    %3946 = vmatpush2.msra.mxu0 0.0
    %3947 = vmatprep.subr.mxu0 0.0
    %3948 = vmatpush2.msra.mxu0 0.0
    %3949 = vmatprep.subr.mxu0 0.0
    %3950 = vmatpush2.msra.mxu0 0.0
    %3951 = vmatprep.subr.mxu0 0.0
    %3952 = vmatpush2.msra.mxu0 0.0
    %3953 = vmatprep.subr.mxu0 0.0
    %3954 = vmatpush2.msra.mxu0 0.0
    %3955 = vmatprep.subr.mxu0 0.0
    %3956 = vmatpush2.msra.mxu0 0.0
    %3957 = vmatprep.subr.mxu0 0.0
    %3958 = vmatpush2.msra.mxu0 0.0
    %3959 = vmatprep.subr.mxu0 0.0
    %3960 = vmatpush2.msra.mxu0 0.0
    %3961 = vmatprep.subr.mxu0 0.0
    %3962 = vmatpush2.msra.mxu0 0.0
    %3963 = vmatprep.subr.mxu0 0.0
    %3964 = vmatpush2.msra.mxu0 0.0
    %3965 = vmatprep.subr.mxu0 0.0
    %3966 = vmatpush2.msra.mxu0 0.0
    %3967 = vmatprep.subr.mxu0 0.0
    %3968 = vmatpush2.msra.mxu0 0.0
    %3969 = vmatprep.subr.mxu0 0.0
    %3970 = vmatpush2.msra.mxu0 0.0
    %3971 = vmatprep.subr.mxu0 0.0
    %3972 = vmatpush2.msra.mxu0 0.0
    %3973 = vmatprep.mubr.f32.mxu0 0.0
    %v3974 = vand.u32 %v3493, 4294901760
    %3975 = vmatmul.mubr.f32.gmra.mxu0 %v3974
    %v3976 = vpop.f32.mrf.mxu0
    %v3977 = vadd.f32 %v3902, %v3976
    %v3978 = vpop.f32.mrf.mxu0
    %3979 = vdwg.mxu0
    %v3980 = vadd.f32 %v985, %v3977
    %v3981 = vtanh.pop %v3980
    %vm3982 = vcmp.eq.s32.totalorder %v1005, 5
    %v3983 = vsel %vm3982, 1, 0
    %3984 = vset.pattern.permute.xlu0 0
    %3985 = vperm.xlu0 %3984, %v3983
    %v3986 = vpop.permute.xlu0 %3985
    %vm3987 = vcmp.eq.s32.totalorder %v3986, 1
    %v3988 = vsel %vm3987, %v3981, %v3491
    %v3990 = vsel %vm1006, %v3981, 0
    %3992 = vmatprep.subr.mxu0 0.0
    %3993 = vmatpush1.msra.mxu0 0.0
    %3994 = vmatprep.subr.mxu0 0.0
    %3995 = vmatpush1.msra.mxu0 0.0
    %3996 = vmatprep.subr.mxu0 0.0
    %3997 = vmatpush1.msra.mxu0 0.0
    %3998 = vmatprep.subr.mxu0 0.0
    %3999 = vmatpush1.msra.mxu0 0.0
    %4000 = vmatprep.subr.mxu0 0.0
    %4001 = vmatpush1.msra.mxu0 0.0
    %4002 = vmatprep.subr.mxu0 0.0
    %4003 = vmatpush1.msra.mxu0 0.0
    %4004 = vmatprep.subr.mxu0 0.0
    %4005 = vmatpush1.msra.mxu0 0.0
    %4006 = vmatprep.subr.mxu0 0.0
    %4007 = vmatpush1.msra.mxu0 0.0
    %4008 = vmatprep.subr.mxu0 0.0
    %4009 = vmatpush1.msra.mxu0 0.0
    %4010 = vmatprep.subr.mxu0 0.0
    %4011 = vmatpush1.msra.mxu0 0.0
    %4012 = vmatprep.subr.mxu0 0.0
    %4013 = vmatpush1.msra.mxu0 0.0
    %4014 = vmatprep.subr.mxu0 0.0
    %4015 = vmatpush1.msra.mxu0 0.0
    %4016 = vmatprep.subr.mxu0 0.0
    %v4017 = vand.u32 %v71, 4294901760
    %4018 = vmatpush1.msra.mxu0 %v4017
    %4019 = vmatprep.subr.mxu0 0.0
    %v4020 = vand.u32 %v70, 4294901760
    %4021 = vmatpush1.msra.mxu0 %v4020
    %4022 = vmatprep.subr.mxu0 0.0
    %v4023 = vand.u32 %v69, 4294901760
    %4024 = vmatpush1.msra.mxu0 %v4023
    %4025 = vmatprep.subr.mxu0 0.0
    %v4026 = vand.u32 %v68, 4294901760
    %4027 = vmatpush1.msra.mxu0 %v4026
    %4028 = vmatprep.subr.mxu0 0.0
    %4029 = vmatpush2.msra.mxu0 0.0
    %4030 = vmatprep.subr.mxu0 0.0
    %4031 = vmatpush2.msra.mxu0 0.0
    %4032 = vmatprep.subr.mxu0 0.0
    %4033 = vmatpush2.msra.mxu0 0.0
    %4034 = vmatprep.subr.mxu0 0.0
    %4035 = vmatpush2.msra.mxu0 0.0
    %4036 = vmatprep.subr.mxu0 0.0
    %4037 = vmatpush2.msra.mxu0 0.0
    %4038 = vmatprep.subr.mxu0 0.0
    %4039 = vmatpush2.msra.mxu0 0.0
    %4040 = vmatprep.subr.mxu0 0.0
    %4041 = vmatpush2.msra.mxu0 0.0
    %4042 = vmatprep.subr.mxu0 0.0
    %4043 = vmatpush2.msra.mxu0 0.0
    %4044 = vmatprep.subr.mxu0 0.0
    %4045 = vmatpush2.msra.mxu0 0.0
    %4046 = vmatprep.subr.mxu0 0.0
    %4047 = vmatpush2.msra.mxu0 0.0
    %4048 = vmatprep.subr.mxu0 0.0
    %4049 = vmatpush2.msra.mxu0 0.0
    %4050 = vmatprep.subr.mxu0 0.0
    %4051 = vmatpush2.msra.mxu0 0.0
    %4052 = vmatprep.subr.mxu0 0.0
    %4053 = vmatpush2.msra.mxu0 0.0
    %4054 = vmatprep.subr.mxu0 0.0
    %4055 = vmatpush2.msra.mxu0 0.0
    %4056 = vmatprep.subr.mxu0 0.0
    %4057 = vmatpush2.msra.mxu0 0.0
    %4058 = vmatprep.subr.mxu0 0.0
    %4059 = vmatpush2.msra.mxu0 0.0
    %4060 = vmatprep.mubr.f32.mxu0 0.0
    %v4061 = vand.u32 %v3990, 4294901760
    %v4062 = vsub.f32 %v3990, %v4061
    %v4063 = vand.u32 %v4062, 4294901760
    %v4064 = vsub.f32 %v4062, %v4063
    %v4065 = vand.u32 %v4064, 4294901760
    %4066 = vmatmul.mubr.f32.gmra.mxu0 %v4065
    %v4067 = vpop.f32.mrf.mxu0
    %v4068 = vadd.f32 0.0, %v4067
    %v4069 = vpop.f32.mrf.mxu0
    %4070 = vdwg.mxu0
    %4071 = vmatprep.subr.mxu0 0.0
    %4072 = vmatpush1.msra.mxu0 0.0
    %4073 = vmatprep.subr.mxu0 0.0
    %4074 = vmatpush1.msra.mxu0 0.0
    %4075 = vmatprep.subr.mxu0 0.0
    %4076 = vmatpush1.msra.mxu0 0.0
    %4077 = vmatprep.subr.mxu0 0.0
    %4078 = vmatpush1.msra.mxu0 0.0
    %4079 = vmatprep.subr.mxu0 0.0
    %4080 = vmatpush1.msra.mxu0 0.0
    %4081 = vmatprep.subr.mxu0 0.0
    %4082 = vmatpush1.msra.mxu0 0.0
    %4083 = vmatprep.subr.mxu0 0.0
    %4084 = vmatpush1.msra.mxu0 0.0
    %4085 = vmatprep.subr.mxu0 0.0
    %4086 = vmatpush1.msra.mxu0 0.0
    %4087 = vmatprep.subr.mxu0 0.0
    %4088 = vmatpush1.msra.mxu0 0.0
    %4089 = vmatprep.subr.mxu0 0.0
    %4090 = vmatpush1.msra.mxu0 0.0
    %4091 = vmatprep.subr.mxu0 0.0
    %4092 = vmatpush1.msra.mxu0 0.0
    %4093 = vmatprep.subr.mxu0 0.0
    %4094 = vmatpush1.msra.mxu0 0.0
    %4095 = vmatprep.subr.mxu0 0.0
    %v4096 = vand.u32 %v71, 4294901760
    %v4097 = vsub.f32 %v71, %v4096
    %v4098 = vand.u32 %v4097, 4294901760
    %v4099 = vsub.f32 %v4097, %v4098
    %v4100 = vand.u32 %v4099, 4294901760
    %4101 = vmatpush1.msra.mxu0 %v4100
    %4102 = vmatprep.subr.mxu0 0.0
    %v4103 = vand.u32 %v70, 4294901760
    %v4104 = vsub.f32 %v70, %v4103
    %v4105 = vand.u32 %v4104, 4294901760
    %v4106 = vsub.f32 %v4104, %v4105
    %v4107 = vand.u32 %v4106, 4294901760
    %4108 = vmatpush1.msra.mxu0 %v4107
    %4109 = vmatprep.subr.mxu0 0.0
    %v4110 = vand.u32 %v69, 4294901760
    %v4111 = vsub.f32 %v69, %v4110
    %v4112 = vand.u32 %v4111, 4294901760
    %v4113 = vsub.f32 %v4111, %v4112
    %v4114 = vand.u32 %v4113, 4294901760
    %4115 = vmatpush1.msra.mxu0 %v4114
    %4116 = vmatprep.subr.mxu0 0.0
    %v4117 = vand.u32 %v68, 4294901760
    %v4118 = vsub.f32 %v68, %v4117
    %v4119 = vand.u32 %v4118, 4294901760
    %v4120 = vsub.f32 %v4118, %v4119
    %v4121 = vand.u32 %v4120, 4294901760
    %4122 = vmatpush1.msra.mxu0 %v4121
    %4123 = vmatprep.subr.mxu0 0.0
    %4124 = vmatpush2.msra.mxu0 0.0
    %4125 = vmatprep.subr.mxu0 0.0
    %4126 = vmatpush2.msra.mxu0 0.0
    %4127 = vmatprep.subr.mxu0 0.0
    %4128 = vmatpush2.msra.mxu0 0.0
    %4129 = vmatprep.subr.mxu0 0.0
    %4130 = vmatpush2.msra.mxu0 0.0
    %4131 = vmatprep.subr.mxu0 0.0
    %4132 = vmatpush2.msra.mxu0 0.0
    %4133 = vmatprep.subr.mxu0 0.0
    %4134 = vmatpush2.msra.mxu0 0.0
    %4135 = vmatprep.subr.mxu0 0.0
    %4136 = vmatpush2.msra.mxu0 0.0
    %4137 = vmatprep.subr.mxu0 0.0
    %4138 = vmatpush2.msra.mxu0 0.0
    %4139 = vmatprep.subr.mxu0 0.0
    %4140 = vmatpush2.msra.mxu0 0.0
    %4141 = vmatprep.subr.mxu0 0.0
    %4142 = vmatpush2.msra.mxu0 0.0
    %4143 = vmatprep.subr.mxu0 0.0
    %4144 = vmatpush2.msra.mxu0 0.0
    %4145 = vmatprep.subr.mxu0 0.0
    %4146 = vmatpush2.msra.mxu0 0.0
    %4147 = vmatprep.subr.mxu0 0.0
    %4148 = vmatpush2.msra.mxu0 0.0
    %4149 = vmatprep.subr.mxu0 0.0
    %4150 = vmatpush2.msra.mxu0 0.0
    %4151 = vmatprep.subr.mxu0 0.0
    %4152 = vmatpush2.msra.mxu0 0.0
    %4153 = vmatprep.subr.mxu0 0.0
    %4154 = vmatpush2.msra.mxu0 0.0
    %4155 = vmatprep.mubr.f32.mxu0 0.0
    %v4156 = vand.u32 %v3990, 4294901760
    %4157 = vmatmul.mubr.f32.gmra.mxu0 %v4156
    %v4158 = vpop.f32.mrf.mxu0
    %v4159 = vadd.f32 %v4068, %v4158
    %v4160 = vpop.f32.mrf.mxu0
    %4161 = vdwg.mxu0
    %4162 = vmatprep.subr.mxu0 0.0
    %4163 = vmatpush1.msra.mxu0 0.0
    %4164 = vmatprep.subr.mxu0 0.0
    %4165 = vmatpush1.msra.mxu0 0.0
    %4166 = vmatprep.subr.mxu0 0.0
    %4167 = vmatpush1.msra.mxu0 0.0
    %4168 = vmatprep.subr.mxu0 0.0
    %4169 = vmatpush1.msra.mxu0 0.0
    %4170 = vmatprep.subr.mxu0 0.0
    %4171 = vmatpush1.msra.mxu0 0.0
    %4172 = vmatprep.subr.mxu0 0.0
    %4173 = vmatpush1.msra.mxu0 0.0
    %4174 = vmatprep.subr.mxu0 0.0
    %4175 = vmatpush1.msra.mxu0 0.0
    %4176 = vmatprep.subr.mxu0 0.0
    %4177 = vmatpush1.msra.mxu0 0.0
    %4178 = vmatprep.subr.mxu0 0.0
    %4179 = vmatpush1.msra.mxu0 0.0
    %4180 = vmatprep.subr.mxu0 0.0
    %4181 = vmatpush1.msra.mxu0 0.0
    %4182 = vmatprep.subr.mxu0 0.0
    %4183 = vmatpush1.msra.mxu0 0.0
    %4184 = vmatprep.subr.mxu0 0.0
    %4185 = vmatpush1.msra.mxu0 0.0
    %4186 = vmatprep.subr.mxu0 0.0
    %v4187 = vand.u32 %v71, 4294901760
    %v4188 = vsub.f32 %v71, %v4187
    %4189 = vmatpush1.msra.mxu0 %v4188
    %4190 = vmatprep.subr.mxu0 0.0
    %v4191 = vand.u32 %v70, 4294901760
    %v4192 = vsub.f32 %v70, %v4191
    %4193 = vmatpush1.msra.mxu0 %v4192
    %4194 = vmatprep.subr.mxu0 0.0
    %v4195 = vand.u32 %v69, 4294901760
    %v4196 = vsub.f32 %v69, %v4195
    %4197 = vmatpush1.msra.mxu0 %v4196
    %4198 = vmatprep.subr.mxu0 0.0
    %v4199 = vand.u32 %v68, 4294901760
    %v4200 = vsub.f32 %v68, %v4199
    %4201 = vmatpush1.msra.mxu0 %v4200
    %4202 = vmatprep.subr.mxu0 0.0
    %4203 = vmatpush2.msra.mxu0 0.0
    %4204 = vmatprep.subr.mxu0 0.0
    %4205 = vmatpush2.msra.mxu0 0.0
    %4206 = vmatprep.subr.mxu0 0.0
    %4207 = vmatpush2.msra.mxu0 0.0
    %4208 = vmatprep.subr.mxu0 0.0
    %4209 = vmatpush2.msra.mxu0 0.0
    %4210 = vmatprep.subr.mxu0 0.0
    %4211 = vmatpush2.msra.mxu0 0.0
    %4212 = vmatprep.subr.mxu0 0.0
    %4213 = vmatpush2.msra.mxu0 0.0
    %4214 = vmatprep.subr.mxu0 0.0
    %4215 = vmatpush2.msra.mxu0 0.0
    %4216 = vmatprep.subr.mxu0 0.0
    %4217 = vmatpush2.msra.mxu0 0.0
    %4218 = vmatprep.subr.mxu0 0.0
    %4219 = vmatpush2.msra.mxu0 0.0
    %4220 = vmatprep.subr.mxu0 0.0
    %4221 = vmatpush2.msra.mxu0 0.0
    %4222 = vmatprep.subr.mxu0 0.0
    %4223 = vmatpush2.msra.mxu0 0.0
    %4224 = vmatprep.subr.mxu0 0.0
    %4225 = vmatpush2.msra.mxu0 0.0
    %4226 = vmatprep.subr.mxu0 0.0
    %4227 = vmatpush2.msra.mxu0 0.0
    %4228 = vmatprep.subr.mxu0 0.0
    %4229 = vmatpush2.msra.mxu0 0.0
    %4230 = vmatprep.subr.mxu0 0.0
    %4231 = vmatpush2.msra.mxu0 0.0
    %4232 = vmatprep.subr.mxu0 0.0
    %4233 = vmatpush2.msra.mxu0 0.0
    %4234 = vmatprep.mubr.f32.mxu0 0.0
    %v4235 = vand.u32 %v3990, 4294901760
    %v4236 = vsub.f32 %v3990, %v4235
    %4237 = vmatmul.mubr.f32.gmra.mxu0 %v4236
    %v4238 = vpop.f32.mrf.mxu0
    %v4239 = vadd.f32 %v4159, %v4238
    %v4240 = vpop.f32.mrf.mxu0
    %4241 = vdwg.mxu0
    %4242 = vmatprep.subr.mxu0 0.0
    %4243 = vmatpush1.msra.mxu0 0.0
    %4244 = vmatprep.subr.mxu0 0.0
    %4245 = vmatpush1.msra.mxu0 0.0
    %4246 = vmatprep.subr.mxu0 0.0
    %4247 = vmatpush1.msra.mxu0 0.0
    %4248 = vmatprep.subr.mxu0 0.0
    %4249 = vmatpush1.msra.mxu0 0.0
    %4250 = vmatprep.subr.mxu0 0.0
    %4251 = vmatpush1.msra.mxu0 0.0
    %4252 = vmatprep.subr.mxu0 0.0
    %4253 = vmatpush1.msra.mxu0 0.0
    %4254 = vmatprep.subr.mxu0 0.0
    %4255 = vmatpush1.msra.mxu0 0.0
    %4256 = vmatprep.subr.mxu0 0.0
    %4257 = vmatpush1.msra.mxu0 0.0
    %4258 = vmatprep.subr.mxu0 0.0
    %4259 = vmatpush1.msra.mxu0 0.0
    %4260 = vmatprep.subr.mxu0 0.0
    %4261 = vmatpush1.msra.mxu0 0.0
    %4262 = vmatprep.subr.mxu0 0.0
    %4263 = vmatpush1.msra.mxu0 0.0
    %4264 = vmatprep.subr.mxu0 0.0
    %4265 = vmatpush1.msra.mxu0 0.0
    %4266 = vmatprep.subr.mxu0 0.0
    %v4267 = vand.u32 %v71, 4294901760
    %4268 = vmatpush1.msra.mxu0 %v4267
    %4269 = vmatprep.subr.mxu0 0.0
    %v4270 = vand.u32 %v70, 4294901760
    %4271 = vmatpush1.msra.mxu0 %v4270
    %4272 = vmatprep.subr.mxu0 0.0
    %v4273 = vand.u32 %v69, 4294901760
    %4274 = vmatpush1.msra.mxu0 %v4273
    %4275 = vmatprep.subr.mxu0 0.0
    %v4276 = vand.u32 %v68, 4294901760
    %4277 = vmatpush1.msra.mxu0 %v4276
    %4278 = vmatprep.subr.mxu0 0.0
    %4279 = vmatpush2.msra.mxu0 0.0
    %4280 = vmatprep.subr.mxu0 0.0
    %4281 = vmatpush2.msra.mxu0 0.0
    %4282 = vmatprep.subr.mxu0 0.0
    %4283 = vmatpush2.msra.mxu0 0.0
    %4284 = vmatprep.subr.mxu0 0.0
    %4285 = vmatpush2.msra.mxu0 0.0
    %4286 = vmatprep.subr.mxu0 0.0
    %4287 = vmatpush2.msra.mxu0 0.0
    %4288 = vmatprep.subr.mxu0 0.0
    %4289 = vmatpush2.msra.mxu0 0.0
    %4290 = vmatprep.subr.mxu0 0.0
    %4291 = vmatpush2.msra.mxu0 0.0
    %4292 = vmatprep.subr.mxu0 0.0
    %4293 = vmatpush2.msra.mxu0 0.0
    %4294 = vmatprep.subr.mxu0 0.0
    %4295 = vmatpush2.msra.mxu0 0.0
    %4296 = vmatprep.subr.mxu0 0.0
    %4297 = vmatpush2.msra.mxu0 0.0
    %4298 = vmatprep.subr.mxu0 0.0
    %4299 = vmatpush2.msra.mxu0 0.0
    %4300 = vmatprep.subr.mxu0 0.0
    %4301 = vmatpush2.msra.mxu0 0.0
    %4302 = vmatprep.subr.mxu0 0.0
    %4303 = vmatpush2.msra.mxu0 0.0
    %4304 = vmatprep.subr.mxu0 0.0
    %4305 = vmatpush2.msra.mxu0 0.0
    %4306 = vmatprep.subr.mxu0 0.0
    %4307 = vmatpush2.msra.mxu0 0.0
    %4308 = vmatprep.subr.mxu0 0.0
    %4309 = vmatpush2.msra.mxu0 0.0
    %4310 = vmatprep.mubr.f32.mxu0 0.0
    %v4311 = vand.u32 %v3990, 4294901760
    %v4312 = vsub.f32 %v3990, %v4311
    %v4313 = vand.u32 %v4312, 4294901760
    %4314 = vmatmul.mubr.f32.gmra.mxu0 %v4313
    %v4315 = vpop.f32.mrf.mxu0
    %v4316 = vadd.f32 %v4239, %v4315
    %v4317 = vpop.f32.mrf.mxu0
    %4318 = vdwg.mxu0
    %4319 = vmatprep.subr.mxu0 0.0
    %4320 = vmatpush1.msra.mxu0 0.0
    %4321 = vmatprep.subr.mxu0 0.0
    %4322 = vmatpush1.msra.mxu0 0.0
    %4323 = vmatprep.subr.mxu0 0.0
    %4324 = vmatpush1.msra.mxu0 0.0
    %4325 = vmatprep.subr.mxu0 0.0
    %4326 = vmatpush1.msra.mxu0 0.0
    %4327 = vmatprep.subr.mxu0 0.0
    %4328 = vmatpush1.msra.mxu0 0.0
    %4329 = vmatprep.subr.mxu0 0.0
    %4330 = vmatpush1.msra.mxu0 0.0
    %4331 = vmatprep.subr.mxu0 0.0
    %4332 = vmatpush1.msra.mxu0 0.0
    %4333 = vmatprep.subr.mxu0 0.0
    %4334 = vmatpush1.msra.mxu0 0.0
    %4335 = vmatprep.subr.mxu0 0.0
    %4336 = vmatpush1.msra.mxu0 0.0
    %4337 = vmatprep.subr.mxu0 0.0
    %4338 = vmatpush1.msra.mxu0 0.0
    %4339 = vmatprep.subr.mxu0 0.0
    %4340 = vmatpush1.msra.mxu0 0.0
    %4341 = vmatprep.subr.mxu0 0.0
    %4342 = vmatpush1.msra.mxu0 0.0
    %4343 = vmatprep.subr.mxu0 0.0
    %v4344 = vand.u32 %v71, 4294901760
    %v4345 = vsub.f32 %v71, %v4344
    %v4346 = vand.u32 %v4345, 4294901760
    %4347 = vmatpush1.msra.mxu0 %v4346
    %4348 = vmatprep.subr.mxu0 0.0
    %v4349 = vand.u32 %v70, 4294901760
    %v4350 = vsub.f32 %v70, %v4349
    %v4351 = vand.u32 %v4350, 4294901760
    %4352 = vmatpush1.msra.mxu0 %v4351
    %4353 = vmatprep.subr.mxu0 0.0
    %v4354 = vand.u32 %v69, 4294901760
    %v4355 = vsub.f32 %v69, %v4354
    %v4356 = vand.u32 %v4355, 4294901760
    %4357 = vmatpush1.msra.mxu0 %v4356
    %4358 = vmatprep.subr.mxu0 0.0
    %v4359 = vand.u32 %v68, 4294901760
    %v4360 = vsub.f32 %v68, %v4359
    %v4361 = vand.u32 %v4360, 4294901760
    %4362 = vmatpush1.msra.mxu0 %v4361
    %4363 = vmatprep.subr.mxu0 0.0
    %4364 = vmatpush2.msra.mxu0 0.0
    %4365 = vmatprep.subr.mxu0 0.0
    %4366 = vmatpush2.msra.mxu0 0.0
    %4367 = vmatprep.subr.mxu0 0.0
    %4368 = vmatpush2.msra.mxu0 0.0
    %4369 = vmatprep.subr.mxu0 0.0
    %4370 = vmatpush2.msra.mxu0 0.0
    %4371 = vmatprep.subr.mxu0 0.0
    %4372 = vmatpush2.msra.mxu0 0.0
    %4373 = vmatprep.subr.mxu0 0.0
    %4374 = vmatpush2.msra.mxu0 0.0
    %4375 = vmatprep.subr.mxu0 0.0
    %4376 = vmatpush2.msra.mxu0 0.0
    %4377 = vmatprep.subr.mxu0 0.0
    %4378 = vmatpush2.msra.mxu0 0.0
    %4379 = vmatprep.subr.mxu0 0.0
    %4380 = vmatpush2.msra.mxu0 0.0
    %4381 = vmatprep.subr.mxu0 0.0
    %4382 = vmatpush2.msra.mxu0 0.0
    %4383 = vmatprep.subr.mxu0 0.0
    %4384 = vmatpush2.msra.mxu0 0.0
    %4385 = vmatprep.subr.mxu0 0.0
    %4386 = vmatpush2.msra.mxu0 0.0
    %4387 = vmatprep.subr.mxu0 0.0
    %4388 = vmatpush2.msra.mxu0 0.0
    %4389 = vmatprep.subr.mxu0 0.0
    %4390 = vmatpush2.msra.mxu0 0.0
    %4391 = vmatprep.subr.mxu0 0.0
    %4392 = vmatpush2.msra.mxu0 0.0
    %4393 = vmatprep.subr.mxu0 0.0
    %4394 = vmatpush2.msra.mxu0 0.0
    %4395 = vmatprep.mubr.f32.mxu0 0.0
    %v4396 = vand.u32 %v3990, 4294901760
    %4397 = vmatmul.mubr.f32.gmra.mxu0 %v4396
    %v4398 = vpop.f32.mrf.mxu0
    %v4399 = vadd.f32 %v4316, %v4398
    %v4400 = vpop.f32.mrf.mxu0
    %4401 = vdwg.mxu0
    %4402 = vmatprep.subr.mxu0 0.0
    %4403 = vmatpush1.msra.mxu0 0.0
    %4404 = vmatprep.subr.mxu0 0.0
    %4405 = vmatpush1.msra.mxu0 0.0
    %4406 = vmatprep.subr.mxu0 0.0
    %4407 = vmatpush1.msra.mxu0 0.0
    %4408 = vmatprep.subr.mxu0 0.0
    %4409 = vmatpush1.msra.mxu0 0.0
    %4410 = vmatprep.subr.mxu0 0.0
    %4411 = vmatpush1.msra.mxu0 0.0
    %4412 = vmatprep.subr.mxu0 0.0
    %4413 = vmatpush1.msra.mxu0 0.0
    %4414 = vmatprep.subr.mxu0 0.0
    %4415 = vmatpush1.msra.mxu0 0.0
    %4416 = vmatprep.subr.mxu0 0.0
    %4417 = vmatpush1.msra.mxu0 0.0
    %4418 = vmatprep.subr.mxu0 0.0
    %4419 = vmatpush1.msra.mxu0 0.0
    %4420 = vmatprep.subr.mxu0 0.0
    %4421 = vmatpush1.msra.mxu0 0.0
    %4422 = vmatprep.subr.mxu0 0.0
    %4423 = vmatpush1.msra.mxu0 0.0
    %4424 = vmatprep.subr.mxu0 0.0
    %4425 = vmatpush1.msra.mxu0 0.0
    %4426 = vmatprep.subr.mxu0 0.0
    %v4427 = vand.u32 %v71, 4294901760
    %4428 = vmatpush1.msra.mxu0 %v4427
    %4429 = vmatprep.subr.mxu0 0.0
    %v4430 = vand.u32 %v70, 4294901760
    %4431 = vmatpush1.msra.mxu0 %v4430
    %4432 = vmatprep.subr.mxu0 0.0
    %v4433 = vand.u32 %v69, 4294901760
    %4434 = vmatpush1.msra.mxu0 %v4433
    %4435 = vmatprep.subr.mxu0 0.0
    %v4436 = vand.u32 %v68, 4294901760
    %4437 = vmatpush1.msra.mxu0 %v4436
    %4438 = vmatprep.subr.mxu0 0.0
    %4439 = vmatpush2.msra.mxu0 0.0
    %4440 = vmatprep.subr.mxu0 0.0
    %4441 = vmatpush2.msra.mxu0 0.0
    %4442 = vmatprep.subr.mxu0 0.0
    %4443 = vmatpush2.msra.mxu0 0.0
    %4444 = vmatprep.subr.mxu0 0.0
    %4445 = vmatpush2.msra.mxu0 0.0
    %4446 = vmatprep.subr.mxu0 0.0
    %4447 = vmatpush2.msra.mxu0 0.0
    %4448 = vmatprep.subr.mxu0 0.0
    %4449 = vmatpush2.msra.mxu0 0.0
    %4450 = vmatprep.subr.mxu0 0.0
    %4451 = vmatpush2.msra.mxu0 0.0
    %4452 = vmatprep.subr.mxu0 0.0
    %4453 = vmatpush2.msra.mxu0 0.0
    %4454 = vmatprep.subr.mxu0 0.0
    %4455 = vmatpush2.msra.mxu0 0.0
    %4456 = vmatprep.subr.mxu0 0.0
    %4457 = vmatpush2.msra.mxu0 0.0
    %4458 = vmatprep.subr.mxu0 0.0
    %4459 = vmatpush2.msra.mxu0 0.0
    %4460 = vmatprep.subr.mxu0 0.0
    %4461 = vmatpush2.msra.mxu0 0.0
    %4462 = vmatprep.subr.mxu0 0.0
    %4463 = vmatpush2.msra.mxu0 0.0
    %4464 = vmatprep.subr.mxu0 0.0
    %4465 = vmatpush2.msra.mxu0 0.0
    %4466 = vmatprep.subr.mxu0 0.0
    %4467 = vmatpush2.msra.mxu0 0.0
    %4468 = vmatprep.subr.mxu0 0.0
    %4469 = vmatpush2.msra.mxu0 0.0
    %4470 = vmatprep.mubr.f32.mxu0 0.0
    %v4471 = vand.u32 %v3990, 4294901760
    %4472 = vmatmul.mubr.f32.gmra.mxu0 %v4471
    %v4473 = vpop.f32.mrf.mxu0
    %v4474 = vadd.f32 %v4399, %v4473
    %v4475 = vpop.f32.mrf.mxu0
    %4476 = vdwg.mxu0
    %v4477 = vadd.f32 %v991, %v4474
    %v4478 = vtanh.pop %v4477
    %vm4479 = vcmp.eq.s32.totalorder %v1005, 6
    %v4480 = vsel %vm4479, 1, 0
    %4481 = vset.pattern.permute.xlu0 0
    %4482 = vperm.xlu0 %4481, %v4480
    %v4483 = vpop.permute.xlu0 %4482
    %vm4484 = vcmp.eq.s32.totalorder %v4483, 1
    %v4485 = vsel %vm4484, %v4478, %v3988
    %v4487 = vsel %vm1006, %v4478, 0
    %4489 = vmatprep.subr.mxu0 0.0
    %4490 = vmatpush1.msra.mxu0 0.0
    %4491 = vmatprep.subr.mxu0 0.0
    %4492 = vmatpush1.msra.mxu0 0.0
    %4493 = vmatprep.subr.mxu0 0.0
    %4494 = vmatpush1.msra.mxu0 0.0
    %4495 = vmatprep.subr.mxu0 0.0
    %4496 = vmatpush1.msra.mxu0 0.0
    %4497 = vmatprep.subr.mxu0 0.0
    %4498 = vmatpush1.msra.mxu0 0.0
    %4499 = vmatprep.subr.mxu0 0.0
    %4500 = vmatpush1.msra.mxu0 0.0
    %4501 = vmatprep.subr.mxu0 0.0
    %4502 = vmatpush1.msra.mxu0 0.0
    %4503 = vmatprep.subr.mxu0 0.0
    %4504 = vmatpush1.msra.mxu0 0.0
    %4505 = vmatprep.subr.mxu0 0.0
    %4506 = vmatpush1.msra.mxu0 0.0
    %4507 = vmatprep.subr.mxu0 0.0
    %4508 = vmatpush1.msra.mxu0 0.0
    %4509 = vmatprep.subr.mxu0 0.0
    %4510 = vmatpush1.msra.mxu0 0.0
    %4511 = vmatprep.subr.mxu0 0.0
    %4512 = vmatpush1.msra.mxu0 0.0
    %4513 = vmatprep.subr.mxu0 0.0
    %v4514 = vand.u32 %v71, 4294901760
    %4515 = vmatpush1.msra.mxu0 %v4514
    %4516 = vmatprep.subr.mxu0 0.0
    %v4517 = vand.u32 %v70, 4294901760
    %4518 = vmatpush1.msra.mxu0 %v4517
    %4519 = vmatprep.subr.mxu0 0.0
    %v4520 = vand.u32 %v69, 4294901760
    %4521 = vmatpush1.msra.mxu0 %v4520
    %4522 = vmatprep.subr.mxu0 0.0
    %v4523 = vand.u32 %v68, 4294901760
    %4524 = vmatpush1.msra.mxu0 %v4523
    %4525 = vmatprep.subr.mxu0 0.0
    %4526 = vmatpush2.msra.mxu0 0.0
    %4527 = vmatprep.subr.mxu0 0.0
    %4528 = vmatpush2.msra.mxu0 0.0
    %4529 = vmatprep.subr.mxu0 0.0
    %4530 = vmatpush2.msra.mxu0 0.0
    %4531 = vmatprep.subr.mxu0 0.0
    %4532 = vmatpush2.msra.mxu0 0.0
    %4533 = vmatprep.subr.mxu0 0.0
    %4534 = vmatpush2.msra.mxu0 0.0
    %4535 = vmatprep.subr.mxu0 0.0
    %4536 = vmatpush2.msra.mxu0 0.0
    %4537 = vmatprep.subr.mxu0 0.0
    %4538 = vmatpush2.msra.mxu0 0.0
    %4539 = vmatprep.subr.mxu0 0.0
    %4540 = vmatpush2.msra.mxu0 0.0
    %4541 = vmatprep.subr.mxu0 0.0
    %4542 = vmatpush2.msra.mxu0 0.0
    %4543 = vmatprep.subr.mxu0 0.0
    %4544 = vmatpush2.msra.mxu0 0.0
    %4545 = vmatprep.subr.mxu0 0.0
    %4546 = vmatpush2.msra.mxu0 0.0
    %4547 = vmatprep.subr.mxu0 0.0
    %4548 = vmatpush2.msra.mxu0 0.0
    %4549 = vmatprep.subr.mxu0 0.0
    %4550 = vmatpush2.msra.mxu0 0.0
    %4551 = vmatprep.subr.mxu0 0.0
    %4552 = vmatpush2.msra.mxu0 0.0
    %4553 = vmatprep.subr.mxu0 0.0
    %4554 = vmatpush2.msra.mxu0 0.0
    %4555 = vmatprep.subr.mxu0 0.0
    %4556 = vmatpush2.msra.mxu0 0.0
    %4557 = vmatprep.mubr.f32.mxu0 0.0
    %v4558 = vand.u32 %v4487, 4294901760
    %v4559 = vsub.f32 %v4487, %v4558
    %v4560 = vand.u32 %v4559, 4294901760
    %v4561 = vsub.f32 %v4559, %v4560
    %v4562 = vand.u32 %v4561, 4294901760
    %4563 = vmatmul.mubr.f32.gmra.mxu0 %v4562
    %v4564 = vpop.f32.mrf.mxu0
    %v4565 = vadd.f32 0.0, %v4564
    %v4566 = vpop.f32.mrf.mxu0
    %4567 = vdwg.mxu0
    %4568 = vmatprep.subr.mxu0 0.0
    %4569 = vmatpush1.msra.mxu0 0.0
    %4570 = vmatprep.subr.mxu0 0.0
    %4571 = vmatpush1.msra.mxu0 0.0
    %4572 = vmatprep.subr.mxu0 0.0
    %4573 = vmatpush1.msra.mxu0 0.0
    %4574 = vmatprep.subr.mxu0 0.0
    %4575 = vmatpush1.msra.mxu0 0.0
    %4576 = vmatprep.subr.mxu0 0.0
    %4577 = vmatpush1.msra.mxu0 0.0
    %4578 = vmatprep.subr.mxu0 0.0
    %4579 = vmatpush1.msra.mxu0 0.0
    %4580 = vmatprep.subr.mxu0 0.0
    %4581 = vmatpush1.msra.mxu0 0.0
    %4582 = vmatprep.subr.mxu0 0.0
    %4583 = vmatpush1.msra.mxu0 0.0
    %4584 = vmatprep.subr.mxu0 0.0
    %4585 = vmatpush1.msra.mxu0 0.0
    %4586 = vmatprep.subr.mxu0 0.0
    %4587 = vmatpush1.msra.mxu0 0.0
    %4588 = vmatprep.subr.mxu0 0.0
    %4589 = vmatpush1.msra.mxu0 0.0
    %4590 = vmatprep.subr.mxu0 0.0
    %4591 = vmatpush1.msra.mxu0 0.0
    %4592 = vmatprep.subr.mxu0 0.0
    %v4593 = vand.u32 %v71, 4294901760
    %v4594 = vsub.f32 %v71, %v4593
    %v4595 = vand.u32 %v4594, 4294901760
    %v4596 = vsub.f32 %v4594, %v4595
    %v4597 = vand.u32 %v4596, 4294901760
    %4598 = vmatpush1.msra.mxu0 %v4597
    %4599 = vmatprep.subr.mxu0 0.0
    %v4600 = vand.u32 %v70, 4294901760
    %v4601 = vsub.f32 %v70, %v4600
    %v4602 = vand.u32 %v4601, 4294901760
    %v4603 = vsub.f32 %v4601, %v4602
    %v4604 = vand.u32 %v4603, 4294901760
    %4605 = vmatpush1.msra.mxu0 %v4604
    %4606 = vmatprep.subr.mxu0 0.0
    %v4607 = vand.u32 %v69, 4294901760
    %v4608 = vsub.f32 %v69, %v4607
    %v4609 = vand.u32 %v4608, 4294901760
    %v4610 = vsub.f32 %v4608, %v4609
    %v4611 = vand.u32 %v4610, 4294901760
    %4612 = vmatpush1.msra.mxu0 %v4611
    %4613 = vmatprep.subr.mxu0 0.0
    %v4614 = vand.u32 %v68, 4294901760
    %v4615 = vsub.f32 %v68, %v4614
    %v4616 = vand.u32 %v4615, 4294901760
    %v4617 = vsub.f32 %v4615, %v4616
    %v4618 = vand.u32 %v4617, 4294901760
    %4619 = vmatpush1.msra.mxu0 %v4618
    %4620 = vmatprep.subr.mxu0 0.0
    %4621 = vmatpush2.msra.mxu0 0.0
    %4622 = vmatprep.subr.mxu0 0.0
    %4623 = vmatpush2.msra.mxu0 0.0
    %4624 = vmatprep.subr.mxu0 0.0
    %4625 = vmatpush2.msra.mxu0 0.0
    %4626 = vmatprep.subr.mxu0 0.0
    %4627 = vmatpush2.msra.mxu0 0.0
    %4628 = vmatprep.subr.mxu0 0.0
    %4629 = vmatpush2.msra.mxu0 0.0
    %4630 = vmatprep.subr.mxu0 0.0
    %4631 = vmatpush2.msra.mxu0 0.0
    %4632 = vmatprep.subr.mxu0 0.0
    %4633 = vmatpush2.msra.mxu0 0.0
    %4634 = vmatprep.subr.mxu0 0.0
    %4635 = vmatpush2.msra.mxu0 0.0
    %4636 = vmatprep.subr.mxu0 0.0
    %4637 = vmatpush2.msra.mxu0 0.0
    %4638 = vmatprep.subr.mxu0 0.0
    %4639 = vmatpush2.msra.mxu0 0.0
    %4640 = vmatprep.subr.mxu0 0.0
    %4641 = vmatpush2.msra.mxu0 0.0
    %4642 = vmatprep.subr.mxu0 0.0
    %4643 = vmatpush2.msra.mxu0 0.0
    %4644 = vmatprep.subr.mxu0 0.0
    %4645 = vmatpush2.msra.mxu0 0.0
    %4646 = vmatprep.subr.mxu0 0.0
    %4647 = vmatpush2.msra.mxu0 0.0
    %4648 = vmatprep.subr.mxu0 0.0
    %4649 = vmatpush2.msra.mxu0 0.0
    %4650 = vmatprep.subr.mxu0 0.0
    %4651 = vmatpush2.msra.mxu0 0.0
    %4652 = vmatprep.mubr.f32.mxu0 0.0
    %v4653 = vand.u32 %v4487, 4294901760
    %4654 = vmatmul.mubr.f32.gmra.mxu0 %v4653
    %v4655 = vpop.f32.mrf.mxu0
    %v4656 = vadd.f32 %v4565, %v4655
    %v4657 = vpop.f32.mrf.mxu0
    %4658 = vdwg.mxu0
    %4659 = vmatprep.subr.mxu0 0.0
    %4660 = vmatpush1.msra.mxu0 0.0
    %4661 = vmatprep.subr.mxu0 0.0
    %4662 = vmatpush1.msra.mxu0 0.0
    %4663 = vmatprep.subr.mxu0 0.0
    %4664 = vmatpush1.msra.mxu0 0.0
    %4665 = vmatprep.subr.mxu0 0.0
    %4666 = vmatpush1.msra.mxu0 0.0
    %4667 = vmatprep.subr.mxu0 0.0
    %4668 = vmatpush1.msra.mxu0 0.0
    %4669 = vmatprep.subr.mxu0 0.0
    %4670 = vmatpush1.msra.mxu0 0.0
    %4671 = vmatprep.subr.mxu0 0.0
    %4672 = vmatpush1.msra.mxu0 0.0
    %4673 = vmatprep.subr.mxu0 0.0
    %4674 = vmatpush1.msra.mxu0 0.0
    %4675 = vmatprep.subr.mxu0 0.0
    %4676 = vmatpush1.msra.mxu0 0.0
    %4677 = vmatprep.subr.mxu0 0.0
    %4678 = vmatpush1.msra.mxu0 0.0
    %4679 = vmatprep.subr.mxu0 0.0
    %4680 = vmatpush1.msra.mxu0 0.0
    %4681 = vmatprep.subr.mxu0 0.0
    %4682 = vmatpush1.msra.mxu0 0.0
    %4683 = vmatprep.subr.mxu0 0.0
    %v4684 = vand.u32 %v71, 4294901760
    %v4685 = vsub.f32 %v71, %v4684
    %4686 = vmatpush1.msra.mxu0 %v4685
    %4687 = vmatprep.subr.mxu0 0.0
    %v4688 = vand.u32 %v70, 4294901760
    %v4689 = vsub.f32 %v70, %v4688
    %4690 = vmatpush1.msra.mxu0 %v4689
    %4691 = vmatprep.subr.mxu0 0.0
    %v4692 = vand.u32 %v69, 4294901760
    %v4693 = vsub.f32 %v69, %v4692
    %4694 = vmatpush1.msra.mxu0 %v4693
    %4695 = vmatprep.subr.mxu0 0.0
    %v4696 = vand.u32 %v68, 4294901760
    %v4697 = vsub.f32 %v68, %v4696
    %4698 = vmatpush1.msra.mxu0 %v4697
    %4699 = vmatprep.subr.mxu0 0.0
    %4700 = vmatpush2.msra.mxu0 0.0
    %4701 = vmatprep.subr.mxu0 0.0
    %4702 = vmatpush2.msra.mxu0 0.0
    %4703 = vmatprep.subr.mxu0 0.0
    %4704 = vmatpush2.msra.mxu0 0.0
    %4705 = vmatprep.subr.mxu0 0.0
    %4706 = vmatpush2.msra.mxu0 0.0
    %4707 = vmatprep.subr.mxu0 0.0
    %4708 = vmatpush2.msra.mxu0 0.0
    %4709 = vmatprep.subr.mxu0 0.0
    %4710 = vmatpush2.msra.mxu0 0.0
    %4711 = vmatprep.subr.mxu0 0.0
    %4712 = vmatpush2.msra.mxu0 0.0
    %4713 = vmatprep.subr.mxu0 0.0
    %4714 = vmatpush2.msra.mxu0 0.0
    %4715 = vmatprep.subr.mxu0 0.0
    %4716 = vmatpush2.msra.mxu0 0.0
    %4717 = vmatprep.subr.mxu0 0.0
    %4718 = vmatpush2.msra.mxu0 0.0
    %4719 = vmatprep.subr.mxu0 0.0
    %4720 = vmatpush2.msra.mxu0 0.0
    %4721 = vmatprep.subr.mxu0 0.0
    %4722 = vmatpush2.msra.mxu0 0.0
    %4723 = vmatprep.subr.mxu0 0.0
    %4724 = vmatpush2.msra.mxu0 0.0
    %4725 = vmatprep.subr.mxu0 0.0
    %4726 = vmatpush2.msra.mxu0 0.0
    %4727 = vmatprep.subr.mxu0 0.0
    %4728 = vmatpush2.msra.mxu0 0.0
    %4729 = vmatprep.subr.mxu0 0.0
    %4730 = vmatpush2.msra.mxu0 0.0
    %4731 = vmatprep.mubr.f32.mxu0 0.0
    %v4732 = vand.u32 %v4487, 4294901760
    %v4733 = vsub.f32 %v4487, %v4732
    %4734 = vmatmul.mubr.f32.gmra.mxu0 %v4733
    %v4735 = vpop.f32.mrf.mxu0
    %v4736 = vadd.f32 %v4656, %v4735
    %v4737 = vpop.f32.mrf.mxu0
    %4738 = vdwg.mxu0
    %4739 = vmatprep.subr.mxu0 0.0
    %4740 = vmatpush1.msra.mxu0 0.0
    %4741 = vmatprep.subr.mxu0 0.0
    %4742 = vmatpush1.msra.mxu0 0.0
    %4743 = vmatprep.subr.mxu0 0.0
    %4744 = vmatpush1.msra.mxu0 0.0
    %4745 = vmatprep.subr.mxu0 0.0
    %4746 = vmatpush1.msra.mxu0 0.0
    %4747 = vmatprep.subr.mxu0 0.0
    %4748 = vmatpush1.msra.mxu0 0.0
    %4749 = vmatprep.subr.mxu0 0.0
    %4750 = vmatpush1.msra.mxu0 0.0
    %4751 = vmatprep.subr.mxu0 0.0
    %4752 = vmatpush1.msra.mxu0 0.0
    %4753 = vmatprep.subr.mxu0 0.0
    %4754 = vmatpush1.msra.mxu0 0.0
    %4755 = vmatprep.subr.mxu0 0.0
    %4756 = vmatpush1.msra.mxu0 0.0
    %4757 = vmatprep.subr.mxu0 0.0
    %4758 = vmatpush1.msra.mxu0 0.0
    %4759 = vmatprep.subr.mxu0 0.0
    %4760 = vmatpush1.msra.mxu0 0.0
    %4761 = vmatprep.subr.mxu0 0.0
    %4762 = vmatpush1.msra.mxu0 0.0
    %4763 = vmatprep.subr.mxu0 0.0
    %v4764 = vand.u32 %v71, 4294901760
    %4765 = vmatpush1.msra.mxu0 %v4764
    %4766 = vmatprep.subr.mxu0 0.0
    %v4767 = vand.u32 %v70, 4294901760
    %4768 = vmatpush1.msra.mxu0 %v4767
    %4769 = vmatprep.subr.mxu0 0.0
    %v4770 = vand.u32 %v69, 4294901760
    %4771 = vmatpush1.msra.mxu0 %v4770
    %4772 = vmatprep.subr.mxu0 0.0
    %v4773 = vand.u32 %v68, 4294901760
    %4774 = vmatpush1.msra.mxu0 %v4773
    %4775 = vmatprep.subr.mxu0 0.0
    %4776 = vmatpush2.msra.mxu0 0.0
    %4777 = vmatprep.subr.mxu0 0.0
    %4778 = vmatpush2.msra.mxu0 0.0
    %4779 = vmatprep.subr.mxu0 0.0
    %4780 = vmatpush2.msra.mxu0 0.0
    %4781 = vmatprep.subr.mxu0 0.0
    %4782 = vmatpush2.msra.mxu0 0.0
    %4783 = vmatprep.subr.mxu0 0.0
    %4784 = vmatpush2.msra.mxu0 0.0
    %4785 = vmatprep.subr.mxu0 0.0
    %4786 = vmatpush2.msra.mxu0 0.0
    %4787 = vmatprep.subr.mxu0 0.0
    %4788 = vmatpush2.msra.mxu0 0.0
    %4789 = vmatprep.subr.mxu0 0.0
    %4790 = vmatpush2.msra.mxu0 0.0
    %4791 = vmatprep.subr.mxu0 0.0
    %4792 = vmatpush2.msra.mxu0 0.0
    %4793 = vmatprep.subr.mxu0 0.0
    %4794 = vmatpush2.msra.mxu0 0.0
    %4795 = vmatprep.subr.mxu0 0.0
    %4796 = vmatpush2.msra.mxu0 0.0
    %4797 = vmatprep.subr.mxu0 0.0
    %4798 = vmatpush2.msra.mxu0 0.0
    %4799 = vmatprep.subr.mxu0 0.0
    %4800 = vmatpush2.msra.mxu0 0.0
    %4801 = vmatprep.subr.mxu0 0.0
    %4802 = vmatpush2.msra.mxu0 0.0
    %4803 = vmatprep.subr.mxu0 0.0
    %4804 = vmatpush2.msra.mxu0 0.0
    %4805 = vmatprep.subr.mxu0 0.0
    %4806 = vmatpush2.msra.mxu0 0.0
    %4807 = vmatprep.mubr.f32.mxu0 0.0
    %v4808 = vand.u32 %v4487, 4294901760
    %v4809 = vsub.f32 %v4487, %v4808
    %v4810 = vand.u32 %v4809, 4294901760
    %4811 = vmatmul.mubr.f32.gmra.mxu0 %v4810
    %v4812 = vpop.f32.mrf.mxu0
    %v4813 = vadd.f32 %v4736, %v4812
    %v4814 = vpop.f32.mrf.mxu0
    %4815 = vdwg.mxu0
    %4816 = vmatprep.subr.mxu0 0.0
    %4817 = vmatpush1.msra.mxu0 0.0
    %4818 = vmatprep.subr.mxu0 0.0
    %4819 = vmatpush1.msra.mxu0 0.0
    %4820 = vmatprep.subr.mxu0 0.0
    %4821 = vmatpush1.msra.mxu0 0.0
    %4822 = vmatprep.subr.mxu0 0.0
    %4823 = vmatpush1.msra.mxu0 0.0
    %4824 = vmatprep.subr.mxu0 0.0
    %4825 = vmatpush1.msra.mxu0 0.0
    %4826 = vmatprep.subr.mxu0 0.0
    %4827 = vmatpush1.msra.mxu0 0.0
    %4828 = vmatprep.subr.mxu0 0.0
    %4829 = vmatpush1.msra.mxu0 0.0
    %4830 = vmatprep.subr.mxu0 0.0
    %4831 = vmatpush1.msra.mxu0 0.0
    %4832 = vmatprep.subr.mxu0 0.0
    %4833 = vmatpush1.msra.mxu0 0.0
    %4834 = vmatprep.subr.mxu0 0.0
    %4835 = vmatpush1.msra.mxu0 0.0
    %4836 = vmatprep.subr.mxu0 0.0
    %4837 = vmatpush1.msra.mxu0 0.0
    %4838 = vmatprep.subr.mxu0 0.0
    %4839 = vmatpush1.msra.mxu0 0.0
    %4840 = vmatprep.subr.mxu0 0.0
    %v4841 = vand.u32 %v71, 4294901760
    %v4842 = vsub.f32 %v71, %v4841
    %v4843 = vand.u32 %v4842, 4294901760
    %4844 = vmatpush1.msra.mxu0 %v4843
    %4845 = vmatprep.subr.mxu0 0.0
    %v4846 = vand.u32 %v70, 4294901760
    %v4847 = vsub.f32 %v70, %v4846
    %v4848 = vand.u32 %v4847, 4294901760
    %4849 = vmatpush1.msra.mxu0 %v4848
    %4850 = vmatprep.subr.mxu0 0.0
    %v4851 = vand.u32 %v69, 4294901760
    %v4852 = vsub.f32 %v69, %v4851
    %v4853 = vand.u32 %v4852, 4294901760
    %4854 = vmatpush1.msra.mxu0 %v4853
    %4855 = vmatprep.subr.mxu0 0.0
    %v4856 = vand.u32 %v68, 4294901760
    %v4857 = vsub.f32 %v68, %v4856
    %v4858 = vand.u32 %v4857, 4294901760
    %4859 = vmatpush1.msra.mxu0 %v4858
    %4860 = vmatprep.subr.mxu0 0.0
    %4861 = vmatpush2.msra.mxu0 0.0
    %4862 = vmatprep.subr.mxu0 0.0
    %4863 = vmatpush2.msra.mxu0 0.0
    %4864 = vmatprep.subr.mxu0 0.0
    %4865 = vmatpush2.msra.mxu0 0.0
    %4866 = vmatprep.subr.mxu0 0.0
    %4867 = vmatpush2.msra.mxu0 0.0
    %4868 = vmatprep.subr.mxu0 0.0
    %4869 = vmatpush2.msra.mxu0 0.0
    %4870 = vmatprep.subr.mxu0 0.0
    %4871 = vmatpush2.msra.mxu0 0.0
    %4872 = vmatprep.subr.mxu0 0.0
    %4873 = vmatpush2.msra.mxu0 0.0
    %4874 = vmatprep.subr.mxu0 0.0
    %4875 = vmatpush2.msra.mxu0 0.0
    %4876 = vmatprep.subr.mxu0 0.0
    %4877 = vmatpush2.msra.mxu0 0.0
    %4878 = vmatprep.subr.mxu0 0.0
    %4879 = vmatpush2.msra.mxu0 0.0
    %4880 = vmatprep.subr.mxu0 0.0
    %4881 = vmatpush2.msra.mxu0 0.0
    %4882 = vmatprep.subr.mxu0 0.0
    %4883 = vmatpush2.msra.mxu0 0.0
    %4884 = vmatprep.subr.mxu0 0.0
    %4885 = vmatpush2.msra.mxu0 0.0
    %4886 = vmatprep.subr.mxu0 0.0
    %4887 = vmatpush2.msra.mxu0 0.0
    %4888 = vmatprep.subr.mxu0 0.0
    %4889 = vmatpush2.msra.mxu0 0.0
    %4890 = vmatprep.subr.mxu0 0.0
    %4891 = vmatpush2.msra.mxu0 0.0
    %4892 = vmatprep.mubr.f32.mxu0 0.0
    %v4893 = vand.u32 %v4487, 4294901760
    %4894 = vmatmul.mubr.f32.gmra.mxu0 %v4893
    %v4895 = vpop.f32.mrf.mxu0
    %v4896 = vadd.f32 %v4813, %v4895
    %v4897 = vpop.f32.mrf.mxu0
    %4898 = vdwg.mxu0
    %4899 = vmatprep.subr.mxu0 0.0
    %4900 = vmatpush1.msra.mxu0 0.0
    %4901 = vmatprep.subr.mxu0 0.0
    %4902 = vmatpush1.msra.mxu0 0.0
    %4903 = vmatprep.subr.mxu0 0.0
    %4904 = vmatpush1.msra.mxu0 0.0
    %4905 = vmatprep.subr.mxu0 0.0
    %4906 = vmatpush1.msra.mxu0 0.0
    %4907 = vmatprep.subr.mxu0 0.0
    %4908 = vmatpush1.msra.mxu0 0.0
    %4909 = vmatprep.subr.mxu0 0.0
    %4910 = vmatpush1.msra.mxu0 0.0
    %4911 = vmatprep.subr.mxu0 0.0
    %4912 = vmatpush1.msra.mxu0 0.0
    %4913 = vmatprep.subr.mxu0 0.0
    %4914 = vmatpush1.msra.mxu0 0.0
    %4915 = vmatprep.subr.mxu0 0.0
    %4916 = vmatpush1.msra.mxu0 0.0
    %4917 = vmatprep.subr.mxu0 0.0
    %4918 = vmatpush1.msra.mxu0 0.0
    %4919 = vmatprep.subr.mxu0 0.0
    %4920 = vmatpush1.msra.mxu0 0.0
    %4921 = vmatprep.subr.mxu0 0.0
    %4922 = vmatpush1.msra.mxu0 0.0
    %4923 = vmatprep.subr.mxu0 0.0
    %v4924 = vand.u32 %v71, 4294901760
    %4925 = vmatpush1.msra.mxu0 %v4924
    %4926 = vmatprep.subr.mxu0 0.0
    %v4927 = vand.u32 %v70, 4294901760
    %4928 = vmatpush1.msra.mxu0 %v4927
    %4929 = vmatprep.subr.mxu0 0.0
    %v4930 = vand.u32 %v69, 4294901760
    %4931 = vmatpush1.msra.mxu0 %v4930
    %4932 = vmatprep.subr.mxu0 0.0
    %v4933 = vand.u32 %v68, 4294901760
    %4934 = vmatpush1.msra.mxu0 %v4933
    %4935 = vmatprep.subr.mxu0 0.0
    %4936 = vmatpush2.msra.mxu0 0.0
    %4937 = vmatprep.subr.mxu0 0.0
    %4938 = vmatpush2.msra.mxu0 0.0
    %4939 = vmatprep.subr.mxu0 0.0
    %4940 = vmatpush2.msra.mxu0 0.0
    %4941 = vmatprep.subr.mxu0 0.0
    %4942 = vmatpush2.msra.mxu0 0.0
    %4943 = vmatprep.subr.mxu0 0.0
    %4944 = vmatpush2.msra.mxu0 0.0
    %4945 = vmatprep.subr.mxu0 0.0
    %4946 = vmatpush2.msra.mxu0 0.0
    %4947 = vmatprep.subr.mxu0 0.0
    %4948 = vmatpush2.msra.mxu0 0.0
    %4949 = vmatprep.subr.mxu0 0.0
    %4950 = vmatpush2.msra.mxu0 0.0
    %4951 = vmatprep.subr.mxu0 0.0
    %4952 = vmatpush2.msra.mxu0 0.0
    %4953 = vmatprep.subr.mxu0 0.0
    %4954 = vmatpush2.msra.mxu0 0.0
    %4955 = vmatprep.subr.mxu0 0.0
    %4956 = vmatpush2.msra.mxu0 0.0
    %4957 = vmatprep.subr.mxu0 0.0
    %4958 = vmatpush2.msra.mxu0 0.0
    %4959 = vmatprep.subr.mxu0 0.0
    %4960 = vmatpush2.msra.mxu0 0.0
    %4961 = vmatprep.subr.mxu0 0.0
    %4962 = vmatpush2.msra.mxu0 0.0
    %4963 = vmatprep.subr.mxu0 0.0
    %4964 = vmatpush2.msra.mxu0 0.0
    %4965 = vmatprep.subr.mxu0 0.0
    %4966 = vmatpush2.msra.mxu0 0.0
    %4967 = vmatprep.mubr.f32.mxu0 0.0
    %v4968 = vand.u32 %v4487, 4294901760
    %4969 = vmatmul.mubr.f32.gmra.mxu0 %v4968
    %v4970 = vpop.f32.mrf.mxu0
    %v4971 = vadd.f32 %v4896, %v4970
    %v4972 = vpop.f32.mrf.mxu0
    %4973 = vdwg.mxu0
    %v4974 = vadd.f32 %v997, %v4971
    %v4975 = vtanh.pop %v4974
    %vm4976 = vcmp.eq.s32.totalorder %v1005, 7
    %v4977 = vsel %vm4976, 1, 0
    %4978 = vset.pattern.permute.xlu0 0
    %4979 = vperm.xlu0 %4978, %v4977
    %v4980 = vpop.permute.xlu0 %4979
    %vm4981 = vcmp.eq.s32.totalorder %v4980, 1
    %v4982 = vsel %vm4981, %v4975, %v4485
    %v4983 = vld [vmem:[%s2] sm:$0x3]
    %v4985 = vsel %vm1006, %v4983, 0
    %4987 = vmatprep.subr.mxu0 0.0
    %4988 = vmatpush1.msra.mxu0 0.0
    %4989 = vmatprep.subr.mxu0 0.0
    %4990 = vmatpush1.msra.mxu0 0.0
    %4991 = vmatprep.subr.mxu0 0.0
    %4992 = vmatpush1.msra.mxu0 0.0
    %4993 = vmatprep.subr.mxu0 0.0
    %4994 = vmatpush1.msra.mxu0 0.0
    %4995 = vmatprep.subr.mxu0 0.0
    %4996 = vmatpush1.msra.mxu0 0.0
    %4997 = vmatprep.subr.mxu0 0.0
    %4998 = vmatpush1.msra.mxu0 0.0
    %4999 = vmatprep.subr.mxu0 0.0
    %5000 = vmatpush1.msra.mxu0 0.0
    %5001 = vmatprep.subr.mxu0 0.0
    %5002 = vmatpush1.msra.mxu0 0.0
    %5003 = vmatprep.subr.mxu0 0.0
    %5004 = vmatpush1.msra.mxu0 0.0
    %5005 = vmatprep.subr.mxu0 0.0
    %5006 = vmatpush1.msra.mxu0 0.0
    %5007 = vmatprep.subr.mxu0 0.0
    %5008 = vmatpush1.msra.mxu0 0.0
    %5009 = vmatprep.subr.mxu0 0.0
    %5010 = vmatpush1.msra.mxu0 0.0
    %5011 = vmatprep.subr.mxu0 0.0
    %v5012 = vand.u32 %v43, 4294901760
    %5013 = vmatpush1.msra.mxu0 %v5012
    %5014 = vmatprep.subr.mxu0 0.0
    %v5015 = vand.u32 %v42, 4294901760
    %5016 = vmatpush1.msra.mxu0 %v5015
    %5017 = vmatprep.subr.mxu0 0.0
    %v5018 = vand.u32 %v41, 4294901760
    %5019 = vmatpush1.msra.mxu0 %v5018
    %5020 = vmatprep.subr.mxu0 0.0
    %v5021 = vand.u32 %v40, 4294901760
    %5022 = vmatpush1.msra.mxu0 %v5021
    %5023 = vmatprep.subr.mxu0 0.0
    %5024 = vmatpush2.msra.mxu0 0.0
    %5025 = vmatprep.subr.mxu0 0.0
    %5026 = vmatpush2.msra.mxu0 0.0
    %5027 = vmatprep.subr.mxu0 0.0
    %5028 = vmatpush2.msra.mxu0 0.0
    %5029 = vmatprep.subr.mxu0 0.0
    %5030 = vmatpush2.msra.mxu0 0.0
    %5031 = vmatprep.subr.mxu0 0.0
    %5032 = vmatpush2.msra.mxu0 0.0
    %5033 = vmatprep.subr.mxu0 0.0
    %5034 = vmatpush2.msra.mxu0 0.0
    %5035 = vmatprep.subr.mxu0 0.0
    %5036 = vmatpush2.msra.mxu0 0.0
    %5037 = vmatprep.subr.mxu0 0.0
    %5038 = vmatpush2.msra.mxu0 0.0
    %5039 = vmatprep.subr.mxu0 0.0
    %5040 = vmatpush2.msra.mxu0 0.0
    %5041 = vmatprep.subr.mxu0 0.0
    %5042 = vmatpush2.msra.mxu0 0.0
    %5043 = vmatprep.subr.mxu0 0.0
    %5044 = vmatpush2.msra.mxu0 0.0
    %5045 = vmatprep.subr.mxu0 0.0
    %5046 = vmatpush2.msra.mxu0 0.0
    %5047 = vmatprep.subr.mxu0 0.0
    %5048 = vmatpush2.msra.mxu0 0.0
    %5049 = vmatprep.subr.mxu0 0.0
    %5050 = vmatpush2.msra.mxu0 0.0
    %5051 = vmatprep.subr.mxu0 0.0
    %5052 = vmatpush2.msra.mxu0 0.0
    %5053 = vmatprep.subr.mxu0 0.0
    %5054 = vmatpush2.msra.mxu0 0.0
    %5055 = vmatprep.mubr.f32.mxu0 0.0
    %v5056 = vand.u32 %v4985, 4294901760
    %v5057 = vsub.f32 %v4985, %v5056
    %v5058 = vand.u32 %v5057, 4294901760
    %v5059 = vsub.f32 %v5057, %v5058
    %v5060 = vand.u32 %v5059, 4294901760
    %5061 = vmatmul.mubr.f32.gmra.mxu0 %v5060
    %v5062 = vpop.f32.mrf.mxu0
    %v5063 = vadd.f32 0.0, %v5062
    %v5064 = vpop.f32.mrf.mxu0
    %5065 = vdwg.mxu0
    %5066 = vmatprep.subr.mxu0 0.0
    %5067 = vmatpush1.msra.mxu0 0.0
    %5068 = vmatprep.subr.mxu0 0.0
    %5069 = vmatpush1.msra.mxu0 0.0
    %5070 = vmatprep.subr.mxu0 0.0
    %5071 = vmatpush1.msra.mxu0 0.0
    %5072 = vmatprep.subr.mxu0 0.0
    %5073 = vmatpush1.msra.mxu0 0.0
    %5074 = vmatprep.subr.mxu0 0.0
    %5075 = vmatpush1.msra.mxu0 0.0
    %5076 = vmatprep.subr.mxu0 0.0
    %5077 = vmatpush1.msra.mxu0 0.0
    %5078 = vmatprep.subr.mxu0 0.0
    %5079 = vmatpush1.msra.mxu0 0.0
    %5080 = vmatprep.subr.mxu0 0.0
    %5081 = vmatpush1.msra.mxu0 0.0
    %5082 = vmatprep.subr.mxu0 0.0
    %5083 = vmatpush1.msra.mxu0 0.0
    %5084 = vmatprep.subr.mxu0 0.0
    %5085 = vmatpush1.msra.mxu0 0.0
    %5086 = vmatprep.subr.mxu0 0.0
    %5087 = vmatpush1.msra.mxu0 0.0
    %5088 = vmatprep.subr.mxu0 0.0
    %5089 = vmatpush1.msra.mxu0 0.0
    %5090 = vmatprep.subr.mxu0 0.0
    %v5091 = vand.u32 %v43, 4294901760
    %v5092 = vsub.f32 %v43, %v5091
    %v5093 = vand.u32 %v5092, 4294901760
    %v5094 = vsub.f32 %v5092, %v5093
    %v5095 = vand.u32 %v5094, 4294901760
    %5096 = vmatpush1.msra.mxu0 %v5095
    %5097 = vmatprep.subr.mxu0 0.0
    %v5098 = vand.u32 %v42, 4294901760
    %v5099 = vsub.f32 %v42, %v5098
    %v5100 = vand.u32 %v5099, 4294901760
    %v5101 = vsub.f32 %v5099, %v5100
    %v5102 = vand.u32 %v5101, 4294901760
    %5103 = vmatpush1.msra.mxu0 %v5102
    %5104 = vmatprep.subr.mxu0 0.0
    %v5105 = vand.u32 %v41, 4294901760
    %v5106 = vsub.f32 %v41, %v5105
    %v5107 = vand.u32 %v5106, 4294901760
    %v5108 = vsub.f32 %v5106, %v5107
    %v5109 = vand.u32 %v5108, 4294901760
    %5110 = vmatpush1.msra.mxu0 %v5109
    %5111 = vmatprep.subr.mxu0 0.0
    %v5112 = vand.u32 %v40, 4294901760
    %v5113 = vsub.f32 %v40, %v5112
    %v5114 = vand.u32 %v5113, 4294901760
    %v5115 = vsub.f32 %v5113, %v5114
    %v5116 = vand.u32 %v5115, 4294901760
    %5117 = vmatpush1.msra.mxu0 %v5116
    %5118 = vmatprep.subr.mxu0 0.0
    %5119 = vmatpush2.msra.mxu0 0.0
    %5120 = vmatprep.subr.mxu0 0.0
    %5121 = vmatpush2.msra.mxu0 0.0
    %5122 = vmatprep.subr.mxu0 0.0
    %5123 = vmatpush2.msra.mxu0 0.0
    %5124 = vmatprep.subr.mxu0 0.0
    %5125 = vmatpush2.msra.mxu0 0.0
    %5126 = vmatprep.subr.mxu0 0.0
    %5127 = vmatpush2.msra.mxu0 0.0
    %5128 = vmatprep.subr.mxu0 0.0
    %5129 = vmatpush2.msra.mxu0 0.0
    %5130 = vmatprep.subr.mxu0 0.0
    %5131 = vmatpush2.msra.mxu0 0.0
    %5132 = vmatprep.subr.mxu0 0.0
    %5133 = vmatpush2.msra.mxu0 0.0
    %5134 = vmatprep.subr.mxu0 0.0
    %5135 = vmatpush2.msra.mxu0 0.0
    %5136 = vmatprep.subr.mxu0 0.0
    %5137 = vmatpush2.msra.mxu0 0.0
    %5138 = vmatprep.subr.mxu0 0.0
    %5139 = vmatpush2.msra.mxu0 0.0
    %5140 = vmatprep.subr.mxu0 0.0
    %5141 = vmatpush2.msra.mxu0 0.0
    %5142 = vmatprep.subr.mxu0 0.0
    %5143 = vmatpush2.msra.mxu0 0.0
    %5144 = vmatprep.subr.mxu0 0.0
    %5145 = vmatpush2.msra.mxu0 0.0
    %5146 = vmatprep.subr.mxu0 0.0
    %5147 = vmatpush2.msra.mxu0 0.0
    %5148 = vmatprep.subr.mxu0 0.0
    %5149 = vmatpush2.msra.mxu0 0.0
    %5150 = vmatprep.mubr.f32.mxu0 0.0
    %v5151 = vand.u32 %v4985, 4294901760
    %5152 = vmatmul.mubr.f32.gmra.mxu0 %v5151
    %v5153 = vpop.f32.mrf.mxu0
    %v5154 = vadd.f32 %v5063, %v5153
    %v5155 = vpop.f32.mrf.mxu0
    %5156 = vdwg.mxu0
    %5157 = vmatprep.subr.mxu0 0.0
    %5158 = vmatpush1.msra.mxu0 0.0
    %5159 = vmatprep.subr.mxu0 0.0
    %5160 = vmatpush1.msra.mxu0 0.0
    %5161 = vmatprep.subr.mxu0 0.0
    %5162 = vmatpush1.msra.mxu0 0.0
    %5163 = vmatprep.subr.mxu0 0.0
    %5164 = vmatpush1.msra.mxu0 0.0
    %5165 = vmatprep.subr.mxu0 0.0
    %5166 = vmatpush1.msra.mxu0 0.0
    %5167 = vmatprep.subr.mxu0 0.0
    %5168 = vmatpush1.msra.mxu0 0.0
    %5169 = vmatprep.subr.mxu0 0.0
    %5170 = vmatpush1.msra.mxu0 0.0
    %5171 = vmatprep.subr.mxu0 0.0
    %5172 = vmatpush1.msra.mxu0 0.0
    %5173 = vmatprep.subr.mxu0 0.0
    %5174 = vmatpush1.msra.mxu0 0.0
    %5175 = vmatprep.subr.mxu0 0.0
    %5176 = vmatpush1.msra.mxu0 0.0
    %5177 = vmatprep.subr.mxu0 0.0
    %5178 = vmatpush1.msra.mxu0 0.0
    %5179 = vmatprep.subr.mxu0 0.0
    %5180 = vmatpush1.msra.mxu0 0.0
    %5181 = vmatprep.subr.mxu0 0.0
    %v5182 = vand.u32 %v43, 4294901760
    %v5183 = vsub.f32 %v43, %v5182
    %5184 = vmatpush1.msra.mxu0 %v5183
    %5185 = vmatprep.subr.mxu0 0.0
    %v5186 = vand.u32 %v42, 4294901760
    %v5187 = vsub.f32 %v42, %v5186
    %5188 = vmatpush1.msra.mxu0 %v5187
    %5189 = vmatprep.subr.mxu0 0.0
    %v5190 = vand.u32 %v41, 4294901760
    %v5191 = vsub.f32 %v41, %v5190
    %5192 = vmatpush1.msra.mxu0 %v5191
    %5193 = vmatprep.subr.mxu0 0.0
    %v5194 = vand.u32 %v40, 4294901760
    %v5195 = vsub.f32 %v40, %v5194
    %5196 = vmatpush1.msra.mxu0 %v5195
    %5197 = vmatprep.subr.mxu0 0.0
    %5198 = vmatpush2.msra.mxu0 0.0
    %5199 = vmatprep.subr.mxu0 0.0
    %5200 = vmatpush2.msra.mxu0 0.0
    %5201 = vmatprep.subr.mxu0 0.0
    %5202 = vmatpush2.msra.mxu0 0.0
    %5203 = vmatprep.subr.mxu0 0.0
    %5204 = vmatpush2.msra.mxu0 0.0
    %5205 = vmatprep.subr.mxu0 0.0
    %5206 = vmatpush2.msra.mxu0 0.0
    %5207 = vmatprep.subr.mxu0 0.0
    %5208 = vmatpush2.msra.mxu0 0.0
    %5209 = vmatprep.subr.mxu0 0.0
    %5210 = vmatpush2.msra.mxu0 0.0
    %5211 = vmatprep.subr.mxu0 0.0
    %5212 = vmatpush2.msra.mxu0 0.0
    %5213 = vmatprep.subr.mxu0 0.0
    %5214 = vmatpush2.msra.mxu0 0.0
    %5215 = vmatprep.subr.mxu0 0.0
    %5216 = vmatpush2.msra.mxu0 0.0
    %5217 = vmatprep.subr.mxu0 0.0
    %5218 = vmatpush2.msra.mxu0 0.0
    %5219 = vmatprep.subr.mxu0 0.0
    %5220 = vmatpush2.msra.mxu0 0.0
    %5221 = vmatprep.subr.mxu0 0.0
    %5222 = vmatpush2.msra.mxu0 0.0
    %5223 = vmatprep.subr.mxu0 0.0
    %5224 = vmatpush2.msra.mxu0 0.0
    %5225 = vmatprep.subr.mxu0 0.0
    %5226 = vmatpush2.msra.mxu0 0.0
    %5227 = vmatprep.subr.mxu0 0.0
    %5228 = vmatpush2.msra.mxu0 0.0
    %5229 = vmatprep.mubr.f32.mxu0 0.0
    %v5230 = vand.u32 %v4985, 4294901760
    %v5231 = vsub.f32 %v4985, %v5230
    %5232 = vmatmul.mubr.f32.gmra.mxu0 %v5231
    %v5233 = vpop.f32.mrf.mxu0
    %v5234 = vadd.f32 %v5154, %v5233
    %v5235 = vpop.f32.mrf.mxu0
    %5236 = vdwg.mxu0
    %5237 = vmatprep.subr.mxu0 0.0
    %5238 = vmatpush1.msra.mxu0 0.0
    %5239 = vmatprep.subr.mxu0 0.0
    %5240 = vmatpush1.msra.mxu0 0.0
    %5241 = vmatprep.subr.mxu0 0.0
    %5242 = vmatpush1.msra.mxu0 0.0
    %5243 = vmatprep.subr.mxu0 0.0
    %5244 = vmatpush1.msra.mxu0 0.0
    %5245 = vmatprep.subr.mxu0 0.0
    %5246 = vmatpush1.msra.mxu0 0.0
    %5247 = vmatprep.subr.mxu0 0.0
    %5248 = vmatpush1.msra.mxu0 0.0
    %5249 = vmatprep.subr.mxu0 0.0
    %5250 = vmatpush1.msra.mxu0 0.0
    %5251 = vmatprep.subr.mxu0 0.0
    %5252 = vmatpush1.msra.mxu0 0.0
    %5253 = vmatprep.subr.mxu0 0.0
    %5254 = vmatpush1.msra.mxu0 0.0
    %5255 = vmatprep.subr.mxu0 0.0
    %5256 = vmatpush1.msra.mxu0 0.0
    %5257 = vmatprep.subr.mxu0 0.0
    %5258 = vmatpush1.msra.mxu0 0.0
    %5259 = vmatprep.subr.mxu0 0.0
    %5260 = vmatpush1.msra.mxu0 0.0
    %5261 = vmatprep.subr.mxu0 0.0
    %v5262 = vand.u32 %v43, 4294901760
    %5263 = vmatpush1.msra.mxu0 %v5262
    %5264 = vmatprep.subr.mxu0 0.0
    %v5265 = vand.u32 %v42, 4294901760
    %5266 = vmatpush1.msra.mxu0 %v5265
    %5267 = vmatprep.subr.mxu0 0.0
    %v5268 = vand.u32 %v41, 4294901760
    %5269 = vmatpush1.msra.mxu0 %v5268
    %5270 = vmatprep.subr.mxu0 0.0
    %v5271 = vand.u32 %v40, 4294901760
    %5272 = vmatpush1.msra.mxu0 %v5271
    %5273 = vmatprep.subr.mxu0 0.0
    %5274 = vmatpush2.msra.mxu0 0.0
    %5275 = vmatprep.subr.mxu0 0.0
    %5276 = vmatpush2.msra.mxu0 0.0
    %5277 = vmatprep.subr.mxu0 0.0
    %5278 = vmatpush2.msra.mxu0 0.0
    %5279 = vmatprep.subr.mxu0 0.0
    %5280 = vmatpush2.msra.mxu0 0.0
    %5281 = vmatprep.subr.mxu0 0.0
    %5282 = vmatpush2.msra.mxu0 0.0
    %5283 = vmatprep.subr.mxu0 0.0
    %5284 = vmatpush2.msra.mxu0 0.0
    %5285 = vmatprep.subr.mxu0 0.0
    %5286 = vmatpush2.msra.mxu0 0.0
    %5287 = vmatprep.subr.mxu0 0.0
    %5288 = vmatpush2.msra.mxu0 0.0
    %5289 = vmatprep.subr.mxu0 0.0
    %5290 = vmatpush2.msra.mxu0 0.0
    %5291 = vmatprep.subr.mxu0 0.0
    %5292 = vmatpush2.msra.mxu0 0.0
    %5293 = vmatprep.subr.mxu0 0.0
    %5294 = vmatpush2.msra.mxu0 0.0
    %5295 = vmatprep.subr.mxu0 0.0
    %5296 = vmatpush2.msra.mxu0 0.0
    %5297 = vmatprep.subr.mxu0 0.0
    %5298 = vmatpush2.msra.mxu0 0.0
    %5299 = vmatprep.subr.mxu0 0.0
    %5300 = vmatpush2.msra.mxu0 0.0
    %5301 = vmatprep.subr.mxu0 0.0
    %5302 = vmatpush2.msra.mxu0 0.0
    %5303 = vmatprep.subr.mxu0 0.0
    %5304 = vmatpush2.msra.mxu0 0.0
    %5305 = vmatprep.mubr.f32.mxu0 0.0
    %v5306 = vand.u32 %v4985, 4294901760
    %v5307 = vsub.f32 %v4985, %v5306
    %v5308 = vand.u32 %v5307, 4294901760
    %5309 = vmatmul.mubr.f32.gmra.mxu0 %v5308
    %v5310 = vpop.f32.mrf.mxu0
    %v5311 = vadd.f32 %v5234, %v5310
    %v5312 = vpop.f32.mrf.mxu0
    %5313 = vdwg.mxu0
    %5314 = vmatprep.subr.mxu0 0.0
    %5315 = vmatpush1.msra.mxu0 0.0
    %5316 = vmatprep.subr.mxu0 0.0
    %5317 = vmatpush1.msra.mxu0 0.0
    %5318 = vmatprep.subr.mxu0 0.0
    %5319 = vmatpush1.msra.mxu0 0.0
    %5320 = vmatprep.subr.mxu0 0.0
    %5321 = vmatpush1.msra.mxu0 0.0
    %5322 = vmatprep.subr.mxu0 0.0
    %5323 = vmatpush1.msra.mxu0 0.0
    %5324 = vmatprep.subr.mxu0 0.0
    %5325 = vmatpush1.msra.mxu0 0.0
    %5326 = vmatprep.subr.mxu0 0.0
    %5327 = vmatpush1.msra.mxu0 0.0
    %5328 = vmatprep.subr.mxu0 0.0
    %5329 = vmatpush1.msra.mxu0 0.0
    %5330 = vmatprep.subr.mxu0 0.0
    %5331 = vmatpush1.msra.mxu0 0.0
    %5332 = vmatprep.subr.mxu0 0.0
    %5333 = vmatpush1.msra.mxu0 0.0
    %5334 = vmatprep.subr.mxu0 0.0
    %5335 = vmatpush1.msra.mxu0 0.0
    %5336 = vmatprep.subr.mxu0 0.0
    %5337 = vmatpush1.msra.mxu0 0.0
    %5338 = vmatprep.subr.mxu0 0.0
    %v5339 = vand.u32 %v43, 4294901760
    %v5340 = vsub.f32 %v43, %v5339
    %v5341 = vand.u32 %v5340, 4294901760
    %5342 = vmatpush1.msra.mxu0 %v5341
    %5343 = vmatprep.subr.mxu0 0.0
    %v5344 = vand.u32 %v42, 4294901760
    %v5345 = vsub.f32 %v42, %v5344
    %v5346 = vand.u32 %v5345, 4294901760
    %5347 = vmatpush1.msra.mxu0 %v5346
    %5348 = vmatprep.subr.mxu0 0.0
    %v5349 = vand.u32 %v41, 4294901760
    %v5350 = vsub.f32 %v41, %v5349
    %v5351 = vand.u32 %v5350, 4294901760
    %5352 = vmatpush1.msra.mxu0 %v5351
    %5353 = vmatprep.subr.mxu0 0.0
    %v5354 = vand.u32 %v40, 4294901760
    %v5355 = vsub.f32 %v40, %v5354
    %v5356 = vand.u32 %v5355, 4294901760
    %5357 = vmatpush1.msra.mxu0 %v5356
    %5358 = vmatprep.subr.mxu0 0.0
    %5359 = vmatpush2.msra.mxu0 0.0
    %5360 = vmatprep.subr.mxu0 0.0
    %5361 = vmatpush2.msra.mxu0 0.0
    %5362 = vmatprep.subr.mxu0 0.0
    %5363 = vmatpush2.msra.mxu0 0.0
    %5364 = vmatprep.subr.mxu0 0.0
    %5365 = vmatpush2.msra.mxu0 0.0
    %5366 = vmatprep.subr.mxu0 0.0
    %5367 = vmatpush2.msra.mxu0 0.0
    %5368 = vmatprep.subr.mxu0 0.0
    %5369 = vmatpush2.msra.mxu0 0.0
    %5370 = vmatprep.subr.mxu0 0.0
    %5371 = vmatpush2.msra.mxu0 0.0
    %5372 = vmatprep.subr.mxu0 0.0
    %5373 = vmatpush2.msra.mxu0 0.0
    %5374 = vmatprep.subr.mxu0 0.0
    %5375 = vmatpush2.msra.mxu0 0.0
    %5376 = vmatprep.subr.mxu0 0.0
    %5377 = vmatpush2.msra.mxu0 0.0
    %5378 = vmatprep.subr.mxu0 0.0
    %5379 = vmatpush2.msra.mxu0 0.0
    %5380 = vmatprep.subr.mxu0 0.0
    %5381 = vmatpush2.msra.mxu0 0.0
    %5382 = vmatprep.subr.mxu0 0.0
    %5383 = vmatpush2.msra.mxu0 0.0
    %5384 = vmatprep.subr.mxu0 0.0
    %5385 = vmatpush2.msra.mxu0 0.0
    %5386 = vmatprep.subr.mxu0 0.0
    %5387 = vmatpush2.msra.mxu0 0.0
    %5388 = vmatprep.subr.mxu0 0.0
    %5389 = vmatpush2.msra.mxu0 0.0
    %5390 = vmatprep.mubr.f32.mxu0 0.0
    %v5391 = vand.u32 %v4985, 4294901760
    %5392 = vmatmul.mubr.f32.gmra.mxu0 %v5391
    %v5393 = vpop.f32.mrf.mxu0
    %v5394 = vadd.f32 %v5311, %v5393
    %v5395 = vpop.f32.mrf.mxu0
    %5396 = vdwg.mxu0
    %5397 = vmatprep.subr.mxu0 0.0
    %5398 = vmatpush1.msra.mxu0 0.0
    %5399 = vmatprep.subr.mxu0 0.0
    %5400 = vmatpush1.msra.mxu0 0.0
    %5401 = vmatprep.subr.mxu0 0.0
    %5402 = vmatpush1.msra.mxu0 0.0
    %5403 = vmatprep.subr.mxu0 0.0
    %5404 = vmatpush1.msra.mxu0 0.0
    %5405 = vmatprep.subr.mxu0 0.0
    %5406 = vmatpush1.msra.mxu0 0.0
    %5407 = vmatprep.subr.mxu0 0.0
    %5408 = vmatpush1.msra.mxu0 0.0
    %5409 = vmatprep.subr.mxu0 0.0
    %5410 = vmatpush1.msra.mxu0 0.0
    %5411 = vmatprep.subr.mxu0 0.0
    %5412 = vmatpush1.msra.mxu0 0.0
    %5413 = vmatprep.subr.mxu0 0.0
    %5414 = vmatpush1.msra.mxu0 0.0
    %5415 = vmatprep.subr.mxu0 0.0
    %5416 = vmatpush1.msra.mxu0 0.0
    %5417 = vmatprep.subr.mxu0 0.0
    %5418 = vmatpush1.msra.mxu0 0.0
    %5419 = vmatprep.subr.mxu0 0.0
    %5420 = vmatpush1.msra.mxu0 0.0
    %5421 = vmatprep.subr.mxu0 0.0
    %v5422 = vand.u32 %v43, 4294901760
    %5423 = vmatpush1.msra.mxu0 %v5422
    %5424 = vmatprep.subr.mxu0 0.0
    %v5425 = vand.u32 %v42, 4294901760
    %5426 = vmatpush1.msra.mxu0 %v5425
    %5427 = vmatprep.subr.mxu0 0.0
    %v5428 = vand.u32 %v41, 4294901760
    %5429 = vmatpush1.msra.mxu0 %v5428
    %5430 = vmatprep.subr.mxu0 0.0
    %v5431 = vand.u32 %v40, 4294901760
    %5432 = vmatpush1.msra.mxu0 %v5431
    %5433 = vmatprep.subr.mxu0 0.0
    %5434 = vmatpush2.msra.mxu0 0.0
    %5435 = vmatprep.subr.mxu0 0.0
    %5436 = vmatpush2.msra.mxu0 0.0
    %5437 = vmatprep.subr.mxu0 0.0
    %5438 = vmatpush2.msra.mxu0 0.0
    %5439 = vmatprep.subr.mxu0 0.0
    %5440 = vmatpush2.msra.mxu0 0.0
    %5441 = vmatprep.subr.mxu0 0.0
    %5442 = vmatpush2.msra.mxu0 0.0
    %5443 = vmatprep.subr.mxu0 0.0
    %5444 = vmatpush2.msra.mxu0 0.0
    %5445 = vmatprep.subr.mxu0 0.0
    %5446 = vmatpush2.msra.mxu0 0.0
    %5447 = vmatprep.subr.mxu0 0.0
    %5448 = vmatpush2.msra.mxu0 0.0
    %5449 = vmatprep.subr.mxu0 0.0
    %5450 = vmatpush2.msra.mxu0 0.0
    %5451 = vmatprep.subr.mxu0 0.0
    %5452 = vmatpush2.msra.mxu0 0.0
    %5453 = vmatprep.subr.mxu0 0.0
    %5454 = vmatpush2.msra.mxu0 0.0
    %5455 = vmatprep.subr.mxu0 0.0
    %5456 = vmatpush2.msra.mxu0 0.0
    %5457 = vmatprep.subr.mxu0 0.0
    %5458 = vmatpush2.msra.mxu0 0.0
    %5459 = vmatprep.subr.mxu0 0.0
    %5460 = vmatpush2.msra.mxu0 0.0
    %5461 = vmatprep.subr.mxu0 0.0
    %5462 = vmatpush2.msra.mxu0 0.0
    %5463 = vmatprep.subr.mxu0 0.0
    %5464 = vmatpush2.msra.mxu0 0.0
    %5465 = vmatprep.mubr.f32.mxu0 0.0
    %v5466 = vand.u32 %v4985, 4294901760
    %5467 = vmatmul.mubr.f32.gmra.mxu0 %v5466
    %v5468 = vpop.f32.mrf.mxu0
    %v5469 = vadd.f32 %v5394, %v5468
    %v5470 = vpop.f32.mrf.mxu0
    %5471 = vdwg.mxu0
    %v5473 = vsel %vm1006, %v4982, 0
    %5475 = vmatprep.subr.mxu0 0.0
    %5476 = vmatpush1.msra.mxu0 0.0
    %5477 = vmatprep.subr.mxu0 0.0
    %5478 = vmatpush1.msra.mxu0 0.0
    %5479 = vmatprep.subr.mxu0 0.0
    %5480 = vmatpush1.msra.mxu0 0.0
    %5481 = vmatprep.subr.mxu0 0.0
    %5482 = vmatpush1.msra.mxu0 0.0
    %5483 = vmatprep.subr.mxu0 0.0
    %5484 = vmatpush1.msra.mxu0 0.0
    %5485 = vmatprep.subr.mxu0 0.0
    %5486 = vmatpush1.msra.mxu0 0.0
    %5487 = vmatprep.subr.mxu0 0.0
    %5488 = vmatpush1.msra.mxu0 0.0
    %5489 = vmatprep.subr.mxu0 0.0
    %5490 = vmatpush1.msra.mxu0 0.0
    %5491 = vmatprep.subr.mxu0 0.0
    %5492 = vmatpush1.msra.mxu0 0.0
    %5493 = vmatprep.subr.mxu0 0.0
    %5494 = vmatpush1.msra.mxu0 0.0
    %5495 = vmatprep.subr.mxu0 0.0
    %5496 = vmatpush1.msra.mxu0 0.0
    %5497 = vmatprep.subr.mxu0 0.0
    %5498 = vmatpush1.msra.mxu0 0.0
    %5499 = vmatprep.subr.mxu0 0.0
    %v5500 = vand.u32 %v35, 4294901760
    %5501 = vmatpush1.msra.mxu0 %v5500
    %5502 = vmatprep.subr.mxu0 0.0
    %v5503 = vand.u32 %v34, 4294901760
    %5504 = vmatpush1.msra.mxu0 %v5503
    %5505 = vmatprep.subr.mxu0 0.0
    %v5506 = vand.u32 %v33, 4294901760
    %5507 = vmatpush1.msra.mxu0 %v5506
    %5508 = vmatprep.subr.mxu0 0.0
    %v5509 = vand.u32 %v32, 4294901760
    %5510 = vmatpush1.msra.mxu0 %v5509
    %5511 = vmatprep.subr.mxu0 0.0
    %5512 = vmatpush2.msra.mxu0 0.0
    %5513 = vmatprep.subr.mxu0 0.0
    %5514 = vmatpush2.msra.mxu0 0.0
    %5515 = vmatprep.subr.mxu0 0.0
    %5516 = vmatpush2.msra.mxu0 0.0
    %5517 = vmatprep.subr.mxu0 0.0
    %5518 = vmatpush2.msra.mxu0 0.0
    %5519 = vmatprep.subr.mxu0 0.0
    %5520 = vmatpush2.msra.mxu0 0.0
    %5521 = vmatprep.subr.mxu0 0.0
    %5522 = vmatpush2.msra.mxu0 0.0
    %5523 = vmatprep.subr.mxu0 0.0
    %5524 = vmatpush2.msra.mxu0 0.0
    %5525 = vmatprep.subr.mxu0 0.0
    %5526 = vmatpush2.msra.mxu0 0.0
    %5527 = vmatprep.subr.mxu0 0.0
    %5528 = vmatpush2.msra.mxu0 0.0
    %5529 = vmatprep.subr.mxu0 0.0
    %5530 = vmatpush2.msra.mxu0 0.0
    %5531 = vmatprep.subr.mxu0 0.0
    %5532 = vmatpush2.msra.mxu0 0.0
    %5533 = vmatprep.subr.mxu0 0.0
    %5534 = vmatpush2.msra.mxu0 0.0
    %5535 = vmatprep.subr.mxu0 0.0
    %5536 = vmatpush2.msra.mxu0 0.0
    %5537 = vmatprep.subr.mxu0 0.0
    %5538 = vmatpush2.msra.mxu0 0.0
    %5539 = vmatprep.subr.mxu0 0.0
    %5540 = vmatpush2.msra.mxu0 0.0
    %5541 = vmatprep.subr.mxu0 0.0
    %5542 = vmatpush2.msra.mxu0 0.0
    %5543 = vmatprep.mubr.f32.mxu0 0.0
    %v5544 = vand.u32 %v5473, 4294901760
    %v5545 = vsub.f32 %v5473, %v5544
    %v5546 = vand.u32 %v5545, 4294901760
    %v5547 = vsub.f32 %v5545, %v5546
    %v5548 = vand.u32 %v5547, 4294901760
    %5549 = vmatmul.mubr.f32.gmra.mxu0 %v5548
    %v5550 = vpop.f32.mrf.mxu0
    %v5551 = vadd.f32 0.0, %v5550
    %v5552 = vpop.f32.mrf.mxu0
    %5553 = vdwg.mxu0
    %5554 = vmatprep.subr.mxu0 0.0
    %5555 = vmatpush1.msra.mxu0 0.0
    %5556 = vmatprep.subr.mxu0 0.0
    %5557 = vmatpush1.msra.mxu0 0.0
    %5558 = vmatprep.subr.mxu0 0.0
    %5559 = vmatpush1.msra.mxu0 0.0
    %5560 = vmatprep.subr.mxu0 0.0
    %5561 = vmatpush1.msra.mxu0 0.0
    %5562 = vmatprep.subr.mxu0 0.0
    %5563 = vmatpush1.msra.mxu0 0.0
    %5564 = vmatprep.subr.mxu0 0.0
    %5565 = vmatpush1.msra.mxu0 0.0
    %5566 = vmatprep.subr.mxu0 0.0
    %5567 = vmatpush1.msra.mxu0 0.0
    %5568 = vmatprep.subr.mxu0 0.0
    %5569 = vmatpush1.msra.mxu0 0.0
    %5570 = vmatprep.subr.mxu0 0.0
    %5571 = vmatpush1.msra.mxu0 0.0
    %5572 = vmatprep.subr.mxu0 0.0
    %5573 = vmatpush1.msra.mxu0 0.0
    %5574 = vmatprep.subr.mxu0 0.0
    %5575 = vmatpush1.msra.mxu0 0.0
    %5576 = vmatprep.subr.mxu0 0.0
    %5577 = vmatpush1.msra.mxu0 0.0
    %5578 = vmatprep.subr.mxu0 0.0
    %v5579 = vand.u32 %v35, 4294901760
    %v5580 = vsub.f32 %v35, %v5579
    %v5581 = vand.u32 %v5580, 4294901760
    %v5582 = vsub.f32 %v5580, %v5581
    %v5583 = vand.u32 %v5582, 4294901760
    %5584 = vmatpush1.msra.mxu0 %v5583
    %5585 = vmatprep.subr.mxu0 0.0
    %v5586 = vand.u32 %v34, 4294901760
    %v5587 = vsub.f32 %v34, %v5586
    %v5588 = vand.u32 %v5587, 4294901760
    %v5589 = vsub.f32 %v5587, %v5588
    %v5590 = vand.u32 %v5589, 4294901760
    %5591 = vmatpush1.msra.mxu0 %v5590
    %5592 = vmatprep.subr.mxu0 0.0
    %v5593 = vand.u32 %v33, 4294901760
    %v5594 = vsub.f32 %v33, %v5593
    %v5595 = vand.u32 %v5594, 4294901760
    %v5596 = vsub.f32 %v5594, %v5595
    %v5597 = vand.u32 %v5596, 4294901760
    %5598 = vmatpush1.msra.mxu0 %v5597
    %5599 = vmatprep.subr.mxu0 0.0
    %v5600 = vand.u32 %v32, 4294901760
    %v5601 = vsub.f32 %v32, %v5600
    %v5602 = vand.u32 %v5601, 4294901760
    %v5603 = vsub.f32 %v5601, %v5602
    %v5604 = vand.u32 %v5603, 4294901760
    %5605 = vmatpush1.msra.mxu0 %v5604
    %5606 = vmatprep.subr.mxu0 0.0
    %5607 = vmatpush2.msra.mxu0 0.0
    %5608 = vmatprep.subr.mxu0 0.0
    %5609 = vmatpush2.msra.mxu0 0.0
    %5610 = vmatprep.subr.mxu0 0.0
    %5611 = vmatpush2.msra.mxu0 0.0
    %5612 = vmatprep.subr.mxu0 0.0
    %5613 = vmatpush2.msra.mxu0 0.0
    %5614 = vmatprep.subr.mxu0 0.0
    %5615 = vmatpush2.msra.mxu0 0.0
    %5616 = vmatprep.subr.mxu0 0.0
    %5617 = vmatpush2.msra.mxu0 0.0
    %5618 = vmatprep.subr.mxu0 0.0
    %5619 = vmatpush2.msra.mxu0 0.0
    %5620 = vmatprep.subr.mxu0 0.0
    %5621 = vmatpush2.msra.mxu0 0.0
    %5622 = vmatprep.subr.mxu0 0.0
    %5623 = vmatpush2.msra.mxu0 0.0
    %5624 = vmatprep.subr.mxu0 0.0
    %5625 = vmatpush2.msra.mxu0 0.0
    %5626 = vmatprep.subr.mxu0 0.0
    %5627 = vmatpush2.msra.mxu0 0.0
    %5628 = vmatprep.subr.mxu0 0.0
    %5629 = vmatpush2.msra.mxu0 0.0
    %5630 = vmatprep.subr.mxu0 0.0
    %5631 = vmatpush2.msra.mxu0 0.0
    %5632 = vmatprep.subr.mxu0 0.0
    %5633 = vmatpush2.msra.mxu0 0.0
    %5634 = vmatprep.subr.mxu0 0.0
    %5635 = vmatpush2.msra.mxu0 0.0
    %5636 = vmatprep.subr.mxu0 0.0
    %5637 = vmatpush2.msra.mxu0 0.0
    %5638 = vmatprep.mubr.f32.mxu0 0.0
    %v5639 = vand.u32 %v5473, 4294901760
    %5640 = vmatmul.mubr.f32.gmra.mxu0 %v5639
    %v5641 = vpop.f32.mrf.mxu0
    %v5642 = vadd.f32 %v5551, %v5641
    %v5643 = vpop.f32.mrf.mxu0
    %5644 = vdwg.mxu0
    %5645 = vmatprep.subr.mxu0 0.0
    %5646 = vmatpush1.msra.mxu0 0.0
    %5647 = vmatprep.subr.mxu0 0.0
    %5648 = vmatpush1.msra.mxu0 0.0
    %5649 = vmatprep.subr.mxu0 0.0
    %5650 = vmatpush1.msra.mxu0 0.0
    %5651 = vmatprep.subr.mxu0 0.0
    %5652 = vmatpush1.msra.mxu0 0.0
    %5653 = vmatprep.subr.mxu0 0.0
    %5654 = vmatpush1.msra.mxu0 0.0
    %5655 = vmatprep.subr.mxu0 0.0
    %5656 = vmatpush1.msra.mxu0 0.0
    %5657 = vmatprep.subr.mxu0 0.0
    %5658 = vmatpush1.msra.mxu0 0.0
    %5659 = vmatprep.subr.mxu0 0.0
    %5660 = vmatpush1.msra.mxu0 0.0
    %5661 = vmatprep.subr.mxu0 0.0
    %5662 = vmatpush1.msra.mxu0 0.0
    %5663 = vmatprep.subr.mxu0 0.0
    %5664 = vmatpush1.msra.mxu0 0.0
    %5665 = vmatprep.subr.mxu0 0.0
    %5666 = vmatpush1.msra.mxu0 0.0
    %5667 = vmatprep.subr.mxu0 0.0
    %5668 = vmatpush1.msra.mxu0 0.0
    %5669 = vmatprep.subr.mxu0 0.0
    %v5670 = vand.u32 %v35, 4294901760
    %v5671 = vsub.f32 %v35, %v5670
    %5672 = vmatpush1.msra.mxu0 %v5671
    %5673 = vmatprep.subr.mxu0 0.0
    %v5674 = vand.u32 %v34, 4294901760
    %v5675 = vsub.f32 %v34, %v5674
    %5676 = vmatpush1.msra.mxu0 %v5675
    %5677 = vmatprep.subr.mxu0 0.0
    %v5678 = vand.u32 %v33, 4294901760
    %v5679 = vsub.f32 %v33, %v5678
    %5680 = vmatpush1.msra.mxu0 %v5679
    %5681 = vmatprep.subr.mxu0 0.0
    %v5682 = vand.u32 %v32, 4294901760
    %v5683 = vsub.f32 %v32, %v5682
    %5684 = vmatpush1.msra.mxu0 %v5683
    %5685 = vmatprep.subr.mxu0 0.0
    %5686 = vmatpush2.msra.mxu0 0.0
    %5687 = vmatprep.subr.mxu0 0.0
    %5688 = vmatpush2.msra.mxu0 0.0
    %5689 = vmatprep.subr.mxu0 0.0
    %5690 = vmatpush2.msra.mxu0 0.0
    %5691 = vmatprep.subr.mxu0 0.0
    %5692 = vmatpush2.msra.mxu0 0.0
    %5693 = vmatprep.subr.mxu0 0.0
    %5694 = vmatpush2.msra.mxu0 0.0
    %5695 = vmatprep.subr.mxu0 0.0
    %5696 = vmatpush2.msra.mxu0 0.0
    %5697 = vmatprep.subr.mxu0 0.0
    %5698 = vmatpush2.msra.mxu0 0.0
    %5699 = vmatprep.subr.mxu0 0.0
    %5700 = vmatpush2.msra.mxu0 0.0
    %5701 = vmatprep.subr.mxu0 0.0
    %5702 = vmatpush2.msra.mxu0 0.0
    %5703 = vmatprep.subr.mxu0 0.0
    %5704 = vmatpush2.msra.mxu0 0.0
    %5705 = vmatprep.subr.mxu0 0.0
    %5706 = vmatpush2.msra.mxu0 0.0
    %5707 = vmatprep.subr.mxu0 0.0
    %5708 = vmatpush2.msra.mxu0 0.0
    %5709 = vmatprep.subr.mxu0 0.0
    %5710 = vmatpush2.msra.mxu0 0.0
    %5711 = vmatprep.subr.mxu0 0.0
    %5712 = vmatpush2.msra.mxu0 0.0
    %5713 = vmatprep.subr.mxu0 0.0
    %5714 = vmatpush2.msra.mxu0 0.0
    %5715 = vmatprep.subr.mxu0 0.0
    %5716 = vmatpush2.msra.mxu0 0.0
    %5717 = vmatprep.mubr.f32.mxu0 0.0
    %v5718 = vand.u32 %v5473, 4294901760
    %v5719 = vsub.f32 %v5473, %v5718
    %5720 = vmatmul.mubr.f32.gmra.mxu0 %v5719
    %v5721 = vpop.f32.mrf.mxu0
    %v5722 = vadd.f32 %v5642, %v5721
    %v5723 = vpop.f32.mrf.mxu0
    %5724 = vdwg.mxu0
    %5725 = vmatprep.subr.mxu0 0.0
    %5726 = vmatpush1.msra.mxu0 0.0
    %5727 = vmatprep.subr.mxu0 0.0
    %5728 = vmatpush1.msra.mxu0 0.0
    %5729 = vmatprep.subr.mxu0 0.0
    %5730 = vmatpush1.msra.mxu0 0.0
    %5731 = vmatprep.subr.mxu0 0.0
    %5732 = vmatpush1.msra.mxu0 0.0
    %5733 = vmatprep.subr.mxu0 0.0
    %5734 = vmatpush1.msra.mxu0 0.0
    %5735 = vmatprep.subr.mxu0 0.0
    %5736 = vmatpush1.msra.mxu0 0.0
    %5737 = vmatprep.subr.mxu0 0.0
    %5738 = vmatpush1.msra.mxu0 0.0
    %5739 = vmatprep.subr.mxu0 0.0
    %5740 = vmatpush1.msra.mxu0 0.0
    %5741 = vmatprep.subr.mxu0 0.0
    %5742 = vmatpush1.msra.mxu0 0.0
    %5743 = vmatprep.subr.mxu0 0.0
    %5744 = vmatpush1.msra.mxu0 0.0
    %5745 = vmatprep.subr.mxu0 0.0
    %5746 = vmatpush1.msra.mxu0 0.0
    %5747 = vmatprep.subr.mxu0 0.0
    %5748 = vmatpush1.msra.mxu0 0.0
    %5749 = vmatprep.subr.mxu0 0.0
    %v5750 = vand.u32 %v35, 4294901760
    %5751 = vmatpush1.msra.mxu0 %v5750
    %5752 = vmatprep.subr.mxu0 0.0
    %v5753 = vand.u32 %v34, 4294901760
    %5754 = vmatpush1.msra.mxu0 %v5753
    %5755 = vmatprep.subr.mxu0 0.0
    %v5756 = vand.u32 %v33, 4294901760
    %5757 = vmatpush1.msra.mxu0 %v5756
    %5758 = vmatprep.subr.mxu0 0.0
    %v5759 = vand.u32 %v32, 4294901760
    %5760 = vmatpush1.msra.mxu0 %v5759
    %5761 = vmatprep.subr.mxu0 0.0
    %5762 = vmatpush2.msra.mxu0 0.0
    %5763 = vmatprep.subr.mxu0 0.0
    %5764 = vmatpush2.msra.mxu0 0.0
    %5765 = vmatprep.subr.mxu0 0.0
    %5766 = vmatpush2.msra.mxu0 0.0
    %5767 = vmatprep.subr.mxu0 0.0
    %5768 = vmatpush2.msra.mxu0 0.0
    %5769 = vmatprep.subr.mxu0 0.0
    %5770 = vmatpush2.msra.mxu0 0.0
    %5771 = vmatprep.subr.mxu0 0.0
    %5772 = vmatpush2.msra.mxu0 0.0
    %5773 = vmatprep.subr.mxu0 0.0
    %5774 = vmatpush2.msra.mxu0 0.0
    %5775 = vmatprep.subr.mxu0 0.0
    %5776 = vmatpush2.msra.mxu0 0.0
    %5777 = vmatprep.subr.mxu0 0.0
    %5778 = vmatpush2.msra.mxu0 0.0
    %5779 = vmatprep.subr.mxu0 0.0
    %5780 = vmatpush2.msra.mxu0 0.0
    %5781 = vmatprep.subr.mxu0 0.0
    %5782 = vmatpush2.msra.mxu0 0.0
    %5783 = vmatprep.subr.mxu0 0.0
    %5784 = vmatpush2.msra.mxu0 0.0
    %5785 = vmatprep.subr.mxu0 0.0
    %5786 = vmatpush2.msra.mxu0 0.0
    %5787 = vmatprep.subr.mxu0 0.0
    %5788 = vmatpush2.msra.mxu0 0.0
    %5789 = vmatprep.subr.mxu0 0.0
    %5790 = vmatpush2.msra.mxu0 0.0
    %5791 = vmatprep.subr.mxu0 0.0
    %5792 = vmatpush2.msra.mxu0 0.0
    %5793 = vmatprep.mubr.f32.mxu0 0.0
    %v5794 = vand.u32 %v5473, 4294901760
    %v5795 = vsub.f32 %v5473, %v5794
    %v5796 = vand.u32 %v5795, 4294901760
    %5797 = vmatmul.mubr.f32.gmra.mxu0 %v5796
    %v5798 = vpop.f32.mrf.mxu0
    %v5799 = vadd.f32 %v5722, %v5798
    %v5800 = vpop.f32.mrf.mxu0
    %5801 = vdwg.mxu0
    %5802 = vmatprep.subr.mxu0 0.0
    %5803 = vmatpush1.msra.mxu0 0.0
    %5804 = vmatprep.subr.mxu0 0.0
    %5805 = vmatpush1.msra.mxu0 0.0
    %5806 = vmatprep.subr.mxu0 0.0
    %5807 = vmatpush1.msra.mxu0 0.0
    %5808 = vmatprep.subr.mxu0 0.0
    %5809 = vmatpush1.msra.mxu0 0.0
    %5810 = vmatprep.subr.mxu0 0.0
    %5811 = vmatpush1.msra.mxu0 0.0
    %5812 = vmatprep.subr.mxu0 0.0
    %5813 = vmatpush1.msra.mxu0 0.0
    %5814 = vmatprep.subr.mxu0 0.0
    %5815 = vmatpush1.msra.mxu0 0.0
    %5816 = vmatprep.subr.mxu0 0.0
    %5817 = vmatpush1.msra.mxu0 0.0
    %5818 = vmatprep.subr.mxu0 0.0
    %5819 = vmatpush1.msra.mxu0 0.0
    %5820 = vmatprep.subr.mxu0 0.0
    %5821 = vmatpush1.msra.mxu0 0.0
    %5822 = vmatprep.subr.mxu0 0.0
    %5823 = vmatpush1.msra.mxu0 0.0
    %5824 = vmatprep.subr.mxu0 0.0
    %5825 = vmatpush1.msra.mxu0 0.0
    %5826 = vmatprep.subr.mxu0 0.0
    %v5827 = vand.u32 %v35, 4294901760
    %v5828 = vsub.f32 %v35, %v5827
    %v5829 = vand.u32 %v5828, 4294901760
    %5830 = vmatpush1.msra.mxu0 %v5829
    %5831 = vmatprep.subr.mxu0 0.0
    %v5832 = vand.u32 %v34, 4294901760
    %v5833 = vsub.f32 %v34, %v5832
    %v5834 = vand.u32 %v5833, 4294901760
    %5835 = vmatpush1.msra.mxu0 %v5834
    %5836 = vmatprep.subr.mxu0 0.0
    %v5837 = vand.u32 %v33, 4294901760
    %v5838 = vsub.f32 %v33, %v5837
    %v5839 = vand.u32 %v5838, 4294901760
    %5840 = vmatpush1.msra.mxu0 %v5839
    %5841 = vmatprep.subr.mxu0 0.0
    %v5842 = vand.u32 %v32, 4294901760
    %v5843 = vsub.f32 %v32, %v5842
    %v5844 = vand.u32 %v5843, 4294901760
    %5845 = vmatpush1.msra.mxu0 %v5844
    %5846 = vmatprep.subr.mxu0 0.0
    %5847 = vmatpush2.msra.mxu0 0.0
    %5848 = vmatprep.subr.mxu0 0.0
    %5849 = vmatpush2.msra.mxu0 0.0
    %5850 = vmatprep.subr.mxu0 0.0
    %5851 = vmatpush2.msra.mxu0 0.0
    %5852 = vmatprep.subr.mxu0 0.0
    %5853 = vmatpush2.msra.mxu0 0.0
    %5854 = vmatprep.subr.mxu0 0.0
    %5855 = vmatpush2.msra.mxu0 0.0
    %5856 = vmatprep.subr.mxu0 0.0
    %5857 = vmatpush2.msra.mxu0 0.0
    %5858 = vmatprep.subr.mxu0 0.0
    %5859 = vmatpush2.msra.mxu0 0.0
    %5860 = vmatprep.subr.mxu0 0.0
    %5861 = vmatpush2.msra.mxu0 0.0
    %5862 = vmatprep.subr.mxu0 0.0
    %5863 = vmatpush2.msra.mxu0 0.0
    %5864 = vmatprep.subr.mxu0 0.0
    %5865 = vmatpush2.msra.mxu0 0.0
    %5866 = vmatprep.subr.mxu0 0.0
    %5867 = vmatpush2.msra.mxu0 0.0
    %5868 = vmatprep.subr.mxu0 0.0
    %5869 = vmatpush2.msra.mxu0 0.0
    %5870 = vmatprep.subr.mxu0 0.0
    %5871 = vmatpush2.msra.mxu0 0.0
    %5872 = vmatprep.subr.mxu0 0.0
    %5873 = vmatpush2.msra.mxu0 0.0
    %5874 = vmatprep.subr.mxu0 0.0
    %5875 = vmatpush2.msra.mxu0 0.0
    %5876 = vmatprep.subr.mxu0 0.0
    %5877 = vmatpush2.msra.mxu0 0.0
    %5878 = vmatprep.mubr.f32.mxu0 0.0
    %v5879 = vand.u32 %v5473, 4294901760
    %5880 = vmatmul.mubr.f32.gmra.mxu0 %v5879
    %v5881 = vpop.f32.mrf.mxu0
    %v5882 = vadd.f32 %v5799, %v5881
    %v5883 = vpop.f32.mrf.mxu0
    %5884 = vdwg.mxu0
    %5885 = vmatprep.subr.mxu0 0.0
    %5886 = vmatpush1.msra.mxu0 0.0
    %5887 = vmatprep.subr.mxu0 0.0
    %5888 = vmatpush1.msra.mxu0 0.0
    %5889 = vmatprep.subr.mxu0 0.0
    %5890 = vmatpush1.msra.mxu0 0.0
    %5891 = vmatprep.subr.mxu0 0.0
    %5892 = vmatpush1.msra.mxu0 0.0
    %5893 = vmatprep.subr.mxu0 0.0
    %5894 = vmatpush1.msra.mxu0 0.0
    %5895 = vmatprep.subr.mxu0 0.0
    %5896 = vmatpush1.msra.mxu0 0.0
    %5897 = vmatprep.subr.mxu0 0.0
    %5898 = vmatpush1.msra.mxu0 0.0
    %5899 = vmatprep.subr.mxu0 0.0
    %5900 = vmatpush1.msra.mxu0 0.0
    %5901 = vmatprep.subr.mxu0 0.0
    %5902 = vmatpush1.msra.mxu0 0.0
    %5903 = vmatprep.subr.mxu0 0.0
    %5904 = vmatpush1.msra.mxu0 0.0
    %5905 = vmatprep.subr.mxu0 0.0
    %5906 = vmatpush1.msra.mxu0 0.0
    %5907 = vmatprep.subr.mxu0 0.0
    %5908 = vmatpush1.msra.mxu0 0.0
    %5909 = vmatprep.subr.mxu0 0.0
    %v5910 = vand.u32 %v35, 4294901760
    %5911 = vmatpush1.msra.mxu0 %v5910
    %5912 = vmatprep.subr.mxu0 0.0
    %v5913 = vand.u32 %v34, 4294901760
    %5914 = vmatpush1.msra.mxu0 %v5913
    %5915 = vmatprep.subr.mxu0 0.0
    %v5916 = vand.u32 %v33, 4294901760
    %5917 = vmatpush1.msra.mxu0 %v5916
    %5918 = vmatprep.subr.mxu0 0.0
    %v5919 = vand.u32 %v32, 4294901760
    %5920 = vmatpush1.msra.mxu0 %v5919
    %5921 = vmatprep.subr.mxu0 0.0
    %5922 = vmatpush2.msra.mxu0 0.0
    %5923 = vmatprep.subr.mxu0 0.0
    %5924 = vmatpush2.msra.mxu0 0.0
    %5925 = vmatprep.subr.mxu0 0.0
    %5926 = vmatpush2.msra.mxu0 0.0
    %5927 = vmatprep.subr.mxu0 0.0
    %5928 = vmatpush2.msra.mxu0 0.0
    %5929 = vmatprep.subr.mxu0 0.0
    %5930 = vmatpush2.msra.mxu0 0.0
    %5931 = vmatprep.subr.mxu0 0.0
    %5932 = vmatpush2.msra.mxu0 0.0
    %5933 = vmatprep.subr.mxu0 0.0
    %5934 = vmatpush2.msra.mxu0 0.0
    %5935 = vmatprep.subr.mxu0 0.0
    %5936 = vmatpush2.msra.mxu0 0.0
    %5937 = vmatprep.subr.mxu0 0.0
    %5938 = vmatpush2.msra.mxu0 0.0
    %5939 = vmatprep.subr.mxu0 0.0
    %5940 = vmatpush2.msra.mxu0 0.0
    %5941 = vmatprep.subr.mxu0 0.0
    %5942 = vmatpush2.msra.mxu0 0.0
    %5943 = vmatprep.subr.mxu0 0.0
    %5944 = vmatpush2.msra.mxu0 0.0
    %5945 = vmatprep.subr.mxu0 0.0
    %5946 = vmatpush2.msra.mxu0 0.0
    %5947 = vmatprep.subr.mxu0 0.0
    %5948 = vmatpush2.msra.mxu0 0.0
    %5949 = vmatprep.subr.mxu0 0.0
    %5950 = vmatpush2.msra.mxu0 0.0
    %5951 = vmatprep.subr.mxu0 0.0
    %5952 = vmatpush2.msra.mxu0 0.0
    %5953 = vmatprep.mubr.f32.mxu0 0.0
    %v5954 = vand.u32 %v5473, 4294901760
    %5955 = vmatmul.mubr.f32.gmra.mxu0 %v5954
    %v5956 = vpop.f32.mrf.mxu0
    %v5957 = vadd.f32 %v5882, %v5956
    %v5958 = vpop.f32.mrf.mxu0
    %5959 = vdwg.mxu0
    %5960 = vmatprep.subr.mxu0 0.0
    %5961 = vmatpush1.msra.mxu0 0.0
    %5962 = vmatprep.subr.mxu0 0.0
    %5963 = vmatpush1.msra.mxu0 0.0
    %5964 = vmatprep.subr.mxu0 0.0
    %5965 = vmatpush1.msra.mxu0 0.0
    %5966 = vmatprep.subr.mxu0 0.0
    %5967 = vmatpush1.msra.mxu0 0.0
    %5968 = vmatprep.subr.mxu0 0.0
    %5969 = vmatpush1.msra.mxu0 0.0
    %5970 = vmatprep.subr.mxu0 0.0
    %5971 = vmatpush1.msra.mxu0 0.0
    %5972 = vmatprep.subr.mxu0 0.0
    %5973 = vmatpush1.msra.mxu0 0.0
    %5974 = vmatprep.subr.mxu0 0.0
    %5975 = vmatpush1.msra.mxu0 0.0
    %5976 = vmatprep.subr.mxu0 0.0
    %5977 = vmatpush1.msra.mxu0 0.0
    %5978 = vmatprep.subr.mxu0 0.0
    %5979 = vmatpush1.msra.mxu0 0.0
    %5980 = vmatprep.subr.mxu0 0.0
    %5981 = vmatpush1.msra.mxu0 0.0
    %5982 = vmatprep.subr.mxu0 0.0
    %5983 = vmatpush1.msra.mxu0 0.0
    %5984 = vmatprep.subr.mxu0 0.0
    %v5985 = vand.u32 %v39, 4294901760
    %5986 = vmatpush1.msra.mxu0 %v5985
    %5987 = vmatprep.subr.mxu0 0.0
    %v5988 = vand.u32 %v38, 4294901760
    %5989 = vmatpush1.msra.mxu0 %v5988
    %5990 = vmatprep.subr.mxu0 0.0
    %v5991 = vand.u32 %v37, 4294901760
    %5992 = vmatpush1.msra.mxu0 %v5991
    %5993 = vmatprep.subr.mxu0 0.0
    %v5994 = vand.u32 %v36, 4294901760
    %5995 = vmatpush1.msra.mxu0 %v5994
    %5996 = vmatprep.subr.mxu0 0.0
    %5997 = vmatpush2.msra.mxu0 0.0
    %5998 = vmatprep.subr.mxu0 0.0
    %5999 = vmatpush2.msra.mxu0 0.0
    %6000 = vmatprep.subr.mxu0 0.0
    %6001 = vmatpush2.msra.mxu0 0.0
    %6002 = vmatprep.subr.mxu0 0.0
    %6003 = vmatpush2.msra.mxu0 0.0
    %6004 = vmatprep.subr.mxu0 0.0
    %6005 = vmatpush2.msra.mxu0 0.0
    %6006 = vmatprep.subr.mxu0 0.0
    %6007 = vmatpush2.msra.mxu0 0.0
    %6008 = vmatprep.subr.mxu0 0.0
    %6009 = vmatpush2.msra.mxu0 0.0
    %6010 = vmatprep.subr.mxu0 0.0
    %6011 = vmatpush2.msra.mxu0 0.0
    %6012 = vmatprep.subr.mxu0 0.0
    %6013 = vmatpush2.msra.mxu0 0.0
    %6014 = vmatprep.subr.mxu0 0.0
    %6015 = vmatpush2.msra.mxu0 0.0
    %6016 = vmatprep.subr.mxu0 0.0
    %6017 = vmatpush2.msra.mxu0 0.0
    %6018 = vmatprep.subr.mxu0 0.0
    %6019 = vmatpush2.msra.mxu0 0.0
    %6020 = vmatprep.subr.mxu0 0.0
    %6021 = vmatpush2.msra.mxu0 0.0
    %6022 = vmatprep.subr.mxu0 0.0
    %6023 = vmatpush2.msra.mxu0 0.0
    %6024 = vmatprep.subr.mxu0 0.0
    %6025 = vmatpush2.msra.mxu0 0.0
    %6026 = vmatprep.subr.mxu0 0.0
    %6027 = vmatpush2.msra.mxu0 0.0
    %6028 = vmatprep.mubr.f32.mxu0 0.0
    %v6029 = vand.u32 %v5473, 4294901760
    %v6030 = vsub.f32 %v5473, %v6029
    %v6031 = vand.u32 %v6030, 4294901760
    %v6032 = vsub.f32 %v6030, %v6031
    %v6033 = vand.u32 %v6032, 4294901760
    %6034 = vmatmul.mubr.f32.gmra.mxu0 %v6033
    %v6035 = vpop.f32.mrf.mxu0
    %v6036 = vadd.f32 0.0, %v6035
    %v6037 = vpop.f32.mrf.mxu0
    %6038 = vdwg.mxu0
    %6039 = vmatprep.subr.mxu0 0.0
    %6040 = vmatpush1.msra.mxu0 0.0
    %6041 = vmatprep.subr.mxu0 0.0
    %6042 = vmatpush1.msra.mxu0 0.0
    %6043 = vmatprep.subr.mxu0 0.0
    %6044 = vmatpush1.msra.mxu0 0.0
    %6045 = vmatprep.subr.mxu0 0.0
    %6046 = vmatpush1.msra.mxu0 0.0
    %6047 = vmatprep.subr.mxu0 0.0
    %6048 = vmatpush1.msra.mxu0 0.0
    %6049 = vmatprep.subr.mxu0 0.0
    %6050 = vmatpush1.msra.mxu0 0.0
    %6051 = vmatprep.subr.mxu0 0.0
    %6052 = vmatpush1.msra.mxu0 0.0
    %6053 = vmatprep.subr.mxu0 0.0
    %6054 = vmatpush1.msra.mxu0 0.0
    %6055 = vmatprep.subr.mxu0 0.0
    %6056 = vmatpush1.msra.mxu0 0.0
    %6057 = vmatprep.subr.mxu0 0.0
    %6058 = vmatpush1.msra.mxu0 0.0
    %6059 = vmatprep.subr.mxu0 0.0
    %6060 = vmatpush1.msra.mxu0 0.0
    %6061 = vmatprep.subr.mxu0 0.0
    %6062 = vmatpush1.msra.mxu0 0.0
    %6063 = vmatprep.subr.mxu0 0.0
    %v6064 = vand.u32 %v39, 4294901760
    %v6065 = vsub.f32 %v39, %v6064
    %v6066 = vand.u32 %v6065, 4294901760
    %v6067 = vsub.f32 %v6065, %v6066
    %v6068 = vand.u32 %v6067, 4294901760
    %6069 = vmatpush1.msra.mxu0 %v6068
    %6070 = vmatprep.subr.mxu0 0.0
    %v6071 = vand.u32 %v38, 4294901760
    %v6072 = vsub.f32 %v38, %v6071
    %v6073 = vand.u32 %v6072, 4294901760
    %v6074 = vsub.f32 %v6072, %v6073
    %v6075 = vand.u32 %v6074, 4294901760
    %6076 = vmatpush1.msra.mxu0 %v6075
    %6077 = vmatprep.subr.mxu0 0.0
    %v6078 = vand.u32 %v37, 4294901760
    %v6079 = vsub.f32 %v37, %v6078
    %v6080 = vand.u32 %v6079, 4294901760
    %v6081 = vsub.f32 %v6079, %v6080
    %v6082 = vand.u32 %v6081, 4294901760
    %6083 = vmatpush1.msra.mxu0 %v6082
    %6084 = vmatprep.subr.mxu0 0.0
    %v6085 = vand.u32 %v36, 4294901760
    %v6086 = vsub.f32 %v36, %v6085
    %v6087 = vand.u32 %v6086, 4294901760
    %v6088 = vsub.f32 %v6086, %v6087
    %v6089 = vand.u32 %v6088, 4294901760
    %6090 = vmatpush1.msra.mxu0 %v6089
    %6091 = vmatprep.subr.mxu0 0.0
    %6092 = vmatpush2.msra.mxu0 0.0
    %6093 = vmatprep.subr.mxu0 0.0
    %6094 = vmatpush2.msra.mxu0 0.0
    %6095 = vmatprep.subr.mxu0 0.0
    %6096 = vmatpush2.msra.mxu0 0.0
    %6097 = vmatprep.subr.mxu0 0.0
    %6098 = vmatpush2.msra.mxu0 0.0
    %6099 = vmatprep.subr.mxu0 0.0
    %6100 = vmatpush2.msra.mxu0 0.0
    %6101 = vmatprep.subr.mxu0 0.0
    %6102 = vmatpush2.msra.mxu0 0.0
    %6103 = vmatprep.subr.mxu0 0.0
    %6104 = vmatpush2.msra.mxu0 0.0
    %6105 = vmatprep.subr.mxu0 0.0
    %6106 = vmatpush2.msra.mxu0 0.0
    %6107 = vmatprep.subr.mxu0 0.0
    %6108 = vmatpush2.msra.mxu0 0.0
    %6109 = vmatprep.subr.mxu0 0.0
    %6110 = vmatpush2.msra.mxu0 0.0
    %6111 = vmatprep.subr.mxu0 0.0
    %6112 = vmatpush2.msra.mxu0 0.0
    %6113 = vmatprep.subr.mxu0 0.0
    %6114 = vmatpush2.msra.mxu0 0.0
    %6115 = vmatprep.subr.mxu0 0.0
    %6116 = vmatpush2.msra.mxu0 0.0
    %6117 = vmatprep.subr.mxu0 0.0
    %6118 = vmatpush2.msra.mxu0 0.0
    %6119 = vmatprep.subr.mxu0 0.0
    %6120 = vmatpush2.msra.mxu0 0.0
    %6121 = vmatprep.subr.mxu0 0.0
    %6122 = vmatpush2.msra.mxu0 0.0
    %6123 = vmatprep.mubr.f32.mxu0 0.0
    %v6124 = vand.u32 %v5473, 4294901760
    %6125 = vmatmul.mubr.f32.gmra.mxu0 %v6124
    %v6126 = vpop.f32.mrf.mxu0
    %v6127 = vadd.f32 %v6036, %v6126
    %v6128 = vpop.f32.mrf.mxu0
    %6129 = vdwg.mxu0
    %6130 = vmatprep.subr.mxu0 0.0
    %6131 = vmatpush1.msra.mxu0 0.0
    %6132 = vmatprep.subr.mxu0 0.0
    %6133 = vmatpush1.msra.mxu0 0.0
    %6134 = vmatprep.subr.mxu0 0.0
    %6135 = vmatpush1.msra.mxu0 0.0
    %6136 = vmatprep.subr.mxu0 0.0
    %6137 = vmatpush1.msra.mxu0 0.0
    %6138 = vmatprep.subr.mxu0 0.0
    %6139 = vmatpush1.msra.mxu0 0.0
    %6140 = vmatprep.subr.mxu0 0.0
    %6141 = vmatpush1.msra.mxu0 0.0
    %6142 = vmatprep.subr.mxu0 0.0
    %6143 = vmatpush1.msra.mxu0 0.0
    %6144 = vmatprep.subr.mxu0 0.0
    %6145 = vmatpush1.msra.mxu0 0.0
    %6146 = vmatprep.subr.mxu0 0.0
    %6147 = vmatpush1.msra.mxu0 0.0
    %6148 = vmatprep.subr.mxu0 0.0
    %6149 = vmatpush1.msra.mxu0 0.0
    %6150 = vmatprep.subr.mxu0 0.0
    %6151 = vmatpush1.msra.mxu0 0.0
    %6152 = vmatprep.subr.mxu0 0.0
    %6153 = vmatpush1.msra.mxu0 0.0
    %6154 = vmatprep.subr.mxu0 0.0
    %v6155 = vand.u32 %v39, 4294901760
    %v6156 = vsub.f32 %v39, %v6155
    %6157 = vmatpush1.msra.mxu0 %v6156
    %6158 = vmatprep.subr.mxu0 0.0
    %v6159 = vand.u32 %v38, 4294901760
    %v6160 = vsub.f32 %v38, %v6159
    %6161 = vmatpush1.msra.mxu0 %v6160
    %6162 = vmatprep.subr.mxu0 0.0
    %v6163 = vand.u32 %v37, 4294901760
    %v6164 = vsub.f32 %v37, %v6163
    %6165 = vmatpush1.msra.mxu0 %v6164
    %6166 = vmatprep.subr.mxu0 0.0
    %v6167 = vand.u32 %v36, 4294901760
    %v6168 = vsub.f32 %v36, %v6167
    %6169 = vmatpush1.msra.mxu0 %v6168
    %6170 = vmatprep.subr.mxu0 0.0
    %6171 = vmatpush2.msra.mxu0 0.0
    %6172 = vmatprep.subr.mxu0 0.0
    %6173 = vmatpush2.msra.mxu0 0.0
    %6174 = vmatprep.subr.mxu0 0.0
    %6175 = vmatpush2.msra.mxu0 0.0
    %6176 = vmatprep.subr.mxu0 0.0
    %6177 = vmatpush2.msra.mxu0 0.0
    %6178 = vmatprep.subr.mxu0 0.0
    %6179 = vmatpush2.msra.mxu0 0.0
    %6180 = vmatprep.subr.mxu0 0.0
    %6181 = vmatpush2.msra.mxu0 0.0
    %6182 = vmatprep.subr.mxu0 0.0
    %6183 = vmatpush2.msra.mxu0 0.0
    %6184 = vmatprep.subr.mxu0 0.0
    %6185 = vmatpush2.msra.mxu0 0.0
    %6186 = vmatprep.subr.mxu0 0.0
    %6187 = vmatpush2.msra.mxu0 0.0
    %6188 = vmatprep.subr.mxu0 0.0
    %6189 = vmatpush2.msra.mxu0 0.0
    %6190 = vmatprep.subr.mxu0 0.0
    %6191 = vmatpush2.msra.mxu0 0.0
    %6192 = vmatprep.subr.mxu0 0.0
    %6193 = vmatpush2.msra.mxu0 0.0
    %6194 = vmatprep.subr.mxu0 0.0
    %6195 = vmatpush2.msra.mxu0 0.0
    %6196 = vmatprep.subr.mxu0 0.0
    %6197 = vmatpush2.msra.mxu0 0.0
    %6198 = vmatprep.subr.mxu0 0.0
    %6199 = vmatpush2.msra.mxu0 0.0
    %6200 = vmatprep.subr.mxu0 0.0
    %6201 = vmatpush2.msra.mxu0 0.0
    %6202 = vmatprep.mubr.f32.mxu0 0.0
    %v6203 = vand.u32 %v5473, 4294901760
    %v6204 = vsub.f32 %v5473, %v6203
    %6205 = vmatmul.mubr.f32.gmra.mxu0 %v6204
    %v6206 = vpop.f32.mrf.mxu0
    %v6207 = vadd.f32 %v6127, %v6206
    %v6208 = vpop.f32.mrf.mxu0
    %6209 = vdwg.mxu0
    %6210 = vmatprep.subr.mxu0 0.0
    %6211 = vmatpush1.msra.mxu0 0.0
    %6212 = vmatprep.subr.mxu0 0.0
    %6213 = vmatpush1.msra.mxu0 0.0
    %6214 = vmatprep.subr.mxu0 0.0
    %6215 = vmatpush1.msra.mxu0 0.0
    %6216 = vmatprep.subr.mxu0 0.0
    %6217 = vmatpush1.msra.mxu0 0.0
    %6218 = vmatprep.subr.mxu0 0.0
    %6219 = vmatpush1.msra.mxu0 0.0
    %6220 = vmatprep.subr.mxu0 0.0
    %6221 = vmatpush1.msra.mxu0 0.0
    %6222 = vmatprep.subr.mxu0 0.0
    %6223 = vmatpush1.msra.mxu0 0.0
    %6224 = vmatprep.subr.mxu0 0.0
    %6225 = vmatpush1.msra.mxu0 0.0
    %6226 = vmatprep.subr.mxu0 0.0
    %6227 = vmatpush1.msra.mxu0 0.0
    %6228 = vmatprep.subr.mxu0 0.0
    %6229 = vmatpush1.msra.mxu0 0.0
    %6230 = vmatprep.subr.mxu0 0.0
    %6231 = vmatpush1.msra.mxu0 0.0
    %6232 = vmatprep.subr.mxu0 0.0
    %6233 = vmatpush1.msra.mxu0 0.0
    %6234 = vmatprep.subr.mxu0 0.0
    %v6235 = vand.u32 %v39, 4294901760
    %6236 = vmatpush1.msra.mxu0 %v6235
    %6237 = vmatprep.subr.mxu0 0.0
    %v6238 = vand.u32 %v38, 4294901760
    %6239 = vmatpush1.msra.mxu0 %v6238
    %6240 = vmatprep.subr.mxu0 0.0
    %v6241 = vand.u32 %v37, 4294901760
    %6242 = vmatpush1.msra.mxu0 %v6241
    %6243 = vmatprep.subr.mxu0 0.0
    %v6244 = vand.u32 %v36, 4294901760
    %6245 = vmatpush1.msra.mxu0 %v6244
    %6246 = vmatprep.subr.mxu0 0.0
    %6247 = vmatpush2.msra.mxu0 0.0
    %6248 = vmatprep.subr.mxu0 0.0
    %6249 = vmatpush2.msra.mxu0 0.0
    %6250 = vmatprep.subr.mxu0 0.0
    %6251 = vmatpush2.msra.mxu0 0.0
    %6252 = vmatprep.subr.mxu0 0.0
    %6253 = vmatpush2.msra.mxu0 0.0
    %6254 = vmatprep.subr.mxu0 0.0
    %6255 = vmatpush2.msra.mxu0 0.0
    %6256 = vmatprep.subr.mxu0 0.0
    %6257 = vmatpush2.msra.mxu0 0.0
    %6258 = vmatprep.subr.mxu0 0.0
    %6259 = vmatpush2.msra.mxu0 0.0
    %6260 = vmatprep.subr.mxu0 0.0
    %6261 = vmatpush2.msra.mxu0 0.0
    %6262 = vmatprep.subr.mxu0 0.0
    %6263 = vmatpush2.msra.mxu0 0.0
    %6264 = vmatprep.subr.mxu0 0.0
    %6265 = vmatpush2.msra.mxu0 0.0
    %6266 = vmatprep.subr.mxu0 0.0
    %6267 = vmatpush2.msra.mxu0 0.0
    %6268 = vmatprep.subr.mxu0 0.0
    %6269 = vmatpush2.msra.mxu0 0.0
    %6270 = vmatprep.subr.mxu0 0.0
    %6271 = vmatpush2.msra.mxu0 0.0
    %6272 = vmatprep.subr.mxu0 0.0
    %6273 = vmatpush2.msra.mxu0 0.0
    %6274 = vmatprep.subr.mxu0 0.0
    %6275 = vmatpush2.msra.mxu0 0.0
    %6276 = vmatprep.subr.mxu0 0.0
    %6277 = vmatpush2.msra.mxu0 0.0
    %6278 = vmatprep.mubr.f32.mxu0 0.0
    %v6279 = vand.u32 %v5473, 4294901760
    %v6280 = vsub.f32 %v5473, %v6279
    %v6281 = vand.u32 %v6280, 4294901760
    %6282 = vmatmul.mubr.f32.gmra.mxu0 %v6281
    %v6283 = vpop.f32.mrf.mxu0
    %v6284 = vadd.f32 %v6207, %v6283
    %v6285 = vpop.f32.mrf.mxu0
    %6286 = vdwg.mxu0
    %6287 = vmatprep.subr.mxu0 0.0
    %6288 = vmatpush1.msra.mxu0 0.0
    %6289 = vmatprep.subr.mxu0 0.0
    %6290 = vmatpush1.msra.mxu0 0.0
    %6291 = vmatprep.subr.mxu0 0.0
    %6292 = vmatpush1.msra.mxu0 0.0
    %6293 = vmatprep.subr.mxu0 0.0
    %6294 = vmatpush1.msra.mxu0 0.0
    %6295 = vmatprep.subr.mxu0 0.0
    %6296 = vmatpush1.msra.mxu0 0.0
    %6297 = vmatprep.subr.mxu0 0.0
    %6298 = vmatpush1.msra.mxu0 0.0
    %6299 = vmatprep.subr.mxu0 0.0
    %6300 = vmatpush1.msra.mxu0 0.0
    %6301 = vmatprep.subr.mxu0 0.0
    %6302 = vmatpush1.msra.mxu0 0.0
    %6303 = vmatprep.subr.mxu0 0.0
    %6304 = vmatpush1.msra.mxu0 0.0
    %6305 = vmatprep.subr.mxu0 0.0
    %6306 = vmatpush1.msra.mxu0 0.0
    %6307 = vmatprep.subr.mxu0 0.0
    %6308 = vmatpush1.msra.mxu0 0.0
    %6309 = vmatprep.subr.mxu0 0.0
    %6310 = vmatpush1.msra.mxu0 0.0
    %6311 = vmatprep.subr.mxu0 0.0
    %v6312 = vand.u32 %v39, 4294901760
    %v6313 = vsub.f32 %v39, %v6312
    %v6314 = vand.u32 %v6313, 4294901760
    %6315 = vmatpush1.msra.mxu0 %v6314
    %6316 = vmatprep.subr.mxu0 0.0
    %v6317 = vand.u32 %v38, 4294901760
    %v6318 = vsub.f32 %v38, %v6317
    %v6319 = vand.u32 %v6318, 4294901760
    %6320 = vmatpush1.msra.mxu0 %v6319
    %6321 = vmatprep.subr.mxu0 0.0
    %v6322 = vand.u32 %v37, 4294901760
    %v6323 = vsub.f32 %v37, %v6322
    %v6324 = vand.u32 %v6323, 4294901760
    %6325 = vmatpush1.msra.mxu0 %v6324
    %6326 = vmatprep.subr.mxu0 0.0
    %v6327 = vand.u32 %v36, 4294901760
    %v6328 = vsub.f32 %v36, %v6327
    %v6329 = vand.u32 %v6328, 4294901760
    %6330 = vmatpush1.msra.mxu0 %v6329
    %6331 = vmatprep.subr.mxu0 0.0
    %6332 = vmatpush2.msra.mxu0 0.0
    %6333 = vmatprep.subr.mxu0 0.0
    %6334 = vmatpush2.msra.mxu0 0.0
    %6335 = vmatprep.subr.mxu0 0.0
    %6336 = vmatpush2.msra.mxu0 0.0
    %6337 = vmatprep.subr.mxu0 0.0
    %6338 = vmatpush2.msra.mxu0 0.0
    %6339 = vmatprep.subr.mxu0 0.0
    %6340 = vmatpush2.msra.mxu0 0.0
    %6341 = vmatprep.subr.mxu0 0.0
    %6342 = vmatpush2.msra.mxu0 0.0
    %6343 = vmatprep.subr.mxu0 0.0
    %6344 = vmatpush2.msra.mxu0 0.0
    %6345 = vmatprep.subr.mxu0 0.0
    %6346 = vmatpush2.msra.mxu0 0.0
    %6347 = vmatprep.subr.mxu0 0.0
    %6348 = vmatpush2.msra.mxu0 0.0
    %6349 = vmatprep.subr.mxu0 0.0
    %6350 = vmatpush2.msra.mxu0 0.0
    %6351 = vmatprep.subr.mxu0 0.0
    %6352 = vmatpush2.msra.mxu0 0.0
    %6353 = vmatprep.subr.mxu0 0.0
    %6354 = vmatpush2.msra.mxu0 0.0
    %6355 = vmatprep.subr.mxu0 0.0
    %6356 = vmatpush2.msra.mxu0 0.0
    %6357 = vmatprep.subr.mxu0 0.0
    %6358 = vmatpush2.msra.mxu0 0.0
    %6359 = vmatprep.subr.mxu0 0.0
    %6360 = vmatpush2.msra.mxu0 0.0
    %6361 = vmatprep.subr.mxu0 0.0
    %6362 = vmatpush2.msra.mxu0 0.0
    %6363 = vmatprep.mubr.f32.mxu0 0.0
    %v6364 = vand.u32 %v5473, 4294901760
    %6365 = vmatmul.mubr.f32.gmra.mxu0 %v6364
    %v6366 = vpop.f32.mrf.mxu0
    %v6367 = vadd.f32 %v6284, %v6366
    %v6368 = vpop.f32.mrf.mxu0
    %6369 = vdwg.mxu0
    %6370 = vmatprep.subr.mxu0 0.0
    %6371 = vmatpush1.msra.mxu0 0.0
    %6372 = vmatprep.subr.mxu0 0.0
    %6373 = vmatpush1.msra.mxu0 0.0
    %6374 = vmatprep.subr.mxu0 0.0
    %6375 = vmatpush1.msra.mxu0 0.0
    %6376 = vmatprep.subr.mxu0 0.0
    %6377 = vmatpush1.msra.mxu0 0.0
    %6378 = vmatprep.subr.mxu0 0.0
    %6379 = vmatpush1.msra.mxu0 0.0
    %6380 = vmatprep.subr.mxu0 0.0
    %6381 = vmatpush1.msra.mxu0 0.0
    %6382 = vmatprep.subr.mxu0 0.0
    %6383 = vmatpush1.msra.mxu0 0.0
    %6384 = vmatprep.subr.mxu0 0.0
    %6385 = vmatpush1.msra.mxu0 0.0
    %6386 = vmatprep.subr.mxu0 0.0
    %6387 = vmatpush1.msra.mxu0 0.0
    %6388 = vmatprep.subr.mxu0 0.0
    %6389 = vmatpush1.msra.mxu0 0.0
    %6390 = vmatprep.subr.mxu0 0.0
    %6391 = vmatpush1.msra.mxu0 0.0
    %6392 = vmatprep.subr.mxu0 0.0
    %6393 = vmatpush1.msra.mxu0 0.0
    %6394 = vmatprep.subr.mxu0 0.0
    %v6395 = vand.u32 %v39, 4294901760
    %6396 = vmatpush1.msra.mxu0 %v6395
    %6397 = vmatprep.subr.mxu0 0.0
    %v6398 = vand.u32 %v38, 4294901760
    %6399 = vmatpush1.msra.mxu0 %v6398
    %6400 = vmatprep.subr.mxu0 0.0
    %v6401 = vand.u32 %v37, 4294901760
    %6402 = vmatpush1.msra.mxu0 %v6401
    %6403 = vmatprep.subr.mxu0 0.0
    %v6404 = vand.u32 %v36, 4294901760
    %6405 = vmatpush1.msra.mxu0 %v6404
    %6406 = vmatprep.subr.mxu0 0.0
    %6407 = vmatpush2.msra.mxu0 0.0
    %6408 = vmatprep.subr.mxu0 0.0
    %6409 = vmatpush2.msra.mxu0 0.0
    %6410 = vmatprep.subr.mxu0 0.0
    %6411 = vmatpush2.msra.mxu0 0.0
    %6412 = vmatprep.subr.mxu0 0.0
    %6413 = vmatpush2.msra.mxu0 0.0
    %6414 = vmatprep.subr.mxu0 0.0
    %6415 = vmatpush2.msra.mxu0 0.0
    %6416 = vmatprep.subr.mxu0 0.0
    %6417 = vmatpush2.msra.mxu0 0.0
    %6418 = vmatprep.subr.mxu0 0.0
    %6419 = vmatpush2.msra.mxu0 0.0
    %6420 = vmatprep.subr.mxu0 0.0
    %6421 = vmatpush2.msra.mxu0 0.0
    %6422 = vmatprep.subr.mxu0 0.0
    %6423 = vmatpush2.msra.mxu0 0.0
    %6424 = vmatprep.subr.mxu0 0.0
    %6425 = vmatpush2.msra.mxu0 0.0
    %6426 = vmatprep.subr.mxu0 0.0
    %6427 = vmatpush2.msra.mxu0 0.0
    %6428 = vmatprep.subr.mxu0 0.0
    %6429 = vmatpush2.msra.mxu0 0.0
    %6430 = vmatprep.subr.mxu0 0.0
    %6431 = vmatpush2.msra.mxu0 0.0
    %6432 = vmatprep.subr.mxu0 0.0
    %6433 = vmatpush2.msra.mxu0 0.0
    %6434 = vmatprep.subr.mxu0 0.0
    %6435 = vmatpush2.msra.mxu0 0.0
    %6436 = vmatprep.subr.mxu0 0.0
    %6437 = vmatpush2.msra.mxu0 0.0
    %6438 = vmatprep.mubr.f32.mxu0 0.0
    %v6439 = vand.u32 %v5473, 4294901760
    %6440 = vmatmul.mubr.f32.gmra.mxu0 %v6439
    %v6441 = vpop.f32.mrf.mxu0
    %v6442 = vadd.f32 %v6367, %v6441
    %v6443 = vpop.f32.mrf.mxu0
    %6444 = vdwg.mxu0
    %v6446 = vcombine.high %v5957, %v5957
    %v6450 = vunpack.c.l.s4 1966171168
    %v6451 = vunpack.c.0.s8 %v6450
    %v6452 = vlaneseq
    %v6453 = vshrl.u32 %v6452, 7
    %v6454 = vsub.s32 %v6451, %v6453
    %v6455 = vrot.slane %v5469, %v6454
    %v6456 = vcombine.high %v6455, %v6455
    %v6458 = vunpack.c.l.s4 1966171168
    %v6459 = vunpack.c.0.s8 %v6458
    %v6460 = vlaneseq
    %v6461 = vshrl.u32 %v6460, 7
    %v6462 = vsub.s32 %v6459, %v6461
    %v6463 = vrot.slane %v6455, %v6462
    %v6465 = vunpack.c.l.s4 1966171168
    %v6466 = vunpack.c.0.s8 %v6465
    %v6467 = vlaneseq
    %v6468 = vshrl.u32 %v6467, 7
    %v6469 = vsub.s32 %v6466, %v6468
    %v6470 = vrot.slane %v6456, %v6469
    %v6471 = vlaneseq
    %v6472 = vshrl.u32 %v6471, 7
    %v6473 = vsub.s32 0, %v6472
    %v6474 = vrot.slane %v6463, %v6473
    %v6475 = vlaneseq
    %v6476 = vshrl.u32 %v6475, 7
    %v6477 = vsub.s32 0, %v6476
    %v6478 = vrot.slane %v6470, %v6477
    %v6481 = vmul.f32 %v5957, %v6474
    %v6482 = vmul.f32 %v6446, %v6478
    %v6484 = vcombine.high %v6442, %v6442
    %v6487 = vunpack.c.l.s4 1966171168
    %v6488 = vunpack.c.0.s8 %v6487
    %v6489 = vlaneseq
    %v6490 = vshrl.u32 %v6489, 7
    %v6491 = vsub.s32 %v6488, %v6490
    %v6492 = vrot.slane %v6442, %v6491
    %v6494 = vunpack.c.l.s4 1966171168
    %v6495 = vunpack.c.0.s8 %v6494
    %v6496 = vlaneseq
    %v6497 = vshrl.u32 %v6496, 7
    %v6498 = vsub.s32 %v6495, %v6497
    %v6499 = vrot.slane %v6484, %v6498
    %v6500 = vcombine.high %v6492, %v6492
    %v6501 = vcombine.high %v6499, %v6499
    %v6503 = vunpack.c.l.s4 1966171168
    %v6504 = vunpack.c.0.s8 %v6503
    %v6505 = vlaneseq
    %v6506 = vshrl.u32 %v6505, 7
    %v6507 = vsub.s32 %v6504, %v6506
    %v6508 = vrot.slane %v6492, %v6507
    %v6510 = vunpack.c.l.s4 1966171168
    %v6511 = vunpack.c.0.s8 %v6510
    %v6512 = vlaneseq
    %v6513 = vshrl.u32 %v6512, 7
    %v6514 = vsub.s32 %v6511, %v6513
    %v6515 = vrot.slane %v6499, %v6514
    %v6517 = vunpack.c.l.s4 1966171168
    %v6518 = vunpack.c.0.s8 %v6517
    %v6519 = vlaneseq
    %v6520 = vshrl.u32 %v6519, 7
    %v6521 = vsub.s32 %v6518, %v6520
    %v6522 = vrot.slane %v6500, %v6521
    %v6524 = vunpack.c.l.s4 1966171168
    %v6525 = vunpack.c.0.s8 %v6524
    %v6526 = vlaneseq
    %v6527 = vshrl.u32 %v6526, 7
    %v6528 = vsub.s32 %v6525, %v6527
    %v6529 = vrot.slane %v6501, %v6528
    %v6530 = vcombine.high %v6508, %v6508
    %v6531 = vcombine.high %v6515, %v6515
    %v6532 = vcombine.high %v6522, %v6522
    %v6533 = vcombine.high %v6529, %v6529
    %v6534 = vlaneseq
    %v6535 = vshrl.u32 %v6534, 7
    %v6536 = vsub.s32 0, %v6535
    %v6537 = vrot.slane %v6508, %v6536
    %v6538 = vlaneseq
    %v6539 = vshrl.u32 %v6538, 7
    %v6540 = vsub.s32 0, %v6539
    %v6541 = vrot.slane %v6522, %v6540
    %v6542 = vlaneseq
    %v6543 = vshrl.u32 %v6542, 7
    %v6544 = vsub.s32 0, %v6543
    %v6545 = vrot.slane %v6530, %v6544
    %v6546 = vlaneseq
    %v6547 = vshrl.u32 %v6546, 7
    %v6548 = vsub.s32 0, %v6547
    %v6549 = vrot.slane %v6532, %v6548
    %v6550 = vlaneseq
    %v6551 = vshrl.u32 %v6550, 7
    %v6552 = vsub.s32 0, %v6551
    %v6553 = vrot.slane %v6515, %v6552
    %v6554 = vlaneseq
    %v6555 = vshrl.u32 %v6554, 7
    %v6556 = vsub.s32 0, %v6555
    %v6557 = vrot.slane %v6529, %v6556
    %v6558 = vlaneseq
    %v6559 = vshrl.u32 %v6558, 7
    %v6560 = vsub.s32 0, %v6559
    %v6561 = vrot.slane %v6531, %v6560
    %v6562 = vlaneseq
    %v6563 = vshrl.u32 %v6562, 7
    %v6564 = vsub.s32 0, %v6563
    %v6565 = vrot.slane %v6533, %v6564
    %v6574 = vmul.f32 %v6537, %v6442
    %v6575 = vmul.f32 %v6541, %v6442
    %v6576 = vmul.f32 %v6545, %v6442
    %v6577 = vmul.f32 %v6549, %v6442
    %v6578 = vmul.f32 %v6553, %v6484
    %v6579 = vmul.f32 %v6557, %v6484
    %v6580 = vmul.f32 %v6561, %v6484
    %v6581 = vmul.f32 %v6565, %v6484
    %v6584 = vcombine.low %v6481, %v6482
    %6586 = vmatprep.subr.mxu0 0.0
    %v6587 = vand.u32 %v59, 4294901760
    %6588 = vmatpush1.msra.mxu0 %v6587
    %6589 = vmatprep.subr.mxu0 0.0
    %v6590 = vand.u32 %v58, 4294901760
    %6591 = vmatpush1.msra.mxu0 %v6590
    %6592 = vmatprep.subr.mxu0 0.0
    %v6593 = vand.u32 %v57, 4294901760
    %6594 = vmatpush1.msra.mxu0 %v6593
    %6595 = vmatprep.subr.mxu0 0.0
    %v6596 = vand.u32 %v56, 4294901760
    %6597 = vmatpush1.msra.mxu0 %v6596
    %6598 = vmatprep.subr.mxu0 0.0
    %v6599 = vand.u32 %v55, 4294901760
    %6600 = vmatpush1.msra.mxu0 %v6599
    %6601 = vmatprep.subr.mxu0 0.0
    %v6602 = vand.u32 %v54, 4294901760
    %6603 = vmatpush1.msra.mxu0 %v6602
    %6604 = vmatprep.subr.mxu0 0.0
    %v6605 = vand.u32 %v53, 4294901760
    %6606 = vmatpush1.msra.mxu0 %v6605
    %6607 = vmatprep.subr.mxu0 0.0
    %v6608 = vand.u32 %v52, 4294901760
    %6609 = vmatpush1.msra.mxu0 %v6608
    %6610 = vmatprep.subr.mxu0 0.0
    %v6611 = vand.u32 %v51, 4294901760
    %6612 = vmatpush1.msra.mxu0 %v6611
    %6613 = vmatprep.subr.mxu0 0.0
    %v6614 = vand.u32 %v50, 4294901760
    %6615 = vmatpush1.msra.mxu0 %v6614
    %6616 = vmatprep.subr.mxu0 0.0
    %v6617 = vand.u32 %v49, 4294901760
    %6618 = vmatpush1.msra.mxu0 %v6617
    %6619 = vmatprep.subr.mxu0 0.0
    %v6620 = vand.u32 %v48, 4294901760
    %6621 = vmatpush1.msra.mxu0 %v6620
    %6622 = vmatprep.subr.mxu0 0.0
    %v6623 = vand.u32 %v47, 4294901760
    %6624 = vmatpush1.msra.mxu0 %v6623
    %6625 = vmatprep.subr.mxu0 0.0
    %v6626 = vand.u32 %v46, 4294901760
    %6627 = vmatpush1.msra.mxu0 %v6626
    %6628 = vmatprep.subr.mxu0 0.0
    %v6629 = vand.u32 %v45, 4294901760
    %6630 = vmatpush1.msra.mxu0 %v6629
    %6631 = vmatprep.subr.mxu0 0.0
    %v6632 = vand.u32 %v44, 4294901760
    %6633 = vmatpush1.msra.mxu0 %v6632
    %6634 = vmatprep.subr.mxu0 0.0
    %6635 = vmatpush2.msra.mxu0 0.0
    %6636 = vmatprep.subr.mxu0 0.0
    %6637 = vmatpush2.msra.mxu0 0.0
    %6638 = vmatprep.subr.mxu0 0.0
    %6639 = vmatpush2.msra.mxu0 0.0
    %6640 = vmatprep.subr.mxu0 0.0
    %6641 = vmatpush2.msra.mxu0 0.0
    %6642 = vmatprep.subr.mxu0 0.0
    %6643 = vmatpush2.msra.mxu0 0.0
    %6644 = vmatprep.subr.mxu0 0.0
    %6645 = vmatpush2.msra.mxu0 0.0
    %6646 = vmatprep.subr.mxu0 0.0
    %6647 = vmatpush2.msra.mxu0 0.0
    %6648 = vmatprep.subr.mxu0 0.0
    %6649 = vmatpush2.msra.mxu0 0.0
    %6650 = vmatprep.subr.mxu0 0.0
    %6651 = vmatpush2.msra.mxu0 0.0
    %6652 = vmatprep.subr.mxu0 0.0
    %6653 = vmatpush2.msra.mxu0 0.0
    %6654 = vmatprep.subr.mxu0 0.0
    %6655 = vmatpush2.msra.mxu0 0.0
    %6656 = vmatprep.subr.mxu0 0.0
    %6657 = vmatpush2.msra.mxu0 0.0
    %6658 = vmatprep.subr.mxu0 0.0
    %6659 = vmatpush2.msra.mxu0 0.0
    %6660 = vmatprep.subr.mxu0 0.0
    %6661 = vmatpush2.msra.mxu0 0.0
    %6662 = vmatprep.subr.mxu0 0.0
    %6663 = vmatpush2.msra.mxu0 0.0
    %6664 = vmatprep.subr.mxu0 0.0
    %6665 = vmatpush2.msra.mxu0 0.0
    %6666 = vmatprep.mubr.f32.mxu0 0.0
    %v6667 = vand.u32 %v6584, 4294901760
    %v6668 = vsub.f32 %v6584, %v6667
    %v6669 = vand.u32 %v6668, 4294901760
    %v6670 = vsub.f32 %v6668, %v6669
    %v6671 = vand.u32 %v6670, 4294901760
    %6672 = vmatmul.mubr.f32.gmra.mxu0 %v6671
    %v6673 = vpop.f32.mrf.mxu0
    %v6674 = vadd.f32 0.0, %v6673
    %v6675 = vpop.f32.mrf.mxu0
    %6676 = vdwg.mxu0
    %6677 = vmatprep.subr.mxu0 0.0
    %v6678 = vand.u32 %v59, 4294901760
    %v6679 = vsub.f32 %v59, %v6678
    %v6680 = vand.u32 %v6679, 4294901760
    %v6681 = vsub.f32 %v6679, %v6680
    %v6682 = vand.u32 %v6681, 4294901760
    %6683 = vmatpush1.msra.mxu0 %v6682
    %6684 = vmatprep.subr.mxu0 0.0
    %v6685 = vand.u32 %v58, 4294901760
    %v6686 = vsub.f32 %v58, %v6685
    %v6687 = vand.u32 %v6686, 4294901760
    %v6688 = vsub.f32 %v6686, %v6687
    %v6689 = vand.u32 %v6688, 4294901760
    %6690 = vmatpush1.msra.mxu0 %v6689
    %6691 = vmatprep.subr.mxu0 0.0
    %v6692 = vand.u32 %v57, 4294901760
    %v6693 = vsub.f32 %v57, %v6692
    %v6694 = vand.u32 %v6693, 4294901760
    %v6695 = vsub.f32 %v6693, %v6694
    %v6696 = vand.u32 %v6695, 4294901760
    %6697 = vmatpush1.msra.mxu0 %v6696
    %6698 = vmatprep.subr.mxu0 0.0
    %v6699 = vand.u32 %v56, 4294901760
    %v6700 = vsub.f32 %v56, %v6699
    %v6701 = vand.u32 %v6700, 4294901760
    %v6702 = vsub.f32 %v6700, %v6701
    %v6703 = vand.u32 %v6702, 4294901760
    %6704 = vmatpush1.msra.mxu0 %v6703
    %6705 = vmatprep.subr.mxu0 0.0
    %v6706 = vand.u32 %v55, 4294901760
    %v6707 = vsub.f32 %v55, %v6706
    %v6708 = vand.u32 %v6707, 4294901760
    %v6709 = vsub.f32 %v6707, %v6708
    %v6710 = vand.u32 %v6709, 4294901760
    %6711 = vmatpush1.msra.mxu0 %v6710
    %6712 = vmatprep.subr.mxu0 0.0
    %v6713 = vand.u32 %v54, 4294901760
    %v6714 = vsub.f32 %v54, %v6713
    %v6715 = vand.u32 %v6714, 4294901760
    %v6716 = vsub.f32 %v6714, %v6715
    %v6717 = vand.u32 %v6716, 4294901760
    %6718 = vmatpush1.msra.mxu0 %v6717
    %6719 = vmatprep.subr.mxu0 0.0
    %v6720 = vand.u32 %v53, 4294901760
    %v6721 = vsub.f32 %v53, %v6720
    %v6722 = vand.u32 %v6721, 4294901760
    %v6723 = vsub.f32 %v6721, %v6722
    %v6724 = vand.u32 %v6723, 4294901760
    %6725 = vmatpush1.msra.mxu0 %v6724
    %6726 = vmatprep.subr.mxu0 0.0
    %v6727 = vand.u32 %v52, 4294901760
    %v6728 = vsub.f32 %v52, %v6727
    %v6729 = vand.u32 %v6728, 4294901760
    %v6730 = vsub.f32 %v6728, %v6729
    %v6731 = vand.u32 %v6730, 4294901760
    %6732 = vmatpush1.msra.mxu0 %v6731
    %6733 = vmatprep.subr.mxu0 0.0
    %v6734 = vand.u32 %v51, 4294901760
    %v6735 = vsub.f32 %v51, %v6734
    %v6736 = vand.u32 %v6735, 4294901760
    %v6737 = vsub.f32 %v6735, %v6736
    %v6738 = vand.u32 %v6737, 4294901760
    %6739 = vmatpush1.msra.mxu0 %v6738
    %6740 = vmatprep.subr.mxu0 0.0
    %v6741 = vand.u32 %v50, 4294901760
    %v6742 = vsub.f32 %v50, %v6741
    %v6743 = vand.u32 %v6742, 4294901760
    %v6744 = vsub.f32 %v6742, %v6743
    %v6745 = vand.u32 %v6744, 4294901760
    %6746 = vmatpush1.msra.mxu0 %v6745
    %6747 = vmatprep.subr.mxu0 0.0
    %v6748 = vand.u32 %v49, 4294901760
    %v6749 = vsub.f32 %v49, %v6748
    %v6750 = vand.u32 %v6749, 4294901760
    %v6751 = vsub.f32 %v6749, %v6750
    %v6752 = vand.u32 %v6751, 4294901760
    %6753 = vmatpush1.msra.mxu0 %v6752
    %6754 = vmatprep.subr.mxu0 0.0
    %v6755 = vand.u32 %v48, 4294901760
    %v6756 = vsub.f32 %v48, %v6755
    %v6757 = vand.u32 %v6756, 4294901760
    %v6758 = vsub.f32 %v6756, %v6757
    %v6759 = vand.u32 %v6758, 4294901760
    %6760 = vmatpush1.msra.mxu0 %v6759
    %6761 = vmatprep.subr.mxu0 0.0
    %v6762 = vand.u32 %v47, 4294901760
    %v6763 = vsub.f32 %v47, %v6762
    %v6764 = vand.u32 %v6763, 4294901760
    %v6765 = vsub.f32 %v6763, %v6764
    %v6766 = vand.u32 %v6765, 4294901760
    %6767 = vmatpush1.msra.mxu0 %v6766
    %6768 = vmatprep.subr.mxu0 0.0
    %v6769 = vand.u32 %v46, 4294901760
    %v6770 = vsub.f32 %v46, %v6769
    %v6771 = vand.u32 %v6770, 4294901760
    %v6772 = vsub.f32 %v6770, %v6771
    %v6773 = vand.u32 %v6772, 4294901760
    %6774 = vmatpush1.msra.mxu0 %v6773
    %6775 = vmatprep.subr.mxu0 0.0
    %v6776 = vand.u32 %v45, 4294901760
    %v6777 = vsub.f32 %v45, %v6776
    %v6778 = vand.u32 %v6777, 4294901760
    %v6779 = vsub.f32 %v6777, %v6778
    %v6780 = vand.u32 %v6779, 4294901760
    %6781 = vmatpush1.msra.mxu0 %v6780
    %6782 = vmatprep.subr.mxu0 0.0
    %v6783 = vand.u32 %v44, 4294901760
    %v6784 = vsub.f32 %v44, %v6783
    %v6785 = vand.u32 %v6784, 4294901760
    %v6786 = vsub.f32 %v6784, %v6785
    %v6787 = vand.u32 %v6786, 4294901760
    %6788 = vmatpush1.msra.mxu0 %v6787
    %6789 = vmatprep.subr.mxu0 0.0
    %6790 = vmatpush2.msra.mxu0 0.0
    %6791 = vmatprep.subr.mxu0 0.0
    %6792 = vmatpush2.msra.mxu0 0.0
    %6793 = vmatprep.subr.mxu0 0.0
    %6794 = vmatpush2.msra.mxu0 0.0
    %6795 = vmatprep.subr.mxu0 0.0
    %6796 = vmatpush2.msra.mxu0 0.0
    %6797 = vmatprep.subr.mxu0 0.0
    %6798 = vmatpush2.msra.mxu0 0.0
    %6799 = vmatprep.subr.mxu0 0.0
    %6800 = vmatpush2.msra.mxu0 0.0
    %6801 = vmatprep.subr.mxu0 0.0
    %6802 = vmatpush2.msra.mxu0 0.0
    %6803 = vmatprep.subr.mxu0 0.0
    %6804 = vmatpush2.msra.mxu0 0.0
    %6805 = vmatprep.subr.mxu0 0.0
    %6806 = vmatpush2.msra.mxu0 0.0
    %6807 = vmatprep.subr.mxu0 0.0
    %6808 = vmatpush2.msra.mxu0 0.0
    %6809 = vmatprep.subr.mxu0 0.0
    %6810 = vmatpush2.msra.mxu0 0.0
    %6811 = vmatprep.subr.mxu0 0.0
    %6812 = vmatpush2.msra.mxu0 0.0
    %6813 = vmatprep.subr.mxu0 0.0
    %6814 = vmatpush2.msra.mxu0 0.0
    %6815 = vmatprep.subr.mxu0 0.0
    %6816 = vmatpush2.msra.mxu0 0.0
    %6817 = vmatprep.subr.mxu0 0.0
    %6818 = vmatpush2.msra.mxu0 0.0
    %6819 = vmatprep.subr.mxu0 0.0
    %6820 = vmatpush2.msra.mxu0 0.0
    %6821 = vmatprep.mubr.f32.mxu0 0.0
    %v6822 = vand.u32 %v6584, 4294901760
    %6823 = vmatmul.mubr.f32.gmra.mxu0 %v6822
    %v6824 = vpop.f32.mrf.mxu0
    %v6825 = vadd.f32 %v6674, %v6824
    %v6826 = vpop.f32.mrf.mxu0
    %6827 = vdwg.mxu0
    %6828 = vmatprep.subr.mxu0 0.0
    %v6829 = vand.u32 %v59, 4294901760
    %v6830 = vsub.f32 %v59, %v6829
    %6831 = vmatpush1.msra.mxu0 %v6830
    %6832 = vmatprep.subr.mxu0 0.0
    %v6833 = vand.u32 %v58, 4294901760
    %v6834 = vsub.f32 %v58, %v6833
    %6835 = vmatpush1.msra.mxu0 %v6834
    %6836 = vmatprep.subr.mxu0 0.0
    %v6837 = vand.u32 %v57, 4294901760
    %v6838 = vsub.f32 %v57, %v6837
    %6839 = vmatpush1.msra.mxu0 %v6838
    %6840 = vmatprep.subr.mxu0 0.0
    %v6841 = vand.u32 %v56, 4294901760
    %v6842 = vsub.f32 %v56, %v6841
    %6843 = vmatpush1.msra.mxu0 %v6842
    %6844 = vmatprep.subr.mxu0 0.0
    %v6845 = vand.u32 %v55, 4294901760
    %v6846 = vsub.f32 %v55, %v6845
    %6847 = vmatpush1.msra.mxu0 %v6846
    %6848 = vmatprep.subr.mxu0 0.0
    %v6849 = vand.u32 %v54, 4294901760
    %v6850 = vsub.f32 %v54, %v6849
    %6851 = vmatpush1.msra.mxu0 %v6850
    %6852 = vmatprep.subr.mxu0 0.0
    %v6853 = vand.u32 %v53, 4294901760
    %v6854 = vsub.f32 %v53, %v6853
    %6855 = vmatpush1.msra.mxu0 %v6854
    %6856 = vmatprep.subr.mxu0 0.0
    %v6857 = vand.u32 %v52, 4294901760
    %v6858 = vsub.f32 %v52, %v6857
    %6859 = vmatpush1.msra.mxu0 %v6858
    %6860 = vmatprep.subr.mxu0 0.0
    %v6861 = vand.u32 %v51, 4294901760
    %v6862 = vsub.f32 %v51, %v6861
    %6863 = vmatpush1.msra.mxu0 %v6862
    %6864 = vmatprep.subr.mxu0 0.0
    %v6865 = vand.u32 %v50, 4294901760
    %v6866 = vsub.f32 %v50, %v6865
    %6867 = vmatpush1.msra.mxu0 %v6866
    %6868 = vmatprep.subr.mxu0 0.0
    %v6869 = vand.u32 %v49, 4294901760
    %v6870 = vsub.f32 %v49, %v6869
    %6871 = vmatpush1.msra.mxu0 %v6870
    %6872 = vmatprep.subr.mxu0 0.0
    %v6873 = vand.u32 %v48, 4294901760
    %v6874 = vsub.f32 %v48, %v6873
    %6875 = vmatpush1.msra.mxu0 %v6874
    %6876 = vmatprep.subr.mxu0 0.0
    %v6877 = vand.u32 %v47, 4294901760
    %v6878 = vsub.f32 %v47, %v6877
    %6879 = vmatpush1.msra.mxu0 %v6878
    %6880 = vmatprep.subr.mxu0 0.0
    %v6881 = vand.u32 %v46, 4294901760
    %v6882 = vsub.f32 %v46, %v6881
    %6883 = vmatpush1.msra.mxu0 %v6882
    %6884 = vmatprep.subr.mxu0 0.0
    %v6885 = vand.u32 %v45, 4294901760
    %v6886 = vsub.f32 %v45, %v6885
    %6887 = vmatpush1.msra.mxu0 %v6886
    %6888 = vmatprep.subr.mxu0 0.0
    %v6889 = vand.u32 %v44, 4294901760
    %v6890 = vsub.f32 %v44, %v6889
    %6891 = vmatpush1.msra.mxu0 %v6890
    %6892 = vmatprep.subr.mxu0 0.0
    %6893 = vmatpush2.msra.mxu0 0.0
    %6894 = vmatprep.subr.mxu0 0.0
    %6895 = vmatpush2.msra.mxu0 0.0
    %6896 = vmatprep.subr.mxu0 0.0
    %6897 = vmatpush2.msra.mxu0 0.0
    %6898 = vmatprep.subr.mxu0 0.0
    %6899 = vmatpush2.msra.mxu0 0.0
    %6900 = vmatprep.subr.mxu0 0.0
    %6901 = vmatpush2.msra.mxu0 0.0
    %6902 = vmatprep.subr.mxu0 0.0
    %6903 = vmatpush2.msra.mxu0 0.0
    %6904 = vmatprep.subr.mxu0 0.0
    %6905 = vmatpush2.msra.mxu0 0.0
    %6906 = vmatprep.subr.mxu0 0.0
    %6907 = vmatpush2.msra.mxu0 0.0
    %6908 = vmatprep.subr.mxu0 0.0
    %6909 = vmatpush2.msra.mxu0 0.0
    %6910 = vmatprep.subr.mxu0 0.0
    %6911 = vmatpush2.msra.mxu0 0.0
    %6912 = vmatprep.subr.mxu0 0.0
    %6913 = vmatpush2.msra.mxu0 0.0
    %6914 = vmatprep.subr.mxu0 0.0
    %6915 = vmatpush2.msra.mxu0 0.0
    %6916 = vmatprep.subr.mxu0 0.0
    %6917 = vmatpush2.msra.mxu0 0.0
    %6918 = vmatprep.subr.mxu0 0.0
    %6919 = vmatpush2.msra.mxu0 0.0
    %6920 = vmatprep.subr.mxu0 0.0
    %6921 = vmatpush2.msra.mxu0 0.0
    %6922 = vmatprep.subr.mxu0 0.0
    %6923 = vmatpush2.msra.mxu0 0.0
    %6924 = vmatprep.mubr.f32.mxu0 0.0
    %v6925 = vand.u32 %v6584, 4294901760
    %v6926 = vsub.f32 %v6584, %v6925
    %6927 = vmatmul.mubr.f32.gmra.mxu0 %v6926
    %v6928 = vpop.f32.mrf.mxu0
    %v6929 = vadd.f32 %v6825, %v6928
    %v6930 = vpop.f32.mrf.mxu0
    %6931 = vdwg.mxu0
    %6932 = vmatprep.subr.mxu0 0.0
    %v6933 = vand.u32 %v59, 4294901760
    %6934 = vmatpush1.msra.mxu0 %v6933
    %6935 = vmatprep.subr.mxu0 0.0
    %v6936 = vand.u32 %v58, 4294901760
    %6937 = vmatpush1.msra.mxu0 %v6936
    %6938 = vmatprep.subr.mxu0 0.0
    %v6939 = vand.u32 %v57, 4294901760
    %6940 = vmatpush1.msra.mxu0 %v6939
    %6941 = vmatprep.subr.mxu0 0.0
    %v6942 = vand.u32 %v56, 4294901760
    %6943 = vmatpush1.msra.mxu0 %v6942
    %6944 = vmatprep.subr.mxu0 0.0
    %v6945 = vand.u32 %v55, 4294901760
    %6946 = vmatpush1.msra.mxu0 %v6945
    %6947 = vmatprep.subr.mxu0 0.0
    %v6948 = vand.u32 %v54, 4294901760
    %6949 = vmatpush1.msra.mxu0 %v6948
    %6950 = vmatprep.subr.mxu0 0.0
    %v6951 = vand.u32 %v53, 4294901760
    %6952 = vmatpush1.msra.mxu0 %v6951
    %6953 = vmatprep.subr.mxu0 0.0
    %v6954 = vand.u32 %v52, 4294901760
    %6955 = vmatpush1.msra.mxu0 %v6954
    %6956 = vmatprep.subr.mxu0 0.0
    %v6957 = vand.u32 %v51, 4294901760
    %6958 = vmatpush1.msra.mxu0 %v6957
    %6959 = vmatprep.subr.mxu0 0.0
    %v6960 = vand.u32 %v50, 4294901760
    %6961 = vmatpush1.msra.mxu0 %v6960
    %6962 = vmatprep.subr.mxu0 0.0
    %v6963 = vand.u32 %v49, 4294901760
    %6964 = vmatpush1.msra.mxu0 %v6963
    %6965 = vmatprep.subr.mxu0 0.0
    %v6966 = vand.u32 %v48, 4294901760
    %6967 = vmatpush1.msra.mxu0 %v6966
    %6968 = vmatprep.subr.mxu0 0.0
    %v6969 = vand.u32 %v47, 4294901760
    %6970 = vmatpush1.msra.mxu0 %v6969
    %6971 = vmatprep.subr.mxu0 0.0
    %v6972 = vand.u32 %v46, 4294901760
    %6973 = vmatpush1.msra.mxu0 %v6972
    %6974 = vmatprep.subr.mxu0 0.0
    %v6975 = vand.u32 %v45, 4294901760
    %6976 = vmatpush1.msra.mxu0 %v6975
    %6977 = vmatprep.subr.mxu0 0.0
    %v6978 = vand.u32 %v44, 4294901760
    %6979 = vmatpush1.msra.mxu0 %v6978
    %6980 = vmatprep.subr.mxu0 0.0
    %6981 = vmatpush2.msra.mxu0 0.0
    %6982 = vmatprep.subr.mxu0 0.0
    %6983 = vmatpush2.msra.mxu0 0.0
    %6984 = vmatprep.subr.mxu0 0.0
    %6985 = vmatpush2.msra.mxu0 0.0
    %6986 = vmatprep.subr.mxu0 0.0
    %6987 = vmatpush2.msra.mxu0 0.0
    %6988 = vmatprep.subr.mxu0 0.0
    %6989 = vmatpush2.msra.mxu0 0.0
    %6990 = vmatprep.subr.mxu0 0.0
    %6991 = vmatpush2.msra.mxu0 0.0
    %6992 = vmatprep.subr.mxu0 0.0
    %6993 = vmatpush2.msra.mxu0 0.0
    %6994 = vmatprep.subr.mxu0 0.0
    %6995 = vmatpush2.msra.mxu0 0.0
    %6996 = vmatprep.subr.mxu0 0.0
    %6997 = vmatpush2.msra.mxu0 0.0
    %6998 = vmatprep.subr.mxu0 0.0
    %6999 = vmatpush2.msra.mxu0 0.0
    %7000 = vmatprep.subr.mxu0 0.0
    %7001 = vmatpush2.msra.mxu0 0.0
    %7002 = vmatprep.subr.mxu0 0.0
    %7003 = vmatpush2.msra.mxu0 0.0
    %7004 = vmatprep.subr.mxu0 0.0
    %7005 = vmatpush2.msra.mxu0 0.0
    %7006 = vmatprep.subr.mxu0 0.0
    %7007 = vmatpush2.msra.mxu0 0.0
    %7008 = vmatprep.subr.mxu0 0.0
    %7009 = vmatpush2.msra.mxu0 0.0
    %7010 = vmatprep.subr.mxu0 0.0
    %7011 = vmatpush2.msra.mxu0 0.0
    %7012 = vmatprep.mubr.f32.mxu0 0.0
    %v7013 = vand.u32 %v6584, 4294901760
    %v7014 = vsub.f32 %v6584, %v7013
    %v7015 = vand.u32 %v7014, 4294901760
    %7016 = vmatmul.mubr.f32.gmra.mxu0 %v7015
    %v7017 = vpop.f32.mrf.mxu0
    %v7018 = vadd.f32 %v6929, %v7017
    %v7019 = vpop.f32.mrf.mxu0
    %7020 = vdwg.mxu0
    %7021 = vmatprep.subr.mxu0 0.0
    %v7022 = vand.u32 %v59, 4294901760
    %v7023 = vsub.f32 %v59, %v7022
    %v7024 = vand.u32 %v7023, 4294901760
    %7025 = vmatpush1.msra.mxu0 %v7024
    %7026 = vmatprep.subr.mxu0 0.0
    %v7027 = vand.u32 %v58, 4294901760
    %v7028 = vsub.f32 %v58, %v7027
    %v7029 = vand.u32 %v7028, 4294901760
    %7030 = vmatpush1.msra.mxu0 %v7029
    %7031 = vmatprep.subr.mxu0 0.0
    %v7032 = vand.u32 %v57, 4294901760
    %v7033 = vsub.f32 %v57, %v7032
    %v7034 = vand.u32 %v7033, 4294901760
    %7035 = vmatpush1.msra.mxu0 %v7034
    %7036 = vmatprep.subr.mxu0 0.0
    %v7037 = vand.u32 %v56, 4294901760
    %v7038 = vsub.f32 %v56, %v7037
    %v7039 = vand.u32 %v7038, 4294901760
    %7040 = vmatpush1.msra.mxu0 %v7039
    %7041 = vmatprep.subr.mxu0 0.0
    %v7042 = vand.u32 %v55, 4294901760
    %v7043 = vsub.f32 %v55, %v7042
    %v7044 = vand.u32 %v7043, 4294901760
    %7045 = vmatpush1.msra.mxu0 %v7044
    %7046 = vmatprep.subr.mxu0 0.0
    %v7047 = vand.u32 %v54, 4294901760
    %v7048 = vsub.f32 %v54, %v7047
    %v7049 = vand.u32 %v7048, 4294901760
    %7050 = vmatpush1.msra.mxu0 %v7049
    %7051 = vmatprep.subr.mxu0 0.0
    %v7052 = vand.u32 %v53, 4294901760
    %v7053 = vsub.f32 %v53, %v7052
    %v7054 = vand.u32 %v7053, 4294901760
    %7055 = vmatpush1.msra.mxu0 %v7054
    %7056 = vmatprep.subr.mxu0 0.0
    %v7057 = vand.u32 %v52, 4294901760
    %v7058 = vsub.f32 %v52, %v7057
    %v7059 = vand.u32 %v7058, 4294901760
    %7060 = vmatpush1.msra.mxu0 %v7059
    %7061 = vmatprep.subr.mxu0 0.0
    %v7062 = vand.u32 %v51, 4294901760
    %v7063 = vsub.f32 %v51, %v7062
    %v7064 = vand.u32 %v7063, 4294901760
    %7065 = vmatpush1.msra.mxu0 %v7064
    %7066 = vmatprep.subr.mxu0 0.0
    %v7067 = vand.u32 %v50, 4294901760
    %v7068 = vsub.f32 %v50, %v7067
    %v7069 = vand.u32 %v7068, 4294901760
    %7070 = vmatpush1.msra.mxu0 %v7069
    %7071 = vmatprep.subr.mxu0 0.0
    %v7072 = vand.u32 %v49, 4294901760
    %v7073 = vsub.f32 %v49, %v7072
    %v7074 = vand.u32 %v7073, 4294901760
    %7075 = vmatpush1.msra.mxu0 %v7074
    %7076 = vmatprep.subr.mxu0 0.0
    %v7077 = vand.u32 %v48, 4294901760
    %v7078 = vsub.f32 %v48, %v7077
    %v7079 = vand.u32 %v7078, 4294901760
    %7080 = vmatpush1.msra.mxu0 %v7079
    %7081 = vmatprep.subr.mxu0 0.0
    %v7082 = vand.u32 %v47, 4294901760
    %v7083 = vsub.f32 %v47, %v7082
    %v7084 = vand.u32 %v7083, 4294901760
    %7085 = vmatpush1.msra.mxu0 %v7084
    %7086 = vmatprep.subr.mxu0 0.0
    %v7087 = vand.u32 %v46, 4294901760
    %v7088 = vsub.f32 %v46, %v7087
    %v7089 = vand.u32 %v7088, 4294901760
    %7090 = vmatpush1.msra.mxu0 %v7089
    %7091 = vmatprep.subr.mxu0 0.0
    %v7092 = vand.u32 %v45, 4294901760
    %v7093 = vsub.f32 %v45, %v7092
    %v7094 = vand.u32 %v7093, 4294901760
    %7095 = vmatpush1.msra.mxu0 %v7094
    %7096 = vmatprep.subr.mxu0 0.0
    %v7097 = vand.u32 %v44, 4294901760
    %v7098 = vsub.f32 %v44, %v7097
    %v7099 = vand.u32 %v7098, 4294901760
    %7100 = vmatpush1.msra.mxu0 %v7099
    %7101 = vmatprep.subr.mxu0 0.0
    %7102 = vmatpush2.msra.mxu0 0.0
    %7103 = vmatprep.subr.mxu0 0.0
    %7104 = vmatpush2.msra.mxu0 0.0
    %7105 = vmatprep.subr.mxu0 0.0
    %7106 = vmatpush2.msra.mxu0 0.0
    %7107 = vmatprep.subr.mxu0 0.0
    %7108 = vmatpush2.msra.mxu0 0.0
    %7109 = vmatprep.subr.mxu0 0.0
    %7110 = vmatpush2.msra.mxu0 0.0
    %7111 = vmatprep.subr.mxu0 0.0
    %7112 = vmatpush2.msra.mxu0 0.0
    %7113 = vmatprep.subr.mxu0 0.0
    %7114 = vmatpush2.msra.mxu0 0.0
    %7115 = vmatprep.subr.mxu0 0.0
    %7116 = vmatpush2.msra.mxu0 0.0
    %7117 = vmatprep.subr.mxu0 0.0
    %7118 = vmatpush2.msra.mxu0 0.0
    %7119 = vmatprep.subr.mxu0 0.0
    %7120 = vmatpush2.msra.mxu0 0.0
    %7121 = vmatprep.subr.mxu0 0.0
    %7122 = vmatpush2.msra.mxu0 0.0
    %7123 = vmatprep.subr.mxu0 0.0
    %7124 = vmatpush2.msra.mxu0 0.0
    %7125 = vmatprep.subr.mxu0 0.0
    %7126 = vmatpush2.msra.mxu0 0.0
    %7127 = vmatprep.subr.mxu0 0.0
    %7128 = vmatpush2.msra.mxu0 0.0
    %7129 = vmatprep.subr.mxu0 0.0
    %7130 = vmatpush2.msra.mxu0 0.0
    %7131 = vmatprep.subr.mxu0 0.0
    %7132 = vmatpush2.msra.mxu0 0.0
    %7133 = vmatprep.mubr.f32.mxu0 0.0
    %v7134 = vand.u32 %v6584, 4294901760
    %7135 = vmatmul.mubr.f32.gmra.mxu0 %v7134
    %v7136 = vpop.f32.mrf.mxu0
    %v7137 = vadd.f32 %v7018, %v7136
    %v7138 = vpop.f32.mrf.mxu0
    %7139 = vdwg.mxu0
    %7140 = vmatprep.subr.mxu0 0.0
    %v7141 = vand.u32 %v59, 4294901760
    %7142 = vmatpush1.msra.mxu0 %v7141
    %7143 = vmatprep.subr.mxu0 0.0
    %v7144 = vand.u32 %v58, 4294901760
    %7145 = vmatpush1.msra.mxu0 %v7144
    %7146 = vmatprep.subr.mxu0 0.0
    %v7147 = vand.u32 %v57, 4294901760
    %7148 = vmatpush1.msra.mxu0 %v7147
    %7149 = vmatprep.subr.mxu0 0.0
    %v7150 = vand.u32 %v56, 4294901760
    %7151 = vmatpush1.msra.mxu0 %v7150
    %7152 = vmatprep.subr.mxu0 0.0
    %v7153 = vand.u32 %v55, 4294901760
    %7154 = vmatpush1.msra.mxu0 %v7153
    %7155 = vmatprep.subr.mxu0 0.0
    %v7156 = vand.u32 %v54, 4294901760
    %7157 = vmatpush1.msra.mxu0 %v7156
    %7158 = vmatprep.subr.mxu0 0.0
    %v7159 = vand.u32 %v53, 4294901760
    %7160 = vmatpush1.msra.mxu0 %v7159
    %7161 = vmatprep.subr.mxu0 0.0
    %v7162 = vand.u32 %v52, 4294901760
    %7163 = vmatpush1.msra.mxu0 %v7162
    %7164 = vmatprep.subr.mxu0 0.0
    %v7165 = vand.u32 %v51, 4294901760
    %7166 = vmatpush1.msra.mxu0 %v7165
    %7167 = vmatprep.subr.mxu0 0.0
    %v7168 = vand.u32 %v50, 4294901760
    %7169 = vmatpush1.msra.mxu0 %v7168
    %7170 = vmatprep.subr.mxu0 0.0
    %v7171 = vand.u32 %v49, 4294901760
    %7172 = vmatpush1.msra.mxu0 %v7171
    %7173 = vmatprep.subr.mxu0 0.0
    %v7174 = vand.u32 %v48, 4294901760
    %7175 = vmatpush1.msra.mxu0 %v7174
    %7176 = vmatprep.subr.mxu0 0.0
    %v7177 = vand.u32 %v47, 4294901760
    %7178 = vmatpush1.msra.mxu0 %v7177
    %7179 = vmatprep.subr.mxu0 0.0
    %v7180 = vand.u32 %v46, 4294901760
    %7181 = vmatpush1.msra.mxu0 %v7180
    %7182 = vmatprep.subr.mxu0 0.0
    %v7183 = vand.u32 %v45, 4294901760
    %7184 = vmatpush1.msra.mxu0 %v7183
    %7185 = vmatprep.subr.mxu0 0.0
    %v7186 = vand.u32 %v44, 4294901760
    %7187 = vmatpush1.msra.mxu0 %v7186
    %7188 = vmatprep.subr.mxu0 0.0
    %7189 = vmatpush2.msra.mxu0 0.0
    %7190 = vmatprep.subr.mxu0 0.0
    %7191 = vmatpush2.msra.mxu0 0.0
    %7192 = vmatprep.subr.mxu0 0.0
    %7193 = vmatpush2.msra.mxu0 0.0
    %7194 = vmatprep.subr.mxu0 0.0
    %7195 = vmatpush2.msra.mxu0 0.0
    %7196 = vmatprep.subr.mxu0 0.0
    %7197 = vmatpush2.msra.mxu0 0.0
    %7198 = vmatprep.subr.mxu0 0.0
    %7199 = vmatpush2.msra.mxu0 0.0
    %7200 = vmatprep.subr.mxu0 0.0
    %7201 = vmatpush2.msra.mxu0 0.0
    %7202 = vmatprep.subr.mxu0 0.0
    %7203 = vmatpush2.msra.mxu0 0.0
    %7204 = vmatprep.subr.mxu0 0.0
    %7205 = vmatpush2.msra.mxu0 0.0
    %7206 = vmatprep.subr.mxu0 0.0
    %7207 = vmatpush2.msra.mxu0 0.0
    %7208 = vmatprep.subr.mxu0 0.0
    %7209 = vmatpush2.msra.mxu0 0.0
    %7210 = vmatprep.subr.mxu0 0.0
    %7211 = vmatpush2.msra.mxu0 0.0
    %7212 = vmatprep.subr.mxu0 0.0
    %7213 = vmatpush2.msra.mxu0 0.0
    %7214 = vmatprep.subr.mxu0 0.0
    %7215 = vmatpush2.msra.mxu0 0.0
    %7216 = vmatprep.subr.mxu0 0.0
    %7217 = vmatpush2.msra.mxu0 0.0
    %7218 = vmatprep.subr.mxu0 0.0
    %7219 = vmatpush2.msra.mxu0 0.0
    %7220 = vmatprep.mubr.f32.mxu0 0.0
    %v7221 = vand.u32 %v6584, 4294901760
    %7222 = vmatmul.mubr.f32.gmra.mxu0 %v7221
    %v7223 = vpop.f32.mrf.mxu0
    %v7224 = vadd.f32 %v7137, %v7223
    %v7225 = vpop.f32.mrf.mxu0
    %7226 = vdwg.mxu0
    %v7227 = vtanh.pop %v7224
    %v7236 = vcombine.low %v6574, %v6575
    %v7237 = vcombine.low %v6576, %v6577
    %v7238 = vcombine.low %v6578, %v6579
    %v7239 = vcombine.low %v6580, %v6581
    %7244 = vmatprep.subr.mxu0 0.0
    %v7245 = vand.u32 %v59, 4294901760
    %7246 = vmatpush1.msra.mxu0 %v7245
    %7247 = vmatprep.subr.mxu0 0.0
    %v7248 = vand.u32 %v58, 4294901760
    %7249 = vmatpush1.msra.mxu0 %v7248
    %7250 = vmatprep.subr.mxu0 0.0
    %v7251 = vand.u32 %v57, 4294901760
    %7252 = vmatpush1.msra.mxu0 %v7251
    %7253 = vmatprep.subr.mxu0 0.0
    %v7254 = vand.u32 %v56, 4294901760
    %7255 = vmatpush1.msra.mxu0 %v7254
    %7256 = vmatprep.subr.mxu0 0.0
    %v7257 = vand.u32 %v55, 4294901760
    %7258 = vmatpush1.msra.mxu0 %v7257
    %7259 = vmatprep.subr.mxu0 0.0
    %v7260 = vand.u32 %v54, 4294901760
    %7261 = vmatpush1.msra.mxu0 %v7260
    %7262 = vmatprep.subr.mxu0 0.0
    %v7263 = vand.u32 %v53, 4294901760
    %7264 = vmatpush1.msra.mxu0 %v7263
    %7265 = vmatprep.subr.mxu0 0.0
    %v7266 = vand.u32 %v52, 4294901760
    %7267 = vmatpush1.msra.mxu0 %v7266
    %7268 = vmatprep.subr.mxu0 0.0
    %v7269 = vand.u32 %v51, 4294901760
    %7270 = vmatpush1.msra.mxu0 %v7269
    %7271 = vmatprep.subr.mxu0 0.0
    %v7272 = vand.u32 %v50, 4294901760
    %7273 = vmatpush1.msra.mxu0 %v7272
    %7274 = vmatprep.subr.mxu0 0.0
    %v7275 = vand.u32 %v49, 4294901760
    %7276 = vmatpush1.msra.mxu0 %v7275
    %7277 = vmatprep.subr.mxu0 0.0
    %v7278 = vand.u32 %v48, 4294901760
    %7279 = vmatpush1.msra.mxu0 %v7278
    %7280 = vmatprep.subr.mxu0 0.0
    %v7281 = vand.u32 %v47, 4294901760
    %7282 = vmatpush1.msra.mxu0 %v7281
    %7283 = vmatprep.subr.mxu0 0.0
    %v7284 = vand.u32 %v46, 4294901760
    %7285 = vmatpush1.msra.mxu0 %v7284
    %7286 = vmatprep.subr.mxu0 0.0
    %v7287 = vand.u32 %v45, 4294901760
    %7288 = vmatpush1.msra.mxu0 %v7287
    %7289 = vmatprep.subr.mxu0 0.0
    %v7290 = vand.u32 %v44, 4294901760
    %7291 = vmatpush1.msra.mxu0 %v7290
    %7292 = vmatprep.subr.mxu0 0.0
    %7293 = vmatpush2.msra.mxu0 0.0
    %7294 = vmatprep.subr.mxu0 0.0
    %7295 = vmatpush2.msra.mxu0 0.0
    %7296 = vmatprep.subr.mxu0 0.0
    %7297 = vmatpush2.msra.mxu0 0.0
    %7298 = vmatprep.subr.mxu0 0.0
    %7299 = vmatpush2.msra.mxu0 0.0
    %7300 = vmatprep.subr.mxu0 0.0
    %7301 = vmatpush2.msra.mxu0 0.0
    %7302 = vmatprep.subr.mxu0 0.0
    %7303 = vmatpush2.msra.mxu0 0.0
    %7304 = vmatprep.subr.mxu0 0.0
    %7305 = vmatpush2.msra.mxu0 0.0
    %7306 = vmatprep.subr.mxu0 0.0
    %7307 = vmatpush2.msra.mxu0 0.0
    %7308 = vmatprep.subr.mxu0 0.0
    %7309 = vmatpush2.msra.mxu0 0.0
    %7310 = vmatprep.subr.mxu0 0.0
    %7311 = vmatpush2.msra.mxu0 0.0
    %7312 = vmatprep.subr.mxu0 0.0
    %7313 = vmatpush2.msra.mxu0 0.0
    %7314 = vmatprep.subr.mxu0 0.0
    %7315 = vmatpush2.msra.mxu0 0.0
    %7316 = vmatprep.subr.mxu0 0.0
    %7317 = vmatpush2.msra.mxu0 0.0
    %7318 = vmatprep.subr.mxu0 0.0
    %7319 = vmatpush2.msra.mxu0 0.0
    %7320 = vmatprep.subr.mxu0 0.0
    %7321 = vmatpush2.msra.mxu0 0.0
    %7322 = vmatprep.subr.mxu0 0.0
    %7323 = vmatpush2.msra.mxu0 0.0
    %7324 = vmatprep.mubr.f32.mxu0 0.0
    %v7325 = vand.u32 %v7236, 4294901760
    %v7326 = vsub.f32 %v7236, %v7325
    %v7327 = vand.u32 %v7326, 4294901760
    %v7328 = vsub.f32 %v7326, %v7327
    %v7329 = vand.u32 %v7328, 4294901760
    %7330 = vmatmul.mubr.f32.gmra.mxu0 %v7329
    %v7331 = vpop.f32.mrf.mxu0
    %v7332 = vadd.f32 0.0, %v7331
    %v7333 = vpop.f32.mrf.mxu0
    %7334 = vmatprep.mubr.f32.mxu0 0.0
    %v7335 = vand.u32 %v7237, 4294901760
    %v7336 = vsub.f32 %v7237, %v7335
    %v7337 = vand.u32 %v7336, 4294901760
    %v7338 = vsub.f32 %v7336, %v7337
    %v7339 = vand.u32 %v7338, 4294901760
    %7340 = vmatmul.mubr.f32.gmra.mxu0 %v7339
    %v7341 = vpop.f32.mrf.mxu0
    %v7342 = vadd.f32 0.0, %v7341
    %v7343 = vpop.f32.mrf.mxu0
    %7344 = vmatprep.mubr.f32.mxu0 0.0
    %v7345 = vand.u32 %v7238, 4294901760
    %v7346 = vsub.f32 %v7238, %v7345
    %v7347 = vand.u32 %v7346, 4294901760
    %v7348 = vsub.f32 %v7346, %v7347
    %v7349 = vand.u32 %v7348, 4294901760
    %7350 = vmatmul.mubr.f32.gmra.mxu0 %v7349
    %v7351 = vpop.f32.mrf.mxu0
    %v7352 = vadd.f32 0.0, %v7351
    %v7353 = vpop.f32.mrf.mxu0
    %7354 = vmatprep.mubr.f32.mxu0 0.0
    %v7355 = vand.u32 %v7239, 4294901760
    %v7356 = vsub.f32 %v7239, %v7355
    %v7357 = vand.u32 %v7356, 4294901760
    %v7358 = vsub.f32 %v7356, %v7357
    %v7359 = vand.u32 %v7358, 4294901760
    %7360 = vmatmul.mubr.f32.gmra.mxu0 %v7359
    %v7361 = vpop.f32.mrf.mxu0
    %v7362 = vadd.f32 0.0, %v7361
    %v7363 = vpop.f32.mrf.mxu0
    %7364 = vdwg.mxu0
    %7365 = vmatprep.subr.mxu0 0.0
    %v7366 = vand.u32 %v59, 4294901760
    %v7367 = vsub.f32 %v59, %v7366
    %v7368 = vand.u32 %v7367, 4294901760
    %v7369 = vsub.f32 %v7367, %v7368
    %v7370 = vand.u32 %v7369, 4294901760
    %7371 = vmatpush1.msra.mxu0 %v7370
    %7372 = vmatprep.subr.mxu0 0.0
    %v7373 = vand.u32 %v58, 4294901760
    %v7374 = vsub.f32 %v58, %v7373
    %v7375 = vand.u32 %v7374, 4294901760
    %v7376 = vsub.f32 %v7374, %v7375
    %v7377 = vand.u32 %v7376, 4294901760
    %7378 = vmatpush1.msra.mxu0 %v7377
    %7379 = vmatprep.subr.mxu0 0.0
    %v7380 = vand.u32 %v57, 4294901760
    %v7381 = vsub.f32 %v57, %v7380
    %v7382 = vand.u32 %v7381, 4294901760
    %v7383 = vsub.f32 %v7381, %v7382
    %v7384 = vand.u32 %v7383, 4294901760
    %7385 = vmatpush1.msra.mxu0 %v7384
    %7386 = vmatprep.subr.mxu0 0.0
    %v7387 = vand.u32 %v56, 4294901760
    %v7388 = vsub.f32 %v56, %v7387
    %v7389 = vand.u32 %v7388, 4294901760
    %v7390 = vsub.f32 %v7388, %v7389
    %v7391 = vand.u32 %v7390, 4294901760
    %7392 = vmatpush1.msra.mxu0 %v7391
    %7393 = vmatprep.subr.mxu0 0.0
    %v7394 = vand.u32 %v55, 4294901760
    %v7395 = vsub.f32 %v55, %v7394
    %v7396 = vand.u32 %v7395, 4294901760
    %v7397 = vsub.f32 %v7395, %v7396
    %v7398 = vand.u32 %v7397, 4294901760
    %7399 = vmatpush1.msra.mxu0 %v7398
    %7400 = vmatprep.subr.mxu0 0.0
    %v7401 = vand.u32 %v54, 4294901760
    %v7402 = vsub.f32 %v54, %v7401
    %v7403 = vand.u32 %v7402, 4294901760
    %v7404 = vsub.f32 %v7402, %v7403
    %v7405 = vand.u32 %v7404, 4294901760
    %7406 = vmatpush1.msra.mxu0 %v7405
    %7407 = vmatprep.subr.mxu0 0.0
    %v7408 = vand.u32 %v53, 4294901760
    %v7409 = vsub.f32 %v53, %v7408
    %v7410 = vand.u32 %v7409, 4294901760
    %v7411 = vsub.f32 %v7409, %v7410
    %v7412 = vand.u32 %v7411, 4294901760
    %7413 = vmatpush1.msra.mxu0 %v7412
    %7414 = vmatprep.subr.mxu0 0.0
    %v7415 = vand.u32 %v52, 4294901760
    %v7416 = vsub.f32 %v52, %v7415
    %v7417 = vand.u32 %v7416, 4294901760
    %v7418 = vsub.f32 %v7416, %v7417
    %v7419 = vand.u32 %v7418, 4294901760
    %7420 = vmatpush1.msra.mxu0 %v7419
    %7421 = vmatprep.subr.mxu0 0.0
    %v7422 = vand.u32 %v51, 4294901760
    %v7423 = vsub.f32 %v51, %v7422
    %v7424 = vand.u32 %v7423, 4294901760
    %v7425 = vsub.f32 %v7423, %v7424
    %v7426 = vand.u32 %v7425, 4294901760
    %7427 = vmatpush1.msra.mxu0 %v7426
    %7428 = vmatprep.subr.mxu0 0.0
    %v7429 = vand.u32 %v50, 4294901760
    %v7430 = vsub.f32 %v50, %v7429
    %v7431 = vand.u32 %v7430, 4294901760
    %v7432 = vsub.f32 %v7430, %v7431
    %v7433 = vand.u32 %v7432, 4294901760
    %7434 = vmatpush1.msra.mxu0 %v7433
    %7435 = vmatprep.subr.mxu0 0.0
    %v7436 = vand.u32 %v49, 4294901760
    %v7437 = vsub.f32 %v49, %v7436
    %v7438 = vand.u32 %v7437, 4294901760
    %v7439 = vsub.f32 %v7437, %v7438
    %v7440 = vand.u32 %v7439, 4294901760
    %7441 = vmatpush1.msra.mxu0 %v7440
    %7442 = vmatprep.subr.mxu0 0.0
    %v7443 = vand.u32 %v48, 4294901760
    %v7444 = vsub.f32 %v48, %v7443
    %v7445 = vand.u32 %v7444, 4294901760
    %v7446 = vsub.f32 %v7444, %v7445
    %v7447 = vand.u32 %v7446, 4294901760
    %7448 = vmatpush1.msra.mxu0 %v7447
    %7449 = vmatprep.subr.mxu0 0.0
    %v7450 = vand.u32 %v47, 4294901760
    %v7451 = vsub.f32 %v47, %v7450
    %v7452 = vand.u32 %v7451, 4294901760
    %v7453 = vsub.f32 %v7451, %v7452
    %v7454 = vand.u32 %v7453, 4294901760
    %7455 = vmatpush1.msra.mxu0 %v7454
    %7456 = vmatprep.subr.mxu0 0.0
    %v7457 = vand.u32 %v46, 4294901760
    %v7458 = vsub.f32 %v46, %v7457
    %v7459 = vand.u32 %v7458, 4294901760
    %v7460 = vsub.f32 %v7458, %v7459
    %v7461 = vand.u32 %v7460, 4294901760
    %7462 = vmatpush1.msra.mxu0 %v7461
    %7463 = vmatprep.subr.mxu0 0.0
    %v7464 = vand.u32 %v45, 4294901760
    %v7465 = vsub.f32 %v45, %v7464
    %v7466 = vand.u32 %v7465, 4294901760
    %v7467 = vsub.f32 %v7465, %v7466
    %v7468 = vand.u32 %v7467, 4294901760
    %7469 = vmatpush1.msra.mxu0 %v7468
    %7470 = vmatprep.subr.mxu0 0.0
    %v7471 = vand.u32 %v44, 4294901760
    %v7472 = vsub.f32 %v44, %v7471
    %v7473 = vand.u32 %v7472, 4294901760
    %v7474 = vsub.f32 %v7472, %v7473
    %v7475 = vand.u32 %v7474, 4294901760
    %7476 = vmatpush1.msra.mxu0 %v7475
    %7477 = vmatprep.subr.mxu0 0.0
    %7478 = vmatpush2.msra.mxu0 0.0
    %7479 = vmatprep.subr.mxu0 0.0
    %7480 = vmatpush2.msra.mxu0 0.0
    %7481 = vmatprep.subr.mxu0 0.0
    %7482 = vmatpush2.msra.mxu0 0.0
    %7483 = vmatprep.subr.mxu0 0.0
    %7484 = vmatpush2.msra.mxu0 0.0
    %7485 = vmatprep.subr.mxu0 0.0
    %7486 = vmatpush2.msra.mxu0 0.0
    %7487 = vmatprep.subr.mxu0 0.0
    %7488 = vmatpush2.msra.mxu0 0.0
    %7489 = vmatprep.subr.mxu0 0.0
    %7490 = vmatpush2.msra.mxu0 0.0
    %7491 = vmatprep.subr.mxu0 0.0
    %7492 = vmatpush2.msra.mxu0 0.0
    %7493 = vmatprep.subr.mxu0 0.0
    %7494 = vmatpush2.msra.mxu0 0.0
    %7495 = vmatprep.subr.mxu0 0.0
    %7496 = vmatpush2.msra.mxu0 0.0
    %7497 = vmatprep.subr.mxu0 0.0
    %7498 = vmatpush2.msra.mxu0 0.0
    %7499 = vmatprep.subr.mxu0 0.0
    %7500 = vmatpush2.msra.mxu0 0.0
    %7501 = vmatprep.subr.mxu0 0.0
    %7502 = vmatpush2.msra.mxu0 0.0
    %7503 = vmatprep.subr.mxu0 0.0
    %7504 = vmatpush2.msra.mxu0 0.0
    %7505 = vmatprep.subr.mxu0 0.0
    %7506 = vmatpush2.msra.mxu0 0.0
    %7507 = vmatprep.subr.mxu0 0.0
    %7508 = vmatpush2.msra.mxu0 0.0
    %7509 = vmatprep.mubr.f32.mxu0 0.0
    %v7510 = vand.u32 %v7236, 4294901760
    %7511 = vmatmul.mubr.f32.gmra.mxu0 %v7510
    %v7512 = vpop.f32.mrf.mxu0
    %v7513 = vadd.f32 %v7332, %v7512
    %v7514 = vpop.f32.mrf.mxu0
    %7515 = vmatprep.mubr.f32.mxu0 0.0
    %v7516 = vand.u32 %v7237, 4294901760
    %7517 = vmatmul.mubr.f32.gmra.mxu0 %v7516
    %v7518 = vpop.f32.mrf.mxu0
    %v7519 = vadd.f32 %v7342, %v7518
    %v7520 = vpop.f32.mrf.mxu0
    %7521 = vmatprep.mubr.f32.mxu0 0.0
    %v7522 = vand.u32 %v7238, 4294901760
    %7523 = vmatmul.mubr.f32.gmra.mxu0 %v7522
    %v7524 = vpop.f32.mrf.mxu0
    %v7525 = vadd.f32 %v7352, %v7524
    %v7526 = vpop.f32.mrf.mxu0
    %7527 = vmatprep.mubr.f32.mxu0 0.0
    %v7528 = vand.u32 %v7239, 4294901760
    %7529 = vmatmul.mubr.f32.gmra.mxu0 %v7528
    %v7530 = vpop.f32.mrf.mxu0
    %v7531 = vadd.f32 %v7362, %v7530
    %v7532 = vpop.f32.mrf.mxu0
    %7533 = vdwg.mxu0
    %7534 = vmatprep.subr.mxu0 0.0
    %v7535 = vand.u32 %v59, 4294901760
    %v7536 = vsub.f32 %v59, %v7535
    %7537 = vmatpush1.msra.mxu0 %v7536
    %7538 = vmatprep.subr.mxu0 0.0
    %v7539 = vand.u32 %v58, 4294901760
    %v7540 = vsub.f32 %v58, %v7539
    %7541 = vmatpush1.msra.mxu0 %v7540
    %7542 = vmatprep.subr.mxu0 0.0
    %v7543 = vand.u32 %v57, 4294901760
    %v7544 = vsub.f32 %v57, %v7543
    %7545 = vmatpush1.msra.mxu0 %v7544
    %7546 = vmatprep.subr.mxu0 0.0
    %v7547 = vand.u32 %v56, 4294901760
    %v7548 = vsub.f32 %v56, %v7547
    %7549 = vmatpush1.msra.mxu0 %v7548
    %7550 = vmatprep.subr.mxu0 0.0
    %v7551 = vand.u32 %v55, 4294901760
    %v7552 = vsub.f32 %v55, %v7551
    %7553 = vmatpush1.msra.mxu0 %v7552
    %7554 = vmatprep.subr.mxu0 0.0
    %v7555 = vand.u32 %v54, 4294901760
    %v7556 = vsub.f32 %v54, %v7555
    %7557 = vmatpush1.msra.mxu0 %v7556
    %7558 = vmatprep.subr.mxu0 0.0
    %v7559 = vand.u32 %v53, 4294901760
    %v7560 = vsub.f32 %v53, %v7559
    %7561 = vmatpush1.msra.mxu0 %v7560
    %7562 = vmatprep.subr.mxu0 0.0
    %v7563 = vand.u32 %v52, 4294901760
    %v7564 = vsub.f32 %v52, %v7563
    %7565 = vmatpush1.msra.mxu0 %v7564
    %7566 = vmatprep.subr.mxu0 0.0
    %v7567 = vand.u32 %v51, 4294901760
    %v7568 = vsub.f32 %v51, %v7567
    %7569 = vmatpush1.msra.mxu0 %v7568
    %7570 = vmatprep.subr.mxu0 0.0
    %v7571 = vand.u32 %v50, 4294901760
    %v7572 = vsub.f32 %v50, %v7571
    %7573 = vmatpush1.msra.mxu0 %v7572
    %7574 = vmatprep.subr.mxu0 0.0
    %v7575 = vand.u32 %v49, 4294901760
    %v7576 = vsub.f32 %v49, %v7575
    %7577 = vmatpush1.msra.mxu0 %v7576
    %7578 = vmatprep.subr.mxu0 0.0
    %v7579 = vand.u32 %v48, 4294901760
    %v7580 = vsub.f32 %v48, %v7579
    %7581 = vmatpush1.msra.mxu0 %v7580
    %7582 = vmatprep.subr.mxu0 0.0
    %v7583 = vand.u32 %v47, 4294901760
    %v7584 = vsub.f32 %v47, %v7583
    %7585 = vmatpush1.msra.mxu0 %v7584
    %7586 = vmatprep.subr.mxu0 0.0
    %v7587 = vand.u32 %v46, 4294901760
    %v7588 = vsub.f32 %v46, %v7587
    %7589 = vmatpush1.msra.mxu0 %v7588
    %7590 = vmatprep.subr.mxu0 0.0
    %v7591 = vand.u32 %v45, 4294901760
    %v7592 = vsub.f32 %v45, %v7591
    %7593 = vmatpush1.msra.mxu0 %v7592
    %7594 = vmatprep.subr.mxu0 0.0
    %v7595 = vand.u32 %v44, 4294901760
    %v7596 = vsub.f32 %v44, %v7595
    %7597 = vmatpush1.msra.mxu0 %v7596
    %7598 = vmatprep.subr.mxu0 0.0
    %7599 = vmatpush2.msra.mxu0 0.0
    %7600 = vmatprep.subr.mxu0 0.0
    %7601 = vmatpush2.msra.mxu0 0.0
    %7602 = vmatprep.subr.mxu0 0.0
    %7603 = vmatpush2.msra.mxu0 0.0
    %7604 = vmatprep.subr.mxu0 0.0
    %7605 = vmatpush2.msra.mxu0 0.0
    %7606 = vmatprep.subr.mxu0 0.0
    %7607 = vmatpush2.msra.mxu0 0.0
    %7608 = vmatprep.subr.mxu0 0.0
    %7609 = vmatpush2.msra.mxu0 0.0
    %7610 = vmatprep.subr.mxu0 0.0
    %7611 = vmatpush2.msra.mxu0 0.0
    %7612 = vmatprep.subr.mxu0 0.0
    %7613 = vmatpush2.msra.mxu0 0.0
    %7614 = vmatprep.subr.mxu0 0.0
    %7615 = vmatpush2.msra.mxu0 0.0
    %7616 = vmatprep.subr.mxu0 0.0
    %7617 = vmatpush2.msra.mxu0 0.0
    %7618 = vmatprep.subr.mxu0 0.0
    %7619 = vmatpush2.msra.mxu0 0.0
    %7620 = vmatprep.subr.mxu0 0.0
    %7621 = vmatpush2.msra.mxu0 0.0
    %7622 = vmatprep.subr.mxu0 0.0
    %7623 = vmatpush2.msra.mxu0 0.0
    %7624 = vmatprep.subr.mxu0 0.0
    %7625 = vmatpush2.msra.mxu0 0.0
    %7626 = vmatprep.subr.mxu0 0.0
    %7627 = vmatpush2.msra.mxu0 0.0
    %7628 = vmatprep.subr.mxu0 0.0
    %7629 = vmatpush2.msra.mxu0 0.0
    %7630 = vmatprep.mubr.f32.mxu0 0.0
    %v7631 = vand.u32 %v7236, 4294901760
    %v7632 = vsub.f32 %v7236, %v7631
    %7633 = vmatmul.mubr.f32.gmra.mxu0 %v7632
    %v7634 = vpop.f32.mrf.mxu0
    %v7635 = vadd.f32 %v7513, %v7634
    %v7636 = vpop.f32.mrf.mxu0
    %7637 = vmatprep.mubr.f32.mxu0 0.0
    %v7638 = vand.u32 %v7237, 4294901760
    %v7639 = vsub.f32 %v7237, %v7638
    %7640 = vmatmul.mubr.f32.gmra.mxu0 %v7639
    %v7641 = vpop.f32.mrf.mxu0
    %v7642 = vadd.f32 %v7519, %v7641
    %v7643 = vpop.f32.mrf.mxu0
    %7644 = vmatprep.mubr.f32.mxu0 0.0
    %v7645 = vand.u32 %v7238, 4294901760
    %v7646 = vsub.f32 %v7238, %v7645
    %7647 = vmatmul.mubr.f32.gmra.mxu0 %v7646
    %v7648 = vpop.f32.mrf.mxu0
    %v7649 = vadd.f32 %v7525, %v7648
    %v7650 = vpop.f32.mrf.mxu0
    %7651 = vmatprep.mubr.f32.mxu0 0.0
    %v7652 = vand.u32 %v7239, 4294901760
    %v7653 = vsub.f32 %v7239, %v7652
    %7654 = vmatmul.mubr.f32.gmra.mxu0 %v7653
    %v7655 = vpop.f32.mrf.mxu0
    %v7656 = vadd.f32 %v7531, %v7655
    %v7657 = vpop.f32.mrf.mxu0
    %7658 = vdwg.mxu0
    %7659 = vmatprep.subr.mxu0 0.0
    %v7660 = vand.u32 %v59, 4294901760
    %7661 = vmatpush1.msra.mxu0 %v7660
    %7662 = vmatprep.subr.mxu0 0.0
    %v7663 = vand.u32 %v58, 4294901760
    %7664 = vmatpush1.msra.mxu0 %v7663
    %7665 = vmatprep.subr.mxu0 0.0
    %v7666 = vand.u32 %v57, 4294901760
    %7667 = vmatpush1.msra.mxu0 %v7666
    %7668 = vmatprep.subr.mxu0 0.0
    %v7669 = vand.u32 %v56, 4294901760
    %7670 = vmatpush1.msra.mxu0 %v7669
    %7671 = vmatprep.subr.mxu0 0.0
    %v7672 = vand.u32 %v55, 4294901760
    %7673 = vmatpush1.msra.mxu0 %v7672
    %7674 = vmatprep.subr.mxu0 0.0
    %v7675 = vand.u32 %v54, 4294901760
    %7676 = vmatpush1.msra.mxu0 %v7675
    %7677 = vmatprep.subr.mxu0 0.0
    %v7678 = vand.u32 %v53, 4294901760
    %7679 = vmatpush1.msra.mxu0 %v7678
    %7680 = vmatprep.subr.mxu0 0.0
    %v7681 = vand.u32 %v52, 4294901760
    %7682 = vmatpush1.msra.mxu0 %v7681
    %7683 = vmatprep.subr.mxu0 0.0
    %v7684 = vand.u32 %v51, 4294901760
    %7685 = vmatpush1.msra.mxu0 %v7684
    %7686 = vmatprep.subr.mxu0 0.0
    %v7687 = vand.u32 %v50, 4294901760
    %7688 = vmatpush1.msra.mxu0 %v7687
    %7689 = vmatprep.subr.mxu0 0.0
    %v7690 = vand.u32 %v49, 4294901760
    %7691 = vmatpush1.msra.mxu0 %v7690
    %7692 = vmatprep.subr.mxu0 0.0
    %v7693 = vand.u32 %v48, 4294901760
    %7694 = vmatpush1.msra.mxu0 %v7693
    %7695 = vmatprep.subr.mxu0 0.0
    %v7696 = vand.u32 %v47, 4294901760
    %7697 = vmatpush1.msra.mxu0 %v7696
    %7698 = vmatprep.subr.mxu0 0.0
    %v7699 = vand.u32 %v46, 4294901760
    %7700 = vmatpush1.msra.mxu0 %v7699
    %7701 = vmatprep.subr.mxu0 0.0
    %v7702 = vand.u32 %v45, 4294901760
    %7703 = vmatpush1.msra.mxu0 %v7702
    %7704 = vmatprep.subr.mxu0 0.0
    %v7705 = vand.u32 %v44, 4294901760
    %7706 = vmatpush1.msra.mxu0 %v7705
    %7707 = vmatprep.subr.mxu0 0.0
    %7708 = vmatpush2.msra.mxu0 0.0
    %7709 = vmatprep.subr.mxu0 0.0
    %7710 = vmatpush2.msra.mxu0 0.0
    %7711 = vmatprep.subr.mxu0 0.0
    %7712 = vmatpush2.msra.mxu0 0.0
    %7713 = vmatprep.subr.mxu0 0.0
    %7714 = vmatpush2.msra.mxu0 0.0
    %7715 = vmatprep.subr.mxu0 0.0
    %7716 = vmatpush2.msra.mxu0 0.0
    %7717 = vmatprep.subr.mxu0 0.0
    %7718 = vmatpush2.msra.mxu0 0.0
    %7719 = vmatprep.subr.mxu0 0.0
    %7720 = vmatpush2.msra.mxu0 0.0
    %7721 = vmatprep.subr.mxu0 0.0
    %7722 = vmatpush2.msra.mxu0 0.0
    %7723 = vmatprep.subr.mxu0 0.0
    %7724 = vmatpush2.msra.mxu0 0.0
    %7725 = vmatprep.subr.mxu0 0.0
    %7726 = vmatpush2.msra.mxu0 0.0
    %7727 = vmatprep.subr.mxu0 0.0
    %7728 = vmatpush2.msra.mxu0 0.0
    %7729 = vmatprep.subr.mxu0 0.0
    %7730 = vmatpush2.msra.mxu0 0.0
    %7731 = vmatprep.subr.mxu0 0.0
    %7732 = vmatpush2.msra.mxu0 0.0
    %7733 = vmatprep.subr.mxu0 0.0
    %7734 = vmatpush2.msra.mxu0 0.0
    %7735 = vmatprep.subr.mxu0 0.0
    %7736 = vmatpush2.msra.mxu0 0.0
    %7737 = vmatprep.subr.mxu0 0.0
    %7738 = vmatpush2.msra.mxu0 0.0
    %7739 = vmatprep.mubr.f32.mxu0 0.0
    %v7740 = vand.u32 %v7236, 4294901760
    %v7741 = vsub.f32 %v7236, %v7740
    %v7742 = vand.u32 %v7741, 4294901760
    %7743 = vmatmul.mubr.f32.gmra.mxu0 %v7742
    %v7744 = vpop.f32.mrf.mxu0
    %v7745 = vadd.f32 %v7635, %v7744
    %v7746 = vpop.f32.mrf.mxu0
    %7747 = vmatprep.mubr.f32.mxu0 0.0
    %v7748 = vand.u32 %v7237, 4294901760
    %v7749 = vsub.f32 %v7237, %v7748
    %v7750 = vand.u32 %v7749, 4294901760
    %7751 = vmatmul.mubr.f32.gmra.mxu0 %v7750
    %v7752 = vpop.f32.mrf.mxu0
    %v7753 = vadd.f32 %v7642, %v7752
    %v7754 = vpop.f32.mrf.mxu0
    %7755 = vmatprep.mubr.f32.mxu0 0.0
    %v7756 = vand.u32 %v7238, 4294901760
    %v7757 = vsub.f32 %v7238, %v7756
    %v7758 = vand.u32 %v7757, 4294901760
    %7759 = vmatmul.mubr.f32.gmra.mxu0 %v7758
    %v7760 = vpop.f32.mrf.mxu0
    %v7761 = vadd.f32 %v7649, %v7760
    %v7762 = vpop.f32.mrf.mxu0
    %7763 = vmatprep.mubr.f32.mxu0 0.0
    %v7764 = vand.u32 %v7239, 4294901760
    %v7765 = vsub.f32 %v7239, %v7764
    %v7766 = vand.u32 %v7765, 4294901760
    %7767 = vmatmul.mubr.f32.gmra.mxu0 %v7766
    %v7768 = vpop.f32.mrf.mxu0
    %v7769 = vadd.f32 %v7656, %v7768
    %v7770 = vpop.f32.mrf.mxu0
    %7771 = vdwg.mxu0
    %7772 = vmatprep.subr.mxu0 0.0
    %v7773 = vand.u32 %v59, 4294901760
    %v7774 = vsub.f32 %v59, %v7773
    %v7775 = vand.u32 %v7774, 4294901760
    %7776 = vmatpush1.msra.mxu0 %v7775
    %7777 = vmatprep.subr.mxu0 0.0
    %v7778 = vand.u32 %v58, 4294901760
    %v7779 = vsub.f32 %v58, %v7778
    %v7780 = vand.u32 %v7779, 4294901760
    %7781 = vmatpush1.msra.mxu0 %v7780
    %7782 = vmatprep.subr.mxu0 0.0
    %v7783 = vand.u32 %v57, 4294901760
    %v7784 = vsub.f32 %v57, %v7783
    %v7785 = vand.u32 %v7784, 4294901760
    %7786 = vmatpush1.msra.mxu0 %v7785
    %7787 = vmatprep.subr.mxu0 0.0
    %v7788 = vand.u32 %v56, 4294901760
    %v7789 = vsub.f32 %v56, %v7788
    %v7790 = vand.u32 %v7789, 4294901760
    %7791 = vmatpush1.msra.mxu0 %v7790
    %7792 = vmatprep.subr.mxu0 0.0
    %v7793 = vand.u32 %v55, 4294901760
    %v7794 = vsub.f32 %v55, %v7793
    %v7795 = vand.u32 %v7794, 4294901760
    %7796 = vmatpush1.msra.mxu0 %v7795
    %7797 = vmatprep.subr.mxu0 0.0
    %v7798 = vand.u32 %v54, 4294901760
    %v7799 = vsub.f32 %v54, %v7798
    %v7800 = vand.u32 %v7799, 4294901760
    %7801 = vmatpush1.msra.mxu0 %v7800
    %7802 = vmatprep.subr.mxu0 0.0
    %v7803 = vand.u32 %v53, 4294901760
    %v7804 = vsub.f32 %v53, %v7803
    %v7805 = vand.u32 %v7804, 4294901760
    %7806 = vmatpush1.msra.mxu0 %v7805
    %7807 = vmatprep.subr.mxu0 0.0
    %v7808 = vand.u32 %v52, 4294901760
    %v7809 = vsub.f32 %v52, %v7808
    %v7810 = vand.u32 %v7809, 4294901760
    %7811 = vmatpush1.msra.mxu0 %v7810
    %7812 = vmatprep.subr.mxu0 0.0
    %v7813 = vand.u32 %v51, 4294901760
    %v7814 = vsub.f32 %v51, %v7813
    %v7815 = vand.u32 %v7814, 4294901760
    %7816 = vmatpush1.msra.mxu0 %v7815
    %7817 = vmatprep.subr.mxu0 0.0
    %v7818 = vand.u32 %v50, 4294901760
    %v7819 = vsub.f32 %v50, %v7818
    %v7820 = vand.u32 %v7819, 4294901760
    %7821 = vmatpush1.msra.mxu0 %v7820
    %7822 = vmatprep.subr.mxu0 0.0
    %v7823 = vand.u32 %v49, 4294901760
    %v7824 = vsub.f32 %v49, %v7823
    %v7825 = vand.u32 %v7824, 4294901760
    %7826 = vmatpush1.msra.mxu0 %v7825
    %7827 = vmatprep.subr.mxu0 0.0
    %v7828 = vand.u32 %v48, 4294901760
    %v7829 = vsub.f32 %v48, %v7828
    %v7830 = vand.u32 %v7829, 4294901760
    %7831 = vmatpush1.msra.mxu0 %v7830
    %7832 = vmatprep.subr.mxu0 0.0
    %v7833 = vand.u32 %v47, 4294901760
    %v7834 = vsub.f32 %v47, %v7833
    %v7835 = vand.u32 %v7834, 4294901760
    %7836 = vmatpush1.msra.mxu0 %v7835
    %7837 = vmatprep.subr.mxu0 0.0
    %v7838 = vand.u32 %v46, 4294901760
    %v7839 = vsub.f32 %v46, %v7838
    %v7840 = vand.u32 %v7839, 4294901760
    %7841 = vmatpush1.msra.mxu0 %v7840
    %7842 = vmatprep.subr.mxu0 0.0
    %v7843 = vand.u32 %v45, 4294901760
    %v7844 = vsub.f32 %v45, %v7843
    %v7845 = vand.u32 %v7844, 4294901760
    %7846 = vmatpush1.msra.mxu0 %v7845
    %7847 = vmatprep.subr.mxu0 0.0
    %v7848 = vand.u32 %v44, 4294901760
    %v7849 = vsub.f32 %v44, %v7848
    %v7850 = vand.u32 %v7849, 4294901760
    %7851 = vmatpush1.msra.mxu0 %v7850
    %7852 = vmatprep.subr.mxu0 0.0
    %7853 = vmatpush2.msra.mxu0 0.0
    %7854 = vmatprep.subr.mxu0 0.0
    %7855 = vmatpush2.msra.mxu0 0.0
    %7856 = vmatprep.subr.mxu0 0.0
    %7857 = vmatpush2.msra.mxu0 0.0
    %7858 = vmatprep.subr.mxu0 0.0
    %7859 = vmatpush2.msra.mxu0 0.0
    %7860 = vmatprep.subr.mxu0 0.0
    %7861 = vmatpush2.msra.mxu0 0.0
    %7862 = vmatprep.subr.mxu0 0.0
    %7863 = vmatpush2.msra.mxu0 0.0
    %7864 = vmatprep.subr.mxu0 0.0
    %7865 = vmatpush2.msra.mxu0 0.0
    %7866 = vmatprep.subr.mxu0 0.0
    %7867 = vmatpush2.msra.mxu0 0.0
    %7868 = vmatprep.subr.mxu0 0.0
    %7869 = vmatpush2.msra.mxu0 0.0
    %7870 = vmatprep.subr.mxu0 0.0
    %7871 = vmatpush2.msra.mxu0 0.0
    %7872 = vmatprep.subr.mxu0 0.0
    %7873 = vmatpush2.msra.mxu0 0.0
    %7874 = vmatprep.subr.mxu0 0.0
    %7875 = vmatpush2.msra.mxu0 0.0
    %7876 = vmatprep.subr.mxu0 0.0
    %7877 = vmatpush2.msra.mxu0 0.0
    %7878 = vmatprep.subr.mxu0 0.0
    %7879 = vmatpush2.msra.mxu0 0.0
    %7880 = vmatprep.subr.mxu0 0.0
    %7881 = vmatpush2.msra.mxu0 0.0
    %7882 = vmatprep.subr.mxu0 0.0
    %7883 = vmatpush2.msra.mxu0 0.0
    %7884 = vmatprep.mubr.f32.mxu0 0.0
    %v7885 = vand.u32 %v7236, 4294901760
    %7886 = vmatmul.mubr.f32.gmra.mxu0 %v7885
    %v7887 = vpop.f32.mrf.mxu0
    %v7888 = vadd.f32 %v7745, %v7887
    %v7889 = vpop.f32.mrf.mxu0
    %7890 = vmatprep.mubr.f32.mxu0 0.0
    %v7891 = vand.u32 %v7237, 4294901760
    %7892 = vmatmul.mubr.f32.gmra.mxu0 %v7891
    %v7893 = vpop.f32.mrf.mxu0
    %v7894 = vadd.f32 %v7753, %v7893
    %v7895 = vpop.f32.mrf.mxu0
    %7896 = vmatprep.mubr.f32.mxu0 0.0
    %v7897 = vand.u32 %v7238, 4294901760
    %7898 = vmatmul.mubr.f32.gmra.mxu0 %v7897
    %v7899 = vpop.f32.mrf.mxu0
    %v7900 = vadd.f32 %v7761, %v7899
    %v7901 = vpop.f32.mrf.mxu0
    %7902 = vmatprep.mubr.f32.mxu0 0.0
    %v7903 = vand.u32 %v7239, 4294901760
    %7904 = vmatmul.mubr.f32.gmra.mxu0 %v7903
    %v7905 = vpop.f32.mrf.mxu0
    %v7906 = vadd.f32 %v7769, %v7905
    %v7907 = vpop.f32.mrf.mxu0
    %7908 = vdwg.mxu0
    %7909 = vmatprep.subr.mxu0 0.0
    %v7910 = vand.u32 %v59, 4294901760
    %7911 = vmatpush1.msra.mxu0 %v7910
    %7912 = vmatprep.subr.mxu0 0.0
    %v7913 = vand.u32 %v58, 4294901760
    %7914 = vmatpush1.msra.mxu0 %v7913
    %7915 = vmatprep.subr.mxu0 0.0
    %v7916 = vand.u32 %v57, 4294901760
    %7917 = vmatpush1.msra.mxu0 %v7916
    %7918 = vmatprep.subr.mxu0 0.0
    %v7919 = vand.u32 %v56, 4294901760
    %7920 = vmatpush1.msra.mxu0 %v7919
    %7921 = vmatprep.subr.mxu0 0.0
    %v7922 = vand.u32 %v55, 4294901760
    %7923 = vmatpush1.msra.mxu0 %v7922
    %7924 = vmatprep.subr.mxu0 0.0
    %v7925 = vand.u32 %v54, 4294901760
    %7926 = vmatpush1.msra.mxu0 %v7925
    %7927 = vmatprep.subr.mxu0 0.0
    %v7928 = vand.u32 %v53, 4294901760
    %7929 = vmatpush1.msra.mxu0 %v7928
    %7930 = vmatprep.subr.mxu0 0.0
    %v7931 = vand.u32 %v52, 4294901760
    %7932 = vmatpush1.msra.mxu0 %v7931
    %7933 = vmatprep.subr.mxu0 0.0
    %v7934 = vand.u32 %v51, 4294901760
    %7935 = vmatpush1.msra.mxu0 %v7934
    %7936 = vmatprep.subr.mxu0 0.0
    %v7937 = vand.u32 %v50, 4294901760
    %7938 = vmatpush1.msra.mxu0 %v7937
    %7939 = vmatprep.subr.mxu0 0.0
    %v7940 = vand.u32 %v49, 4294901760
    %7941 = vmatpush1.msra.mxu0 %v7940
    %7942 = vmatprep.subr.mxu0 0.0
    %v7943 = vand.u32 %v48, 4294901760
    %7944 = vmatpush1.msra.mxu0 %v7943
    %7945 = vmatprep.subr.mxu0 0.0
    %v7946 = vand.u32 %v47, 4294901760
    %7947 = vmatpush1.msra.mxu0 %v7946
    %7948 = vmatprep.subr.mxu0 0.0
    %v7949 = vand.u32 %v46, 4294901760
    %7950 = vmatpush1.msra.mxu0 %v7949
    %7951 = vmatprep.subr.mxu0 0.0
    %v7952 = vand.u32 %v45, 4294901760
    %7953 = vmatpush1.msra.mxu0 %v7952
    %7954 = vmatprep.subr.mxu0 0.0
    %v7955 = vand.u32 %v44, 4294901760
    %7956 = vmatpush1.msra.mxu0 %v7955
    %7957 = vmatprep.subr.mxu0 0.0
    %7958 = vmatpush2.msra.mxu0 0.0
    %7959 = vmatprep.subr.mxu0 0.0
    %7960 = vmatpush2.msra.mxu0 0.0
    %7961 = vmatprep.subr.mxu0 0.0
    %7962 = vmatpush2.msra.mxu0 0.0
    %7963 = vmatprep.subr.mxu0 0.0
    %7964 = vmatpush2.msra.mxu0 0.0
    %7965 = vmatprep.subr.mxu0 0.0
    %7966 = vmatpush2.msra.mxu0 0.0
    %7967 = vmatprep.subr.mxu0 0.0
    %7968 = vmatpush2.msra.mxu0 0.0
    %7969 = vmatprep.subr.mxu0 0.0
    %7970 = vmatpush2.msra.mxu0 0.0
    %7971 = vmatprep.subr.mxu0 0.0
    %7972 = vmatpush2.msra.mxu0 0.0
    %7973 = vmatprep.subr.mxu0 0.0
    %7974 = vmatpush2.msra.mxu0 0.0
    %7975 = vmatprep.subr.mxu0 0.0
    %7976 = vmatpush2.msra.mxu0 0.0
    %7977 = vmatprep.subr.mxu0 0.0
    %7978 = vmatpush2.msra.mxu0 0.0
    %7979 = vmatprep.subr.mxu0 0.0
    %7980 = vmatpush2.msra.mxu0 0.0
    %7981 = vmatprep.subr.mxu0 0.0
    %7982 = vmatpush2.msra.mxu0 0.0
    %7983 = vmatprep.subr.mxu0 0.0
    %7984 = vmatpush2.msra.mxu0 0.0
    %7985 = vmatprep.subr.mxu0 0.0
    %7986 = vmatpush2.msra.mxu0 0.0
    %7987 = vmatprep.subr.mxu0 0.0
    %7988 = vmatpush2.msra.mxu0 0.0
    %7989 = vmatprep.mubr.f32.mxu0 0.0
    %v7990 = vand.u32 %v7236, 4294901760
    %7991 = vmatmul.mubr.f32.gmra.mxu0 %v7990
    %v7992 = vpop.f32.mrf.mxu0
    %v7993 = vadd.f32 %v7888, %v7992
    %v7994 = vpop.f32.mrf.mxu0
    %7995 = vmatprep.mubr.f32.mxu0 0.0
    %v7996 = vand.u32 %v7237, 4294901760
    %7997 = vmatmul.mubr.f32.gmra.mxu0 %v7996
    %v7998 = vpop.f32.mrf.mxu0
    %v7999 = vadd.f32 %v7894, %v7998
    %v8000 = vpop.f32.mrf.mxu0
    %8001 = vmatprep.mubr.f32.mxu0 0.0
    %v8002 = vand.u32 %v7238, 4294901760
    %8003 = vmatmul.mubr.f32.gmra.mxu0 %v8002
    %v8004 = vpop.f32.mrf.mxu0
    %v8005 = vadd.f32 %v7900, %v8004
    %v8006 = vpop.f32.mrf.mxu0
    %8007 = vmatprep.mubr.f32.mxu0 0.0
    %v8008 = vand.u32 %v7239, 4294901760
    %8009 = vmatmul.mubr.f32.gmra.mxu0 %v8008
    %v8010 = vpop.f32.mrf.mxu0
    %v8011 = vadd.f32 %v7906, %v8010
    %v8012 = vpop.f32.mrf.mxu0
    %8013 = vdwg.mxu0
    %v8014 = vtanh.pop %v7993
    %v8015 = vtanh.pop %v7999
    %v8016 = vtanh.pop %v8005
    %v8017 = vtanh.pop %v8011
    %v8018 = vmul.f32 %v8014, %v77
    %v8019 = vmul.f32 %v8015, %v78
    %v8020 = vmul.f32 %v8016, %v77
    %v8021 = vmul.f32 %v8017, %v78
    %v8026 = vcombine.high %v8018, %v8018
    %v8027 = vcombine.high %v8019, %v8019
    %v8028 = vcombine.high %v8020, %v8020
    %v8029 = vcombine.high %v8021, %v8021
    %vm8034 = vcmask 125952
    %v8035 = vsel %vm8034, %v8018, 0.0
    %v8036 = vrot.slane %v8035, 4
    %v8037 = vadd.f32 %v8035, %v8036
    %v8038 = vrot.slane %v8037, 2
    %v8039 = vadd.f32 %v8037, %v8038
    %v8040 = vrot.slane %v8039, 1
    %v8041 = vadd.f32 %v8039, %v8040
    %v8042 = vsel %vm8034, %v8026, 0.0
    %v8043 = vrot.slane %v8042, 4
    %v8044 = vadd.f32 %v8042, %v8043
    %v8045 = vrot.slane %v8044, 2
    %v8046 = vadd.f32 %v8044, %v8045
    %v8047 = vrot.slane %v8046, 1
    %v8048 = vadd.f32 %v8046, %v8047
    %v8049 = vsel %vm8034, %v8019, 0.0
    %v8050 = vrot.slane %v8049, 4
    %v8051 = vadd.f32 %v8049, %v8050
    %v8052 = vrot.slane %v8051, 2
    %v8053 = vadd.f32 %v8051, %v8052
    %v8054 = vrot.slane %v8053, 1
    %v8055 = vadd.f32 %v8053, %v8054
    %v8056 = vsel %vm8034, %v8027, 0.0
    %v8057 = vrot.slane %v8056, 4
    %v8058 = vadd.f32 %v8056, %v8057
    %v8059 = vrot.slane %v8058, 2
    %v8060 = vadd.f32 %v8058, %v8059
    %v8061 = vrot.slane %v8060, 1
    %v8062 = vadd.f32 %v8060, %v8061
    %v8063 = vsel %vm8034, %v8020, 0.0
    %v8064 = vrot.slane %v8063, 4
    %v8065 = vadd.f32 %v8063, %v8064
    %v8066 = vrot.slane %v8065, 2
    %v8067 = vadd.f32 %v8065, %v8066
    %v8068 = vrot.slane %v8067, 1
    %v8069 = vadd.f32 %v8067, %v8068
    %v8070 = vsel %vm8034, %v8028, 0.0
    %v8071 = vrot.slane %v8070, 4
    %v8072 = vadd.f32 %v8070, %v8071
    %v8073 = vrot.slane %v8072, 2
    %v8074 = vadd.f32 %v8072, %v8073
    %v8075 = vrot.slane %v8074, 1
    %v8076 = vadd.f32 %v8074, %v8075
    %v8077 = vsel %vm8034, %v8021, 0.0
    %v8078 = vrot.slane %v8077, 4
    %v8079 = vadd.f32 %v8077, %v8078
    %v8080 = vrot.slane %v8079, 2
    %v8081 = vadd.f32 %v8079, %v8080
    %v8082 = vrot.slane %v8081, 1
    %v8083 = vadd.f32 %v8081, %v8082
    %v8084 = vsel %vm8034, %v8029, 0.0
    %v8085 = vrot.slane %v8084, 4
    %v8086 = vadd.f32 %v8084, %v8085
    %v8087 = vrot.slane %v8086, 2
    %v8088 = vadd.f32 %v8086, %v8087
    %v8089 = vrot.slane %v8088, 1
    %v8090 = vadd.f32 %v8088, %v8089
    %v8091 = vmul.f32 %v8041, 0.33333334
    %v8092 = vmul.f32 %v8048, 0.33333334
    %v8093 = vmul.f32 %v8055, 0.33333334
    %v8094 = vmul.f32 %v8062, 0.33333334
    %v8095 = vmul.f32 %v8069, 0.33333334
    %v8096 = vmul.f32 %v8076, 0.33333334
    %v8097 = vmul.f32 %v8083, 0.33333334
    %v8098 = vmul.f32 %v8090, 0.33333334
    %vm8107 = vcmask 1041409
    %v8108 = vsel %vm8107, %v8092, %v8091
    %vm8109 = vcmask 1042434
    %v8110 = vsel %vm8109, %v8093, %v8108
    %vm8111 = vcmask 1043459
    %v8112 = vsel %vm8111, %v8094, %v8110
    %vm8113 = vcmask 1044484
    %v8114 = vsel %vm8113, %v8095, %v8112
    %vm8115 = vcmask 1045509
    %v8116 = vsel %vm8115, %v8096, %v8114
    %vm8117 = vcmask 1046534
    %v8118 = vsel %vm8117, %v8097, %v8116
    %vm8119 = vcmask 1047559
    %v8120 = vsel %vm8119, %v8098, %v8118
    %8121 = vrot.lane.b32.xlu0 %v8120, 16
    %v8122 = vpop.permute.xlu0 %8121
    %vm8124 = vcmask 130048
    %v8125 = vsel %vm8124, %v7227, %v8122
    %v8126 = vlaneseq
    %v8127 = vshrl.u32 %v8126, 7
    %v8128 = vsub.s32 0, %v8127
    %v8129 = vrot.slane %v76, %v8128
    %v8131 = vsel %vm1006, %v8125, 0
    %8133 = vmatprep.subr.mxu0 0.0
    %8134 = vmatpush1.msra.mxu0 0.0
    %8135 = vmatprep.subr.mxu0 0.0
    %8136 = vmatpush1.msra.mxu0 0.0
    %8137 = vmatprep.subr.mxu0 0.0
    %8138 = vmatpush1.msra.mxu0 0.0
    %8139 = vmatprep.subr.mxu0 0.0
    %8140 = vmatpush1.msra.mxu0 0.0
    %8141 = vmatprep.subr.mxu0 0.0
    %8142 = vmatpush1.msra.mxu0 0.0
    %8143 = vmatprep.subr.mxu0 0.0
    %8144 = vmatpush1.msra.mxu0 0.0
    %8145 = vmatprep.subr.mxu0 0.0
    %8146 = vmatpush1.msra.mxu0 0.0
    %8147 = vmatprep.subr.mxu0 0.0
    %8148 = vmatpush1.msra.mxu0 0.0
    %8149 = vmatprep.subr.mxu0 0.0
    %8150 = vmatpush1.msra.mxu0 0.0
    %8151 = vmatprep.subr.mxu0 0.0
    %8152 = vmatpush1.msra.mxu0 0.0
    %8153 = vmatprep.subr.mxu0 0.0
    %8154 = vmatpush1.msra.mxu0 0.0
    %8155 = vmatprep.subr.mxu0 0.0
    %8156 = vmatpush1.msra.mxu0 0.0
    %8157 = vmatprep.subr.mxu0 0.0
    %v8158 = vand.u32 %v75, 4294901760
    %8159 = vmatpush1.msra.mxu0 %v8158
    %8160 = vmatprep.subr.mxu0 0.0
    %v8161 = vand.u32 %v74, 4294901760
    %8162 = vmatpush1.msra.mxu0 %v8161
    %8163 = vmatprep.subr.mxu0 0.0
    %v8164 = vand.u32 %v73, 4294901760
    %8165 = vmatpush1.msra.mxu0 %v8164
    %8166 = vmatprep.subr.mxu0 0.0
    %v8167 = vand.u32 %v72, 4294901760
    %8168 = vmatpush1.msra.mxu0 %v8167
    %8169 = vmatprep.subr.mxu0 0.0
    %8170 = vmatpush2.msra.mxu0 0.0
    %8171 = vmatprep.subr.mxu0 0.0
    %8172 = vmatpush2.msra.mxu0 0.0
    %8173 = vmatprep.subr.mxu0 0.0
    %8174 = vmatpush2.msra.mxu0 0.0
    %8175 = vmatprep.subr.mxu0 0.0
    %8176 = vmatpush2.msra.mxu0 0.0
    %8177 = vmatprep.subr.mxu0 0.0
    %8178 = vmatpush2.msra.mxu0 0.0
    %8179 = vmatprep.subr.mxu0 0.0
    %8180 = vmatpush2.msra.mxu0 0.0
    %8181 = vmatprep.subr.mxu0 0.0
    %8182 = vmatpush2.msra.mxu0 0.0
    %8183 = vmatprep.subr.mxu0 0.0
    %8184 = vmatpush2.msra.mxu0 0.0
    %8185 = vmatprep.subr.mxu0 0.0
    %8186 = vmatpush2.msra.mxu0 0.0
    %8187 = vmatprep.subr.mxu0 0.0
    %8188 = vmatpush2.msra.mxu0 0.0
    %8189 = vmatprep.subr.mxu0 0.0
    %8190 = vmatpush2.msra.mxu0 0.0
    %8191 = vmatprep.subr.mxu0 0.0
    %8192 = vmatpush2.msra.mxu0 0.0
    %8193 = vmatprep.subr.mxu0 0.0
    %8194 = vmatpush2.msra.mxu0 0.0
    %8195 = vmatprep.subr.mxu0 0.0
    %8196 = vmatpush2.msra.mxu0 0.0
    %8197 = vmatprep.subr.mxu0 0.0
    %8198 = vmatpush2.msra.mxu0 0.0
    %8199 = vmatprep.subr.mxu0 0.0
    %8200 = vmatpush2.msra.mxu0 0.0
    %8201 = vmatprep.mubr.f32.mxu0 0.0
    %v8202 = vand.u32 %v8131, 4294901760
    %v8203 = vsub.f32 %v8131, %v8202
    %v8204 = vand.u32 %v8203, 4294901760
    %v8205 = vsub.f32 %v8203, %v8204
    %v8206 = vand.u32 %v8205, 4294901760
    %8207 = vmatmul.mubr.f32.gmra.mxu0 %v8206
    %v8208 = vpop.f32.mrf.mxu0
    %v8209 = vadd.f32 %v8129, %v8208
    %v8210 = vpop.f32.mrf.mxu0
    %8211 = vdwg.mxu0
    %8212 = vmatprep.subr.mxu0 0.0
    %8213 = vmatpush1.msra.mxu0 0.0
    %8214 = vmatprep.subr.mxu0 0.0
    %8215 = vmatpush1.msra.mxu0 0.0
    %8216 = vmatprep.subr.mxu0 0.0
    %8217 = vmatpush1.msra.mxu0 0.0
    %8218 = vmatprep.subr.mxu0 0.0
    %8219 = vmatpush1.msra.mxu0 0.0
    %8220 = vmatprep.subr.mxu0 0.0
    %8221 = vmatpush1.msra.mxu0 0.0
    %8222 = vmatprep.subr.mxu0 0.0
    %8223 = vmatpush1.msra.mxu0 0.0
    %8224 = vmatprep.subr.mxu0 0.0
    %8225 = vmatpush1.msra.mxu0 0.0
    %8226 = vmatprep.subr.mxu0 0.0
    %8227 = vmatpush1.msra.mxu0 0.0
    %8228 = vmatprep.subr.mxu0 0.0
    %8229 = vmatpush1.msra.mxu0 0.0
    %8230 = vmatprep.subr.mxu0 0.0
    %8231 = vmatpush1.msra.mxu0 0.0
    %8232 = vmatprep.subr.mxu0 0.0
    %8233 = vmatpush1.msra.mxu0 0.0
    %8234 = vmatprep.subr.mxu0 0.0
    %8235 = vmatpush1.msra.mxu0 0.0
    %8236 = vmatprep.subr.mxu0 0.0
    %v8237 = vand.u32 %v75, 4294901760
    %v8238 = vsub.f32 %v75, %v8237
    %v8239 = vand.u32 %v8238, 4294901760
    %v8240 = vsub.f32 %v8238, %v8239
    %v8241 = vand.u32 %v8240, 4294901760
    %8242 = vmatpush1.msra.mxu0 %v8241
    %8243 = vmatprep.subr.mxu0 0.0
    %v8244 = vand.u32 %v74, 4294901760
    %v8245 = vsub.f32 %v74, %v8244
    %v8246 = vand.u32 %v8245, 4294901760
    %v8247 = vsub.f32 %v8245, %v8246
    %v8248 = vand.u32 %v8247, 4294901760
    %8249 = vmatpush1.msra.mxu0 %v8248
    %8250 = vmatprep.subr.mxu0 0.0
    %v8251 = vand.u32 %v73, 4294901760
    %v8252 = vsub.f32 %v73, %v8251
    %v8253 = vand.u32 %v8252, 4294901760
    %v8254 = vsub.f32 %v8252, %v8253
    %v8255 = vand.u32 %v8254, 4294901760
    %8256 = vmatpush1.msra.mxu0 %v8255
    %8257 = vmatprep.subr.mxu0 0.0
    %v8258 = vand.u32 %v72, 4294901760
    %v8259 = vsub.f32 %v72, %v8258
    %v8260 = vand.u32 %v8259, 4294901760
    %v8261 = vsub.f32 %v8259, %v8260
    %v8262 = vand.u32 %v8261, 4294901760
    %8263 = vmatpush1.msra.mxu0 %v8262
    %8264 = vmatprep.subr.mxu0 0.0
    %8265 = vmatpush2.msra.mxu0 0.0
    %8266 = vmatprep.subr.mxu0 0.0
    %8267 = vmatpush2.msra.mxu0 0.0
    %8268 = vmatprep.subr.mxu0 0.0
    %8269 = vmatpush2.msra.mxu0 0.0
    %8270 = vmatprep.subr.mxu0 0.0
    %8271 = vmatpush2.msra.mxu0 0.0
    %8272 = vmatprep.subr.mxu0 0.0
    %8273 = vmatpush2.msra.mxu0 0.0
    %8274 = vmatprep.subr.mxu0 0.0
    %8275 = vmatpush2.msra.mxu0 0.0
    %8276 = vmatprep.subr.mxu0 0.0
    %8277 = vmatpush2.msra.mxu0 0.0
    %8278 = vmatprep.subr.mxu0 0.0
    %8279 = vmatpush2.msra.mxu0 0.0
    %8280 = vmatprep.subr.mxu0 0.0
    %8281 = vmatpush2.msra.mxu0 0.0
    %8282 = vmatprep.subr.mxu0 0.0
    %8283 = vmatpush2.msra.mxu0 0.0
    %8284 = vmatprep.subr.mxu0 0.0
    %8285 = vmatpush2.msra.mxu0 0.0
    %8286 = vmatprep.subr.mxu0 0.0
    %8287 = vmatpush2.msra.mxu0 0.0
    %8288 = vmatprep.subr.mxu0 0.0
    %8289 = vmatpush2.msra.mxu0 0.0
    %8290 = vmatprep.subr.mxu0 0.0
    %8291 = vmatpush2.msra.mxu0 0.0
    %8292 = vmatprep.subr.mxu0 0.0
    %8293 = vmatpush2.msra.mxu0 0.0
    %8294 = vmatprep.subr.mxu0 0.0
    %8295 = vmatpush2.msra.mxu0 0.0
    %8296 = vmatprep.mubr.f32.mxu0 0.0
    %v8297 = vand.u32 %v8131, 4294901760
    %8298 = vmatmul.mubr.f32.gmra.mxu0 %v8297
    %v8299 = vpop.f32.mrf.mxu0
    %v8300 = vadd.f32 %v8209, %v8299
    %v8301 = vpop.f32.mrf.mxu0
    %8302 = vdwg.mxu0
    %8303 = vmatprep.subr.mxu0 0.0
    %8304 = vmatpush1.msra.mxu0 0.0
    %8305 = vmatprep.subr.mxu0 0.0
    %8306 = vmatpush1.msra.mxu0 0.0
    %8307 = vmatprep.subr.mxu0 0.0
    %8308 = vmatpush1.msra.mxu0 0.0
    %8309 = vmatprep.subr.mxu0 0.0
    %8310 = vmatpush1.msra.mxu0 0.0
    %8311 = vmatprep.subr.mxu0 0.0
    %8312 = vmatpush1.msra.mxu0 0.0
    %8313 = vmatprep.subr.mxu0 0.0
    %8314 = vmatpush1.msra.mxu0 0.0
    %8315 = vmatprep.subr.mxu0 0.0
    %8316 = vmatpush1.msra.mxu0 0.0
    %8317 = vmatprep.subr.mxu0 0.0
    %8318 = vmatpush1.msra.mxu0 0.0
    %8319 = vmatprep.subr.mxu0 0.0
    %8320 = vmatpush1.msra.mxu0 0.0
    %8321 = vmatprep.subr.mxu0 0.0
    %8322 = vmatpush1.msra.mxu0 0.0
    %8323 = vmatprep.subr.mxu0 0.0
    %8324 = vmatpush1.msra.mxu0 0.0
    %8325 = vmatprep.subr.mxu0 0.0
    %8326 = vmatpush1.msra.mxu0 0.0
    %8327 = vmatprep.subr.mxu0 0.0
    %v8328 = vand.u32 %v75, 4294901760
    %v8329 = vsub.f32 %v75, %v8328
    %8330 = vmatpush1.msra.mxu0 %v8329
    %8331 = vmatprep.subr.mxu0 0.0
    %v8332 = vand.u32 %v74, 4294901760
    %v8333 = vsub.f32 %v74, %v8332
    %8334 = vmatpush1.msra.mxu0 %v8333
    %8335 = vmatprep.subr.mxu0 0.0
    %v8336 = vand.u32 %v73, 4294901760
    %v8337 = vsub.f32 %v73, %v8336
    %8338 = vmatpush1.msra.mxu0 %v8337
    %8339 = vmatprep.subr.mxu0 0.0
    %v8340 = vand.u32 %v72, 4294901760
    %v8341 = vsub.f32 %v72, %v8340
    %8342 = vmatpush1.msra.mxu0 %v8341
    %8343 = vmatprep.subr.mxu0 0.0
    %8344 = vmatpush2.msra.mxu0 0.0
    %8345 = vmatprep.subr.mxu0 0.0
    %8346 = vmatpush2.msra.mxu0 0.0
    %8347 = vmatprep.subr.mxu0 0.0
    %8348 = vmatpush2.msra.mxu0 0.0
    %8349 = vmatprep.subr.mxu0 0.0
    %8350 = vmatpush2.msra.mxu0 0.0
    %8351 = vmatprep.subr.mxu0 0.0
    %8352 = vmatpush2.msra.mxu0 0.0
    %8353 = vmatprep.subr.mxu0 0.0
    %8354 = vmatpush2.msra.mxu0 0.0
    %8355 = vmatprep.subr.mxu0 0.0
    %8356 = vmatpush2.msra.mxu0 0.0
    %8357 = vmatprep.subr.mxu0 0.0
    %8358 = vmatpush2.msra.mxu0 0.0
    %8359 = vmatprep.subr.mxu0 0.0
    %8360 = vmatpush2.msra.mxu0 0.0
    %8361 = vmatprep.subr.mxu0 0.0
    %8362 = vmatpush2.msra.mxu0 0.0
    %8363 = vmatprep.subr.mxu0 0.0
    %8364 = vmatpush2.msra.mxu0 0.0
    %8365 = vmatprep.subr.mxu0 0.0
    %8366 = vmatpush2.msra.mxu0 0.0
    %8367 = vmatprep.subr.mxu0 0.0
    %8368 = vmatpush2.msra.mxu0 0.0
    %8369 = vmatprep.subr.mxu0 0.0
    %8370 = vmatpush2.msra.mxu0 0.0
    %8371 = vmatprep.subr.mxu0 0.0
    %8372 = vmatpush2.msra.mxu0 0.0
    %8373 = vmatprep.subr.mxu0 0.0
    %8374 = vmatpush2.msra.mxu0 0.0
    %8375 = vmatprep.mubr.f32.mxu0 0.0
    %v8376 = vand.u32 %v8131, 4294901760
    %v8377 = vsub.f32 %v8131, %v8376
    %8378 = vmatmul.mubr.f32.gmra.mxu0 %v8377
    %v8379 = vpop.f32.mrf.mxu0
    %v8380 = vadd.f32 %v8300, %v8379
    %v8381 = vpop.f32.mrf.mxu0
    %8382 = vdwg.mxu0
    %8383 = vmatprep.subr.mxu0 0.0
    %8384 = vmatpush1.msra.mxu0 0.0
    %8385 = vmatprep.subr.mxu0 0.0
    %8386 = vmatpush1.msra.mxu0 0.0
    %8387 = vmatprep.subr.mxu0 0.0
    %8388 = vmatpush1.msra.mxu0 0.0
    %8389 = vmatprep.subr.mxu0 0.0
    %8390 = vmatpush1.msra.mxu0 0.0
    %8391 = vmatprep.subr.mxu0 0.0
    %8392 = vmatpush1.msra.mxu0 0.0
    %8393 = vmatprep.subr.mxu0 0.0
    %8394 = vmatpush1.msra.mxu0 0.0
    %8395 = vmatprep.subr.mxu0 0.0
    %8396 = vmatpush1.msra.mxu0 0.0
    %8397 = vmatprep.subr.mxu0 0.0
    %8398 = vmatpush1.msra.mxu0 0.0
    %8399 = vmatprep.subr.mxu0 0.0
    %8400 = vmatpush1.msra.mxu0 0.0
    %8401 = vmatprep.subr.mxu0 0.0
    %8402 = vmatpush1.msra.mxu0 0.0
    %8403 = vmatprep.subr.mxu0 0.0
    %8404 = vmatpush1.msra.mxu0 0.0
    %8405 = vmatprep.subr.mxu0 0.0
    %8406 = vmatpush1.msra.mxu0 0.0
    %8407 = vmatprep.subr.mxu0 0.0
    %v8408 = vand.u32 %v75, 4294901760
    %8409 = vmatpush1.msra.mxu0 %v8408
    %8410 = vmatprep.subr.mxu0 0.0
    %v8411 = vand.u32 %v74, 4294901760
    %8412 = vmatpush1.msra.mxu0 %v8411
    %8413 = vmatprep.subr.mxu0 0.0
    %v8414 = vand.u32 %v73, 4294901760
    %8415 = vmatpush1.msra.mxu0 %v8414
    %8416 = vmatprep.subr.mxu0 0.0
    %v8417 = vand.u32 %v72, 4294901760
    %8418 = vmatpush1.msra.mxu0 %v8417
    %8419 = vmatprep.subr.mxu0 0.0
    %8420 = vmatpush2.msra.mxu0 0.0
    %8421 = vmatprep.subr.mxu0 0.0
    %8422 = vmatpush2.msra.mxu0 0.0
    %8423 = vmatprep.subr.mxu0 0.0
    %8424 = vmatpush2.msra.mxu0 0.0
    %8425 = vmatprep.subr.mxu0 0.0
    %8426 = vmatpush2.msra.mxu0 0.0
    %8427 = vmatprep.subr.mxu0 0.0
    %8428 = vmatpush2.msra.mxu0 0.0
    %8429 = vmatprep.subr.mxu0 0.0
    %8430 = vmatpush2.msra.mxu0 0.0
    %8431 = vmatprep.subr.mxu0 0.0
    %8432 = vmatpush2.msra.mxu0 0.0
    %8433 = vmatprep.subr.mxu0 0.0
    %8434 = vmatpush2.msra.mxu0 0.0
    %8435 = vmatprep.subr.mxu0 0.0
    %8436 = vmatpush2.msra.mxu0 0.0
    %8437 = vmatprep.subr.mxu0 0.0
    %8438 = vmatpush2.msra.mxu0 0.0
    %8439 = vmatprep.subr.mxu0 0.0
    %8440 = vmatpush2.msra.mxu0 0.0
    %8441 = vmatprep.subr.mxu0 0.0
    %8442 = vmatpush2.msra.mxu0 0.0
    %8443 = vmatprep.subr.mxu0 0.0
    %8444 = vmatpush2.msra.mxu0 0.0
    %8445 = vmatprep.subr.mxu0 0.0
    %8446 = vmatpush2.msra.mxu0 0.0
    %8447 = vmatprep.subr.mxu0 0.0
    %8448 = vmatpush2.msra.mxu0 0.0
    %8449 = vmatprep.subr.mxu0 0.0
    %8450 = vmatpush2.msra.mxu0 0.0
    %8451 = vmatprep.mubr.f32.mxu0 0.0
    %v8452 = vand.u32 %v8131, 4294901760
    %v8453 = vsub.f32 %v8131, %v8452
    %v8454 = vand.u32 %v8453, 4294901760
    %8455 = vmatmul.mubr.f32.gmra.mxu0 %v8454
    %v8456 = vpop.f32.mrf.mxu0
    %v8457 = vadd.f32 %v8380, %v8456
    %v8458 = vpop.f32.mrf.mxu0
    %8459 = vdwg.mxu0
    %8460 = vmatprep.subr.mxu0 0.0
    %8461 = vmatpush1.msra.mxu0 0.0
    %8462 = vmatprep.subr.mxu0 0.0
    %8463 = vmatpush1.msra.mxu0 0.0
    %8464 = vmatprep.subr.mxu0 0.0
    %8465 = vmatpush1.msra.mxu0 0.0
    %8466 = vmatprep.subr.mxu0 0.0
    %8467 = vmatpush1.msra.mxu0 0.0
    %8468 = vmatprep.subr.mxu0 0.0
    %8469 = vmatpush1.msra.mxu0 0.0
    %8470 = vmatprep.subr.mxu0 0.0
    %8471 = vmatpush1.msra.mxu0 0.0
    %8472 = vmatprep.subr.mxu0 0.0
    %8473 = vmatpush1.msra.mxu0 0.0
    %8474 = vmatprep.subr.mxu0 0.0
    %8475 = vmatpush1.msra.mxu0 0.0
    %8476 = vmatprep.subr.mxu0 0.0
    %8477 = vmatpush1.msra.mxu0 0.0
    %8478 = vmatprep.subr.mxu0 0.0
    %8479 = vmatpush1.msra.mxu0 0.0
    %8480 = vmatprep.subr.mxu0 0.0
    %8481 = vmatpush1.msra.mxu0 0.0
    %8482 = vmatprep.subr.mxu0 0.0
    %8483 = vmatpush1.msra.mxu0 0.0
    %8484 = vmatprep.subr.mxu0 0.0
    %v8485 = vand.u32 %v75, 4294901760
    %v8486 = vsub.f32 %v75, %v8485
    %v8487 = vand.u32 %v8486, 4294901760
    %8488 = vmatpush1.msra.mxu0 %v8487
    %8489 = vmatprep.subr.mxu0 0.0
    %v8490 = vand.u32 %v74, 4294901760
    %v8491 = vsub.f32 %v74, %v8490
    %v8492 = vand.u32 %v8491, 4294901760
    %8493 = vmatpush1.msra.mxu0 %v8492
    %8494 = vmatprep.subr.mxu0 0.0
    %v8495 = vand.u32 %v73, 4294901760
    %v8496 = vsub.f32 %v73, %v8495
    %v8497 = vand.u32 %v8496, 4294901760
    %8498 = vmatpush1.msra.mxu0 %v8497
    %8499 = vmatprep.subr.mxu0 0.0
    %v8500 = vand.u32 %v72, 4294901760
    %v8501 = vsub.f32 %v72, %v8500
    %v8502 = vand.u32 %v8501, 4294901760
    %8503 = vmatpush1.msra.mxu0 %v8502
    %8504 = vmatprep.subr.mxu0 0.0
    %8505 = vmatpush2.msra.mxu0 0.0
    %8506 = vmatprep.subr.mxu0 0.0
    %8507 = vmatpush2.msra.mxu0 0.0
    %8508 = vmatprep.subr.mxu0 0.0
    %8509 = vmatpush2.msra.mxu0 0.0
    %8510 = vmatprep.subr.mxu0 0.0
    %8511 = vmatpush2.msra.mxu0 0.0
    %8512 = vmatprep.subr.mxu0 0.0
    %8513 = vmatpush2.msra.mxu0 0.0
    %8514 = vmatprep.subr.mxu0 0.0
    %8515 = vmatpush2.msra.mxu0 0.0
    %8516 = vmatprep.subr.mxu0 0.0
    %8517 = vmatpush2.msra.mxu0 0.0
    %8518 = vmatprep.subr.mxu0 0.0
    %8519 = vmatpush2.msra.mxu0 0.0
    %8520 = vmatprep.subr.mxu0 0.0
    %8521 = vmatpush2.msra.mxu0 0.0
    %8522 = vmatprep.subr.mxu0 0.0
    %8523 = vmatpush2.msra.mxu0 0.0
    %8524 = vmatprep.subr.mxu0 0.0
    %8525 = vmatpush2.msra.mxu0 0.0
    %8526 = vmatprep.subr.mxu0 0.0
    %8527 = vmatpush2.msra.mxu0 0.0
    %8528 = vmatprep.subr.mxu0 0.0
    %8529 = vmatpush2.msra.mxu0 0.0
    %8530 = vmatprep.subr.mxu0 0.0
    %8531 = vmatpush2.msra.mxu0 0.0
    %8532 = vmatprep.subr.mxu0 0.0
    %8533 = vmatpush2.msra.mxu0 0.0
    %8534 = vmatprep.subr.mxu0 0.0
    %8535 = vmatpush2.msra.mxu0 0.0
    %8536 = vmatprep.mubr.f32.mxu0 0.0
    %v8537 = vand.u32 %v8131, 4294901760
    %8538 = vmatmul.mubr.f32.gmra.mxu0 %v8537
    %v8539 = vpop.f32.mrf.mxu0
    %v8540 = vadd.f32 %v8457, %v8539
    %v8541 = vpop.f32.mrf.mxu0
    %8542 = vdwg.mxu0
    %8543 = vmatprep.subr.mxu0 0.0
    %8544 = vmatpush1.msra.mxu0 0.0
    %8545 = vmatprep.subr.mxu0 0.0
    %8546 = vmatpush1.msra.mxu0 0.0
    %8547 = vmatprep.subr.mxu0 0.0
    %8548 = vmatpush1.msra.mxu0 0.0
    %8549 = vmatprep.subr.mxu0 0.0
    %8550 = vmatpush1.msra.mxu0 0.0
    %8551 = vmatprep.subr.mxu0 0.0
    %8552 = vmatpush1.msra.mxu0 0.0
    %8553 = vmatprep.subr.mxu0 0.0
    %8554 = vmatpush1.msra.mxu0 0.0
    %8555 = vmatprep.subr.mxu0 0.0
    %8556 = vmatpush1.msra.mxu0 0.0
    %8557 = vmatprep.subr.mxu0 0.0
    %8558 = vmatpush1.msra.mxu0 0.0
    %8559 = vmatprep.subr.mxu0 0.0
    %8560 = vmatpush1.msra.mxu0 0.0
    %8561 = vmatprep.subr.mxu0 0.0
    %8562 = vmatpush1.msra.mxu0 0.0
    %8563 = vmatprep.subr.mxu0 0.0
    %8564 = vmatpush1.msra.mxu0 0.0
    %8565 = vmatprep.subr.mxu0 0.0
    %8566 = vmatpush1.msra.mxu0 0.0
    %8567 = vmatprep.subr.mxu0 0.0
    %v8568 = vand.u32 %v75, 4294901760
    %8569 = vmatpush1.msra.mxu0 %v8568
    %8570 = vmatprep.subr.mxu0 0.0
    %v8571 = vand.u32 %v74, 4294901760
    %8572 = vmatpush1.msra.mxu0 %v8571
    %8573 = vmatprep.subr.mxu0 0.0
    %v8574 = vand.u32 %v73, 4294901760
    %8575 = vmatpush1.msra.mxu0 %v8574
    %8576 = vmatprep.subr.mxu0 0.0
    %v8577 = vand.u32 %v72, 4294901760
    %8578 = vmatpush1.msra.mxu0 %v8577
    %8579 = vmatprep.subr.mxu0 0.0
    %8580 = vmatpush2.msra.mxu0 0.0
    %8581 = vmatprep.subr.mxu0 0.0
    %8582 = vmatpush2.msra.mxu0 0.0
    %8583 = vmatprep.subr.mxu0 0.0
    %8584 = vmatpush2.msra.mxu0 0.0
    %8585 = vmatprep.subr.mxu0 0.0
    %8586 = vmatpush2.msra.mxu0 0.0
    %8587 = vmatprep.subr.mxu0 0.0
    %8588 = vmatpush2.msra.mxu0 0.0
    %8589 = vmatprep.subr.mxu0 0.0
    %8590 = vmatpush2.msra.mxu0 0.0
    %8591 = vmatprep.subr.mxu0 0.0
    %8592 = vmatpush2.msra.mxu0 0.0
    %8593 = vmatprep.subr.mxu0 0.0
    %8594 = vmatpush2.msra.mxu0 0.0
    %8595 = vmatprep.subr.mxu0 0.0
    %8596 = vmatpush2.msra.mxu0 0.0
    %8597 = vmatprep.subr.mxu0 0.0
    %8598 = vmatpush2.msra.mxu0 0.0
    %8599 = vmatprep.subr.mxu0 0.0
    %8600 = vmatpush2.msra.mxu0 0.0
    %8601 = vmatprep.subr.mxu0 0.0
    %8602 = vmatpush2.msra.mxu0 0.0
    %8603 = vmatprep.subr.mxu0 0.0
    %8604 = vmatpush2.msra.mxu0 0.0
    %8605 = vmatprep.subr.mxu0 0.0
    %8606 = vmatpush2.msra.mxu0 0.0
    %8607 = vmatprep.subr.mxu0 0.0
    %8608 = vmatpush2.msra.mxu0 0.0
    %8609 = vmatprep.subr.mxu0 0.0
    %8610 = vmatpush2.msra.mxu0 0.0
    %8611 = vmatprep.mubr.f32.mxu0 0.0
    %v8612 = vand.u32 %v8131, 4294901760
    %8613 = vmatmul.mubr.f32.gmra.mxu0 %v8612
    %v8614 = vpop.f32.mrf.mxu0
    %v8615 = vadd.f32 %v8540, %v8614
    %v8616 = vpop.f32.mrf.mxu0
    %8617 = vdwg.mxu0
    %8619 = vrot.lane.b32.xlu0 %v8615, 126
    %v8620 = vpop.permute.xlu0 %8619
    %v8622 = vadd.f32 %v8615, %v8620
    %vm8623 = vcmask 15360
    %v8624 = vsel %vm8623, %v8622, 0.0
    %8625 = vrot.lane.b32.xlu0 %v8615, 32
    %v8626 = vpop.permute.xlu0 %8625
    %8629 = vrot.lane.b32.xlu0 %v8624, 40
    %v8630 = vpop.permute.xlu0 %8629
    %v8632 = vsel %vm1006, %v8125, %v8626
    %vm8633 = vcmask 326656
    %v8634 = vsel %vm8633, %v8632, %v8630
    %vm8635 = vcmask 392192
    %v8636 = vsel %vm8635, %v8634, 0.0
    %8637 = vst [vmem:[#allocation5] sm:$0xff] %v8636
    // Predicated region
    $region22: #{tpu_custom_call.1} parent=1 // pred_check
      _
    $region23: #{tpu_custom_call.1} parent=1 // pred_check_branch
      %8639 = sbr.rel (0) target = $region25
    $region24: #{tpu_custom_call.1} parent=1 // pred_region
      %s8641 = ssub.s32 128, 128
      %8642 = vsyncadd [#allocation4], %s8641
      %s8644 = sshll.u32 [#allocation5], 4
      %s8645 = int_to_ptr.vmem [resolvable:$true] %s8644
      %8647 = dma.vmem_to_hbm [thread:$0]  %s8645, 128, %s4, [#allocation4]
    $region25: #{tpu_custom_call.1} parent=1 // pred_fallthru
      _
    // Predicated region
    $region26: #{tpu_custom_call.1} parent=1 // pred_check
      _
    $region27: #{tpu_custom_call.1} parent=1 // pred_check_branch
      %8649 = sbr.rel (0) target = $region29
    $region28: #{tpu_custom_call.1} parent=1 // pred_region
      %8650 = dma.done [#allocation4], 128
    $region29: #{tpu_custom_call.1} parent=1 // pred_fallthru
      _
    %8651 = vsyncpa [#allocation3], 1
    %8652 = vsyncpa [#allocation4], 1

</llo_original>
